<compile_context>
chip_gen: v7x
topology: tpu7x:2x2x1
jax: 0.10.0
libtpu: 0.0.40
codegen_flags: <defaults>
</compile_context>

<pallas_src>
import functools

import jax
import jax.numpy as jnp
from jax.experimental import pallas as pl
from jax.experimental.pallas import tpu as pltpu


TK_MAX = 2560   # max K tile: 2560*512*bf16 = 2.6 MB weight block (fits v5e)
TM_MAX = 256    # M tile for conv-sized matmuls (megacore-splittable)


def _round_up(x, m):
    return (x + m - 1) // m * m


# ----------------------------------------------------------------------------
# Fused Pallas kernel:  O = relu?(X @ W + b)
#   X, W are bf16 (native MXU rate); accumulation is f32 in a VMEM scratch
#   tile resident across the K ("arbitrary") grid axis.  BN scale is
#   pre-folded into W; bias + ReLU + downcast run in the final-K epilogue, so
#   the output tile is stored once, already in its final dtype.
# ----------------------------------------------------------------------------
def _fused_mm_kernel(x_ref, w_ref, b_ref, o_ref, acc_ref, *, apply_relu):
    k = pl.program_id(1)

    @pl.when(k == 0)
    def _():
        acc_ref[...] = jnp.zeros_like(acc_ref)

    acc_ref[...] += jnp.dot(x_ref[...], w_ref[...],
                            preferred_element_type=jnp.float32)

    @pl.when(k == pl.num_programs(1) - 1)
    def _():
        y = acc_ref[...] + b_ref[...]        # f32 epilogue (safe on v5e too)
        if apply_relu:
            y = jnp.maximum(y, 0.0)
        o_ref[...] = y.astype(o_ref.dtype)


def _choose_tk(k_pad):
    # Inverse of the packing rule in _pack_matmul (exact by construction).
    n_k = -(-k_pad // TK_MAX)
    return k_pad // n_k


def matmul_bias(x, w_p, b_p, n_out, *, relu, out_dtype=jnp.bfloat16):
    """x:(M,K) @ pre-padded bf16 w_p:(K_pad,N_pad) + bias, optional ReLU."""
    M, K = x.shape
    K_pad, N_pad = w_p.shape
    tk = _choose_tk(K_pad)
    tm = TM_MAX if M >= TM_MAX else _round_up(M, 16)
    M_pad = _round_up(M, tm)

    x_p = jnp.pad(x.astype(jnp.bfloat16), ((0, M_pad - M), (0, K_pad - K)))

    kernel = functools.partial(_fused_mm_kernel, apply_relu=relu)
    out = pl.pallas_call(
        kernel,
        out_shape=jax.ShapeDtypeStruct((M_pad, N_pad), out_dtype),
        grid_spec=pltpu.PrefetchScalarGridSpec(
            num_scalar_prefetch=0,
            grid=(M_pad // tm, K_pad // tk),
            in_specs=[
                pl.BlockSpec((tm, tk), lambda i, k: (i, k)),
                pl.BlockSpec((tk, N_pad), lambda i, k: (k, 0)),
                pl.BlockSpec((1, N_pad), lambda i, k: (0, 0)),
            ],
            out_specs=pl.BlockSpec((tm, N_pad), lambda i, k: (i, 0)),
            scratch_shapes=[pltpu.VMEM((tm, N_pad), jnp.float32)],
        ),
        compiler_params=pltpu.CompilerParams(
            dimension_semantics=("parallel", "arbitrary")),
    )(x_p, w_p, b_p)
    return out[:M, :n_out]


# ----------------------------------------------------------------------------
# im2col (pure indexing / reshape glue — no arithmetic)
# ----------------------------------------------------------------------------
def extract_patches(x, kh, kw, stride):
    """x: (B,H,W,C) NHWC -> patches (B*OH*OW, KH*KW*C), rows = (kh,kw,cin)."""
    B, H, W, C = x.shape
    OH = (H - kh) // stride + 1
    OW = (W - kw) // stride + 1
    cols = []
    for i in range(kh):
        for j in range(kw):
            cols.append(x[:, i:i + stride * OH:stride,
                          j:j + stride * OW:stride, :])
    p = jnp.stack(cols, axis=3)                      # (B, OH, OW, KH*KW, C)
    return p.reshape(B * OH * OW, kh * kw * C), (B, OH, OW)


def conv_bn_relu(x, layer, n_out, kh, kw, stride):
    patches, (B, OH, OW) = extract_patches(x, kh, kw, stride)
    y = matmul_bias(patches, layer["w"], layer["b"], n_out, relu=True)
    return y.reshape(B, OH, OW, n_out)               # already bf16


# ----------------------------------------------------------------------------
# One-time parameter prep: PyTorch-layout init -> BN-folded, permuted,
# padded, bf16 kernel-ready weights (no per-forward re-padding).
# ----------------------------------------------------------------------------
def _pack_matmul(w_kn, bias):
    K, N = w_kn.shape
    n_k = -(-K // TK_MAX)
    tk = _round_up(-(-K // n_k), 128)
    K_pad = n_k * tk
    N_pad = _round_up(N, 128)
    w_p = jnp.zeros((K_pad, N_pad), jnp.bfloat16)
    w_p = w_p.at[:K, :N].set(w_kn.astype(jnp.bfloat16))
    b_p = jnp.zeros((1, N_pad), jnp.float32).at[0, :N].set(bias)
    return {"w": w_p, "b": b_p}


def _init_conv_raw(key, cin, cout, kh, kw):
    k1, k2 = jax.random.split(key)
    bound = 1.0 / jnp.sqrt(cin * kh * kw)
    w = jax.random.uniform(k1, (cout, cin, kh, kw), jnp.float32, -bound, bound)
    b = jax.random.uniform(k2, (cout,), jnp.float32, -bound, bound)
    return {"w": w, "b": b,
            "gamma": jnp.ones((cout,), jnp.float32),
            "beta": jnp.zeros((cout,), jnp.float32),
            "rmean": jnp.zeros((cout,), jnp.float32),
            "rvar": jnp.ones((cout,), jnp.float32)}


def _init_linear_raw(key, fin, fout):
    k1, k2 = jax.random.split(key)
    bound = 1.0 / jnp.sqrt(fin)
    w = jax.random.uniform(k1, (fout, fin), jnp.float32, -bound, bound)
    b = jax.random.uniform(k2, (fout,), jnp.float32, -bound, bound)
    return {"w": w, "b": b}


def _prep_conv_bn(raw, eps=1e-5):
    # (cout, cin, kh, kw) -> im2col row order (kh, kw, cin); fold BN scale.
    cout, cin, kh, kw = raw["w"].shape
    w = jnp.transpose(raw["w"], (2, 3, 1, 0)).reshape(kh * kw * cin, cout)
    scale = raw["gamma"] / jnp.sqrt(raw["rvar"] + eps)
    w_folded = w * scale[None, :]
    b_folded = (raw["b"] - raw["rmean"]) * scale + raw["beta"]
    return _pack_matmul(w_folded, b_folded)


def _prep_linear(raw, in_perm=None):
    w = raw["w"].T                    # (in, out)
    if in_perm is not None:
        w = w[in_perm]                # rows reordered to NHWC-flatten order
    return _pack_matmul(w, raw["b"])


def init_network_params(action_size, seed=42):
    keys = jax.random.split(jax.random.PRNGKey(seed), 7)
    raw = {
        "conv1": _init_conv_raw(keys[0], 3, 32, 8, 8),
        "conv2": _init_conv_raw(keys[1], 32, 64, 4, 4),
        "conv3": _init_conv_raw(keys[2], 64, 64, 3, 3),
        "conv4": _init_conv_raw(keys[3], 64, 128, 3, 3),
        "fc1": _init_linear_raw(keys[4], 12800, 512),
        "fc2": _init_linear_raw(keys[5], 512, 256),
        "fc3": _init_linear_raw(keys[6], 256, action_size),
    }
    # fc1 consumes the NHWC-flattened (10,10,128) activation; permute its rows
    # from PyTorch's NCHW-flatten order so no runtime transpose is needed.
    nhwc_perm = (jnp.arange(128 * 10 * 10).reshape(128, 10, 10)
                 .transpose(1, 2, 0).reshape(-1))
    return {
        "conv1": _prep_conv_bn(raw["conv1"]),
        "conv2": _prep_conv_bn(raw["conv2"]),
        "conv3": _prep_conv_bn(raw["conv3"]),
        "conv4": _prep_conv_bn(raw["conv4"]),
        "fc1": _prep_linear(raw["fc1"], in_perm=nhwc_perm),
        "fc2": _prep_linear(raw["fc2"]),
        "fc3": _prep_linear(raw["fc3"]),
    }


# ----------------------------------------------------------------------------
# Network forward (mirrors the PyTorch module)
# ----------------------------------------------------------------------------
def network_forward(params, state_nchw, *, action_size):
    # (B, 3, 124, 124) NCHW -> NHWC; activations travel as bf16 between layers.
    x = jnp.transpose(state_nchw, (0, 2, 3, 1)).astype(jnp.bfloat16)
    x = conv_bn_relu(x, params["conv1"], 32, 8, 8, 4)     # (B, 30, 30, 32)
    x = conv_bn_relu(x, params["conv2"], 64, 4, 4, 2)     # (B, 14, 14, 64)
    x = conv_bn_relu(x, params["conv3"], 64, 3, 3, 1)     # (B, 12, 12, 64)
    x = conv_bn_relu(x, params["conv4"], 128, 3, 3, 1)    # (B, 10, 10, 128)
    B = x.shape[0]
    x = x.reshape(B, -1)   # NHWC flatten; fc1 rows pre-permuted to match
    x = matmul_bias(x, params["fc1"]["w"], params["fc1"]["b"], 512,
                    relu=True)                             # (B, 512) bf16
    x = matmul_bias(x, params["fc2"]["w"], params["fc2"]["b"], 256,
                    relu=True)                             # (B, 256) bf16
    return matmul_bias(x, params["fc3"]["w"], params["fc3"]["b"],
                       action_size, relu=False,
                       out_dtype=jnp.float32)              # (B, action_size)


if __name__ == "__main__":
    action_size = 4
    batch = 2
    # fc1 in_features = 12800 = 128*10*10 implies an input of 3 x 124 x 124.
    key = jax.random.PRNGKey(0)
    state = jax.random.normal(key, (batch, 3, 124, 124), jnp.float32)

    params = init_network_params(action_size, seed=42)
    forward = jax.jit(functools.partial(network_forward,
                                        action_size=action_size))
    out = forward(params, state)
    out = jax.block_until_ready(out)
    assert out.shape == (batch, action_size), out.shape
    print("KERNEL_OK")
</pallas_src>

<mosaic_0001>
module attributes {stable_mosaic.version = 11 : i64} {
  func.func @_fused_mm_kernel(%arg0: i32, %arg1: i32, %arg2: memref<256x256xbf16, #tpu.memory_space<vmem>>, %arg3: memref<256x128xbf16, #tpu.memory_space<vmem>>, %arg4: memref<1x128xf32, #tpu.memory_space<vmem>>, %arg5: memref<256x128xbf16, #tpu.memory_space<vmem>>, %arg6: memref<256x128xf32, #tpu.memory_space<vmem>>) attributes {dimension_semantics = [#tpu.dimension_semantics<parallel>, #tpu.dimension_semantics<arbitrary>], iteration_bounds = array<i64: 8, 1>, scalar_prefetch = 0 : i64, scratch_operands = 1 : i64, tpu.core_type = #tpu.core_type<tc>, window_params = [{transform_indices = @transform_0, window_bounds = array<i64: 256, 256>}, {transform_indices = @transform_1, window_bounds = array<i64: 256, 128>}, {pipeline_mode = #tpu.pipeline_mode<synchronous>, transform_indices = @transform_2, window_bounds = array<i64: 1, 128>}, {transform_indices = @transform_3, window_bounds = array<i64: 256, 128>}]} {
    %c0_i32 = arith.constant 0 : i32
    %0 = arith.cmpi eq, %arg1, %c0_i32 : i32
    %1 = arith.extui %0 : i1 to i32
    %c0_i32_0 = arith.constant 0 : i32
    %2 = arith.cmpi ne, %1, %c0_i32_0 : i32
    scf.if %2 {
      %cst_10 = arith.constant 0.000000e+00 : f32
      %12 = vector.broadcast %cst_10 : f32 to vector<256x128xf32>
      %c0_11 = arith.constant 0 : index
      %c0_12 = arith.constant 0 : index
      %13 = vector.load %arg6[%c0_11, %c0_12] : memref<256x128xf32, #tpu.memory_space<vmem>>, vector<256x128xf32>
      tpu.vector_store %arg6[%c0_11, %c0_12], %12 {strides = array<i32>} : memref<256x128xf32, #tpu.memory_space<vmem>>, vector<256x128xf32>,
    } else {
    }
    %c0 = arith.constant 0 : index
    %c0_1 = arith.constant 0 : index
    %3 = vector.load %arg6[%c0, %c0_1] : memref<256x128xf32, #tpu.memory_space<vmem>>, vector<256x128xf32>
    %c0_2 = arith.constant 0 : index
    %c0_3 = arith.constant 0 : index
    %4 = vector.load %arg2[%c0_2, %c0_3] : memref<256x256xbf16, #tpu.memory_space<vmem>>, vector<256x256xbf16>
    %c0_4 = arith.constant 0 : index
    %c0_5 = arith.constant 0 : index
    %5 = vector.load %arg3[%c0_4, %c0_5] : memref<256x128xbf16, #tpu.memory_space<vmem>>, vector<256x128xbf16>
    %cst = arith.constant dense<0.000000e+00> : vector<256x128xf32>
    %6 = tpu.matmul %4, %5, %cst {dimension_numbers = #tpu.dot_dimension_numbers<[1], [0], [0], [1], [0, 0, 1, 1], [], []>} : vector<256x256xbf16>, vector<256x128xbf16>, vector<256x128xf32> -> vector<256x128xf32>
    %7 = arith.addf %3, %6 : vector<256x128xf32>
    %c0_6 = arith.constant 0 : index
    %c0_7 = arith.constant 0 : index
    %8 = vector.load %arg6[%c0_6, %c0_7] : memref<256x128xf32, #tpu.memory_space<vmem>>, vector<256x128xf32>
    tpu.vector_store %arg6[%c0_6, %c0_7], %7 {strides = array<i32>} : memref<256x128xf32, #tpu.memory_space<vmem>>, vector<256x128xf32>,
    %c0_i32_8 = arith.constant 0 : i32
    %9 = arith.cmpi eq, %arg1, %c0_i32_8 : i32
    %10 = arith.extui %9 : i1 to i32
    %c0_i32_9 = arith.constant 0 : i32
    %11 = arith.cmpi ne, %10, %c0_i32_9 : i32
    scf.if %11 {
      %c0_10 = arith.constant 0 : index
      %c0_11 = arith.constant 0 : index
      %12 = vector.load %arg6[%c0_10, %c0_11] : memref<256x128xf32, #tpu.memory_space<vmem>>, vector<256x128xf32>
      %c0_12 = arith.constant 0 : index
      %c0_13 = arith.constant 0 : index
      %13 = vector.load %arg4[%c0_12, %c0_13] : memref<1x128xf32, #tpu.memory_space<vmem>>, vector<1x128xf32>
      %14 = vector.broadcast %13 : vector<1x128xf32> to vector<256x128xf32>
      %15 = arith.addf %12, %14 : vector<256x128xf32>
      %cst_14 = arith.constant 0.000000e+00 : f32
      %16 = vector.broadcast %cst_14 : f32 to vector<256x128xf32>
      %17 = arith.maximumf %15, %16 : vector<256x128xf32>
      %18 = arith.truncf %17 : vector<256x128xf32> to vector<256x128xbf16>
      %c0_15 = arith.constant 0 : index
      %c0_16 = arith.constant 0 : index
      %19 = vector.load %arg5[%c0_15, %c0_16] : memref<256x128xbf16, #tpu.memory_space<vmem>>, vector<256x128xbf16>
      tpu.vector_store %arg5[%c0_15, %c0_16], %18 {strides = array<i32>} : memref<256x128xbf16, #tpu.memory_space<vmem>>, vector<256x128xbf16>,
    } else {
    }
    return
  }
  func.func @transform_0(%arg0: i32, %arg1: i32) -> (i32, i32) {
    %c0_i32 = arith.constant 0 : i32
    return %arg0, %arg1 : i32, i32
  }
  func.func @transform_1(%arg0: i32, %arg1: i32) -> (i32, i32) {
    %c0_i32 = arith.constant 0 : i32
    %c0_i32_0 = arith.constant 0 : i32
    return %arg1, %c0_i32 : i32, i32
  }
  func.func @transform_2(%arg0: i32, %arg1: i32) -> (i32, i32) {
    %c0_i32 = arith.constant 0 : i32
    %c0_i32_0 = arith.constant 0 : i32
    %c0_i32_1 = arith.constant 0 : i32
    return %c0_i32, %c0_i32_0 : i32, i32
  }
  func.func @transform_3(%arg0: i32, %arg1: i32) -> (i32, i32) {
    %c0_i32 = arith.constant 0 : i32
    %c0_i32_0 = arith.constant 0 : i32
    return %arg0, %c0_i32 : i32, i32
  }
}

module attributes {stable_mosaic.version = 11 : i64} {
  func.func @_fused_mm_kernel(%arg0: i32, %arg1: i32, %arg2: memref<256x512xbf16, #tpu.memory_space<vmem>>, %arg3: memref<512x128xbf16, #tpu.memory_space<vmem>>, %arg4: memref<1x128xf32, #tpu.memory_space<vmem>>, %arg5: memref<256x128xbf16, #tpu.memory_space<vmem>>, %arg6: memref<256x128xf32, #tpu.memory_space<vmem>>) attributes {dimension_semantics = [#tpu.dimension_semantics<parallel>, #tpu.dimension_semantics<arbitrary>], iteration_bounds = array<i64: 2, 1>, scalar_prefetch = 0 : i64, scratch_operands = 1 : i64, tpu.core_type = #tpu.core_type<tc>, window_params = [{transform_indices = @transform_0, window_bounds = array<i64: 256, 512>}, {transform_indices = @transform_1, window_bounds = array<i64: 512, 128>}, {pipeline_mode = #tpu.pipeline_mode<synchronous>, transform_indices = @transform_2, window_bounds = array<i64: 1, 128>}, {transform_indices = @transform_3, window_bounds = array<i64: 256, 128>}]} {
    %c0_i32 = arith.constant 0 : i32
    %0 = arith.cmpi eq, %arg1, %c0_i32 : i32
    %1 = arith.extui %0 : i1 to i32
    %c0_i32_0 = arith.constant 0 : i32
    %2 = arith.cmpi ne, %1, %c0_i32_0 : i32
    scf.if %2 {
      %cst_10 = arith.constant 0.000000e+00 : f32
      %12 = vector.broadcast %cst_10 : f32 to vector<256x128xf32>
      %c0_11 = arith.constant 0 : index
      %c0_12 = arith.constant 0 : index
      %13 = vector.load %arg6[%c0_11, %c0_12] : memref<256x128xf32, #tpu.memory_space<vmem>>, vector<256x128xf32>
      tpu.vector_store %arg6[%c0_11, %c0_12], %12 {strides = array<i32>} : memref<256x128xf32, #tpu.memory_space<vmem>>, vector<256x128xf32>,
    } else {
    }
    %c0 = arith.constant 0 : index
    %c0_1 = arith.constant 0 : index
    %3 = vector.load %arg6[%c0, %c0_1] : memref<256x128xf32, #tpu.memory_space<vmem>>, vector<256x128xf32>
    %c0_2 = arith.constant 0 : index
    %c0_3 = arith.constant 0 : index
    %4 = vector.load %arg2[%c0_2, %c0_3] : memref<256x512xbf16, #tpu.memory_space<vmem>>, vector<256x512xbf16>
    %c0_4 = arith.constant 0 : index
    %c0_5 = arith.constant 0 : index
    %5 = vector.load %arg3[%c0_4, %c0_5] : memref<512x128xbf16, #tpu.memory_space<vmem>>, vector<512x128xbf16>
    %cst = arith.constant dense<0.000000e+00> : vector<256x128xf32>
    %6 = tpu.matmul %4, %5, %cst {dimension_numbers = #tpu.dot_dimension_numbers<[1], [0], [0], [1], [0, 0, 1, 1], [], []>} : vector<256x512xbf16>, vector<512x128xbf16>, vector<256x128xf32> -> vector<256x128xf32>
    %7 = arith.addf %3, %6 : vector<256x128xf32>
    %c0_6 = arith.constant 0 : index
    %c0_7 = arith.constant 0 : index
    %8 = vector.load %arg6[%c0_6, %c0_7] : memref<256x128xf32, #tpu.memory_space<vmem>>, vector<256x128xf32>
    tpu.vector_store %arg6[%c0_6, %c0_7], %7 {strides = array<i32>} : memref<256x128xf32, #tpu.memory_space<vmem>>, vector<256x128xf32>,
    %c0_i32_8 = arith.constant 0 : i32
    %9 = arith.cmpi eq, %arg1, %c0_i32_8 : i32
    %10 = arith.extui %9 : i1 to i32
    %c0_i32_9 = arith.constant 0 : i32
    %11 = arith.cmpi ne, %10, %c0_i32_9 : i32
    scf.if %11 {
      %c0_10 = arith.constant 0 : index
      %c0_11 = arith.constant 0 : index
      %12 = vector.load %arg6[%c0_10, %c0_11] : memref<256x128xf32, #tpu.memory_space<vmem>>, vector<256x128xf32>
      %c0_12 = arith.constant 0 : index
      %c0_13 = arith.constant 0 : index
      %13 = vector.load %arg4[%c0_12, %c0_13] : memref<1x128xf32, #tpu.memory_space<vmem>>, vector<1x128xf32>
      %14 = vector.broadcast %13 : vector<1x128xf32> to vector<256x128xf32>
      %15 = arith.addf %12, %14 : vector<256x128xf32>
      %cst_14 = arith.constant 0.000000e+00 : f32
      %16 = vector.broadcast %cst_14 : f32 to vector<256x128xf32>
      %17 = arith.maximumf %15, %16 : vector<256x128xf32>
      %18 = arith.truncf %17 : vector<256x128xf32> to vector<256x128xbf16>
      %c0_15 = arith.constant 0 : index
      %c0_16 = arith.constant 0 : index
      %19 = vector.load %arg5[%c0_15, %c0_16] : memref<256x128xbf16, #tpu.memory_space<vmem>>, vector<256x128xbf16>
      tpu.vector_store %arg5[%c0_15, %c0_16], %18 {strides = array<i32>} : memref<256x128xbf16, #tpu.memory_space<vmem>>, vector<256x128xbf16>,
    } else {
    }
    return
  }
  func.func @transform_0(%arg0: i32, %arg1: i32) -> (i32, i32) {
    %c0_i32 = arith.constant 0 : i32
    return %arg0, %arg1 : i32, i32
  }
  func.func @transform_1(%arg0: i32, %arg1: i32) -> (i32, i32) {
    %c0_i32 = arith.constant 0 : i32
    %c0_i32_0 = arith.constant 0 : i32
    return %arg1, %c0_i32 : i32, i32
  }
  func.func @transform_2(%arg0: i32, %arg1: i32) -> (i32, i32) {
    %c0_i32 = arith.constant 0 : i32
    %c0_i32_0 = arith.constant 0 : i32
    %c0_i32_1 = arith.constant 0 : i32
    return %c0_i32, %c0_i32_0 : i32, i32
  }
  func.func @transform_3(%arg0: i32, %arg1: i32) -> (i32, i32) {
    %c0_i32 = arith.constant 0 : i32
    %c0_i32_0 = arith.constant 0 : i32
    return %arg0, %c0_i32 : i32, i32
  }
}

module attributes {stable_mosaic.version = 11 : i64} {
  func.func @_fused_mm_kernel(%arg0: i32, %arg1: i32, %arg2: memref<256x640xbf16, #tpu.memory_space<vmem>>, %arg3: memref<640x128xbf16, #tpu.memory_space<vmem>>, %arg4: memref<1x128xf32, #tpu.memory_space<vmem>>, %arg5: memref<256x128xbf16, #tpu.memory_space<vmem>>, %arg6: memref<256x128xf32, #tpu.memory_space<vmem>>) attributes {dimension_semantics = [#tpu.dimension_semantics<parallel>, #tpu.dimension_semantics<arbitrary>], iteration_bounds = array<i64: 2, 1>, scalar_prefetch = 0 : i64, scratch_operands = 1 : i64, tpu.core_type = #tpu.core_type<tc>, window_params = [{transform_indices = @transform_0, window_bounds = array<i64: 256, 640>}, {transform_indices = @transform_1, window_bounds = array<i64: 640, 128>}, {pipeline_mode = #tpu.pipeline_mode<synchronous>, transform_indices = @transform_2, window_bounds = array<i64: 1, 128>}, {transform_indices = @transform_3, window_bounds = array<i64: 256, 128>}]} {
    %c0_i32 = arith.constant 0 : i32
    %0 = arith.cmpi eq, %arg1, %c0_i32 : i32
    %1 = arith.extui %0 : i1 to i32
    %c0_i32_0 = arith.constant 0 : i32
    %2 = arith.cmpi ne, %1, %c0_i32_0 : i32
    scf.if %2 {
      %cst_10 = arith.constant 0.000000e+00 : f32
      %12 = vector.broadcast %cst_10 : f32 to vector<256x128xf32>
      %c0_11 = arith.constant 0 : index
      %c0_12 = arith.constant 0 : index
      %13 = vector.load %arg6[%c0_11, %c0_12] : memref<256x128xf32, #tpu.memory_space<vmem>>, vector<256x128xf32>
      tpu.vector_store %arg6[%c0_11, %c0_12], %12 {strides = array<i32>} : memref<256x128xf32, #tpu.memory_space<vmem>>, vector<256x128xf32>,
    } else {
    }
    %c0 = arith.constant 0 : index
    %c0_1 = arith.constant 0 : index
    %3 = vector.load %arg6[%c0, %c0_1] : memref<256x128xf32, #tpu.memory_space<vmem>>, vector<256x128xf32>
    %c0_2 = arith.constant 0 : index
    %c0_3 = arith.constant 0 : index
    %4 = vector.load %arg2[%c0_2, %c0_3] : memref<256x640xbf16, #tpu.memory_space<vmem>>, vector<256x640xbf16>
    %c0_4 = arith.constant 0 : index
    %c0_5 = arith.constant 0 : index
    %5 = vector.load %arg3[%c0_4, %c0_5] : memref<640x128xbf16, #tpu.memory_space<vmem>>, vector<640x128xbf16>
    %cst = arith.constant dense<0.000000e+00> : vector<256x128xf32>
    %6 = tpu.matmul %4, %5, %cst {dimension_numbers = #tpu.dot_dimension_numbers<[1], [0], [0], [1], [0, 0, 1, 1], [], []>} : vector<256x640xbf16>, vector<640x128xbf16>, vector<256x128xf32> -> vector<256x128xf32>
    %7 = arith.addf %3, %6 : vector<256x128xf32>
    %c0_6 = arith.constant 0 : index
    %c0_7 = arith.constant 0 : index
    %8 = vector.load %arg6[%c0_6, %c0_7] : memref<256x128xf32, #tpu.memory_space<vmem>>, vector<256x128xf32>
    tpu.vector_store %arg6[%c0_6, %c0_7], %7 {strides = array<i32>} : memref<256x128xf32, #tpu.memory_space<vmem>>, vector<256x128xf32>,
    %c0_i32_8 = arith.constant 0 : i32
    %9 = arith.cmpi eq, %arg1, %c0_i32_8 : i32
    %10 = arith.extui %9 : i1 to i32
    %c0_i32_9 = arith.constant 0 : i32
    %11 = arith.cmpi ne, %10, %c0_i32_9 : i32
    scf.if %11 {
      %c0_10 = arith.constant 0 : index
      %c0_11 = arith.constant 0 : index
      %12 = vector.load %arg6[%c0_10, %c0_11] : memref<256x128xf32, #tpu.memory_space<vmem>>, vector<256x128xf32>
      %c0_12 = arith.constant 0 : index
      %c0_13 = arith.constant 0 : index
      %13 = vector.load %arg4[%c0_12, %c0_13] : memref<1x128xf32, #tpu.memory_space<vmem>>, vector<1x128xf32>
      %14 = vector.broadcast %13 : vector<1x128xf32> to vector<256x128xf32>
      %15 = arith.addf %12, %14 : vector<256x128xf32>
      %cst_14 = arith.constant 0.000000e+00 : f32
      %16 = vector.broadcast %cst_14 : f32 to vector<256x128xf32>
      %17 = arith.maximumf %15, %16 : vector<256x128xf32>
      %18 = arith.truncf %17 : vector<256x128xf32> to vector<256x128xbf16>
      %c0_15 = arith.constant 0 : index
      %c0_16 = arith.constant 0 : index
      %19 = vector.load %arg5[%c0_15, %c0_16] : memref<256x128xbf16, #tpu.memory_space<vmem>>, vector<256x128xbf16>
      tpu.vector_store %arg5[%c0_15, %c0_16], %18 {strides = array<i32>} : memref<256x128xbf16, #tpu.memory_space<vmem>>, vector<256x128xbf16>,
    } else {
    }
    return
  }
  func.func @transform_0(%arg0: i32, %arg1: i32) -> (i32, i32) {
    %c0_i32 = arith.constant 0 : i32
    return %arg0, %arg1 : i32, i32
  }
  func.func @transform_1(%arg0: i32, %arg1: i32) -> (i32, i32) {
    %c0_i32 = arith.constant 0 : i32
    %c0_i32_0 = arith.constant 0 : i32
    return %arg1, %c0_i32 : i32, i32
  }
  func.func @transform_2(%arg0: i32, %arg1: i32) -> (i32, i32) {
    %c0_i32 = arith.constant 0 : i32
    %c0_i32_0 = arith.constant 0 : i32
    %c0_i32_1 = arith.constant 0 : i32
    return %c0_i32, %c0_i32_0 : i32, i32
  }
  func.func @transform_3(%arg0: i32, %arg1: i32) -> (i32, i32) {
    %c0_i32 = arith.constant 0 : i32
    %c0_i32_0 = arith.constant 0 : i32
    return %arg0, %c0_i32 : i32, i32
  }
}

module attributes {stable_mosaic.version = 11 : i64} {
  func.func @_fused_mm_kernel(%arg0: i32, %arg1: i32, %arg2: memref<208x640xbf16, #tpu.memory_space<vmem>>, %arg3: memref<640x128xbf16, #tpu.memory_space<vmem>>, %arg4: memref<1x128xf32, #tpu.memory_space<vmem>>, %arg5: memref<208x128xbf16, #tpu.memory_space<vmem>>, %arg6: memref<208x128xf32, #tpu.memory_space<vmem>>) attributes {dimension_semantics = [#tpu.dimension_semantics<parallel>, #tpu.dimension_semantics<arbitrary>], iteration_bounds = array<i64: 1, 1>, scalar_prefetch = 0 : i64, scratch_operands = 1 : i64, tpu.core_type = #tpu.core_type<tc>, window_params = [{transform_indices = @transform_0, window_bounds = array<i64: 208, 640>}, {transform_indices = @transform_1, window_bounds = array<i64: 640, 128>}, {pipeline_mode = #tpu.pipeline_mode<synchronous>, transform_indices = @transform_2, window_bounds = array<i64: 1, 128>}, {transform_indices = @transform_3, window_bounds = array<i64: 208, 128>}]} {
    %c0_i32 = arith.constant 0 : i32
    %0 = arith.cmpi eq, %arg1, %c0_i32 : i32
    %1 = arith.extui %0 : i1 to i32
    %c0_i32_0 = arith.constant 0 : i32
    %2 = arith.cmpi ne, %1, %c0_i32_0 : i32
    scf.if %2 {
      %cst_10 = arith.constant 0.000000e+00 : f32
      %12 = vector.broadcast %cst_10 : f32 to vector<208x128xf32>
      %c0_11 = arith.constant 0 : index
      %c0_12 = arith.constant 0 : index
      %13 = vector.load %arg6[%c0_11, %c0_12] : memref<208x128xf32, #tpu.memory_space<vmem>>, vector<208x128xf32>
      tpu.vector_store %arg6[%c0_11, %c0_12], %12 {strides = array<i32>} : memref<208x128xf32, #tpu.memory_space<vmem>>, vector<208x128xf32>,
    } else {
    }
    %c0 = arith.constant 0 : index
    %c0_1 = arith.constant 0 : index
    %3 = vector.load %arg6[%c0, %c0_1] : memref<208x128xf32, #tpu.memory_space<vmem>>, vector<208x128xf32>
    %c0_2 = arith.constant 0 : index
    %c0_3 = arith.constant 0 : index
    %4 = vector.load %arg2[%c0_2, %c0_3] : memref<208x640xbf16, #tpu.memory_space<vmem>>, vector<208x640xbf16>
    %c0_4 = arith.constant 0 : index
    %c0_5 = arith.constant 0 : index
    %5 = vector.load %arg3[%c0_4, %c0_5] : memref<640x128xbf16, #tpu.memory_space<vmem>>, vector<640x128xbf16>
    %cst = arith.constant dense<0.000000e+00> : vector<208x128xf32>
    %6 = tpu.matmul %4, %5, %cst {dimension_numbers = #tpu.dot_dimension_numbers<[1], [0], [0], [1], [0, 0, 1, 1], [], []>} : vector<208x640xbf16>, vector<640x128xbf16>, vector<208x128xf32> -> vector<208x128xf32>
    %7 = arith.addf %3, %6 : vector<208x128xf32>
    %c0_6 = arith.constant 0 : index
    %c0_7 = arith.constant 0 : index
    %8 = vector.load %arg6[%c0_6, %c0_7] : memref<208x128xf32, #tpu.memory_space<vmem>>, vector<208x128xf32>
    tpu.vector_store %arg6[%c0_6, %c0_7], %7 {strides = array<i32>} : memref<208x128xf32, #tpu.memory_space<vmem>>, vector<208x128xf32>,
    %c0_i32_8 = arith.constant 0 : i32
    %9 = arith.cmpi eq, %arg1, %c0_i32_8 : i32
    %10 = arith.extui %9 : i1 to i32
    %c0_i32_9 = arith.constant 0 : i32
    %11 = arith.cmpi ne, %10, %c0_i32_9 : i32
    scf.if %11 {
      %c0_10 = arith.constant 0 : index
      %c0_11 = arith.constant 0 : index
      %12 = vector.load %arg6[%c0_10, %c0_11] : memref<208x128xf32, #tpu.memory_space<vmem>>, vector<208x128xf32>
      %c0_12 = arith.constant 0 : index
      %c0_13 = arith.constant 0 : index
      %13 = vector.load %arg4[%c0_12, %c0_13] : memref<1x128xf32, #tpu.memory_space<vmem>>, vector<1x128xf32>
      %14 = vector.broadcast %13 : vector<1x128xf32> to vector<208x128xf32>
      %15 = arith.addf %12, %14 : vector<208x128xf32>
      %cst_14 = arith.constant 0.000000e+00 : f32
      %16 = vector.broadcast %cst_14 : f32 to vector<208x128xf32>
      %17 = arith.maximumf %15, %16 : vector<208x128xf32>
      %18 = arith.truncf %17 : vector<208x128xf32> to vector<208x128xbf16>
      %c0_15 = arith.constant 0 : index
      %c0_16 = arith.constant 0 : index
      %19 = vector.load %arg5[%c0_15, %c0_16] : memref<208x128xbf16, #tpu.memory_space<vmem>>, vector<208x128xbf16>
      tpu.vector_store %arg5[%c0_15, %c0_16], %18 {strides = array<i32>} : memref<208x128xbf16, #tpu.memory_space<vmem>>, vector<208x128xbf16>,
    } else {
    }
    return
  }
  func.func @transform_0(%arg0: i32, %arg1: i32) -> (i32, i32) {
    %c0_i32 = arith.constant 0 : i32
    return %arg0, %arg1 : i32, i32
  }
  func.func @transform_1(%arg0: i32, %arg1: i32) -> (i32, i32) {
    %c0_i32 = arith.constant 0 : i32
    %c0_i32_0 = arith.constant 0 : i32
    return %arg1, %c0_i32 : i32, i32
  }
  func.func @transform_2(%arg0: i32, %arg1: i32) -> (i32, i32) {
    %c0_i32 = arith.constant 0 : i32
    %c0_i32_0 = arith.constant 0 : i32
    %c0_i32_1 = arith.constant 0 : i32
    return %c0_i32, %c0_i32_0 : i32, i32
  }
  func.func @transform_3(%arg0: i32, %arg1: i32) -> (i32, i32) {
    %c0_i32 = arith.constant 0 : i32
    %c0_i32_0 = arith.constant 0 : i32
    return %arg0, %c0_i32 : i32, i32
  }
}

module attributes {stable_mosaic.version = 11 : i64} {
  func.func @_fused_mm_kernel(%arg0: i32, %arg1: i32, %arg2: memref<16x2560xbf16, #tpu.memory_space<vmem>>, %arg3: memref<2560x512xbf16, #tpu.memory_space<vmem>>, %arg4: memref<1x512xf32, #tpu.memory_space<vmem>>, %arg5: memref<16x512xbf16, #tpu.memory_space<vmem>>, %arg6: memref<16x512xf32, #tpu.memory_space<vmem>>) attributes {dimension_semantics = [#tpu.dimension_semantics<parallel>, #tpu.dimension_semantics<arbitrary>], iteration_bounds = array<i64: 1, 5>, scalar_prefetch = 0 : i64, scratch_operands = 1 : i64, tpu.core_type = #tpu.core_type<tc>, window_params = [{transform_indices = @transform_0, window_bounds = array<i64: 16, 2560>}, {transform_indices = @transform_1, window_bounds = array<i64: 2560, 512>}, {pipeline_mode = #tpu.pipeline_mode<synchronous>, transform_indices = @transform_2, window_bounds = array<i64: 1, 512>}, {transform_indices = @transform_3, window_bounds = array<i64: 16, 512>}]} {
    %c0_i32 = arith.constant 0 : i32
    %0 = arith.cmpi eq, %arg1, %c0_i32 : i32
    %1 = arith.extui %0 : i1 to i32
    %c0_i32_0 = arith.constant 0 : i32
    %2 = arith.cmpi ne, %1, %c0_i32_0 : i32
    scf.if %2 {
      %cst_9 = arith.constant 0.000000e+00 : f32
      %12 = vector.broadcast %cst_9 : f32 to vector<16x512xf32>
      %c0_10 = arith.constant 0 : index
      %c0_11 = arith.constant 0 : index
      %13 = vector.load %arg6[%c0_10, %c0_11] : memref<16x512xf32, #tpu.memory_space<vmem>>, vector<16x512xf32>
      tpu.vector_store %arg6[%c0_10, %c0_11], %12 {strides = array<i32>} : memref<16x512xf32, #tpu.memory_space<vmem>>, vector<16x512xf32>,
    } else {
    }
    %c0 = arith.constant 0 : index
    %c0_1 = arith.constant 0 : index
    %3 = vector.load %arg6[%c0, %c0_1] : memref<16x512xf32, #tpu.memory_space<vmem>>, vector<16x512xf32>
    %c0_2 = arith.constant 0 : index
    %c0_3 = arith.constant 0 : index
    %4 = vector.load %arg2[%c0_2, %c0_3] : memref<16x2560xbf16, #tpu.memory_space<vmem>>, vector<16x2560xbf16>
    %c0_4 = arith.constant 0 : index
    %c0_5 = arith.constant 0 : index
    %5 = vector.load %arg3[%c0_4, %c0_5] : memref<2560x512xbf16, #tpu.memory_space<vmem>>, vector<2560x512xbf16>
    %cst = arith.constant dense<0.000000e+00> : vector<16x512xf32>
    %6 = tpu.matmul %4, %5, %cst {dimension_numbers = #tpu.dot_dimension_numbers<[1], [0], [0], [1], [0, 0, 1, 1], [], []>} : vector<16x2560xbf16>, vector<2560x512xbf16>, vector<16x512xf32> -> vector<16x512xf32>
    %7 = arith.addf %3, %6 : vector<16x512xf32>
    %c0_6 = arith.constant 0 : index
    %c0_7 = arith.constant 0 : index
    %8 = vector.load %arg6[%c0_6, %c0_7] : memref<16x512xf32, #tpu.memory_space<vmem>>, vector<16x512xf32>
    tpu.vector_store %arg6[%c0_6, %c0_7], %7 {strides = array<i32>} : memref<16x512xf32, #tpu.memory_space<vmem>>, vector<16x512xf32>,
    %c4_i32 = arith.constant 4 : i32
    %9 = arith.cmpi eq, %arg1, %c4_i32 : i32
    %10 = arith.extui %9 : i1 to i32
    %c0_i32_8 = arith.constant 0 : i32
    %11 = arith.cmpi ne, %10, %c0_i32_8 : i32
    scf.if %11 {
      %c0_9 = arith.constant 0 : index
      %c0_10 = arith.constant 0 : index
      %12 = vector.load %arg6[%c0_9, %c0_10] : memref<16x512xf32, #tpu.memory_space<vmem>>, vector<16x512xf32>
      %c0_11 = arith.constant 0 : index
      %c0_12 = arith.constant 0 : index
      %13 = vector.load %arg4[%c0_11, %c0_12] : memref<1x512xf32, #tpu.memory_space<vmem>>, vector<1x512xf32>
      %14 = vector.broadcast %13 : vector<1x512xf32> to vector<16x512xf32>
      %15 = arith.addf %12, %14 : vector<16x512xf32>
      %cst_13 = arith.constant 0.000000e+00 : f32
      %16 = vector.broadcast %cst_13 : f32 to vector<16x512xf32>
      %17 = arith.maximumf %15, %16 : vector<16x512xf32>
      %18 = arith.truncf %17 : vector<16x512xf32> to vector<16x512xbf16>
      %c0_14 = arith.constant 0 : index
      %c0_15 = arith.constant 0 : index
      %19 = vector.load %arg5[%c0_14, %c0_15] : memref<16x512xbf16, #tpu.memory_space<vmem>>, vector<16x512xbf16>
      tpu.vector_store %arg5[%c0_14, %c0_15], %18 {strides = array<i32>} : memref<16x512xbf16, #tpu.memory_space<vmem>>, vector<16x512xbf16>,
    } else {
    }
    return
  }
  func.func @transform_0(%arg0: i32, %arg1: i32) -> (i32, i32) {
    %c0_i32 = arith.constant 0 : i32
    return %arg0, %arg1 : i32, i32
  }
  func.func @transform_1(%arg0: i32, %arg1: i32) -> (i32, i32) {
    %c0_i32 = arith.constant 0 : i32
    %c0_i32_0 = arith.constant 0 : i32
    return %arg1, %c0_i32 : i32, i32
  }
  func.func @transform_2(%arg0: i32, %arg1: i32) -> (i32, i32) {
    %c0_i32 = arith.constant 0 : i32
    %c0_i32_0 = arith.constant 0 : i32
    %c0_i32_1 = arith.constant 0 : i32
    return %c0_i32, %c0_i32_0 : i32, i32
  }
  func.func @transform_3(%arg0: i32, %arg1: i32) -> (i32, i32) {
    %c0_i32 = arith.constant 0 : i32
    %c0_i32_0 = arith.constant 0 : i32
    return %arg0, %c0_i32 : i32, i32
  }
}

module attributes {stable_mosaic.version = 11 : i64} {
  func.func @_fused_mm_kernel(%arg0: i32, %arg1: i32, %arg2: memref<16x512xbf16, #tpu.memory_space<vmem>>, %arg3: memref<512x256xbf16, #tpu.memory_space<vmem>>, %arg4: memref<1x256xf32, #tpu.memory_space<vmem>>, %arg5: memref<16x256xbf16, #tpu.memory_space<vmem>>, %arg6: memref<16x256xf32, #tpu.memory_space<vmem>>) attributes {dimension_semantics = [#tpu.dimension_semantics<parallel>, #tpu.dimension_semantics<arbitrary>], iteration_bounds = array<i64: 1, 1>, scalar_prefetch = 0 : i64, scratch_operands = 1 : i64, tpu.core_type = #tpu.core_type<tc>, window_params = [{transform_indices = @transform_0, window_bounds = array<i64: 16, 512>}, {transform_indices = @transform_1, window_bounds = array<i64: 512, 256>}, {pipeline_mode = #tpu.pipeline_mode<synchronous>, transform_indices = @transform_2, window_bounds = array<i64: 1, 256>}, {transform_indices = @transform_3, window_bounds = array<i64: 16, 256>}]} {
    %c0_i32 = arith.constant 0 : i32
    %0 = arith.cmpi eq, %arg1, %c0_i32 : i32
    %1 = arith.extui %0 : i1 to i32
    %c0_i32_0 = arith.constant 0 : i32
    %2 = arith.cmpi ne, %1, %c0_i32_0 : i32
    scf.if %2 {
      %cst_10 = arith.constant 0.000000e+00 : f32
      %12 = vector.broadcast %cst_10 : f32 to vector<16x256xf32>
      %c0_11 = arith.constant 0 : index
      %c0_12 = arith.constant 0 : index
      %13 = vector.load %arg6[%c0_11, %c0_12] : memref<16x256xf32, #tpu.memory_space<vmem>>, vector<16x256xf32>
      tpu.vector_store %arg6[%c0_11, %c0_12], %12 {strides = array<i32>} : memref<16x256xf32, #tpu.memory_space<vmem>>, vector<16x256xf32>,
    } else {
    }
    %c0 = arith.constant 0 : index
    %c0_1 = arith.constant 0 : index
    %3 = vector.load %arg6[%c0, %c0_1] : memref<16x256xf32, #tpu.memory_space<vmem>>, vector<16x256xf32>
    %c0_2 = arith.constant 0 : index
    %c0_3 = arith.constant 0 : index
    %4 = vector.load %arg2[%c0_2, %c0_3] : memref<16x512xbf16, #tpu.memory_space<vmem>>, vector<16x512xbf16>
    %c0_4 = arith.constant 0 : index
    %c0_5 = arith.constant 0 : index
    %5 = vector.load %arg3[%c0_4, %c0_5] : memref<512x256xbf16, #tpu.memory_space<vmem>>, vector<512x256xbf16>
    %cst = arith.constant dense<0.000000e+00> : vector<16x256xf32>
    %6 = tpu.matmul %4, %5, %cst {dimension_numbers = #tpu.dot_dimension_numbers<[1], [0], [0], [1], [0, 0, 1, 1], [], []>} : vector<16x512xbf16>, vector<512x256xbf16>, vector<16x256xf32> -> vector<16x256xf32>
    %7 = arith.addf %3, %6 : vector<16x256xf32>
    %c0_6 = arith.constant 0 : index
    %c0_7 = arith.constant 0 : index
    %8 = vector.load %arg6[%c0_6, %c0_7] : memref<16x256xf32, #tpu.memory_space<vmem>>, vector<16x256xf32>
    tpu.vector_store %arg6[%c0_6, %c0_7], %7 {strides = array<i32>} : memref<16x256xf32, #tpu.memory_space<vmem>>, vector<16x256xf32>,
    %c0_i32_8 = arith.constant 0 : i32
    %9 = arith.cmpi eq, %arg1, %c0_i32_8 : i32
    %10 = arith.extui %9 : i1 to i32
    %c0_i32_9 = arith.constant 0 : i32
    %11 = arith.cmpi ne, %10, %c0_i32_9 : i32
    scf.if %11 {
      %c0_10 = arith.constant 0 : index
      %c0_11 = arith.constant 0 : index
      %12 = vector.load %arg6[%c0_10, %c0_11] : memref<16x256xf32, #tpu.memory_space<vmem>>, vector<16x256xf32>
      %c0_12 = arith.constant 0 : index
      %c0_13 = arith.constant 0 : index
      %13 = vector.load %arg4[%c0_12, %c0_13] : memref<1x256xf32, #tpu.memory_space<vmem>>, vector<1x256xf32>
      %14 = vector.broadcast %13 : vector<1x256xf32> to vector<16x256xf32>
      %15 = arith.addf %12, %14 : vector<16x256xf32>
      %cst_14 = arith.constant 0.000000e+00 : f32
      %16 = vector.broadcast %cst_14 : f32 to vector<16x256xf32>
      %17 = arith.maximumf %15, %16 : vector<16x256xf32>
      %18 = arith.truncf %17 : vector<16x256xf32> to vector<16x256xbf16>
      %c0_15 = arith.constant 0 : index
      %c0_16 = arith.constant 0 : index
      %19 = vector.load %arg5[%c0_15, %c0_16] : memref<16x256xbf16, #tpu.memory_space<vmem>>, vector<16x256xbf16>
      tpu.vector_store %arg5[%c0_15, %c0_16], %18 {strides = array<i32>} : memref<16x256xbf16, #tpu.memory_space<vmem>>, vector<16x256xbf16>,
    } else {
    }
    return
  }
  func.func @transform_0(%arg0: i32, %arg1: i32) -> (i32, i32) {
    %c0_i32 = arith.constant 0 : i32
    return %arg0, %arg1 : i32, i32
  }
  func.func @transform_1(%arg0: i32, %arg1: i32) -> (i32, i32) {
    %c0_i32 = arith.constant 0 : i32
    %c0_i32_0 = arith.constant 0 : i32
    return %arg1, %c0_i32 : i32, i32
  }
  func.func @transform_2(%arg0: i32, %arg1: i32) -> (i32, i32) {
    %c0_i32 = arith.constant 0 : i32
    %c0_i32_0 = arith.constant 0 : i32
    %c0_i32_1 = arith.constant 0 : i32
    return %c0_i32, %c0_i32_0 : i32, i32
  }
  func.func @transform_3(%arg0: i32, %arg1: i32) -> (i32, i32) {
    %c0_i32 = arith.constant 0 : i32
    %c0_i32_0 = arith.constant 0 : i32
    return %arg0, %c0_i32 : i32, i32
  }
}

module attributes {stable_mosaic.version = 11 : i64} {
  func.func @_fused_mm_kernel(%arg0: i32, %arg1: i32, %arg2: memref<16x256xbf16, #tpu.memory_space<vmem>>, %arg3: memref<256x128xbf16, #tpu.memory_space<vmem>>, %arg4: memref<1x128xf32, #tpu.memory_space<vmem>>, %arg5: memref<16x128xf32, #tpu.memory_space<vmem>>, %arg6: memref<16x128xf32, #tpu.memory_space<vmem>>) attributes {dimension_semantics = [#tpu.dimension_semantics<parallel>, #tpu.dimension_semantics<arbitrary>], iteration_bounds = array<i64: 1, 1>, scalar_prefetch = 0 : i64, scratch_operands = 1 : i64, tpu.core_type = #tpu.core_type<tc>, window_params = [{transform_indices = @transform_0, window_bounds = array<i64: 16, 256>}, {transform_indices = @transform_1, window_bounds = array<i64: 256, 128>}, {pipeline_mode = #tpu.pipeline_mode<synchronous>, transform_indices = @transform_2, window_bounds = array<i64: 1, 128>}, {transform_indices = @transform_3, window_bounds = array<i64: 16, 128>}]} {
    %c0_i32 = arith.constant 0 : i32
    %0 = arith.cmpi eq, %arg1, %c0_i32 : i32
    %1 = arith.extui %0 : i1 to i32
    %c0_i32_0 = arith.constant 0 : i32
    %2 = arith.cmpi ne, %1, %c0_i32_0 : i32
    scf.if %2 {
      %cst_10 = arith.constant 0.000000e+00 : f32
      %12 = vector.broadcast %cst_10 : f32 to vector<16x128xf32>
      %c0_11 = arith.constant 0 : index
      %c0_12 = arith.constant 0 : index
      %13 = vector.load %arg6[%c0_11, %c0_12] : memref<16x128xf32, #tpu.memory_space<vmem>>, vector<16x128xf32>
      tpu.vector_store %arg6[%c0_11, %c0_12], %12 {strides = array<i32>} : memref<16x128xf32, #tpu.memory_space<vmem>>, vector<16x128xf32>,
    } else {
    }
    %c0 = arith.constant 0 : index
    %c0_1 = arith.constant 0 : index
    %3 = vector.load %arg6[%c0, %c0_1] : memref<16x128xf32, #tpu.memory_space<vmem>>, vector<16x128xf32>
    %c0_2 = arith.constant 0 : index
    %c0_3 = arith.constant 0 : index
    %4 = vector.load %arg2[%c0_2, %c0_3] : memref<16x256xbf16, #tpu.memory_space<vmem>>, vector<16x256xbf16>
    %c0_4 = arith.constant 0 : index
    %c0_5 = arith.constant 0 : index
    %5 = vector.load %arg3[%c0_4, %c0_5] : memref<256x128xbf16, #tpu.memory_space<vmem>>, vector<256x128xbf16>
    %cst = arith.constant dense<0.000000e+00> : vector<16x128xf32>
    %6 = tpu.matmul %4, %5, %cst {dimension_numbers = #tpu.dot_dimension_numbers<[1], [0], [0], [1], [0, 0, 1, 1], [], []>} : vector<16x256xbf16>, vector<256x128xbf16>, vector<16x128xf32> -> vector<16x128xf32>
    %7 = arith.addf %3, %6 : vector<16x128xf32>
    %c0_6 = arith.constant 0 : index
    %c0_7 = arith.constant 0 : index
    %8 = vector.load %arg6[%c0_6, %c0_7] : memref<16x128xf32, #tpu.memory_space<vmem>>, vector<16x128xf32>
    tpu.vector_store %arg6[%c0_6, %c0_7], %7 {strides = array<i32>} : memref<16x128xf32, #tpu.memory_space<vmem>>, vector<16x128xf32>,
    %c0_i32_8 = arith.constant 0 : i32
    %9 = arith.cmpi eq, %arg1, %c0_i32_8 : i32
    %10 = arith.extui %9 : i1 to i32
    %c0_i32_9 = arith.constant 0 : i32
    %11 = arith.cmpi ne, %10, %c0_i32_9 : i32
    scf.if %11 {
      %c0_10 = arith.constant 0 : index
      %c0_11 = arith.constant 0 : index
      %12 = vector.load %arg6[%c0_10, %c0_11] : memref<16x128xf32, #tpu.memory_space<vmem>>, vector<16x128xf32>
      %c0_12 = arith.constant 0 : index
      %c0_13 = arith.constant 0 : index
      %13 = vector.load %arg4[%c0_12, %c0_13] : memref<1x128xf32, #tpu.memory_space<vmem>>, vector<1x128xf32>
      %14 = vector.broadcast %13 : vector<1x128xf32> to vector<16x128xf32>
      %15 = arith.addf %12, %14 : vector<16x128xf32>
      %c0_14 = arith.constant 0 : index
      %c0_15 = arith.constant 0 : index
      %16 = vector.load %arg5[%c0_14, %c0_15] : memref<16x128xf32, #tpu.memory_space<vmem>>, vector<16x128xf32>
      tpu.vector_store %arg5[%c0_14, %c0_15], %15 {strides = array<i32>} : memref<16x128xf32, #tpu.memory_space<vmem>>, vector<16x128xf32>,
    } else {
    }
    return
  }
  func.func @transform_0(%arg0: i32, %arg1: i32) -> (i32, i32) {
    %c0_i32 = arith.constant 0 : i32
    return %arg0, %arg1 : i32, i32
  }
  func.func @transform_1(%arg0: i32, %arg1: i32) -> (i32, i32) {
    %c0_i32 = arith.constant 0 : i32
    %c0_i32_0 = arith.constant 0 : i32
    return %arg1, %c0_i32 : i32, i32
  }
  func.func @transform_2(%arg0: i32, %arg1: i32) -> (i32, i32) {
    %c0_i32 = arith.constant 0 : i32
    %c0_i32_0 = arith.constant 0 : i32
    %c0_i32_1 = arith.constant 0 : i32
    return %c0_i32, %c0_i32_0 : i32, i32
  }
  func.func @transform_3(%arg0: i32, %arg1: i32) -> (i32, i32) {
    %c0_i32 = arith.constant 0 : i32
    %c0_i32_0 = arith.constant 0 : i32
    return %arg0, %c0_i32 : i32, i32
  }
}

</mosaic_0001>

<llo_original>
// kernel: network_forward.7
$region0: #{network_forward.7}
  #allocation0 [shape = 'u32[]', space=smem, size = 0x4, offset = 0x4, fixed_abs, tag = 'smem constant byte address 0x4 - core index']
  #allocation1 [shape = 'u32[144,128]{1,0:T(1,128)}', space=vmem, size = 0x12000, scoped, tag = 'internal scratch']
  #allocation2 [shape = 'f32[256,128]{1,0:T(8,128)}', space=vmem, size = 0x20000, scoped, tag = 'scratch operand']
  %s0 = inlined_call_operand.vmem [shape: bf16[2048,256], index: 0, kind: input, shape index: {}]
  %s1 = inlined_call_operand.vmem [shape: bf16[256,128], index: 1, kind: input, shape index: {}]
  %s2 = inlined_call_operand.vmem [shape: f32[1,128], index: 2, kind: input, shape index: {}]
  %s3 = inlined_call_operand.vmem [shape: bf16[2048,128], index: 3, kind: output, shape index: {}]
  %s4 = sld [smem:[#allocation0]]
  $region53: #{network_forward.7} parent=0
    _
  %s6 = ssub.s32 1, %s4
  %s7 = scalar_select 0, %s6, %s4
  loop: start=0, step=1, limit=10
  $region2: #{network_forward.7} parent=0 // loop_pre_header
    _
  $region3: #{network_forward.7} parent=0 // loop_header
    %s9 = sphi 0, %s13
    %p10 = scmp.ge.s32.totalorder %s9, 10
    %s16 = sphi 0, %s28
    %s17 = sphi 0, %s24
    %s18 = sphi 0, %s16
    %s19 = sphi 0, %s17
    %s20 = sphi 0, %s18
    %s21 = sphi 0, %s19
    %s33 = sphi 0, %s35
    %s36 = sphi 0, %s33
    %s37 = sphi 0, %s36
    %s53 = sphi 0, %s37
    %s59 = sphi 0, %s61
    %s62 = sphi 0, %s59
    %s63 = sphi 0, %s62
    %s79 = sphi 0, %s63
    %s83 = sphi 0, %s83
    %s85 = sphi 0, %s83
    %s86 = sphi 0, %s85
    %s100 = sphi 0, %s86
    %s106 = sphi 0, %s108
    %s109 = sphi 0, %s106
    %s110 = sphi 0, %s109
    %s126 = sphi 0, %s110
  $region4: #{network_forward.7} parent=0 // loop_header_branch
    %12 = sbr.rel (%p10) target = $region8
  $region5: #{network_forward.7} parent=0 // loop_body
    %s14 = ssub.s32 %s9, 1
    %s15 = ssub.s32 %s9, 2
    %s22 = sadd.s32 1, %s17
    %p23 = scmp.ge.s32.totalorder %s22, 1
    %s24 = scalar_select %p23, 0, %s22
    %s25 = sadd.s32 1, %s16
    %s26 = scalar_select %p23, %s25, %s16
    %p27 = scmp.ge.s32.totalorder %s26, 8
    %s28 = scalar_select %p27, 0, %s26
    %s29 = ssub.s32 %s16, %s28
    %s30 = ssub.s32 %s17, %s24
    %s31 = sor.u32 %s29, %s30
    %p32 = scmp.eq.s32.totalorder %s31, 0
    %s34 = sadd.s32 %s33, 1
    %s35 = scalar_select %p32, %s33, %s34
    %p38 = pneg %p32
    %p39 = scmp.eq.s32.totalorder %s9, 7
    %p40 = por %p38, %p39
    %p41 = scmp.ne.s32.totalorder %s33, %s36
    %p42 = scmp.eq.s32.totalorder %s9, 0
    %p43 = por %p41, %p42
    %p44 = scmp.ne.s32.totalorder %s33, %s36
    %p45 = scmp.eq.s32.totalorder %s14, 7
    %p46 = por %p44, %p45
    %p47 = scmp.ne.s32.totalorder %s36, %s37
    %p48 = scmp.eq.s32.totalorder %s14, 0
    %p49 = por %p47, %p48
    %p50 = scmp.ne.s32.totalorder %s36, %s37
    %p51 = scmp.eq.s32.totalorder %s15, 7
    %p52 = por %p50, %p51
    %p54 = scmp.ne.s32.totalorder %s37, %s53
    %p55 = scmp.eq.s32.totalorder %s15, 0
    %p56 = por %p54, %p55
    %s57 = ssub.s32 %s17, %s24
    %p58 = scmp.eq.s32.totalorder %s57, 0
    %s60 = sadd.s32 %s59, 1
    %s61 = scalar_select %p58, %s59, %s60
    %p64 = pneg %p58
    %p65 = scmp.eq.s32.totalorder %s9, 7
    %p66 = por %p64, %p65
    %p67 = scmp.ne.s32.totalorder %s59, %s62
    %p68 = scmp.eq.s32.totalorder %s9, 0
    %p69 = por %p67, %p68
    %p70 = scmp.ne.s32.totalorder %s59, %s62
    %p71 = scmp.eq.s32.totalorder %s14, 7
    %p72 = por %p70, %p71
    %p73 = scmp.ne.s32.totalorder %s62, %s63
    %p74 = scmp.eq.s32.totalorder %s14, 0
    %p75 = por %p73, %p74
    %p76 = scmp.ne.s32.totalorder %s62, %s63
    %p77 = scmp.eq.s32.totalorder %s15, 7
    %p78 = por %p76, %p77
    %p80 = scmp.ne.s32.totalorder %s63, %s79
    %p81 = scmp.eq.s32.totalorder %s15, 0
    %p82 = por %p80, %p81
    %s84 = sadd.s32 %s83, 1
    %p87 = scmp.eq.s32.totalorder %s9, 7
    %p88 = scmp.ne.s32.totalorder %s83, %s85
    %p89 = scmp.eq.s32.totalorder %s9, 0
    %p90 = por %p88, %p89
    %p91 = scmp.ne.s32.totalorder %s83, %s85
    %p92 = scmp.eq.s32.totalorder %s14, 7
    %p93 = por %p91, %p92
    %p94 = scmp.ne.s32.totalorder %s85, %s86
    %p95 = scmp.eq.s32.totalorder %s14, 0
    %p96 = por %p94, %p95
    %p97 = scmp.ne.s32.totalorder %s85, %s86
    %p98 = scmp.eq.s32.totalorder %s15, 7
    %p99 = por %p97, %p98
    %p101 = scmp.ne.s32.totalorder %s86, %s100
    %p102 = scmp.eq.s32.totalorder %s15, 0
    %p103 = por %p101, %p102
    %s104 = ssub.s32 %s16, %s28
    %p105 = scmp.eq.s32.totalorder %s104, 0
    %s107 = sadd.s32 %s106, 1
    %s108 = scalar_select %p105, %s106, %s107
    %p111 = pneg %p105
    %p112 = scmp.eq.s32.totalorder %s9, 7
    %p113 = por %p111, %p112
    %p114 = scmp.ne.s32.totalorder %s106, %s109
    %p115 = scmp.eq.s32.totalorder %s9, 0
    %p116 = por %p114, %p115
    %p117 = scmp.ne.s32.totalorder %s106, %s109
    %p118 = scmp.eq.s32.totalorder %s14, 7
    %p119 = por %p117, %p118
    %p120 = scmp.ne.s32.totalorder %s109, %s110
    %p121 = scmp.eq.s32.totalorder %s14, 0
    %p122 = por %p120, %p121
    %p123 = scmp.ne.s32.totalorder %s109, %s110
    %p124 = scmp.eq.s32.totalorder %s15, 7
    %p125 = por %p123, %p124
    %p127 = scmp.ne.s32.totalorder %s110, %s126
    %p128 = scmp.eq.s32.totalorder %s15, 0
    %p129 = por %p127, %p128
    %p130 = scmp.le.s32.totalorder 1, %s9
    %p131 = scmp.lt.s32.totalorder %s9, 9
    %p132 = pnand %p130, %p131
    %p133 = pneg %p132
    // Predicated region
    $region9: #{network_forward.7} parent=5 // pred_check
      _
    $region10: #{network_forward.7} parent=5 // pred_check_branch
      %135 = sbr.rel (%p132) target = $region12
    $region11: #{network_forward.7} parent=5 // pred_region
      %s136 = ssub.s32 %s9, 1
      // Predicated region
      $region13: #{network_forward.7} parent=11 // pred_check
        %p137 = pneg %p75
      $region14: #{network_forward.7} parent=11 // pred_check_branch
        %139 = sbr.rel (%p137) target = $region16
      $region15: #{network_forward.7} parent=11 // pred_region
        %s140 = smul.u32 32, %s19
        %p141 = scmp.lt.s32.totalorder %s140, 31
        %s142 = scalar_select %p141, %s140, 31
        %s143 = smul.addr %s142, 4
        %s144 = scalar_lea.vmem %s1, %s143
        %s145 = smul.u32 32, %s19
      $region16: #{network_forward.7} parent=11 // pred_fallthru
        _
      // Predicated region
      $region17: #{network_forward.7} parent=11 // pred_check
        %p146 = pneg %p96
      $region18: #{network_forward.7} parent=11 // pred_check_branch
        %148 = sbr.rel (%p146) target = $region20
      $region19: #{network_forward.7} parent=11 // pred_region
        _
      $region20: #{network_forward.7} parent=11 // pred_fallthru
        _
    $region12: #{network_forward.7} parent=5 // pred_fallthru
      _
    %p149 = scmp.lt.s32.totalorder %s9, 8
    // Predicated region
    $region21: #{network_forward.7} parent=5 // pred_check
      %p150 = pneg %p149
    $region22: #{network_forward.7} parent=5 // pred_check_branch
      %152 = sbr.rel (%p150) target = $region24
    $region23: #{network_forward.7} parent=5 // pred_region
      // Predicated region
      $region25: #{network_forward.7} parent=23 // pred_check
        %p153 = pneg %p43
      $region26: #{network_forward.7} parent=23 // pred_check_branch
        %155 = sbr.rel (%p153) target = $region28
      $region27: #{network_forward.7} parent=23 // pred_region
        %s156 = smul.u32 32, %s16
        %s157 = smul.u32 2, %s17
        %p158 = scmp.lt.s32.totalorder %s156, 255
        %s159 = scalar_select %p158, %s156, 255
        %p160 = scmp.lt.s32.totalorder %s157, 1
        %s161 = scalar_select %p160, %s157, 1
        %s162 = smul.addr %s159, 2
        %s163 = sadd.s32 %s161, %s162
        %s164 = smul.addr %s163, 4
        %s165 = scalar_lea.vmem %s0, %s164
        %s166 = smul.u32 32, %s16
        %s167 = smul.u32 2, %s17
      $region28: #{network_forward.7} parent=23 // pred_fallthru
        _
    $region24: #{network_forward.7} parent=5 // pred_fallthru
      _
    %p168 = scmp.le.s32.totalorder 1, %s9
    %p169 = scmp.lt.s32.totalorder %s9, 9
    %p170 = pnand %p168, %p169
    %p171 = pneg %p170
    // Predicated region
    $region29: #{network_forward.7} parent=5 // pred_check
      _
    $region30: #{network_forward.7} parent=5 // pred_check_branch
      %173 = sbr.rel (%p170) target = $region32
    $region31: #{network_forward.7} parent=5 // pred_region
      %s174 = ssub.s32 %s9, 1
      %s175 = smul.u32 32, %s18
      %s176 = smul.u32 2, %s19
      %p177 = scmp.lt.s32.totalorder %s175, 255
      %s178 = scalar_select %p177, %s175, 255
      %p179 = scmp.lt.s32.totalorder %s176, 1
      %s180 = scalar_select %p179, %s176, 1
      %s181 = smul.addr %s178, 2
      %s182 = sadd.s32 %s180, %s181
      %s183 = smul.addr %s182, 4
      %s184 = scalar_lea.vmem %s0, %s183
      %p185 = pneg %p49
      %p186 = pneg %p46
      %s187 = smul.u32 32, %s19
      %p188 = scmp.lt.s32.totalorder %s187, 31
      %s189 = scalar_select %p188, %s187, 31
      %s190 = smul.addr %s189, 4
      %s191 = scalar_lea.vmem %s1, %s190
      %p192 = pneg %p75
      %p193 = pneg %p72
      %p194 = pneg %p96
      %p195 = pneg %p93
      %p196 = pneg %p122
      %p197 = pneg %p119
      %s198 = smul.u32 32, %s18
      %p199 = scmp.lt.s32.totalorder %s198, 255
      %s200 = scalar_select %p199, %s198, 255
      %s201 = smul.addr %s200, 4
      %s202 = scalar_lea.vmem %s3, %s201
      %s203 = smul.u32 32, %s18
      %s204 = smul.u32 2, %s19
      %p205 = scmp.lt.s32.totalorder %s203, 255
      %s206 = scalar_select %p205, %s203, 255
      %p207 = scmp.lt.s32.totalorder %s204, 1
      %s208 = scalar_select %p207, %s204, 1
      %s209 = smul.addr %s206, 2
      %s210 = sadd.s32 %s208, %s209
      %s211 = smul.addr %s210, 4
      %s212 = scalar_lea.vmem %s0, %s211
      %s213 = smul.u32 32, %s18
      %s214 = smul.u32 2, %s19
      %s215 = smul.u32 32, %s19
      %p216 = scmp.lt.s32.totalorder %s215, 31
      %s217 = scalar_select %p216, %s215, 31
      %s218 = smul.addr %s217, 4
      %s219 = scalar_lea.vmem %s1, %s218
      %s220 = smul.u32 32, %s19
      %s221 = smul.u32 32, %s18
      %p222 = scmp.lt.s32.totalorder %s221, 255
      %s223 = scalar_select %p222, %s221, 255
      %s224 = smul.addr %s223, 4
      %s225 = scalar_lea.vmem %s3, %s224
      %s226 = smul.u32 32, %s18
      %p228 = scmp.eq.s32.totalorder %s19, 0
      // Predicated region
      $region33: #{network_forward.7} parent=31 // pred_check
        %p229 = pneg %p228
      $region34: #{network_forward.7} parent=31 // pred_check_branch
        %231 = sbr.rel (%p229) target = $region36
      $region35: #{network_forward.7} parent=31 // pred_region
        %232 = vst [vmem:[#allocation2] sm:$0xff] 0.0
        %233 = vst [vmem:[#allocation2 + $0x8] sm:$0xff] 0.0
        %234 = vst [vmem:[#allocation2 + $0x10] sm:$0xff] 0.0
        %235 = vst [vmem:[#allocation2 + $0x18] sm:$0xff] 0.0
        %236 = vst [vmem:[#allocation2 + $0x20] sm:$0xff] 0.0
        %237 = vst [vmem:[#allocation2 + $0x28] sm:$0xff] 0.0
        %238 = vst [vmem:[#allocation2 + $0x30] sm:$0xff] 0.0
        %239 = vst [vmem:[#allocation2 + $0x38] sm:$0xff] 0.0
        %240 = vst [vmem:[#allocation2 + $0x40] sm:$0xff] 0.0
        %241 = vst [vmem:[#allocation2 + $0x48] sm:$0xff] 0.0
        %242 = vst [vmem:[#allocation2 + $0x50] sm:$0xff] 0.0
        %243 = vst [vmem:[#allocation2 + $0x58] sm:$0xff] 0.0
        %244 = vst [vmem:[#allocation2 + $0x60] sm:$0xff] 0.0
        %245 = vst [vmem:[#allocation2 + $0x68] sm:$0xff] 0.0
        %246 = vst [vmem:[#allocation2 + $0x70] sm:$0xff] 0.0
        %247 = vst [vmem:[#allocation2 + $0x78] sm:$0xff] 0.0
        %248 = vst [vmem:[#allocation2 + $0x80] sm:$0xff] 0.0
        %249 = vst [vmem:[#allocation2 + $0x88] sm:$0xff] 0.0
        %250 = vst [vmem:[#allocation2 + $0x90] sm:$0xff] 0.0
        %251 = vst [vmem:[#allocation2 + $0x98] sm:$0xff] 0.0
        %252 = vst [vmem:[#allocation2 + $0xa0] sm:$0xff] 0.0
        %253 = vst [vmem:[#allocation2 + $0xa8] sm:$0xff] 0.0
        %254 = vst [vmem:[#allocation2 + $0xb0] sm:$0xff] 0.0
        %255 = vst [vmem:[#allocation2 + $0xb8] sm:$0xff] 0.0
        %256 = vst [vmem:[#allocation2 + $0xc0] sm:$0xff] 0.0
        %257 = vst [vmem:[#allocation2 + $0xc8] sm:$0xff] 0.0
        %258 = vst [vmem:[#allocation2 + $0xd0] sm:$0xff] 0.0
        %259 = vst [vmem:[#allocation2 + $0xd8] sm:$0xff] 0.0
        %260 = vst [vmem:[#allocation2 + $0xe0] sm:$0xff] 0.0
        %261 = vst [vmem:[#allocation2 + $0xe8] sm:$0xff] 0.0
        %262 = vst [vmem:[#allocation2 + $0xf0] sm:$0xff] 0.0
        %263 = vst [vmem:[#allocation2 + $0xf8] sm:$0xff] 0.0
      $region36: #{network_forward.7} parent=31 // pred_fallthru
        _
      %v264 = vld [vmem:[#allocation2] sm:$0xff]
      %v265 = vld [vmem:[#allocation2 + $0x8] sm:$0xff]
      %v266 = vld [vmem:[#allocation2 + $0x10] sm:$0xff]
      %v267 = vld [vmem:[#allocation2 + $0x18] sm:$0xff]
      %v268 = vld [vmem:[#allocation2 + $0x20] sm:$0xff]
      %v269 = vld [vmem:[#allocation2 + $0x28] sm:$0xff]
      %v270 = vld [vmem:[#allocation2 + $0x30] sm:$0xff]
      %v271 = vld [vmem:[#allocation2 + $0x38] sm:$0xff]
      %v272 = vld [vmem:[#allocation2 + $0x40] sm:$0xff]
      %v273 = vld [vmem:[#allocation2 + $0x48] sm:$0xff]
      %v274 = vld [vmem:[#allocation2 + $0x50] sm:$0xff]
      %v275 = vld [vmem:[#allocation2 + $0x58] sm:$0xff]
      %v276 = vld [vmem:[#allocation2 + $0x60] sm:$0xff]
      %v277 = vld [vmem:[#allocation2 + $0x68] sm:$0xff]
      %v278 = vld [vmem:[#allocation2 + $0x70] sm:$0xff]
      %v279 = vld [vmem:[#allocation2 + $0x78] sm:$0xff]
      %v280 = vld [vmem:[#allocation2 + $0x80] sm:$0xff]
      %v281 = vld [vmem:[#allocation2 + $0x88] sm:$0xff]
      %v282 = vld [vmem:[#allocation2 + $0x90] sm:$0xff]
      %v283 = vld [vmem:[#allocation2 + $0x98] sm:$0xff]
      %v284 = vld [vmem:[#allocation2 + $0xa0] sm:$0xff]
      %v285 = vld [vmem:[#allocation2 + $0xa8] sm:$0xff]
      %v286 = vld [vmem:[#allocation2 + $0xb0] sm:$0xff]
      %v287 = vld [vmem:[#allocation2 + $0xb8] sm:$0xff]
      %v288 = vld [vmem:[#allocation2 + $0xc0] sm:$0xff]
      %v289 = vld [vmem:[#allocation2 + $0xc8] sm:$0xff]
      %v290 = vld [vmem:[#allocation2 + $0xd0] sm:$0xff]
      %v291 = vld [vmem:[#allocation2 + $0xd8] sm:$0xff]
      %v292 = vld [vmem:[#allocation2 + $0xe0] sm:$0xff]
      %v293 = vld [vmem:[#allocation2 + $0xe8] sm:$0xff]
      %v294 = vld [vmem:[#allocation2 + $0xf0] sm:$0xff]
      %v295 = vld [vmem:[#allocation2 + $0xf8] sm:$0xff]
      %v296 = vld [vmem:[%s212] sm:$0xff]
      %v297 = vld [vmem:[%s212 + $0x8] sm:$0xff]
      %v298 = vld [vmem:[%s212 + $0x10] sm:$0xff]
      %v299 = vld [vmem:[%s212 + $0x18] sm:$0xff]
      %v300 = vld [vmem:[%s212 + $0x20] sm:$0xff]
      %v301 = vld [vmem:[%s212 + $0x28] sm:$0xff]
      %v302 = vld [vmem:[%s212 + $0x30] sm:$0xff]
      %v303 = vld [vmem:[%s212 + $0x38] sm:$0xff]
      %v304 = vld [vmem:[%s212 + $0x40] sm:$0xff]
      %v305 = vld [vmem:[%s212 + $0x48] sm:$0xff]
      %v306 = vld [vmem:[%s212 + $0x50] sm:$0xff]
      %v307 = vld [vmem:[%s212 + $0x58] sm:$0xff]
      %v308 = vld [vmem:[%s212 + $0x60] sm:$0xff]
      %v309 = vld [vmem:[%s212 + $0x68] sm:$0xff]
      %v310 = vld [vmem:[%s212 + $0x70] sm:$0xff]
      %v311 = vld [vmem:[%s212 + $0x78] sm:$0xff]
      %v312 = vld [vmem:[%s212 + $0x80] sm:$0xff]
      %v313 = vld [vmem:[%s212 + $0x88] sm:$0xff]
      %v314 = vld [vmem:[%s212 + $0x90] sm:$0xff]
      %v315 = vld [vmem:[%s212 + $0x98] sm:$0xff]
      %v316 = vld [vmem:[%s212 + $0xa0] sm:$0xff]
      %v317 = vld [vmem:[%s212 + $0xa8] sm:$0xff]
      %v318 = vld [vmem:[%s212 + $0xb0] sm:$0xff]
      %v319 = vld [vmem:[%s212 + $0xb8] sm:$0xff]
      %v320 = vld [vmem:[%s212 + $0xc0] sm:$0xff]
      %v321 = vld [vmem:[%s212 + $0xc8] sm:$0xff]
      %v322 = vld [vmem:[%s212 + $0xd0] sm:$0xff]
      %v323 = vld [vmem:[%s212 + $0xd8] sm:$0xff]
      %v324 = vld [vmem:[%s212 + $0xe0] sm:$0xff]
      %v325 = vld [vmem:[%s212 + $0xe8] sm:$0xff]
      %v326 = vld [vmem:[%s212 + $0xf0] sm:$0xff]
      %v327 = vld [vmem:[%s212 + $0xf8] sm:$0xff]
      %v328 = vld [vmem:[%s219] sm:$0xf]
      %v329 = vld [vmem:[%s219 + $0x4] sm:$0xf]
      %v330 = vld [vmem:[%s219 + $0x8] sm:$0xf]
      %v331 = vld [vmem:[%s219 + $0xc] sm:$0xf]
      %v332 = vld [vmem:[%s219 + $0x10] sm:$0xf]
      %v333 = vld [vmem:[%s219 + $0x14] sm:$0xf]
      %v334 = vld [vmem:[%s219 + $0x18] sm:$0xf]
      %v335 = vld [vmem:[%s219 + $0x1c] sm:$0xf]
      %v336 = vld [vmem:[%s219 + $0x20] sm:$0xf]
      %v337 = vld [vmem:[%s219 + $0x24] sm:$0xf]
      %v338 = vld [vmem:[%s219 + $0x28] sm:$0xf]
      %v339 = vld [vmem:[%s219 + $0x2c] sm:$0xf]
      %v340 = vld [vmem:[%s219 + $0x30] sm:$0xf]
      %v341 = vld [vmem:[%s219 + $0x34] sm:$0xf]
      %v342 = vld [vmem:[%s219 + $0x38] sm:$0xf]
      %v343 = vld [vmem:[%s219 + $0x3c] sm:$0xf]
      %v344 = vld [vmem:[%s219 + $0x40] sm:$0xf]
      %v345 = vld [vmem:[%s219 + $0x44] sm:$0xf]
      %v346 = vld [vmem:[%s219 + $0x48] sm:$0xf]
      %v347 = vld [vmem:[%s219 + $0x4c] sm:$0xf]
      %v348 = vld [vmem:[%s219 + $0x50] sm:$0xf]
      %v349 = vld [vmem:[%s219 + $0x54] sm:$0xf]
      %v350 = vld [vmem:[%s219 + $0x58] sm:$0xf]
      %v351 = vld [vmem:[%s219 + $0x5c] sm:$0xf]
      %v352 = vld [vmem:[%s219 + $0x60] sm:$0xf]
      %v353 = vld [vmem:[%s219 + $0x64] sm:$0xf]
      %v354 = vld [vmem:[%s219 + $0x68] sm:$0xf]
      %v355 = vld [vmem:[%s219 + $0x6c] sm:$0xf]
      %v356 = vld [vmem:[%s219 + $0x70] sm:$0xf]
      %v357 = vld [vmem:[%s219 + $0x74] sm:$0xf]
      %v358 = vld [vmem:[%s219 + $0x78] sm:$0xf]
      %v359 = vld [vmem:[%s219 + $0x7c] sm:$0xf]
      %v392 = vunpack.c.l.b16 %v296
      %v393 = vunpack.c.h.b16 %v296
      %v394 = vunpack.c.l.b16 %v297
      %v395 = vunpack.c.h.b16 %v297
      %v396 = vunpack.c.l.b16 %v298
      %v397 = vunpack.c.h.b16 %v298
      %v398 = vunpack.c.l.b16 %v299
      %v399 = vunpack.c.h.b16 %v299
      %v400 = vunpack.c.l.b16 %v300
      %v401 = vunpack.c.h.b16 %v300
      %v402 = vunpack.c.l.b16 %v301
      %v403 = vunpack.c.h.b16 %v301
      %v404 = vunpack.c.l.b16 %v302
      %v405 = vunpack.c.h.b16 %v302
      %v406 = vunpack.c.l.b16 %v303
      %v407 = vunpack.c.h.b16 %v303
      %v408 = vunpack.c.l.b16 %v304
      %v409 = vunpack.c.h.b16 %v304
      %v410 = vunpack.c.l.b16 %v305
      %v411 = vunpack.c.h.b16 %v305
      %v412 = vunpack.c.l.b16 %v306
      %v413 = vunpack.c.h.b16 %v306
      %v414 = vunpack.c.l.b16 %v307
      %v415 = vunpack.c.h.b16 %v307
      %v416 = vunpack.c.l.b16 %v308
      %v417 = vunpack.c.h.b16 %v308
      %v418 = vunpack.c.l.b16 %v309
      %v419 = vunpack.c.h.b16 %v309
      %v420 = vunpack.c.l.b16 %v310
      %v421 = vunpack.c.h.b16 %v310
      %v422 = vunpack.c.l.b16 %v311
      %v423 = vunpack.c.h.b16 %v311
      %v424 = vunpack.c.l.b16 %v312
      %v425 = vunpack.c.h.b16 %v312
      %v426 = vunpack.c.l.b16 %v313
      %v427 = vunpack.c.h.b16 %v313
      %v428 = vunpack.c.l.b16 %v314
      %v429 = vunpack.c.h.b16 %v314
      %v430 = vunpack.c.l.b16 %v315
      %v431 = vunpack.c.h.b16 %v315
      %v432 = vunpack.c.l.b16 %v316
      %v433 = vunpack.c.h.b16 %v316
      %v434 = vunpack.c.l.b16 %v317
      %v435 = vunpack.c.h.b16 %v317
      %v436 = vunpack.c.l.b16 %v318
      %v437 = vunpack.c.h.b16 %v318
      %v438 = vunpack.c.l.b16 %v319
      %v439 = vunpack.c.h.b16 %v319
      %v440 = vunpack.c.l.b16 %v320
      %v441 = vunpack.c.h.b16 %v320
      %v442 = vunpack.c.l.b16 %v321
      %v443 = vunpack.c.h.b16 %v321
      %v444 = vunpack.c.l.b16 %v322
      %v445 = vunpack.c.h.b16 %v322
      %v446 = vunpack.c.l.b16 %v323
      %v447 = vunpack.c.h.b16 %v323
      %v448 = vunpack.c.l.b16 %v324
      %v449 = vunpack.c.h.b16 %v324
      %v450 = vunpack.c.l.b16 %v325
      %v451 = vunpack.c.h.b16 %v325
      %v452 = vunpack.c.l.b16 %v326
      %v453 = vunpack.c.h.b16 %v326
      %v454 = vunpack.c.l.b16 %v327
      %v455 = vunpack.c.h.b16 %v327
      %v456 = vpack.c.b16 %v394, %v392
      %v457 = vpack.c.b16 %v395, %v393
      %v458 = vpack.c.b16 %v398, %v396
      %v459 = vpack.c.b16 %v399, %v397
      %v460 = vpack.c.b16 %v402, %v400
      %v461 = vpack.c.b16 %v403, %v401
      %v462 = vpack.c.b16 %v406, %v404
      %v463 = vpack.c.b16 %v407, %v405
      %v464 = vpack.c.b16 %v410, %v408
      %v465 = vpack.c.b16 %v411, %v409
      %v466 = vpack.c.b16 %v414, %v412
      %v467 = vpack.c.b16 %v415, %v413
      %v468 = vpack.c.b16 %v418, %v416
      %v469 = vpack.c.b16 %v419, %v417
      %v470 = vpack.c.b16 %v422, %v420
      %v471 = vpack.c.b16 %v423, %v421
      %v472 = vpack.c.b16 %v426, %v424
      %v473 = vpack.c.b16 %v427, %v425
      %v474 = vpack.c.b16 %v430, %v428
      %v475 = vpack.c.b16 %v431, %v429
      %v476 = vpack.c.b16 %v434, %v432
      %v477 = vpack.c.b16 %v435, %v433
      %v478 = vpack.c.b16 %v438, %v436
      %v479 = vpack.c.b16 %v439, %v437
      %v480 = vpack.c.b16 %v442, %v440
      %v481 = vpack.c.b16 %v443, %v441
      %v482 = vpack.c.b16 %v446, %v444
      %v483 = vpack.c.b16 %v447, %v445
      %v484 = vpack.c.b16 %v450, %v448
      %v485 = vpack.c.b16 %v451, %v449
      %v486 = vpack.c.b16 %v454, %v452
      %v487 = vpack.c.b16 %v455, %v453
      %v552 = vunpack.c.l.b16 %v328
      %v553 = vunpack.c.l.b16 %v329
      %v554 = vunpack.c.l.b16 %v330
      %v555 = vunpack.c.l.b16 %v331
      %v556 = vunpack.c.l.b16 %v332
      %v557 = vunpack.c.l.b16 %v333
      %v558 = vunpack.c.l.b16 %v334
      %v559 = vunpack.c.l.b16 %v335
      %v560 = vunpack.c.l.b16 %v336
      %v561 = vunpack.c.l.b16 %v337
      %v562 = vunpack.c.l.b16 %v338
      %v563 = vunpack.c.l.b16 %v339
      %v564 = vunpack.c.l.b16 %v340
      %v565 = vunpack.c.l.b16 %v341
      %v566 = vunpack.c.l.b16 %v342
      %v567 = vunpack.c.l.b16 %v343
      %v568 = vunpack.c.l.b16 %v344
      %v569 = vunpack.c.l.b16 %v345
      %v570 = vunpack.c.l.b16 %v346
      %v571 = vunpack.c.l.b16 %v347
      %v572 = vunpack.c.l.b16 %v348
      %v573 = vunpack.c.l.b16 %v349
      %v574 = vunpack.c.l.b16 %v350
      %v575 = vunpack.c.l.b16 %v351
      %v576 = vunpack.c.l.b16 %v352
      %v577 = vunpack.c.l.b16 %v353
      %v578 = vunpack.c.l.b16 %v354
      %v579 = vunpack.c.l.b16 %v355
      %v580 = vunpack.c.l.b16 %v356
      %v581 = vunpack.c.l.b16 %v357
      %v582 = vunpack.c.l.b16 %v358
      %v583 = vunpack.c.l.b16 %v359
      %v584 = vpack.c.b16 %v553, %v552
      %v585 = vpack.c.b16 %v555, %v554
      %v586 = vpack.c.b16 %v557, %v556
      %v587 = vpack.c.b16 %v559, %v558
      %v588 = vpack.c.b16 %v561, %v560
      %v589 = vpack.c.b16 %v563, %v562
      %v590 = vpack.c.b16 %v565, %v564
      %v591 = vpack.c.b16 %v567, %v566
      %v592 = vpack.c.b16 %v569, %v568
      %v593 = vpack.c.b16 %v571, %v570
      %v594 = vpack.c.b16 %v573, %v572
      %v595 = vpack.c.b16 %v575, %v574
      %v596 = vpack.c.b16 %v577, %v576
      %v597 = vpack.c.b16 %v579, %v578
      %v598 = vpack.c.b16 %v581, %v580
      %v599 = vpack.c.b16 %v583, %v582
      %616 = vmatprep.subr.bf16.mxu0 0
      %617 = vmatpush1.bf16.msra.mxu0 %v584
      %618 = vmatprep.subr.bf16.mxu0 0
      %619 = vmatpush1.bf16.msra.mxu0 %v585
      %620 = vmatprep.subr.bf16.mxu0 0
      %621 = vmatpush1.bf16.msra.mxu0 %v586
      %622 = vmatprep.subr.bf16.mxu0 0
      %623 = vmatpush1.bf16.msra.mxu0 %v587
      %624 = vmatprep.subr.bf16.mxu0 0
      %625 = vmatpush1.bf16.msra.mxu0 %v588
      %626 = vmatprep.subr.bf16.mxu0 0
      %627 = vmatpush1.bf16.msra.mxu0 %v589
      %628 = vmatprep.subr.bf16.mxu0 0
      %629 = vmatpush1.bf16.msra.mxu0 %v590
      %630 = vmatprep.subr.bf16.mxu0 0
      %631 = vmatpush1.bf16.msra.mxu0 %v591
      %632 = vmatprep.subr.bf16.mxu0 0
      %633 = vmatpush1.bf16.msra.mxu0 %v592
      %634 = vmatprep.subr.bf16.mxu0 0
      %635 = vmatpush1.bf16.msra.mxu0 %v593
      %636 = vmatprep.subr.bf16.mxu0 0
      %637 = vmatpush1.bf16.msra.mxu0 %v594
      %638 = vmatprep.subr.bf16.mxu0 0
      %639 = vmatpush1.bf16.msra.mxu0 %v595
      %640 = vmatprep.subr.bf16.mxu0 0
      %641 = vmatpush1.bf16.msra.mxu0 %v596
      %642 = vmatprep.subr.bf16.mxu0 0
      %643 = vmatpush1.bf16.msra.mxu0 %v597
      %644 = vmatprep.subr.bf16.mxu0 0
      %645 = vmatpush1.bf16.msra.mxu0 %v598
      %646 = vmatprep.subr.bf16.mxu0 0
      %647 = vmatpush1.bf16.msra.mxu0 %v599
      %648 = vmatprep.mubr.bf16.mxu0 %v457
      %649 = vmatmul.mubr.bf16.gmra.mrb[0].mxu0 %v456
      %v650 = vpop.f32.mrb[0].mxu0
      %v651 = vadd.f32 0.0, %v650
      %v652 = vpop.f32.mrb[0].mxu0
      %v653 = vpop.f32.mrb[0].mxu0
      %v654 = vadd.f32 0.0, %v653
      %v655 = vpop.f32.mrb[0].mxu0
      %656 = vmatprep.mubr.bf16.mxu0 %v459
      %657 = vmatmul.mubr.bf16.gmra.mrb[0].mxu0 %v458
      %v658 = vpop.f32.mrb[0].mxu0
      %v659 = vadd.f32 0.0, %v658
      %v660 = vpop.f32.mrb[0].mxu0
      %v661 = vpop.f32.mrb[0].mxu0
      %v662 = vadd.f32 0.0, %v661
      %v663 = vpop.f32.mrb[0].mxu0
      %664 = vmatprep.mubr.bf16.mxu0 %v461
      %665 = vmatmul.mubr.bf16.gmra.mrb[0].mxu0 %v460
      %v666 = vpop.f32.mrb[0].mxu0
      %v667 = vadd.f32 0.0, %v666
      %v668 = vpop.f32.mrb[0].mxu0
      %v669 = vpop.f32.mrb[0].mxu0
      %v670 = vadd.f32 0.0, %v669
      %v671 = vpop.f32.mrb[0].mxu0
      %672 = vmatprep.mubr.bf16.mxu0 %v463
      %673 = vmatmul.mubr.bf16.gmra.mrb[0].mxu0 %v462
      %v674 = vpop.f32.mrb[0].mxu0
      %v675 = vadd.f32 0.0, %v674
      %v676 = vpop.f32.mrb[0].mxu0
      %v677 = vpop.f32.mrb[0].mxu0
      %v678 = vadd.f32 0.0, %v677
      %v679 = vpop.f32.mrb[0].mxu0
      %680 = vmatprep.mubr.bf16.mxu0 %v465
      %681 = vmatmul.mubr.bf16.gmra.mrb[0].mxu0 %v464
      %v682 = vpop.f32.mrb[0].mxu0
      %v683 = vadd.f32 0.0, %v682
      %v684 = vpop.f32.mrb[0].mxu0
      %v685 = vpop.f32.mrb[0].mxu0
      %v686 = vadd.f32 0.0, %v685
      %v687 = vpop.f32.mrb[0].mxu0
      %688 = vmatprep.mubr.bf16.mxu0 %v467
      %689 = vmatmul.mubr.bf16.gmra.mrb[0].mxu0 %v466
      %v690 = vpop.f32.mrb[0].mxu0
      %v691 = vadd.f32 0.0, %v690
      %v692 = vpop.f32.mrb[0].mxu0
      %v693 = vpop.f32.mrb[0].mxu0
      %v694 = vadd.f32 0.0, %v693
      %v695 = vpop.f32.mrb[0].mxu0
      %696 = vmatprep.mubr.bf16.mxu0 %v469
      %697 = vmatmul.mubr.bf16.gmra.mrb[0].mxu0 %v468
      %v698 = vpop.f32.mrb[0].mxu0
      %v699 = vadd.f32 0.0, %v698
      %v700 = vpop.f32.mrb[0].mxu0
      %v701 = vpop.f32.mrb[0].mxu0
      %v702 = vadd.f32 0.0, %v701
      %v703 = vpop.f32.mrb[0].mxu0
      %704 = vmatprep.mubr.bf16.mxu0 %v471
      %705 = vmatmul.mubr.bf16.gmra.mrb[0].mxu0 %v470
      %v706 = vpop.f32.mrb[0].mxu0
      %v707 = vadd.f32 0.0, %v706
      %v708 = vpop.f32.mrb[0].mxu0
      %v709 = vpop.f32.mrb[0].mxu0
      %v710 = vadd.f32 0.0, %v709
      %v711 = vpop.f32.mrb[0].mxu0
      %712 = vmatprep.mubr.bf16.mxu0 %v473
      %713 = vmatmul.mubr.bf16.gmra.mrb[0].mxu0 %v472
      %v714 = vpop.f32.mrb[0].mxu0
      %v715 = vadd.f32 0.0, %v714
      %v716 = vpop.f32.mrb[0].mxu0
      %v717 = vpop.f32.mrb[0].mxu0
      %v718 = vadd.f32 0.0, %v717
      %v719 = vpop.f32.mrb[0].mxu0
      %720 = vmatprep.mubr.bf16.mxu0 %v475
      %721 = vmatmul.mubr.bf16.gmra.mrb[0].mxu0 %v474
      %v722 = vpop.f32.mrb[0].mxu0
      %v723 = vadd.f32 0.0, %v722
      %v724 = vpop.f32.mrb[0].mxu0
      %v725 = vpop.f32.mrb[0].mxu0
      %v726 = vadd.f32 0.0, %v725
      %v727 = vpop.f32.mrb[0].mxu0
      %728 = vmatprep.mubr.bf16.mxu0 %v477
      %729 = vmatmul.mubr.bf16.gmra.mrb[0].mxu0 %v476
      %v730 = vpop.f32.mrb[0].mxu0
      %v731 = vadd.f32 0.0, %v730
      %v732 = vpop.f32.mrb[0].mxu0
      %v733 = vpop.f32.mrb[0].mxu0
      %v734 = vadd.f32 0.0, %v733
      %v735 = vpop.f32.mrb[0].mxu0
      %736 = vmatprep.mubr.bf16.mxu0 %v479
      %737 = vmatmul.mubr.bf16.gmra.mrb[0].mxu0 %v478
      %v738 = vpop.f32.mrb[0].mxu0
      %v739 = vadd.f32 0.0, %v738
      %v740 = vpop.f32.mrb[0].mxu0
      %v741 = vpop.f32.mrb[0].mxu0
      %v742 = vadd.f32 0.0, %v741
      %v743 = vpop.f32.mrb[0].mxu0
      %744 = vmatprep.mubr.bf16.mxu0 %v481
      %745 = vmatmul.mubr.bf16.gmra.mrb[0].mxu0 %v480
      %v746 = vpop.f32.mrb[0].mxu0
      %v747 = vadd.f32 0.0, %v746
      %v748 = vpop.f32.mrb[0].mxu0
      %v749 = vpop.f32.mrb[0].mxu0
      %v750 = vadd.f32 0.0, %v749
      %v751 = vpop.f32.mrb[0].mxu0
      %752 = vmatprep.mubr.bf16.mxu0 %v483
      %753 = vmatmul.mubr.bf16.gmra.mrb[0].mxu0 %v482
      %v754 = vpop.f32.mrb[0].mxu0
      %v755 = vadd.f32 0.0, %v754
      %v756 = vpop.f32.mrb[0].mxu0
      %v757 = vpop.f32.mrb[0].mxu0
      %v758 = vadd.f32 0.0, %v757
      %v759 = vpop.f32.mrb[0].mxu0
      %760 = vmatprep.mubr.bf16.mxu0 %v485
      %761 = vmatmul.mubr.bf16.gmra.mrb[0].mxu0 %v484
      %v762 = vpop.f32.mrb[0].mxu0
      %v763 = vadd.f32 0.0, %v762
      %v764 = vpop.f32.mrb[0].mxu0
      %v765 = vpop.f32.mrb[0].mxu0
      %v766 = vadd.f32 0.0, %v765
      %v767 = vpop.f32.mrb[0].mxu0
      %768 = vmatprep.mubr.bf16.mxu0 %v487
      %769 = vmatmul.mubr.bf16.gmra.mrb[0].mxu0 %v486
      %v770 = vpop.f32.mrb[0].mxu0
      %v771 = vadd.f32 0.0, %v770
      %v772 = vpop.f32.mrb[0].mxu0
      %v773 = vpop.f32.mrb[0].mxu0
      %v774 = vadd.f32 0.0, %v773
      %v775 = vpop.f32.mrb[0].mxu0
      %776 = vdwg.mxu0
      %v777 = vadd.f32 %v264, %v651
      %v778 = vadd.f32 %v265, %v654
      %v779 = vadd.f32 %v266, %v659
      %v780 = vadd.f32 %v267, %v662
      %v781 = vadd.f32 %v268, %v667
      %v782 = vadd.f32 %v269, %v670
      %v783 = vadd.f32 %v270, %v675
      %v784 = vadd.f32 %v271, %v678
      %v785 = vadd.f32 %v272, %v683
      %v786 = vadd.f32 %v273, %v686
      %v787 = vadd.f32 %v274, %v691
      %v788 = vadd.f32 %v275, %v694
      %v789 = vadd.f32 %v276, %v699
      %v790 = vadd.f32 %v277, %v702
      %v791 = vadd.f32 %v278, %v707
      %v792 = vadd.f32 %v279, %v710
      %v793 = vadd.f32 %v280, %v715
      %v794 = vadd.f32 %v281, %v718
      %v795 = vadd.f32 %v282, %v723
      %v796 = vadd.f32 %v283, %v726
      %v797 = vadd.f32 %v284, %v731
      %v798 = vadd.f32 %v285, %v734
      %v799 = vadd.f32 %v286, %v739
      %v800 = vadd.f32 %v287, %v742
      %v801 = vadd.f32 %v288, %v747
      %v802 = vadd.f32 %v289, %v750
      %v803 = vadd.f32 %v290, %v755
      %v804 = vadd.f32 %v291, %v758
      %v805 = vadd.f32 %v292, %v763
      %v806 = vadd.f32 %v293, %v766
      %v807 = vadd.f32 %v294, %v771
      %v808 = vadd.f32 %v295, %v774
      %809 = vst [vmem:[#allocation2] sm:$0xff] %v777
      %810 = vst [vmem:[#allocation2 + $0x8] sm:$0xff] %v778
      %811 = vst [vmem:[#allocation2 + $0x10] sm:$0xff] %v779
      %812 = vst [vmem:[#allocation2 + $0x18] sm:$0xff] %v780
      %813 = vst [vmem:[#allocation2 + $0x20] sm:$0xff] %v781
      %814 = vst [vmem:[#allocation2 + $0x28] sm:$0xff] %v782
      %815 = vst [vmem:[#allocation2 + $0x30] sm:$0xff] %v783
      %816 = vst [vmem:[#allocation2 + $0x38] sm:$0xff] %v784
      %817 = vst [vmem:[#allocation2 + $0x40] sm:$0xff] %v785
      %818 = vst [vmem:[#allocation2 + $0x48] sm:$0xff] %v786
      %819 = vst [vmem:[#allocation2 + $0x50] sm:$0xff] %v787
      %820 = vst [vmem:[#allocation2 + $0x58] sm:$0xff] %v788
      %821 = vst [vmem:[#allocation2 + $0x60] sm:$0xff] %v789
      %822 = vst [vmem:[#allocation2 + $0x68] sm:$0xff] %v790
      %823 = vst [vmem:[#allocation2 + $0x70] sm:$0xff] %v791
      %824 = vst [vmem:[#allocation2 + $0x78] sm:$0xff] %v792
      %825 = vst [vmem:[#allocation2 + $0x80] sm:$0xff] %v793
      %826 = vst [vmem:[#allocation2 + $0x88] sm:$0xff] %v794
      %827 = vst [vmem:[#allocation2 + $0x90] sm:$0xff] %v795
      %828 = vst [vmem:[#allocation2 + $0x98] sm:$0xff] %v796
      %829 = vst [vmem:[#allocation2 + $0xa0] sm:$0xff] %v797
      %830 = vst [vmem:[#allocation2 + $0xa8] sm:$0xff] %v798
      %831 = vst [vmem:[#allocation2 + $0xb0] sm:$0xff] %v799
      %832 = vst [vmem:[#allocation2 + $0xb8] sm:$0xff] %v800
      %833 = vst [vmem:[#allocation2 + $0xc0] sm:$0xff] %v801
      %834 = vst [vmem:[#allocation2 + $0xc8] sm:$0xff] %v802
      %835 = vst [vmem:[#allocation2 + $0xd0] sm:$0xff] %v803
      %836 = vst [vmem:[#allocation2 + $0xd8] sm:$0xff] %v804
      %837 = vst [vmem:[#allocation2 + $0xe0] sm:$0xff] %v805
      %838 = vst [vmem:[#allocation2 + $0xe8] sm:$0xff] %v806
      %839 = vst [vmem:[#allocation2 + $0xf0] sm:$0xff] %v807
      %840 = vst [vmem:[#allocation2 + $0xf8] sm:$0xff] %v808
      // Predicated region
      $region37: #{network_forward.7} parent=31 // pred_check
        %p841 = pneg %p228
      $region38: #{network_forward.7} parent=31 // pred_check_branch
        %843 = sbr.rel (%p841) target = $region40
      $region39: #{network_forward.7} parent=31 // pred_region
        %v844 = vld [vmem:[#allocation2] sm:$0xff]
        %v845 = vld [vmem:[#allocation2 + $0x8] sm:$0xff]
        %v846 = vld [vmem:[#allocation2 + $0x10] sm:$0xff]
        %v847 = vld [vmem:[#allocation2 + $0x18] sm:$0xff]
        %v848 = vld [vmem:[#allocation2 + $0x20] sm:$0xff]
        %v849 = vld [vmem:[#allocation2 + $0x28] sm:$0xff]
        %v850 = vld [vmem:[#allocation2 + $0x30] sm:$0xff]
        %v851 = vld [vmem:[#allocation2 + $0x38] sm:$0xff]
        %v852 = vld [vmem:[#allocation2 + $0x40] sm:$0xff]
        %v853 = vld [vmem:[#allocation2 + $0x48] sm:$0xff]
        %v854 = vld [vmem:[#allocation2 + $0x50] sm:$0xff]
        %v855 = vld [vmem:[#allocation2 + $0x58] sm:$0xff]
        %v856 = vld [vmem:[#allocation2 + $0x60] sm:$0xff]
        %v857 = vld [vmem:[#allocation2 + $0x68] sm:$0xff]
        %v858 = vld [vmem:[#allocation2 + $0x70] sm:$0xff]
        %v859 = vld [vmem:[#allocation2 + $0x78] sm:$0xff]
        %v860 = vld [vmem:[#allocation2 + $0x80] sm:$0xff]
        %v861 = vld [vmem:[#allocation2 + $0x88] sm:$0xff]
        %v862 = vld [vmem:[#allocation2 + $0x90] sm:$0xff]
        %v863 = vld [vmem:[#allocation2 + $0x98] sm:$0xff]
        %v864 = vld [vmem:[#allocation2 + $0xa0] sm:$0xff]
        %v865 = vld [vmem:[#allocation2 + $0xa8] sm:$0xff]
        %v866 = vld [vmem:[#allocation2 + $0xb0] sm:$0xff]
        %v867 = vld [vmem:[#allocation2 + $0xb8] sm:$0xff]
        %v868 = vld [vmem:[#allocation2 + $0xc0] sm:$0xff]
        %v869 = vld [vmem:[#allocation2 + $0xc8] sm:$0xff]
        %v870 = vld [vmem:[#allocation2 + $0xd0] sm:$0xff]
        %v871 = vld [vmem:[#allocation2 + $0xd8] sm:$0xff]
        %v872 = vld [vmem:[#allocation2 + $0xe0] sm:$0xff]
        %v873 = vld [vmem:[#allocation2 + $0xe8] sm:$0xff]
        %v874 = vld [vmem:[#allocation2 + $0xf0] sm:$0xff]
        %v875 = vld [vmem:[#allocation2 + $0xf8] sm:$0xff]
        %v876 = vld [vmem:[%s2] sm:$0x1]
        %v878 = vlaneseq
        %v879 = vshrl.u32 %v878, 7
        %v880 = vsub.s32 0, %v879
        %v881 = vrot.slane %v876, %v880
        %v883 = vadd.f32 %v844, %v881
        %v884 = vadd.f32 %v845, %v881
        %v885 = vadd.f32 %v846, %v881
        %v886 = vadd.f32 %v847, %v881
        %v887 = vadd.f32 %v848, %v881
        %v888 = vadd.f32 %v849, %v881
        %v889 = vadd.f32 %v850, %v881
        %v890 = vadd.f32 %v851, %v881
        %v891 = vadd.f32 %v852, %v881
        %v892 = vadd.f32 %v853, %v881
        %v893 = vadd.f32 %v854, %v881
        %v894 = vadd.f32 %v855, %v881
        %v895 = vadd.f32 %v856, %v881
        %v896 = vadd.f32 %v857, %v881
        %v897 = vadd.f32 %v858, %v881
        %v898 = vadd.f32 %v859, %v881
        %v899 = vadd.f32 %v860, %v881
        %v900 = vadd.f32 %v861, %v881
        %v901 = vadd.f32 %v862, %v881
        %v902 = vadd.f32 %v863, %v881
        %v903 = vadd.f32 %v864, %v881
        %v904 = vadd.f32 %v865, %v881
        %v905 = vadd.f32 %v866, %v881
        %v906 = vadd.f32 %v867, %v881
        %v907 = vadd.f32 %v868, %v881
        %v908 = vadd.f32 %v869, %v881
        %v909 = vadd.f32 %v870, %v881
        %v910 = vadd.f32 %v871, %v881
        %v911 = vadd.f32 %v872, %v881
        %v912 = vadd.f32 %v873, %v881
        %v913 = vadd.f32 %v874, %v881
        %v914 = vadd.f32 %v875, %v881
        %v915 = vmax.f32 %v883, 0.0
        %v916 = vmax.f32 %v884, 0.0
        %v917 = vmax.f32 %v885, 0.0
        %v918 = vmax.f32 %v886, 0.0
        %v919 = vmax.f32 %v887, 0.0
        %v920 = vmax.f32 %v888, 0.0
        %v921 = vmax.f32 %v889, 0.0
        %v922 = vmax.f32 %v890, 0.0
        %v923 = vmax.f32 %v891, 0.0
        %v924 = vmax.f32 %v892, 0.0
        %v925 = vmax.f32 %v893, 0.0
        %v926 = vmax.f32 %v894, 0.0
        %v927 = vmax.f32 %v895, 0.0
        %v928 = vmax.f32 %v896, 0.0
        %v929 = vmax.f32 %v897, 0.0
        %v930 = vmax.f32 %v898, 0.0
        %v931 = vmax.f32 %v899, 0.0
        %v932 = vmax.f32 %v900, 0.0
        %v933 = vmax.f32 %v901, 0.0
        %v934 = vmax.f32 %v902, 0.0
        %v935 = vmax.f32 %v903, 0.0
        %v936 = vmax.f32 %v904, 0.0
        %v937 = vmax.f32 %v905, 0.0
        %v938 = vmax.f32 %v906, 0.0
        %v939 = vmax.f32 %v907, 0.0
        %v940 = vmax.f32 %v908, 0.0
        %v941 = vmax.f32 %v909, 0.0
        %v942 = vmax.f32 %v910, 0.0
        %v943 = vmax.f32 %v911, 0.0
        %v944 = vmax.f32 %v912, 0.0
        %v945 = vmax.f32 %v913, 0.0
        %v946 = vmax.f32 %v914, 0.0
        %v947 = vpack.c.bf16 %v916, %v915
        %v948 = vpack.c.bf16 %v918, %v917
        %v949 = vpack.c.bf16 %v920, %v919
        %v950 = vpack.c.bf16 %v922, %v921
        %v951 = vpack.c.bf16 %v924, %v923
        %v952 = vpack.c.bf16 %v926, %v925
        %v953 = vpack.c.bf16 %v928, %v927
        %v954 = vpack.c.bf16 %v930, %v929
        %v955 = vpack.c.bf16 %v932, %v931
        %v956 = vpack.c.bf16 %v934, %v933
        %v957 = vpack.c.bf16 %v936, %v935
        %v958 = vpack.c.bf16 %v938, %v937
        %v959 = vpack.c.bf16 %v940, %v939
        %v960 = vpack.c.bf16 %v942, %v941
        %v961 = vpack.c.bf16 %v944, %v943
        %v962 = vpack.c.bf16 %v946, %v945
        %v979 = vunpack.c.l.b16 %v947
        %v980 = vunpack.c.h.b16 %v947
        %v981 = vunpack.c.l.b16 %v948
        %v982 = vunpack.c.h.b16 %v948
        %v983 = vunpack.c.l.b16 %v949
        %v984 = vunpack.c.h.b16 %v949
        %v985 = vunpack.c.l.b16 %v950
        %v986 = vunpack.c.h.b16 %v950
        %v987 = vunpack.c.l.b16 %v951
        %v988 = vunpack.c.h.b16 %v951
        %v989 = vunpack.c.l.b16 %v952
        %v990 = vunpack.c.h.b16 %v952
        %v991 = vunpack.c.l.b16 %v953
        %v992 = vunpack.c.h.b16 %v953
        %v993 = vunpack.c.l.b16 %v954
        %v994 = vunpack.c.h.b16 %v954
        %v995 = vunpack.c.l.b16 %v955
        %v996 = vunpack.c.h.b16 %v955
        %v997 = vunpack.c.l.b16 %v956
        %v998 = vunpack.c.h.b16 %v956
        %v999 = vunpack.c.l.b16 %v957
        %v1000 = vunpack.c.h.b16 %v957
        %v1001 = vunpack.c.l.b16 %v958
        %v1002 = vunpack.c.h.b16 %v958
        %v1003 = vunpack.c.l.b16 %v959
        %v1004 = vunpack.c.h.b16 %v959
        %v1005 = vunpack.c.l.b16 %v960
        %v1006 = vunpack.c.h.b16 %v960
        %v1007 = vunpack.c.l.b16 %v961
        %v1008 = vunpack.c.h.b16 %v961
        %v1009 = vunpack.c.l.b16 %v962
        %v1010 = vunpack.c.h.b16 %v962
        %v1011 = vpack.c.b16 %v979, %v979
        %v1012 = vpack.c.b16 %v980, %v980
        %v1013 = vpack.c.b16 %v981, %v981
        %v1014 = vpack.c.b16 %v982, %v982
        %v1015 = vpack.c.b16 %v983, %v983
        %v1016 = vpack.c.b16 %v984, %v984
        %v1017 = vpack.c.b16 %v985, %v985
        %v1018 = vpack.c.b16 %v986, %v986
        %v1019 = vpack.c.b16 %v987, %v987
        %v1020 = vpack.c.b16 %v988, %v988
        %v1021 = vpack.c.b16 %v989, %v989
        %v1022 = vpack.c.b16 %v990, %v990
        %v1023 = vpack.c.b16 %v991, %v991
        %v1024 = vpack.c.b16 %v992, %v992
        %v1025 = vpack.c.b16 %v993, %v993
        %v1026 = vpack.c.b16 %v994, %v994
        %v1027 = vpack.c.b16 %v995, %v995
        %v1028 = vpack.c.b16 %v996, %v996
        %v1029 = vpack.c.b16 %v997, %v997
        %v1030 = vpack.c.b16 %v998, %v998
        %v1031 = vpack.c.b16 %v999, %v999
        %v1032 = vpack.c.b16 %v1000, %v1000
        %v1033 = vpack.c.b16 %v1001, %v1001
        %v1034 = vpack.c.b16 %v1002, %v1002
        %v1035 = vpack.c.b16 %v1003, %v1003
        %v1036 = vpack.c.b16 %v1004, %v1004
        %v1037 = vpack.c.b16 %v1005, %v1005
        %v1038 = vpack.c.b16 %v1006, %v1006
        %v1039 = vpack.c.b16 %v1007, %v1007
        %v1040 = vpack.c.b16 %v1008, %v1008
        %v1041 = vpack.c.b16 %v1009, %v1009
        %v1042 = vpack.c.b16 %v1010, %v1010
        %1075 = vst [vmem:[%s225] sm:$0xf] %v1011
        %1076 = vst [vmem:[%s225 + $0x4] sm:$0xf] %v1012
        %1077 = vst [vmem:[%s225 + $0x8] sm:$0xf] %v1013
        %1078 = vst [vmem:[%s225 + $0xc] sm:$0xf] %v1014
        %1079 = vst [vmem:[%s225 + $0x10] sm:$0xf] %v1015
        %1080 = vst [vmem:[%s225 + $0x14] sm:$0xf] %v1016
        %1081 = vst [vmem:[%s225 + $0x18] sm:$0xf] %v1017
        %1082 = vst [vmem:[%s225 + $0x1c] sm:$0xf] %v1018
        %1083 = vst [vmem:[%s225 + $0x20] sm:$0xf] %v1019
        %1084 = vst [vmem:[%s225 + $0x24] sm:$0xf] %v1020
        %1085 = vst [vmem:[%s225 + $0x28] sm:$0xf] %v1021
        %1086 = vst [vmem:[%s225 + $0x2c] sm:$0xf] %v1022
        %1087 = vst [vmem:[%s225 + $0x30] sm:$0xf] %v1023
        %1088 = vst [vmem:[%s225 + $0x34] sm:$0xf] %v1024
        %1089 = vst [vmem:[%s225 + $0x38] sm:$0xf] %v1025
        %1090 = vst [vmem:[%s225 + $0x3c] sm:$0xf] %v1026
        %1091 = vst [vmem:[%s225 + $0x40] sm:$0xf] %v1027
        %1092 = vst [vmem:[%s225 + $0x44] sm:$0xf] %v1028
        %1093 = vst [vmem:[%s225 + $0x48] sm:$0xf] %v1029
        %1094 = vst [vmem:[%s225 + $0x4c] sm:$0xf] %v1030
        %1095 = vst [vmem:[%s225 + $0x50] sm:$0xf] %v1031
        %1096 = vst [vmem:[%s225 + $0x54] sm:$0xf] %v1032
        %1097 = vst [vmem:[%s225 + $0x58] sm:$0xf] %v1033
        %1098 = vst [vmem:[%s225 + $0x5c] sm:$0xf] %v1034
        %1099 = vst [vmem:[%s225 + $0x60] sm:$0xf] %v1035
        %1100 = vst [vmem:[%s225 + $0x64] sm:$0xf] %v1036
        %1101 = vst [vmem:[%s225 + $0x68] sm:$0xf] %v1037
        %1102 = vst [vmem:[%s225 + $0x6c] sm:$0xf] %v1038
        %1103 = vst [vmem:[%s225 + $0x70] sm:$0xf] %v1039
        %1104 = vst [vmem:[%s225 + $0x74] sm:$0xf] %v1040
        %1105 = vst [vmem:[%s225 + $0x78] sm:$0xf] %v1041
        %1106 = vst [vmem:[%s225 + $0x7c] sm:$0xf] %v1042
      $region40: #{network_forward.7} parent=31 // pred_fallthru
        _
      %s1107 = smul.u32 32, %s18
      %p1108 = scmp.lt.s32.totalorder %s1107, 255
      %s1109 = scalar_select %p1108, %s1107, 255
      %s1110 = smul.addr %s1109, 4
      %s1111 = scalar_lea.vmem %s3, %s1110
      // Predicated region
      $region41: #{network_forward.7} parent=31 // pred_check
        %p1112 = pneg %p119
      $region42: #{network_forward.7} parent=31 // pred_check_branch
        %1114 = sbr.rel (%p1112) target = $region44
      $region43: #{network_forward.7} parent=31 // pred_region
        %s1115 = smul.u32 32, %s18
      $region44: #{network_forward.7} parent=31 // pred_fallthru
        _
    $region32: #{network_forward.7} parent=5 // pred_fallthru
      _
    %p1116 = scmp.le.s32.totalorder 2, %s9
    // Predicated region
    $region45: #{network_forward.7} parent=5 // pred_check
      %p1117 = pneg %p1116
    $region46: #{network_forward.7} parent=5 // pred_check_branch
      %1119 = sbr.rel (%p1117) target = $region48
    $region47: #{network_forward.7} parent=5 // pred_region
      %s1120 = ssub.s32 %s9, 2
      // Predicated region
      $region49: #{network_forward.7} parent=47 // pred_check
        %p1121 = pneg %p125
      $region50: #{network_forward.7} parent=47 // pred_check_branch
        %1123 = sbr.rel (%p1121) target = $region52
      $region51: #{network_forward.7} parent=47 // pred_region
        %s1124 = smul.u32 32, %s20
        %p1125 = scmp.lt.s32.totalorder %s1124, 255
        %s1126 = scalar_select %p1125, %s1124, 255
        %s1127 = smul.addr %s1126, 4
        %s1128 = scalar_lea.vmem %s3, %s1127
      $region52: #{network_forward.7} parent=47 // pred_fallthru
        _
    $region48: #{network_forward.7} parent=5 // pred_fallthru
      _
  $region6: #{network_forward.7} parent=0 // loop_footer
    %s13 = sadd.s32 1, %s9
  $region7: #{network_forward.7} parent=0 // loop_footer_branch
    %8 = sbr.rel target = $region3
  $region8: #{network_forward.7} parent=0 // loop_exit
    _

// kernel: network_forward.8
$region0: #{network_forward.8}
  #allocation0 [shape = 'u32[]', space=smem, size = 0x4, offset = 0x4, fixed_abs, tag = 'smem constant byte address 0x4 - core index']
  #allocation1 [shape = 'u32[144,128]{1,0:T(1,128)}', space=vmem, size = 0x12000, scoped, tag = 'internal scratch']
  #allocation2 [shape = 'f32[256,128]{1,0:T(8,128)}', space=vmem, size = 0x20000, scoped, tag = 'scratch operand']
  %s0 = inlined_call_operand.vmem [shape: bf16[512,512], index: 0, kind: input, shape index: {}]
  %s1 = inlined_call_operand.vmem [shape: bf16[512,128], index: 1, kind: input, shape index: {}]
  %s2 = inlined_call_operand.vmem [shape: f32[1,128], index: 2, kind: input, shape index: {}]
  %s3 = inlined_call_operand.vmem [shape: bf16[512,128], index: 3, kind: output, shape index: {}]
  %s4 = sld [smem:[#allocation0]]
  $region53: #{network_forward.8} parent=0
    _
  %s6 = ssub.s32 1, %s4
  %s7 = scalar_select 0, %s6, %s4
  loop: start=0, step=1, limit=4
  $region2: #{network_forward.8} parent=0 // loop_pre_header
    _
  $region3: #{network_forward.8} parent=0 // loop_header
    %s9 = sphi 0, %s13
    %p10 = scmp.ge.s32.totalorder %s9, 4
    %s16 = sphi 0, %s28
    %s17 = sphi 0, %s24
    %s18 = sphi 0, %s16
    %s19 = sphi 0, %s17
    %s20 = sphi 0, %s18
    %s21 = sphi 0, %s19
    %s33 = sphi 0, %s35
    %s36 = sphi 0, %s33
    %s37 = sphi 0, %s36
    %s53 = sphi 0, %s37
    %s59 = sphi 0, %s61
    %s62 = sphi 0, %s59
    %s63 = sphi 0, %s62
    %s79 = sphi 0, %s63
    %s83 = sphi 0, %s83
    %s85 = sphi 0, %s83
    %s86 = sphi 0, %s85
    %s100 = sphi 0, %s86
    %s106 = sphi 0, %s108
    %s109 = sphi 0, %s106
    %s110 = sphi 0, %s109
    %s126 = sphi 0, %s110
  $region4: #{network_forward.8} parent=0 // loop_header_branch
    %12 = sbr.rel (%p10) target = $region8
  $region5: #{network_forward.8} parent=0 // loop_body
    %s14 = ssub.s32 %s9, 1
    %s15 = ssub.s32 %s9, 2
    %s22 = sadd.s32 1, %s17
    %p23 = scmp.ge.s32.totalorder %s22, 1
    %s24 = scalar_select %p23, 0, %s22
    %s25 = sadd.s32 1, %s16
    %s26 = scalar_select %p23, %s25, %s16
    %p27 = scmp.ge.s32.totalorder %s26, 2
    %s28 = scalar_select %p27, 0, %s26
    %s29 = ssub.s32 %s16, %s28
    %s30 = ssub.s32 %s17, %s24
    %s31 = sor.u32 %s29, %s30
    %p32 = scmp.eq.s32.totalorder %s31, 0
    %s34 = sadd.s32 %s33, 1
    %s35 = scalar_select %p32, %s33, %s34
    %p38 = pneg %p32
    %p39 = scmp.eq.s32.totalorder %s9, 1
    %p40 = por %p38, %p39
    %p41 = scmp.ne.s32.totalorder %s33, %s36
    %p42 = scmp.eq.s32.totalorder %s9, 0
    %p43 = por %p41, %p42
    %p44 = scmp.ne.s32.totalorder %s33, %s36
    %p45 = scmp.eq.s32.totalorder %s14, 1
    %p46 = por %p44, %p45
    %p47 = scmp.ne.s32.totalorder %s36, %s37
    %p48 = scmp.eq.s32.totalorder %s14, 0
    %p49 = por %p47, %p48
    %p50 = scmp.ne.s32.totalorder %s36, %s37
    %p51 = scmp.eq.s32.totalorder %s15, 1
    %p52 = por %p50, %p51
    %p54 = scmp.ne.s32.totalorder %s37, %s53
    %p55 = scmp.eq.s32.totalorder %s15, 0
    %p56 = por %p54, %p55
    %s57 = ssub.s32 %s17, %s24
    %p58 = scmp.eq.s32.totalorder %s57, 0
    %s60 = sadd.s32 %s59, 1
    %s61 = scalar_select %p58, %s59, %s60
    %p64 = pneg %p58
    %p65 = scmp.eq.s32.totalorder %s9, 1
    %p66 = por %p64, %p65
    %p67 = scmp.ne.s32.totalorder %s59, %s62
    %p68 = scmp.eq.s32.totalorder %s9, 0
    %p69 = por %p67, %p68
    %p70 = scmp.ne.s32.totalorder %s59, %s62
    %p71 = scmp.eq.s32.totalorder %s14, 1
    %p72 = por %p70, %p71
    %p73 = scmp.ne.s32.totalorder %s62, %s63
    %p74 = scmp.eq.s32.totalorder %s14, 0
    %p75 = por %p73, %p74
    %p76 = scmp.ne.s32.totalorder %s62, %s63
    %p77 = scmp.eq.s32.totalorder %s15, 1
    %p78 = por %p76, %p77
    %p80 = scmp.ne.s32.totalorder %s63, %s79
    %p81 = scmp.eq.s32.totalorder %s15, 0
    %p82 = por %p80, %p81
    %s84 = sadd.s32 %s83, 1
    %p87 = scmp.eq.s32.totalorder %s9, 1
    %p88 = scmp.ne.s32.totalorder %s83, %s85
    %p89 = scmp.eq.s32.totalorder %s9, 0
    %p90 = por %p88, %p89
    %p91 = scmp.ne.s32.totalorder %s83, %s85
    %p92 = scmp.eq.s32.totalorder %s14, 1
    %p93 = por %p91, %p92
    %p94 = scmp.ne.s32.totalorder %s85, %s86
    %p95 = scmp.eq.s32.totalorder %s14, 0
    %p96 = por %p94, %p95
    %p97 = scmp.ne.s32.totalorder %s85, %s86
    %p98 = scmp.eq.s32.totalorder %s15, 1
    %p99 = por %p97, %p98
    %p101 = scmp.ne.s32.totalorder %s86, %s100
    %p102 = scmp.eq.s32.totalorder %s15, 0
    %p103 = por %p101, %p102
    %s104 = ssub.s32 %s16, %s28
    %p105 = scmp.eq.s32.totalorder %s104, 0
    %s107 = sadd.s32 %s106, 1
    %s108 = scalar_select %p105, %s106, %s107
    %p111 = pneg %p105
    %p112 = scmp.eq.s32.totalorder %s9, 1
    %p113 = por %p111, %p112
    %p114 = scmp.ne.s32.totalorder %s106, %s109
    %p115 = scmp.eq.s32.totalorder %s9, 0
    %p116 = por %p114, %p115
    %p117 = scmp.ne.s32.totalorder %s106, %s109
    %p118 = scmp.eq.s32.totalorder %s14, 1
    %p119 = por %p117, %p118
    %p120 = scmp.ne.s32.totalorder %s109, %s110
    %p121 = scmp.eq.s32.totalorder %s14, 0
    %p122 = por %p120, %p121
    %p123 = scmp.ne.s32.totalorder %s109, %s110
    %p124 = scmp.eq.s32.totalorder %s15, 1
    %p125 = por %p123, %p124
    %p127 = scmp.ne.s32.totalorder %s110, %s126
    %p128 = scmp.eq.s32.totalorder %s15, 0
    %p129 = por %p127, %p128
    %p130 = scmp.le.s32.totalorder 1, %s9
    %p131 = scmp.lt.s32.totalorder %s9, 3
    %p132 = pnand %p130, %p131
    %p133 = pneg %p132
    // Predicated region
    $region9: #{network_forward.8} parent=5 // pred_check
      _
    $region10: #{network_forward.8} parent=5 // pred_check_branch
      %135 = sbr.rel (%p132) target = $region12
    $region11: #{network_forward.8} parent=5 // pred_region
      %s136 = ssub.s32 %s9, 1
      // Predicated region
      $region13: #{network_forward.8} parent=11 // pred_check
        %p137 = pneg %p75
      $region14: #{network_forward.8} parent=11 // pred_check_branch
        %139 = sbr.rel (%p137) target = $region16
      $region15: #{network_forward.8} parent=11 // pred_region
        %s140 = smul.u32 64, %s19
        %p141 = scmp.lt.s32.totalorder %s140, 63
        %s142 = scalar_select %p141, %s140, 63
        %s143 = smul.addr %s142, 4
        %s144 = scalar_lea.vmem %s1, %s143
        %s145 = smul.u32 64, %s19
      $region16: #{network_forward.8} parent=11 // pred_fallthru
        _
      // Predicated region
      $region17: #{network_forward.8} parent=11 // pred_check
        %p146 = pneg %p96
      $region18: #{network_forward.8} parent=11 // pred_check_branch
        %148 = sbr.rel (%p146) target = $region20
      $region19: #{network_forward.8} parent=11 // pred_region
        _
      $region20: #{network_forward.8} parent=11 // pred_fallthru
        _
    $region12: #{network_forward.8} parent=5 // pred_fallthru
      _
    %p149 = scmp.lt.s32.totalorder %s9, 2
    // Predicated region
    $region21: #{network_forward.8} parent=5 // pred_check
      %p150 = pneg %p149
    $region22: #{network_forward.8} parent=5 // pred_check_branch
      %152 = sbr.rel (%p150) target = $region24
    $region23: #{network_forward.8} parent=5 // pred_region
      // Predicated region
      $region25: #{network_forward.8} parent=23 // pred_check
        %p153 = pneg %p43
      $region26: #{network_forward.8} parent=23 // pred_check_branch
        %155 = sbr.rel (%p153) target = $region28
      $region27: #{network_forward.8} parent=23 // pred_region
        %s156 = smul.u32 32, %s16
        %s157 = smul.u32 4, %s17
        %p158 = scmp.lt.s32.totalorder %s156, 63
        %s159 = scalar_select %p158, %s156, 63
        %p160 = scmp.lt.s32.totalorder %s157, 3
        %s161 = scalar_select %p160, %s157, 3
        %s162 = smul.addr %s159, 4
        %s163 = sadd.s32 %s161, %s162
        %s164 = smul.addr %s163, 4
        %s165 = scalar_lea.vmem %s0, %s164
        %s166 = smul.u32 32, %s16
        %s167 = smul.u32 4, %s17
      $region28: #{network_forward.8} parent=23 // pred_fallthru
        _
    $region24: #{network_forward.8} parent=5 // pred_fallthru
      _
    %p168 = scmp.le.s32.totalorder 1, %s9
    %p169 = scmp.lt.s32.totalorder %s9, 3
    %p170 = pnand %p168, %p169
    %p171 = pneg %p170
    // Predicated region
    $region29: #{network_forward.8} parent=5 // pred_check
      _
    $region30: #{network_forward.8} parent=5 // pred_check_branch
      %173 = sbr.rel (%p170) target = $region32
    $region31: #{network_forward.8} parent=5 // pred_region
      %s174 = ssub.s32 %s9, 1
      %s175 = smul.u32 32, %s18
      %s176 = smul.u32 4, %s19
      %p177 = scmp.lt.s32.totalorder %s175, 63
      %s178 = scalar_select %p177, %s175, 63
      %p179 = scmp.lt.s32.totalorder %s176, 3
      %s180 = scalar_select %p179, %s176, 3
      %s181 = smul.addr %s178, 4
      %s182 = sadd.s32 %s180, %s181
      %s183 = smul.addr %s182, 4
      %s184 = scalar_lea.vmem %s0, %s183
      %p185 = pneg %p49
      %p186 = pneg %p46
      %s187 = smul.u32 64, %s19
      %p188 = scmp.lt.s32.totalorder %s187, 63
      %s189 = scalar_select %p188, %s187, 63
      %s190 = smul.addr %s189, 4
      %s191 = scalar_lea.vmem %s1, %s190
      %p192 = pneg %p75
      %p193 = pneg %p72
      %p194 = pneg %p96
      %p195 = pneg %p93
      %p196 = pneg %p122
      %p197 = pneg %p119
      %s198 = smul.u32 32, %s18
      %p199 = scmp.lt.s32.totalorder %s198, 63
      %s200 = scalar_select %p199, %s198, 63
      %s201 = smul.addr %s200, 4
      %s202 = scalar_lea.vmem %s3, %s201
      %s203 = smul.u32 32, %s18
      %s204 = smul.u32 4, %s19
      %p205 = scmp.lt.s32.totalorder %s203, 63
      %s206 = scalar_select %p205, %s203, 63
      %p207 = scmp.lt.s32.totalorder %s204, 3
      %s208 = scalar_select %p207, %s204, 3
      %s209 = smul.addr %s206, 4
      %s210 = sadd.s32 %s208, %s209
      %s211 = smul.addr %s210, 4
      %s212 = scalar_lea.vmem %s0, %s211
      %s213 = smul.u32 32, %s18
      %s214 = smul.u32 4, %s19
      %s215 = smul.u32 64, %s19
      %p216 = scmp.lt.s32.totalorder %s215, 63
      %s217 = scalar_select %p216, %s215, 63
      %s218 = smul.addr %s217, 4
      %s219 = scalar_lea.vmem %s1, %s218
      %s220 = smul.u32 64, %s19
      %s221 = smul.u32 32, %s18
      %p222 = scmp.lt.s32.totalorder %s221, 63
      %s223 = scalar_select %p222, %s221, 63
      %s224 = smul.addr %s223, 4
      %s225 = scalar_lea.vmem %s3, %s224
      %s226 = smul.u32 32, %s18
      %p228 = scmp.eq.s32.totalorder %s19, 0
      // Predicated region
      $region33: #{network_forward.8} parent=31 // pred_check
        %p229 = pneg %p228
      $region34: #{network_forward.8} parent=31 // pred_check_branch
        %231 = sbr.rel (%p229) target = $region36
      $region35: #{network_forward.8} parent=31 // pred_region
        %232 = vst [vmem:[#allocation2] sm:$0xff] 0.0
        %233 = vst [vmem:[#allocation2 + $0x8] sm:$0xff] 0.0
        %234 = vst [vmem:[#allocation2 + $0x10] sm:$0xff] 0.0
        %235 = vst [vmem:[#allocation2 + $0x18] sm:$0xff] 0.0
        %236 = vst [vmem:[#allocation2 + $0x20] sm:$0xff] 0.0
        %237 = vst [vmem:[#allocation2 + $0x28] sm:$0xff] 0.0
        %238 = vst [vmem:[#allocation2 + $0x30] sm:$0xff] 0.0
        %239 = vst [vmem:[#allocation2 + $0x38] sm:$0xff] 0.0
        %240 = vst [vmem:[#allocation2 + $0x40] sm:$0xff] 0.0
        %241 = vst [vmem:[#allocation2 + $0x48] sm:$0xff] 0.0
        %242 = vst [vmem:[#allocation2 + $0x50] sm:$0xff] 0.0
        %243 = vst [vmem:[#allocation2 + $0x58] sm:$0xff] 0.0
        %244 = vst [vmem:[#allocation2 + $0x60] sm:$0xff] 0.0
        %245 = vst [vmem:[#allocation2 + $0x68] sm:$0xff] 0.0
        %246 = vst [vmem:[#allocation2 + $0x70] sm:$0xff] 0.0
        %247 = vst [vmem:[#allocation2 + $0x78] sm:$0xff] 0.0
        %248 = vst [vmem:[#allocation2 + $0x80] sm:$0xff] 0.0
        %249 = vst [vmem:[#allocation2 + $0x88] sm:$0xff] 0.0
        %250 = vst [vmem:[#allocation2 + $0x90] sm:$0xff] 0.0
        %251 = vst [vmem:[#allocation2 + $0x98] sm:$0xff] 0.0
        %252 = vst [vmem:[#allocation2 + $0xa0] sm:$0xff] 0.0
        %253 = vst [vmem:[#allocation2 + $0xa8] sm:$0xff] 0.0
        %254 = vst [vmem:[#allocation2 + $0xb0] sm:$0xff] 0.0
        %255 = vst [vmem:[#allocation2 + $0xb8] sm:$0xff] 0.0
        %256 = vst [vmem:[#allocation2 + $0xc0] sm:$0xff] 0.0
        %257 = vst [vmem:[#allocation2 + $0xc8] sm:$0xff] 0.0
        %258 = vst [vmem:[#allocation2 + $0xd0] sm:$0xff] 0.0
        %259 = vst [vmem:[#allocation2 + $0xd8] sm:$0xff] 0.0
        %260 = vst [vmem:[#allocation2 + $0xe0] sm:$0xff] 0.0
        %261 = vst [vmem:[#allocation2 + $0xe8] sm:$0xff] 0.0
        %262 = vst [vmem:[#allocation2 + $0xf0] sm:$0xff] 0.0
        %263 = vst [vmem:[#allocation2 + $0xf8] sm:$0xff] 0.0
      $region36: #{network_forward.8} parent=31 // pred_fallthru
        _
      %v264 = vld [vmem:[#allocation2] sm:$0xff]
      %v265 = vld [vmem:[#allocation2 + $0x8] sm:$0xff]
      %v266 = vld [vmem:[#allocation2 + $0x10] sm:$0xff]
      %v267 = vld [vmem:[#allocation2 + $0x18] sm:$0xff]
      %v268 = vld [vmem:[#allocation2 + $0x20] sm:$0xff]
      %v269 = vld [vmem:[#allocation2 + $0x28] sm:$0xff]
      %v270 = vld [vmem:[#allocation2 + $0x30] sm:$0xff]
      %v271 = vld [vmem:[#allocation2 + $0x38] sm:$0xff]
      %v272 = vld [vmem:[#allocation2 + $0x40] sm:$0xff]
      %v273 = vld [vmem:[#allocation2 + $0x48] sm:$0xff]
      %v274 = vld [vmem:[#allocation2 + $0x50] sm:$0xff]
      %v275 = vld [vmem:[#allocation2 + $0x58] sm:$0xff]
      %v276 = vld [vmem:[#allocation2 + $0x60] sm:$0xff]
      %v277 = vld [vmem:[#allocation2 + $0x68] sm:$0xff]
      %v278 = vld [vmem:[#allocation2 + $0x70] sm:$0xff]
      %v279 = vld [vmem:[#allocation2 + $0x78] sm:$0xff]
      %v280 = vld [vmem:[#allocation2 + $0x80] sm:$0xff]
      %v281 = vld [vmem:[#allocation2 + $0x88] sm:$0xff]
      %v282 = vld [vmem:[#allocation2 + $0x90] sm:$0xff]
      %v283 = vld [vmem:[#allocation2 + $0x98] sm:$0xff]
      %v284 = vld [vmem:[#allocation2 + $0xa0] sm:$0xff]
      %v285 = vld [vmem:[#allocation2 + $0xa8] sm:$0xff]
      %v286 = vld [vmem:[#allocation2 + $0xb0] sm:$0xff]
      %v287 = vld [vmem:[#allocation2 + $0xb8] sm:$0xff]
      %v288 = vld [vmem:[#allocation2 + $0xc0] sm:$0xff]
      %v289 = vld [vmem:[#allocation2 + $0xc8] sm:$0xff]
      %v290 = vld [vmem:[#allocation2 + $0xd0] sm:$0xff]
      %v291 = vld [vmem:[#allocation2 + $0xd8] sm:$0xff]
      %v292 = vld [vmem:[#allocation2 + $0xe0] sm:$0xff]
      %v293 = vld [vmem:[#allocation2 + $0xe8] sm:$0xff]
      %v294 = vld [vmem:[#allocation2 + $0xf0] sm:$0xff]
      %v295 = vld [vmem:[#allocation2 + $0xf8] sm:$0xff]
      %v296 = vld [vmem:[%s212] sm:$0xff]
      %v297 = vld [vmem:[%s212 + $0x8] sm:$0xff]
      %v298 = vld [vmem:[%s212 + $0x10] sm:$0xff]
      %v299 = vld [vmem:[%s212 + $0x18] sm:$0xff]
      %v300 = vld [vmem:[%s212 + $0x20] sm:$0xff]
      %v301 = vld [vmem:[%s212 + $0x28] sm:$0xff]
      %v302 = vld [vmem:[%s212 + $0x30] sm:$0xff]
      %v303 = vld [vmem:[%s212 + $0x38] sm:$0xff]
      %v304 = vld [vmem:[%s212 + $0x40] sm:$0xff]
      %v305 = vld [vmem:[%s212 + $0x48] sm:$0xff]
      %v306 = vld [vmem:[%s212 + $0x50] sm:$0xff]
      %v307 = vld [vmem:[%s212 + $0x58] sm:$0xff]
      %v308 = vld [vmem:[%s212 + $0x60] sm:$0xff]
      %v309 = vld [vmem:[%s212 + $0x68] sm:$0xff]
      %v310 = vld [vmem:[%s212 + $0x70] sm:$0xff]
      %v311 = vld [vmem:[%s212 + $0x78] sm:$0xff]
      %v312 = vld [vmem:[%s212 + $0x80] sm:$0xff]
      %v313 = vld [vmem:[%s212 + $0x88] sm:$0xff]
      %v314 = vld [vmem:[%s212 + $0x90] sm:$0xff]
      %v315 = vld [vmem:[%s212 + $0x98] sm:$0xff]
      %v316 = vld [vmem:[%s212 + $0xa0] sm:$0xff]
      %v317 = vld [vmem:[%s212 + $0xa8] sm:$0xff]
      %v318 = vld [vmem:[%s212 + $0xb0] sm:$0xff]
      %v319 = vld [vmem:[%s212 + $0xb8] sm:$0xff]
      %v320 = vld [vmem:[%s212 + $0xc0] sm:$0xff]
      %v321 = vld [vmem:[%s212 + $0xc8] sm:$0xff]
      %v322 = vld [vmem:[%s212 + $0xd0] sm:$0xff]
      %v323 = vld [vmem:[%s212 + $0xd8] sm:$0xff]
      %v324 = vld [vmem:[%s212 + $0xe0] sm:$0xff]
      %v325 = vld [vmem:[%s212 + $0xe8] sm:$0xff]
      %v326 = vld [vmem:[%s212 + $0xf0] sm:$0xff]
      %v327 = vld [vmem:[%s212 + $0xf8] sm:$0xff]
      %v328 = vld [vmem:[%s212 + $0x100] sm:$0xff]
      %v329 = vld [vmem:[%s212 + $0x108] sm:$0xff]
      %v330 = vld [vmem:[%s212 + $0x110] sm:$0xff]
      %v331 = vld [vmem:[%s212 + $0x118] sm:$0xff]
      %v332 = vld [vmem:[%s212 + $0x120] sm:$0xff]
      %v333 = vld [vmem:[%s212 + $0x128] sm:$0xff]
      %v334 = vld [vmem:[%s212 + $0x130] sm:$0xff]
      %v335 = vld [vmem:[%s212 + $0x138] sm:$0xff]
      %v336 = vld [vmem:[%s212 + $0x140] sm:$0xff]
      %v337 = vld [vmem:[%s212 + $0x148] sm:$0xff]
      %v338 = vld [vmem:[%s212 + $0x150] sm:$0xff]
      %v339 = vld [vmem:[%s212 + $0x158] sm:$0xff]
      %v340 = vld [vmem:[%s212 + $0x160] sm:$0xff]
      %v341 = vld [vmem:[%s212 + $0x168] sm:$0xff]
      %v342 = vld [vmem:[%s212 + $0x170] sm:$0xff]
      %v343 = vld [vmem:[%s212 + $0x178] sm:$0xff]
      %v344 = vld [vmem:[%s212 + $0x180] sm:$0xff]
      %v345 = vld [vmem:[%s212 + $0x188] sm:$0xff]
      %v346 = vld [vmem:[%s212 + $0x190] sm:$0xff]
      %v347 = vld [vmem:[%s212 + $0x198] sm:$0xff]
      %v348 = vld [vmem:[%s212 + $0x1a0] sm:$0xff]
      %v349 = vld [vmem:[%s212 + $0x1a8] sm:$0xff]
      %v350 = vld [vmem:[%s212 + $0x1b0] sm:$0xff]
      %v351 = vld [vmem:[%s212 + $0x1b8] sm:$0xff]
      %v352 = vld [vmem:[%s212 + $0x1c0] sm:$0xff]
      %v353 = vld [vmem:[%s212 + $0x1c8] sm:$0xff]
      %v354 = vld [vmem:[%s212 + $0x1d0] sm:$0xff]
      %v355 = vld [vmem:[%s212 + $0x1d8] sm:$0xff]
      %v356 = vld [vmem:[%s212 + $0x1e0] sm:$0xff]
      %v357 = vld [vmem:[%s212 + $0x1e8] sm:$0xff]
      %v358 = vld [vmem:[%s212 + $0x1f0] sm:$0xff]
      %v359 = vld [vmem:[%s212 + $0x1f8] sm:$0xff]
      %v360 = vld [vmem:[%s219] sm:$0xf]
      %v361 = vld [vmem:[%s219 + $0x4] sm:$0xf]
      %v362 = vld [vmem:[%s219 + $0x8] sm:$0xf]
      %v363 = vld [vmem:[%s219 + $0xc] sm:$0xf]
      %v364 = vld [vmem:[%s219 + $0x10] sm:$0xf]
      %v365 = vld [vmem:[%s219 + $0x14] sm:$0xf]
      %v366 = vld [vmem:[%s219 + $0x18] sm:$0xf]
      %v367 = vld [vmem:[%s219 + $0x1c] sm:$0xf]
      %v368 = vld [vmem:[%s219 + $0x20] sm:$0xf]
      %v369 = vld [vmem:[%s219 + $0x24] sm:$0xf]
      %v370 = vld [vmem:[%s219 + $0x28] sm:$0xf]
      %v371 = vld [vmem:[%s219 + $0x2c] sm:$0xf]
      %v372 = vld [vmem:[%s219 + $0x30] sm:$0xf]
      %v373 = vld [vmem:[%s219 + $0x34] sm:$0xf]
      %v374 = vld [vmem:[%s219 + $0x38] sm:$0xf]
      %v375 = vld [vmem:[%s219 + $0x3c] sm:$0xf]
      %v376 = vld [vmem:[%s219 + $0x40] sm:$0xf]
      %v377 = vld [vmem:[%s219 + $0x44] sm:$0xf]
      %v378 = vld [vmem:[%s219 + $0x48] sm:$0xf]
      %v379 = vld [vmem:[%s219 + $0x4c] sm:$0xf]
      %v380 = vld [vmem:[%s219 + $0x50] sm:$0xf]
      %v381 = vld [vmem:[%s219 + $0x54] sm:$0xf]
      %v382 = vld [vmem:[%s219 + $0x58] sm:$0xf]
      %v383 = vld [vmem:[%s219 + $0x5c] sm:$0xf]
      %v384 = vld [vmem:[%s219 + $0x60] sm:$0xf]
      %v385 = vld [vmem:[%s219 + $0x64] sm:$0xf]
      %v386 = vld [vmem:[%s219 + $0x68] sm:$0xf]
      %v387 = vld [vmem:[%s219 + $0x6c] sm:$0xf]
      %v388 = vld [vmem:[%s219 + $0x70] sm:$0xf]
      %v389 = vld [vmem:[%s219 + $0x74] sm:$0xf]
      %v390 = vld [vmem:[%s219 + $0x78] sm:$0xf]
      %v391 = vld [vmem:[%s219 + $0x7c] sm:$0xf]
      %v392 = vld [vmem:[%s219 + $0x80] sm:$0xf]
      %v393 = vld [vmem:[%s219 + $0x84] sm:$0xf]
      %v394 = vld [vmem:[%s219 + $0x88] sm:$0xf]
      %v395 = vld [vmem:[%s219 + $0x8c] sm:$0xf]
      %v396 = vld [vmem:[%s219 + $0x90] sm:$0xf]
      %v397 = vld [vmem:[%s219 + $0x94] sm:$0xf]
      %v398 = vld [vmem:[%s219 + $0x98] sm:$0xf]
      %v399 = vld [vmem:[%s219 + $0x9c] sm:$0xf]
      %v400 = vld [vmem:[%s219 + $0xa0] sm:$0xf]
      %v401 = vld [vmem:[%s219 + $0xa4] sm:$0xf]
      %v402 = vld [vmem:[%s219 + $0xa8] sm:$0xf]
      %v403 = vld [vmem:[%s219 + $0xac] sm:$0xf]
      %v404 = vld [vmem:[%s219 + $0xb0] sm:$0xf]
      %v405 = vld [vmem:[%s219 + $0xb4] sm:$0xf]
      %v406 = vld [vmem:[%s219 + $0xb8] sm:$0xf]
      %v407 = vld [vmem:[%s219 + $0xbc] sm:$0xf]
      %v408 = vld [vmem:[%s219 + $0xc0] sm:$0xf]
      %v409 = vld [vmem:[%s219 + $0xc4] sm:$0xf]
      %v410 = vld [vmem:[%s219 + $0xc8] sm:$0xf]
      %v411 = vld [vmem:[%s219 + $0xcc] sm:$0xf]
      %v412 = vld [vmem:[%s219 + $0xd0] sm:$0xf]
      %v413 = vld [vmem:[%s219 + $0xd4] sm:$0xf]
      %v414 = vld [vmem:[%s219 + $0xd8] sm:$0xf]
      %v415 = vld [vmem:[%s219 + $0xdc] sm:$0xf]
      %v416 = vld [vmem:[%s219 + $0xe0] sm:$0xf]
      %v417 = vld [vmem:[%s219 + $0xe4] sm:$0xf]
      %v418 = vld [vmem:[%s219 + $0xe8] sm:$0xf]
      %v419 = vld [vmem:[%s219 + $0xec] sm:$0xf]
      %v420 = vld [vmem:[%s219 + $0xf0] sm:$0xf]
      %v421 = vld [vmem:[%s219 + $0xf4] sm:$0xf]
      %v422 = vld [vmem:[%s219 + $0xf8] sm:$0xf]
      %v423 = vld [vmem:[%s219 + $0xfc] sm:$0xf]
      %v488 = vunpack.c.l.b16 %v296
      %v489 = vunpack.c.h.b16 %v296
      %v490 = vunpack.c.l.b16 %v297
      %v491 = vunpack.c.h.b16 %v297
      %v492 = vunpack.c.l.b16 %v298
      %v493 = vunpack.c.h.b16 %v298
      %v494 = vunpack.c.l.b16 %v299
      %v495 = vunpack.c.h.b16 %v299
      %v496 = vunpack.c.l.b16 %v300
      %v497 = vunpack.c.h.b16 %v300
      %v498 = vunpack.c.l.b16 %v301
      %v499 = vunpack.c.h.b16 %v301
      %v500 = vunpack.c.l.b16 %v302
      %v501 = vunpack.c.h.b16 %v302
      %v502 = vunpack.c.l.b16 %v303
      %v503 = vunpack.c.h.b16 %v303
      %v504 = vunpack.c.l.b16 %v304
      %v505 = vunpack.c.h.b16 %v304
      %v506 = vunpack.c.l.b16 %v305
      %v507 = vunpack.c.h.b16 %v305
      %v508 = vunpack.c.l.b16 %v306
      %v509 = vunpack.c.h.b16 %v306
      %v510 = vunpack.c.l.b16 %v307
      %v511 = vunpack.c.h.b16 %v307
      %v512 = vunpack.c.l.b16 %v308
      %v513 = vunpack.c.h.b16 %v308
      %v514 = vunpack.c.l.b16 %v309
      %v515 = vunpack.c.h.b16 %v309
      %v516 = vunpack.c.l.b16 %v310
      %v517 = vunpack.c.h.b16 %v310
      %v518 = vunpack.c.l.b16 %v311
      %v519 = vunpack.c.h.b16 %v311
      %v520 = vunpack.c.l.b16 %v312
      %v521 = vunpack.c.h.b16 %v312
      %v522 = vunpack.c.l.b16 %v313
      %v523 = vunpack.c.h.b16 %v313
      %v524 = vunpack.c.l.b16 %v314
      %v525 = vunpack.c.h.b16 %v314
      %v526 = vunpack.c.l.b16 %v315
      %v527 = vunpack.c.h.b16 %v315
      %v528 = vunpack.c.l.b16 %v316
      %v529 = vunpack.c.h.b16 %v316
      %v530 = vunpack.c.l.b16 %v317
      %v531 = vunpack.c.h.b16 %v317
      %v532 = vunpack.c.l.b16 %v318
      %v533 = vunpack.c.h.b16 %v318
      %v534 = vunpack.c.l.b16 %v319
      %v535 = vunpack.c.h.b16 %v319
      %v536 = vunpack.c.l.b16 %v320
      %v537 = vunpack.c.h.b16 %v320
      %v538 = vunpack.c.l.b16 %v321
      %v539 = vunpack.c.h.b16 %v321
      %v540 = vunpack.c.l.b16 %v322
      %v541 = vunpack.c.h.b16 %v322
      %v542 = vunpack.c.l.b16 %v323
      %v543 = vunpack.c.h.b16 %v323
      %v544 = vunpack.c.l.b16 %v324
      %v545 = vunpack.c.h.b16 %v324
      %v546 = vunpack.c.l.b16 %v325
      %v547 = vunpack.c.h.b16 %v325
      %v548 = vunpack.c.l.b16 %v326
      %v549 = vunpack.c.h.b16 %v326
      %v550 = vunpack.c.l.b16 %v327
      %v551 = vunpack.c.h.b16 %v327
      %v552 = vunpack.c.l.b16 %v328
      %v553 = vunpack.c.h.b16 %v328
      %v554 = vunpack.c.l.b16 %v329
      %v555 = vunpack.c.h.b16 %v329
      %v556 = vunpack.c.l.b16 %v330
      %v557 = vunpack.c.h.b16 %v330
      %v558 = vunpack.c.l.b16 %v331
      %v559 = vunpack.c.h.b16 %v331
      %v560 = vunpack.c.l.b16 %v332
      %v561 = vunpack.c.h.b16 %v332
      %v562 = vunpack.c.l.b16 %v333
      %v563 = vunpack.c.h.b16 %v333
      %v564 = vunpack.c.l.b16 %v334
      %v565 = vunpack.c.h.b16 %v334
      %v566 = vunpack.c.l.b16 %v335
      %v567 = vunpack.c.h.b16 %v335
      %v568 = vunpack.c.l.b16 %v336
      %v569 = vunpack.c.h.b16 %v336
      %v570 = vunpack.c.l.b16 %v337
      %v571 = vunpack.c.h.b16 %v337
      %v572 = vunpack.c.l.b16 %v338
      %v573 = vunpack.c.h.b16 %v338
      %v574 = vunpack.c.l.b16 %v339
      %v575 = vunpack.c.h.b16 %v339
      %v576 = vunpack.c.l.b16 %v340
      %v577 = vunpack.c.h.b16 %v340
      %v578 = vunpack.c.l.b16 %v341
      %v579 = vunpack.c.h.b16 %v341
      %v580 = vunpack.c.l.b16 %v342
      %v581 = vunpack.c.h.b16 %v342
      %v582 = vunpack.c.l.b16 %v343
      %v583 = vunpack.c.h.b16 %v343
      %v584 = vunpack.c.l.b16 %v344
      %v585 = vunpack.c.h.b16 %v344
      %v586 = vunpack.c.l.b16 %v345
      %v587 = vunpack.c.h.b16 %v345
      %v588 = vunpack.c.l.b16 %v346
      %v589 = vunpack.c.h.b16 %v346
      %v590 = vunpack.c.l.b16 %v347
      %v591 = vunpack.c.h.b16 %v347
      %v592 = vunpack.c.l.b16 %v348
      %v593 = vunpack.c.h.b16 %v348
      %v594 = vunpack.c.l.b16 %v349
      %v595 = vunpack.c.h.b16 %v349
      %v596 = vunpack.c.l.b16 %v350
      %v597 = vunpack.c.h.b16 %v350
      %v598 = vunpack.c.l.b16 %v351
      %v599 = vunpack.c.h.b16 %v351
      %v600 = vunpack.c.l.b16 %v352
      %v601 = vunpack.c.h.b16 %v352
      %v602 = vunpack.c.l.b16 %v353
      %v603 = vunpack.c.h.b16 %v353
      %v604 = vunpack.c.l.b16 %v354
      %v605 = vunpack.c.h.b16 %v354
      %v606 = vunpack.c.l.b16 %v355
      %v607 = vunpack.c.h.b16 %v355
      %v608 = vunpack.c.l.b16 %v356
      %v609 = vunpack.c.h.b16 %v356
      %v610 = vunpack.c.l.b16 %v357
      %v611 = vunpack.c.h.b16 %v357
      %v612 = vunpack.c.l.b16 %v358
      %v613 = vunpack.c.h.b16 %v358
      %v614 = vunpack.c.l.b16 %v359
      %v615 = vunpack.c.h.b16 %v359
      %v616 = vpack.c.b16 %v492, %v488
      %v617 = vpack.c.b16 %v493, %v489
      %v618 = vpack.c.b16 %v494, %v490
      %v619 = vpack.c.b16 %v495, %v491
      %v620 = vpack.c.b16 %v500, %v496
      %v621 = vpack.c.b16 %v501, %v497
      %v622 = vpack.c.b16 %v502, %v498
      %v623 = vpack.c.b16 %v503, %v499
      %v624 = vpack.c.b16 %v508, %v504
      %v625 = vpack.c.b16 %v509, %v505
      %v626 = vpack.c.b16 %v510, %v506
      %v627 = vpack.c.b16 %v511, %v507
      %v628 = vpack.c.b16 %v516, %v512
      %v629 = vpack.c.b16 %v517, %v513
      %v630 = vpack.c.b16 %v518, %v514
      %v631 = vpack.c.b16 %v519, %v515
      %v632 = vpack.c.b16 %v524, %v520
      %v633 = vpack.c.b16 %v525, %v521
      %v634 = vpack.c.b16 %v526, %v522
      %v635 = vpack.c.b16 %v527, %v523
      %v636 = vpack.c.b16 %v532, %v528
      %v637 = vpack.c.b16 %v533, %v529
      %v638 = vpack.c.b16 %v534, %v530
      %v639 = vpack.c.b16 %v535, %v531
      %v640 = vpack.c.b16 %v540, %v536
      %v641 = vpack.c.b16 %v541, %v537
      %v642 = vpack.c.b16 %v542, %v538
      %v643 = vpack.c.b16 %v543, %v539
      %v644 = vpack.c.b16 %v548, %v544
      %v645 = vpack.c.b16 %v549, %v545
      %v646 = vpack.c.b16 %v550, %v546
      %v647 = vpack.c.b16 %v551, %v547
      %v648 = vpack.c.b16 %v556, %v552
      %v649 = vpack.c.b16 %v557, %v553
      %v650 = vpack.c.b16 %v558, %v554
      %v651 = vpack.c.b16 %v559, %v555
      %v652 = vpack.c.b16 %v564, %v560
      %v653 = vpack.c.b16 %v565, %v561
      %v654 = vpack.c.b16 %v566, %v562
      %v655 = vpack.c.b16 %v567, %v563
      %v656 = vpack.c.b16 %v572, %v568
      %v657 = vpack.c.b16 %v573, %v569
      %v658 = vpack.c.b16 %v574, %v570
      %v659 = vpack.c.b16 %v575, %v571
      %v660 = vpack.c.b16 %v580, %v576
      %v661 = vpack.c.b16 %v581, %v577
      %v662 = vpack.c.b16 %v582, %v578
      %v663 = vpack.c.b16 %v583, %v579
      %v664 = vpack.c.b16 %v588, %v584
      %v665 = vpack.c.b16 %v589, %v585
      %v666 = vpack.c.b16 %v590, %v586
      %v667 = vpack.c.b16 %v591, %v587
      %v668 = vpack.c.b16 %v596, %v592
      %v669 = vpack.c.b16 %v597, %v593
      %v670 = vpack.c.b16 %v598, %v594
      %v671 = vpack.c.b16 %v599, %v595
      %v672 = vpack.c.b16 %v604, %v600
      %v673 = vpack.c.b16 %v605, %v601
      %v674 = vpack.c.b16 %v606, %v602
      %v675 = vpack.c.b16 %v607, %v603
      %v676 = vpack.c.b16 %v612, %v608
      %v677 = vpack.c.b16 %v613, %v609
      %v678 = vpack.c.b16 %v614, %v610
      %v679 = vpack.c.b16 %v615, %v611
      %v808 = vunpack.c.l.b16 %v360
      %v809 = vunpack.c.l.b16 %v361
      %v810 = vunpack.c.l.b16 %v362
      %v811 = vunpack.c.l.b16 %v363
      %v812 = vunpack.c.l.b16 %v364
      %v813 = vunpack.c.l.b16 %v365
      %v814 = vunpack.c.l.b16 %v366
      %v815 = vunpack.c.l.b16 %v367
      %v816 = vunpack.c.l.b16 %v368
      %v817 = vunpack.c.l.b16 %v369
      %v818 = vunpack.c.l.b16 %v370
      %v819 = vunpack.c.l.b16 %v371
      %v820 = vunpack.c.l.b16 %v372
      %v821 = vunpack.c.l.b16 %v373
      %v822 = vunpack.c.l.b16 %v374
      %v823 = vunpack.c.l.b16 %v375
      %v824 = vunpack.c.l.b16 %v376
      %v825 = vunpack.c.l.b16 %v377
      %v826 = vunpack.c.l.b16 %v378
      %v827 = vunpack.c.l.b16 %v379
      %v828 = vunpack.c.l.b16 %v380
      %v829 = vunpack.c.l.b16 %v381
      %v830 = vunpack.c.l.b16 %v382
      %v831 = vunpack.c.l.b16 %v383
      %v832 = vunpack.c.l.b16 %v384
      %v833 = vunpack.c.l.b16 %v385
      %v834 = vunpack.c.l.b16 %v386
      %v835 = vunpack.c.l.b16 %v387
      %v836 = vunpack.c.l.b16 %v388
      %v837 = vunpack.c.l.b16 %v389
      %v838 = vunpack.c.l.b16 %v390
      %v839 = vunpack.c.l.b16 %v391
      %v840 = vunpack.c.l.b16 %v392
      %v841 = vunpack.c.l.b16 %v393
      %v842 = vunpack.c.l.b16 %v394
      %v843 = vunpack.c.l.b16 %v395
      %v844 = vunpack.c.l.b16 %v396
      %v845 = vunpack.c.l.b16 %v397
      %v846 = vunpack.c.l.b16 %v398
      %v847 = vunpack.c.l.b16 %v399
      %v848 = vunpack.c.l.b16 %v400
      %v849 = vunpack.c.l.b16 %v401
      %v850 = vunpack.c.l.b16 %v402
      %v851 = vunpack.c.l.b16 %v403
      %v852 = vunpack.c.l.b16 %v404
      %v853 = vunpack.c.l.b16 %v405
      %v854 = vunpack.c.l.b16 %v406
      %v855 = vunpack.c.l.b16 %v407
      %v856 = vunpack.c.l.b16 %v408
      %v857 = vunpack.c.l.b16 %v409
      %v858 = vunpack.c.l.b16 %v410
      %v859 = vunpack.c.l.b16 %v411
      %v860 = vunpack.c.l.b16 %v412
      %v861 = vunpack.c.l.b16 %v413
      %v862 = vunpack.c.l.b16 %v414
      %v863 = vunpack.c.l.b16 %v415
      %v864 = vunpack.c.l.b16 %v416
      %v865 = vunpack.c.l.b16 %v417
      %v866 = vunpack.c.l.b16 %v418
      %v867 = vunpack.c.l.b16 %v419
      %v868 = vunpack.c.l.b16 %v420
      %v869 = vunpack.c.l.b16 %v421
      %v870 = vunpack.c.l.b16 %v422
      %v871 = vunpack.c.l.b16 %v423
      %v872 = vpack.c.b16 %v809, %v808
      %v873 = vpack.c.b16 %v811, %v810
      %v874 = vpack.c.b16 %v813, %v812
      %v875 = vpack.c.b16 %v815, %v814
      %v876 = vpack.c.b16 %v817, %v816
      %v877 = vpack.c.b16 %v819, %v818
      %v878 = vpack.c.b16 %v821, %v820
      %v879 = vpack.c.b16 %v823, %v822
      %v880 = vpack.c.b16 %v825, %v824
      %v881 = vpack.c.b16 %v827, %v826
      %v882 = vpack.c.b16 %v829, %v828
      %v883 = vpack.c.b16 %v831, %v830
      %v884 = vpack.c.b16 %v833, %v832
      %v885 = vpack.c.b16 %v835, %v834
      %v886 = vpack.c.b16 %v837, %v836
      %v887 = vpack.c.b16 %v839, %v838
      %v888 = vpack.c.b16 %v841, %v840
      %v889 = vpack.c.b16 %v843, %v842
      %v890 = vpack.c.b16 %v845, %v844
      %v891 = vpack.c.b16 %v847, %v846
      %v892 = vpack.c.b16 %v849, %v848
      %v893 = vpack.c.b16 %v851, %v850
      %v894 = vpack.c.b16 %v853, %v852
      %v895 = vpack.c.b16 %v855, %v854
      %v896 = vpack.c.b16 %v857, %v856
      %v897 = vpack.c.b16 %v859, %v858
      %v898 = vpack.c.b16 %v861, %v860
      %v899 = vpack.c.b16 %v863, %v862
      %v900 = vpack.c.b16 %v865, %v864
      %v901 = vpack.c.b16 %v867, %v866
      %v902 = vpack.c.b16 %v869, %v868
      %v903 = vpack.c.b16 %v871, %v870
      %936 = vmatprep.subr.bf16.mxu0 0
      %937 = vmatpush1.bf16.msra.mxu0 %v872
      %938 = vmatprep.subr.bf16.mxu0 0
      %939 = vmatpush1.bf16.msra.mxu0 %v873
      %940 = vmatprep.subr.bf16.mxu0 0
      %941 = vmatpush1.bf16.msra.mxu0 %v874
      %942 = vmatprep.subr.bf16.mxu0 0
      %943 = vmatpush1.bf16.msra.mxu0 %v875
      %944 = vmatprep.subr.bf16.mxu0 0
      %945 = vmatpush1.bf16.msra.mxu0 %v876
      %946 = vmatprep.subr.bf16.mxu0 0
      %947 = vmatpush1.bf16.msra.mxu0 %v877
      %948 = vmatprep.subr.bf16.mxu0 0
      %949 = vmatpush1.bf16.msra.mxu0 %v878
      %950 = vmatprep.subr.bf16.mxu0 0
      %951 = vmatpush1.bf16.msra.mxu0 %v879
      %952 = vmatprep.subr.bf16.mxu0 0
      %953 = vmatpush1.bf16.msra.mxu0 %v880
      %954 = vmatprep.subr.bf16.mxu0 0
      %955 = vmatpush1.bf16.msra.mxu0 %v881
      %956 = vmatprep.subr.bf16.mxu0 0
      %957 = vmatpush1.bf16.msra.mxu0 %v882
      %958 = vmatprep.subr.bf16.mxu0 0
      %959 = vmatpush1.bf16.msra.mxu0 %v883
      %960 = vmatprep.subr.bf16.mxu0 0
      %961 = vmatpush1.bf16.msra.mxu0 %v884
      %962 = vmatprep.subr.bf16.mxu0 0
      %963 = vmatpush1.bf16.msra.mxu0 %v885
      %964 = vmatprep.subr.bf16.mxu0 0
      %965 = vmatpush1.bf16.msra.mxu0 %v886
      %966 = vmatprep.subr.bf16.mxu0 0
      %967 = vmatpush1.bf16.msra.mxu0 %v887
      %968 = vmatprep.mubr.bf16.mxu0 %v617
      %969 = vmatmul.mubr.bf16.gmra.mrb[0].mxu0 %v616
      %v970 = vpop.f32.mrb[0].mxu0
      %v971 = vadd.f32 0.0, %v970
      %v972 = vpop.f32.mrb[0].mxu0
      %v973 = vpop.f32.mrb[0].mxu0
      %v974 = vadd.f32 0.0, %v973
      %v975 = vpop.f32.mrb[0].mxu0
      %976 = vmatprep.mubr.bf16.mxu0 %v621
      %977 = vmatmul.mubr.bf16.gmra.mrb[0].mxu0 %v620
      %v978 = vpop.f32.mrb[0].mxu0
      %v979 = vadd.f32 0.0, %v978
      %v980 = vpop.f32.mrb[0].mxu0
      %v981 = vpop.f32.mrb[0].mxu0
      %v982 = vadd.f32 0.0, %v981
      %v983 = vpop.f32.mrb[0].mxu0
      %984 = vmatprep.mubr.bf16.mxu0 %v625
      %985 = vmatmul.mubr.bf16.gmra.mrb[0].mxu0 %v624
      %v986 = vpop.f32.mrb[0].mxu0
      %v987 = vadd.f32 0.0, %v986
      %v988 = vpop.f32.mrb[0].mxu0
      %v989 = vpop.f32.mrb[0].mxu0
      %v990 = vadd.f32 0.0, %v989
      %v991 = vpop.f32.mrb[0].mxu0
      %992 = vmatprep.mubr.bf16.mxu0 %v629
      %993 = vmatmul.mubr.bf16.gmra.mrb[0].mxu0 %v628
      %v994 = vpop.f32.mrb[0].mxu0
      %v995 = vadd.f32 0.0, %v994
      %v996 = vpop.f32.mrb[0].mxu0
      %v997 = vpop.f32.mrb[0].mxu0
      %v998 = vadd.f32 0.0, %v997
      %v999 = vpop.f32.mrb[0].mxu0
      %1000 = vmatprep.mubr.bf16.mxu0 %v633
      %1001 = vmatmul.mubr.bf16.gmra.mrb[0].mxu0 %v632
      %v1002 = vpop.f32.mrb[0].mxu0
      %v1003 = vadd.f32 0.0, %v1002
      %v1004 = vpop.f32.mrb[0].mxu0
      %v1005 = vpop.f32.mrb[0].mxu0
      %v1006 = vadd.f32 0.0, %v1005
      %v1007 = vpop.f32.mrb[0].mxu0
      %1008 = vmatprep.mubr.bf16.mxu0 %v637
      %1009 = vmatmul.mubr.bf16.gmra.mrb[0].mxu0 %v636
      %v1010 = vpop.f32.mrb[0].mxu0
      %v1011 = vadd.f32 0.0, %v1010
      %v1012 = vpop.f32.mrb[0].mxu0
      %v1013 = vpop.f32.mrb[0].mxu0
      %v1014 = vadd.f32 0.0, %v1013
      %v1015 = vpop.f32.mrb[0].mxu0
      %1016 = vmatprep.mubr.bf16.mxu0 %v641
      %1017 = vmatmul.mubr.bf16.gmra.mrb[0].mxu0 %v640
      %v1018 = vpop.f32.mrb[0].mxu0
      %v1019 = vadd.f32 0.0, %v1018
      %v1020 = vpop.f32.mrb[0].mxu0
      %v1021 = vpop.f32.mrb[0].mxu0
      %v1022 = vadd.f32 0.0, %v1021
      %v1023 = vpop.f32.mrb[0].mxu0
      %1024 = vmatprep.mubr.bf16.mxu0 %v645
      %1025 = vmatmul.mubr.bf16.gmra.mrb[0].mxu0 %v644
      %v1026 = vpop.f32.mrb[0].mxu0
      %v1027 = vadd.f32 0.0, %v1026
      %v1028 = vpop.f32.mrb[0].mxu0
      %v1029 = vpop.f32.mrb[0].mxu0
      %v1030 = vadd.f32 0.0, %v1029
      %v1031 = vpop.f32.mrb[0].mxu0
      %1032 = vmatprep.mubr.bf16.mxu0 %v649
      %1033 = vmatmul.mubr.bf16.gmra.mrb[0].mxu0 %v648
      %v1034 = vpop.f32.mrb[0].mxu0
      %v1035 = vadd.f32 0.0, %v1034
      %v1036 = vpop.f32.mrb[0].mxu0
      %v1037 = vpop.f32.mrb[0].mxu0
      %v1038 = vadd.f32 0.0, %v1037
      %v1039 = vpop.f32.mrb[0].mxu0
      %1040 = vmatprep.mubr.bf16.mxu0 %v653
      %1041 = vmatmul.mubr.bf16.gmra.mrb[0].mxu0 %v652
      %v1042 = vpop.f32.mrb[0].mxu0
      %v1043 = vadd.f32 0.0, %v1042
      %v1044 = vpop.f32.mrb[0].mxu0
      %v1045 = vpop.f32.mrb[0].mxu0
      %v1046 = vadd.f32 0.0, %v1045
      %v1047 = vpop.f32.mrb[0].mxu0
      %1048 = vmatprep.mubr.bf16.mxu0 %v657
      %1049 = vmatmul.mubr.bf16.gmra.mrb[0].mxu0 %v656
      %v1050 = vpop.f32.mrb[0].mxu0
      %v1051 = vadd.f32 0.0, %v1050
      %v1052 = vpop.f32.mrb[0].mxu0
      %v1053 = vpop.f32.mrb[0].mxu0
      %v1054 = vadd.f32 0.0, %v1053
      %v1055 = vpop.f32.mrb[0].mxu0
      %1056 = vmatprep.mubr.bf16.mxu0 %v661
      %1057 = vmatmul.mubr.bf16.gmra.mrb[0].mxu0 %v660
      %v1058 = vpop.f32.mrb[0].mxu0
      %v1059 = vadd.f32 0.0, %v1058
      %v1060 = vpop.f32.mrb[0].mxu0
      %v1061 = vpop.f32.mrb[0].mxu0
      %v1062 = vadd.f32 0.0, %v1061
      %v1063 = vpop.f32.mrb[0].mxu0
      %1064 = vmatprep.mubr.bf16.mxu0 %v665
      %1065 = vmatmul.mubr.bf16.gmra.mrb[0].mxu0 %v664
      %v1066 = vpop.f32.mrb[0].mxu0
      %v1067 = vadd.f32 0.0, %v1066
      %v1068 = vpop.f32.mrb[0].mxu0
      %v1069 = vpop.f32.mrb[0].mxu0
      %v1070 = vadd.f32 0.0, %v1069
      %v1071 = vpop.f32.mrb[0].mxu0
      %1072 = vmatprep.mubr.bf16.mxu0 %v669
      %1073 = vmatmul.mubr.bf16.gmra.mrb[0].mxu0 %v668
      %v1074 = vpop.f32.mrb[0].mxu0
      %v1075 = vadd.f32 0.0, %v1074
      %v1076 = vpop.f32.mrb[0].mxu0
      %v1077 = vpop.f32.mrb[0].mxu0
      %v1078 = vadd.f32 0.0, %v1077
      %v1079 = vpop.f32.mrb[0].mxu0
      %1080 = vmatprep.mubr.bf16.mxu0 %v673
      %1081 = vmatmul.mubr.bf16.gmra.mrb[0].mxu0 %v672
      %v1082 = vpop.f32.mrb[0].mxu0
      %v1083 = vadd.f32 0.0, %v1082
      %v1084 = vpop.f32.mrb[0].mxu0
      %v1085 = vpop.f32.mrb[0].mxu0
      %v1086 = vadd.f32 0.0, %v1085
      %v1087 = vpop.f32.mrb[0].mxu0
      %1088 = vmatprep.mubr.bf16.mxu0 %v677
      %1089 = vmatmul.mubr.bf16.gmra.mrb[0].mxu0 %v676
      %v1090 = vpop.f32.mrb[0].mxu0
      %v1091 = vadd.f32 0.0, %v1090
      %v1092 = vpop.f32.mrb[0].mxu0
      %v1093 = vpop.f32.mrb[0].mxu0
      %v1094 = vadd.f32 0.0, %v1093
      %v1095 = vpop.f32.mrb[0].mxu0
      %1096 = vdwg.mxu0
      %1097 = vmatprep.subr.bf16.mxu0 0
      %1098 = vmatpush1.bf16.msra.mxu0 %v888
      %1099 = vmatprep.subr.bf16.mxu0 0
      %1100 = vmatpush1.bf16.msra.mxu0 %v889
      %1101 = vmatprep.subr.bf16.mxu0 0
      %1102 = vmatpush1.bf16.msra.mxu0 %v890
      %1103 = vmatprep.subr.bf16.mxu0 0
      %1104 = vmatpush1.bf16.msra.mxu0 %v891
      %1105 = vmatprep.subr.bf16.mxu0 0
      %1106 = vmatpush1.bf16.msra.mxu0 %v892
      %1107 = vmatprep.subr.bf16.mxu0 0
      %1108 = vmatpush1.bf16.msra.mxu0 %v893
      %1109 = vmatprep.subr.bf16.mxu0 0
      %1110 = vmatpush1.bf16.msra.mxu0 %v894
      %1111 = vmatprep.subr.bf16.mxu0 0
      %1112 = vmatpush1.bf16.msra.mxu0 %v895
      %1113 = vmatprep.subr.bf16.mxu0 0
      %1114 = vmatpush1.bf16.msra.mxu0 %v896
      %1115 = vmatprep.subr.bf16.mxu0 0
      %1116 = vmatpush1.bf16.msra.mxu0 %v897
      %1117 = vmatprep.subr.bf16.mxu0 0
      %1118 = vmatpush1.bf16.msra.mxu0 %v898
      %1119 = vmatprep.subr.bf16.mxu0 0
      %1120 = vmatpush1.bf16.msra.mxu0 %v899
      %1121 = vmatprep.subr.bf16.mxu0 0
      %1122 = vmatpush1.bf16.msra.mxu0 %v900
      %1123 = vmatprep.subr.bf16.mxu0 0
      %1124 = vmatpush1.bf16.msra.mxu0 %v901
      %1125 = vmatprep.subr.bf16.mxu0 0
      %1126 = vmatpush1.bf16.msra.mxu0 %v902
      %1127 = vmatprep.subr.bf16.mxu0 0
      %1128 = vmatpush1.bf16.msra.mxu0 %v903
      %1129 = vmatprep.mubr.bf16.mxu0 %v619
      %1130 = vmatmul.mubr.bf16.gmra.mrb[0].mxu0 %v618
      %v1131 = vpop.f32.mrb[0].mxu0
      %v1132 = vadd.f32 %v971, %v1131
      %v1133 = vpop.f32.mrb[0].mxu0
      %v1134 = vpop.f32.mrb[0].mxu0
      %v1135 = vadd.f32 %v974, %v1134
      %v1136 = vpop.f32.mrb[0].mxu0
      %1137 = vmatprep.mubr.bf16.mxu0 %v623
      %1138 = vmatmul.mubr.bf16.gmra.mrb[0].mxu0 %v622
      %v1139 = vpop.f32.mrb[0].mxu0
      %v1140 = vadd.f32 %v979, %v1139
      %v1141 = vpop.f32.mrb[0].mxu0
      %v1142 = vpop.f32.mrb[0].mxu0
      %v1143 = vadd.f32 %v982, %v1142
      %v1144 = vpop.f32.mrb[0].mxu0
      %1145 = vmatprep.mubr.bf16.mxu0 %v627
      %1146 = vmatmul.mubr.bf16.gmra.mrb[0].mxu0 %v626
      %v1147 = vpop.f32.mrb[0].mxu0
      %v1148 = vadd.f32 %v987, %v1147
      %v1149 = vpop.f32.mrb[0].mxu0
      %v1150 = vpop.f32.mrb[0].mxu0
      %v1151 = vadd.f32 %v990, %v1150
      %v1152 = vpop.f32.mrb[0].mxu0
      %1153 = vmatprep.mubr.bf16.mxu0 %v631
      %1154 = vmatmul.mubr.bf16.gmra.mrb[0].mxu0 %v630
      %v1155 = vpop.f32.mrb[0].mxu0
      %v1156 = vadd.f32 %v995, %v1155
      %v1157 = vpop.f32.mrb[0].mxu0
      %v1158 = vpop.f32.mrb[0].mxu0
      %v1159 = vadd.f32 %v998, %v1158
      %v1160 = vpop.f32.mrb[0].mxu0
      %1161 = vmatprep.mubr.bf16.mxu0 %v635
      %1162 = vmatmul.mubr.bf16.gmra.mrb[0].mxu0 %v634
      %v1163 = vpop.f32.mrb[0].mxu0
      %v1164 = vadd.f32 %v1003, %v1163
      %v1165 = vpop.f32.mrb[0].mxu0
      %v1166 = vpop.f32.mrb[0].mxu0
      %v1167 = vadd.f32 %v1006, %v1166
      %v1168 = vpop.f32.mrb[0].mxu0
      %1169 = vmatprep.mubr.bf16.mxu0 %v639
      %1170 = vmatmul.mubr.bf16.gmra.mrb[0].mxu0 %v638
      %v1171 = vpop.f32.mrb[0].mxu0
      %v1172 = vadd.f32 %v1011, %v1171
      %v1173 = vpop.f32.mrb[0].mxu0
      %v1174 = vpop.f32.mrb[0].mxu0
      %v1175 = vadd.f32 %v1014, %v1174
      %v1176 = vpop.f32.mrb[0].mxu0
      %1177 = vmatprep.mubr.bf16.mxu0 %v643
      %1178 = vmatmul.mubr.bf16.gmra.mrb[0].mxu0 %v642
      %v1179 = vpop.f32.mrb[0].mxu0
      %v1180 = vadd.f32 %v1019, %v1179
      %v1181 = vpop.f32.mrb[0].mxu0
      %v1182 = vpop.f32.mrb[0].mxu0
      %v1183 = vadd.f32 %v1022, %v1182
      %v1184 = vpop.f32.mrb[0].mxu0
      %1185 = vmatprep.mubr.bf16.mxu0 %v647
      %1186 = vmatmul.mubr.bf16.gmra.mrb[0].mxu0 %v646
      %v1187 = vpop.f32.mrb[0].mxu0
      %v1188 = vadd.f32 %v1027, %v1187
      %v1189 = vpop.f32.mrb[0].mxu0
      %v1190 = vpop.f32.mrb[0].mxu0
      %v1191 = vadd.f32 %v1030, %v1190
      %v1192 = vpop.f32.mrb[0].mxu0
      %1193 = vmatprep.mubr.bf16.mxu0 %v651
      %1194 = vmatmul.mubr.bf16.gmra.mrb[0].mxu0 %v650
      %v1195 = vpop.f32.mrb[0].mxu0
      %v1196 = vadd.f32 %v1035, %v1195
      %v1197 = vpop.f32.mrb[0].mxu0
      %v1198 = vpop.f32.mrb[0].mxu0
      %v1199 = vadd.f32 %v1038, %v1198
      %v1200 = vpop.f32.mrb[0].mxu0
      %1201 = vmatprep.mubr.bf16.mxu0 %v655
      %1202 = vmatmul.mubr.bf16.gmra.mrb[0].mxu0 %v654
      %v1203 = vpop.f32.mrb[0].mxu0
      %v1204 = vadd.f32 %v1043, %v1203
      %v1205 = vpop.f32.mrb[0].mxu0
      %v1206 = vpop.f32.mrb[0].mxu0
      %v1207 = vadd.f32 %v1046, %v1206
      %v1208 = vpop.f32.mrb[0].mxu0
      %1209 = vmatprep.mubr.bf16.mxu0 %v659
      %1210 = vmatmul.mubr.bf16.gmra.mrb[0].mxu0 %v658
      %v1211 = vpop.f32.mrb[0].mxu0
      %v1212 = vadd.f32 %v1051, %v1211
      %v1213 = vpop.f32.mrb[0].mxu0
      %v1214 = vpop.f32.mrb[0].mxu0
      %v1215 = vadd.f32 %v1054, %v1214
      %v1216 = vpop.f32.mrb[0].mxu0
      %1217 = vmatprep.mubr.bf16.mxu0 %v663
      %1218 = vmatmul.mubr.bf16.gmra.mrb[0].mxu0 %v662
      %v1219 = vpop.f32.mrb[0].mxu0
      %v1220 = vadd.f32 %v1059, %v1219
      %v1221 = vpop.f32.mrb[0].mxu0
      %v1222 = vpop.f32.mrb[0].mxu0
      %v1223 = vadd.f32 %v1062, %v1222
      %v1224 = vpop.f32.mrb[0].mxu0
      %1225 = vmatprep.mubr.bf16.mxu0 %v667
      %1226 = vmatmul.mubr.bf16.gmra.mrb[0].mxu0 %v666
      %v1227 = vpop.f32.mrb[0].mxu0
      %v1228 = vadd.f32 %v1067, %v1227
      %v1229 = vpop.f32.mrb[0].mxu0
      %v1230 = vpop.f32.mrb[0].mxu0
      %v1231 = vadd.f32 %v1070, %v1230
      %v1232 = vpop.f32.mrb[0].mxu0
      %1233 = vmatprep.mubr.bf16.mxu0 %v671
      %1234 = vmatmul.mubr.bf16.gmra.mrb[0].mxu0 %v670
      %v1235 = vpop.f32.mrb[0].mxu0
      %v1236 = vadd.f32 %v1075, %v1235
      %v1237 = vpop.f32.mrb[0].mxu0
      %v1238 = vpop.f32.mrb[0].mxu0
      %v1239 = vadd.f32 %v1078, %v1238
      %v1240 = vpop.f32.mrb[0].mxu0
      %1241 = vmatprep.mubr.bf16.mxu0 %v675
      %1242 = vmatmul.mubr.bf16.gmra.mrb[0].mxu0 %v674
      %v1243 = vpop.f32.mrb[0].mxu0
      %v1244 = vadd.f32 %v1083, %v1243
      %v1245 = vpop.f32.mrb[0].mxu0
      %v1246 = vpop.f32.mrb[0].mxu0
      %v1247 = vadd.f32 %v1086, %v1246
      %v1248 = vpop.f32.mrb[0].mxu0
      %1249 = vmatprep.mubr.bf16.mxu0 %v679
      %1250 = vmatmul.mubr.bf16.gmra.mrb[0].mxu0 %v678
      %v1251 = vpop.f32.mrb[0].mxu0
      %v1252 = vadd.f32 %v1091, %v1251
      %v1253 = vpop.f32.mrb[0].mxu0
      %v1254 = vpop.f32.mrb[0].mxu0
      %v1255 = vadd.f32 %v1094, %v1254
      %v1256 = vpop.f32.mrb[0].mxu0
      %1257 = vdwg.mxu0
      %v1258 = vadd.f32 %v264, %v1132
      %v1259 = vadd.f32 %v265, %v1135
      %v1260 = vadd.f32 %v266, %v1140
      %v1261 = vadd.f32 %v267, %v1143
      %v1262 = vadd.f32 %v268, %v1148
      %v1263 = vadd.f32 %v269, %v1151
      %v1264 = vadd.f32 %v270, %v1156
      %v1265 = vadd.f32 %v271, %v1159
      %v1266 = vadd.f32 %v272, %v1164
      %v1267 = vadd.f32 %v273, %v1167
      %v1268 = vadd.f32 %v274, %v1172
      %v1269 = vadd.f32 %v275, %v1175
      %v1270 = vadd.f32 %v276, %v1180
      %v1271 = vadd.f32 %v277, %v1183
      %v1272 = vadd.f32 %v278, %v1188
      %v1273 = vadd.f32 %v279, %v1191
      %v1274 = vadd.f32 %v280, %v1196
      %v1275 = vadd.f32 %v281, %v1199
      %v1276 = vadd.f32 %v282, %v1204
      %v1277 = vadd.f32 %v283, %v1207
      %v1278 = vadd.f32 %v284, %v1212
      %v1279 = vadd.f32 %v285, %v1215
      %v1280 = vadd.f32 %v286, %v1220
      %v1281 = vadd.f32 %v287, %v1223
      %v1282 = vadd.f32 %v288, %v1228
      %v1283 = vadd.f32 %v289, %v1231
      %v1284 = vadd.f32 %v290, %v1236
      %v1285 = vadd.f32 %v291, %v1239
      %v1286 = vadd.f32 %v292, %v1244
      %v1287 = vadd.f32 %v293, %v1247
      %v1288 = vadd.f32 %v294, %v1252
      %v1289 = vadd.f32 %v295, %v1255
      %1290 = vst [vmem:[#allocation2] sm:$0xff] %v1258
      %1291 = vst [vmem:[#allocation2 + $0x8] sm:$0xff] %v1259
      %1292 = vst [vmem:[#allocation2 + $0x10] sm:$0xff] %v1260
      %1293 = vst [vmem:[#allocation2 + $0x18] sm:$0xff] %v1261
      %1294 = vst [vmem:[#allocation2 + $0x20] sm:$0xff] %v1262
      %1295 = vst [vmem:[#allocation2 + $0x28] sm:$0xff] %v1263
      %1296 = vst [vmem:[#allocation2 + $0x30] sm:$0xff] %v1264
      %1297 = vst [vmem:[#allocation2 + $0x38] sm:$0xff] %v1265
      %1298 = vst [vmem:[#allocation2 + $0x40] sm:$0xff] %v1266
      %1299 = vst [vmem:[#allocation2 + $0x48] sm:$0xff] %v1267
      %1300 = vst [vmem:[#allocation2 + $0x50] sm:$0xff] %v1268
      %1301 = vst [vmem:[#allocation2 + $0x58] sm:$0xff] %v1269
      %1302 = vst [vmem:[#allocation2 + $0x60] sm:$0xff] %v1270
      %1303 = vst [vmem:[#allocation2 + $0x68] sm:$0xff] %v1271
      %1304 = vst [vmem:[#allocation2 + $0x70] sm:$0xff] %v1272
      %1305 = vst [vmem:[#allocation2 + $0x78] sm:$0xff] %v1273
      %1306 = vst [vmem:[#allocation2 + $0x80] sm:$0xff] %v1274
      %1307 = vst [vmem:[#allocation2 + $0x88] sm:$0xff] %v1275
      %1308 = vst [vmem:[#allocation2 + $0x90] sm:$0xff] %v1276
      %1309 = vst [vmem:[#allocation2 + $0x98] sm:$0xff] %v1277
      %1310 = vst [vmem:[#allocation2 + $0xa0] sm:$0xff] %v1278
      %1311 = vst [vmem:[#allocation2 + $0xa8] sm:$0xff] %v1279
      %1312 = vst [vmem:[#allocation2 + $0xb0] sm:$0xff] %v1280
      %1313 = vst [vmem:[#allocation2 + $0xb8] sm:$0xff] %v1281
      %1314 = vst [vmem:[#allocation2 + $0xc0] sm:$0xff] %v1282
      %1315 = vst [vmem:[#allocation2 + $0xc8] sm:$0xff] %v1283
      %1316 = vst [vmem:[#allocation2 + $0xd0] sm:$0xff] %v1284
      %1317 = vst [vmem:[#allocation2 + $0xd8] sm:$0xff] %v1285
      %1318 = vst [vmem:[#allocation2 + $0xe0] sm:$0xff] %v1286
      %1319 = vst [vmem:[#allocation2 + $0xe8] sm:$0xff] %v1287
      %1320 = vst [vmem:[#allocation2 + $0xf0] sm:$0xff] %v1288
      %1321 = vst [vmem:[#allocation2 + $0xf8] sm:$0xff] %v1289
      // Predicated region
      $region37: #{network_forward.8} parent=31 // pred_check
        %p1322 = pneg %p228
      $region38: #{network_forward.8} parent=31 // pred_check_branch
        %1324 = sbr.rel (%p1322) target = $region40
      $region39: #{network_forward.8} parent=31 // pred_region
        %v1325 = vld [vmem:[#allocation2] sm:$0xff]
        %v1326 = vld [vmem:[#allocation2 + $0x8] sm:$0xff]
        %v1327 = vld [vmem:[#allocation2 + $0x10] sm:$0xff]
        %v1328 = vld [vmem:[#allocation2 + $0x18] sm:$0xff]
        %v1329 = vld [vmem:[#allocation2 + $0x20] sm:$0xff]
        %v1330 = vld [vmem:[#allocation2 + $0x28] sm:$0xff]
        %v1331 = vld [vmem:[#allocation2 + $0x30] sm:$0xff]
        %v1332 = vld [vmem:[#allocation2 + $0x38] sm:$0xff]
        %v1333 = vld [vmem:[#allocation2 + $0x40] sm:$0xff]
        %v1334 = vld [vmem:[#allocation2 + $0x48] sm:$0xff]
        %v1335 = vld [vmem:[#allocation2 + $0x50] sm:$0xff]
        %v1336 = vld [vmem:[#allocation2 + $0x58] sm:$0xff]
        %v1337 = vld [vmem:[#allocation2 + $0x60] sm:$0xff]
        %v1338 = vld [vmem:[#allocation2 + $0x68] sm:$0xff]
        %v1339 = vld [vmem:[#allocation2 + $0x70] sm:$0xff]
        %v1340 = vld [vmem:[#allocation2 + $0x78] sm:$0xff]
        %v1341 = vld [vmem:[#allocation2 + $0x80] sm:$0xff]
        %v1342 = vld [vmem:[#allocation2 + $0x88] sm:$0xff]
        %v1343 = vld [vmem:[#allocation2 + $0x90] sm:$0xff]
        %v1344 = vld [vmem:[#allocation2 + $0x98] sm:$0xff]
        %v1345 = vld [vmem:[#allocation2 + $0xa0] sm:$0xff]
        %v1346 = vld [vmem:[#allocation2 + $0xa8] sm:$0xff]
        %v1347 = vld [vmem:[#allocation2 + $0xb0] sm:$0xff]
        %v1348 = vld [vmem:[#allocation2 + $0xb8] sm:$0xff]
        %v1349 = vld [vmem:[#allocation2 + $0xc0] sm:$0xff]
        %v1350 = vld [vmem:[#allocation2 + $0xc8] sm:$0xff]
        %v1351 = vld [vmem:[#allocation2 + $0xd0] sm:$0xff]
        %v1352 = vld [vmem:[#allocation2 + $0xd8] sm:$0xff]
        %v1353 = vld [vmem:[#allocation2 + $0xe0] sm:$0xff]
        %v1354 = vld [vmem:[#allocation2 + $0xe8] sm:$0xff]
        %v1355 = vld [vmem:[#allocation2 + $0xf0] sm:$0xff]
        %v1356 = vld [vmem:[#allocation2 + $0xf8] sm:$0xff]
        %v1357 = vld [vmem:[%s2] sm:$0x1]
        %v1359 = vlaneseq
        %v1360 = vshrl.u32 %v1359, 7
        %v1361 = vsub.s32 0, %v1360
        %v1362 = vrot.slane %v1357, %v1361
        %v1364 = vadd.f32 %v1325, %v1362
        %v1365 = vadd.f32 %v1326, %v1362
        %v1366 = vadd.f32 %v1327, %v1362
        %v1367 = vadd.f32 %v1328, %v1362
        %v1368 = vadd.f32 %v1329, %v1362
        %v1369 = vadd.f32 %v1330, %v1362
        %v1370 = vadd.f32 %v1331, %v1362
        %v1371 = vadd.f32 %v1332, %v1362
        %v1372 = vadd.f32 %v1333, %v1362
        %v1373 = vadd.f32 %v1334, %v1362
        %v1374 = vadd.f32 %v1335, %v1362
        %v1375 = vadd.f32 %v1336, %v1362
        %v1376 = vadd.f32 %v1337, %v1362
        %v1377 = vadd.f32 %v1338, %v1362
        %v1378 = vadd.f32 %v1339, %v1362
        %v1379 = vadd.f32 %v1340, %v1362
        %v1380 = vadd.f32 %v1341, %v1362
        %v1381 = vadd.f32 %v1342, %v1362
        %v1382 = vadd.f32 %v1343, %v1362
        %v1383 = vadd.f32 %v1344, %v1362
        %v1384 = vadd.f32 %v1345, %v1362
        %v1385 = vadd.f32 %v1346, %v1362
        %v1386 = vadd.f32 %v1347, %v1362
        %v1387 = vadd.f32 %v1348, %v1362
        %v1388 = vadd.f32 %v1349, %v1362
        %v1389 = vadd.f32 %v1350, %v1362
        %v1390 = vadd.f32 %v1351, %v1362
        %v1391 = vadd.f32 %v1352, %v1362
        %v1392 = vadd.f32 %v1353, %v1362
        %v1393 = vadd.f32 %v1354, %v1362
        %v1394 = vadd.f32 %v1355, %v1362
        %v1395 = vadd.f32 %v1356, %v1362
        %v1396 = vmax.f32 %v1364, 0.0
        %v1397 = vmax.f32 %v1365, 0.0
        %v1398 = vmax.f32 %v1366, 0.0
        %v1399 = vmax.f32 %v1367, 0.0
        %v1400 = vmax.f32 %v1368, 0.0
        %v1401 = vmax.f32 %v1369, 0.0
        %v1402 = vmax.f32 %v1370, 0.0
        %v1403 = vmax.f32 %v1371, 0.0
        %v1404 = vmax.f32 %v1372, 0.0
        %v1405 = vmax.f32 %v1373, 0.0
        %v1406 = vmax.f32 %v1374, 0.0
        %v1407 = vmax.f32 %v1375, 0.0
        %v1408 = vmax.f32 %v1376, 0.0
        %v1409 = vmax.f32 %v1377, 0.0
        %v1410 = vmax.f32 %v1378, 0.0
        %v1411 = vmax.f32 %v1379, 0.0
        %v1412 = vmax.f32 %v1380, 0.0
        %v1413 = vmax.f32 %v1381, 0.0
        %v1414 = vmax.f32 %v1382, 0.0
        %v1415 = vmax.f32 %v1383, 0.0
        %v1416 = vmax.f32 %v1384, 0.0
        %v1417 = vmax.f32 %v1385, 0.0
        %v1418 = vmax.f32 %v1386, 0.0
        %v1419 = vmax.f32 %v1387, 0.0
        %v1420 = vmax.f32 %v1388, 0.0
        %v1421 = vmax.f32 %v1389, 0.0
        %v1422 = vmax.f32 %v1390, 0.0
        %v1423 = vmax.f32 %v1391, 0.0
        %v1424 = vmax.f32 %v1392, 0.0
        %v1425 = vmax.f32 %v1393, 0.0
        %v1426 = vmax.f32 %v1394, 0.0
        %v1427 = vmax.f32 %v1395, 0.0
        %v1428 = vpack.c.bf16 %v1397, %v1396
        %v1429 = vpack.c.bf16 %v1399, %v1398
        %v1430 = vpack.c.bf16 %v1401, %v1400
        %v1431 = vpack.c.bf16 %v1403, %v1402
        %v1432 = vpack.c.bf16 %v1405, %v1404
        %v1433 = vpack.c.bf16 %v1407, %v1406
        %v1434 = vpack.c.bf16 %v1409, %v1408
        %v1435 = vpack.c.bf16 %v1411, %v1410
        %v1436 = vpack.c.bf16 %v1413, %v1412
        %v1437 = vpack.c.bf16 %v1415, %v1414
        %v1438 = vpack.c.bf16 %v1417, %v1416
        %v1439 = vpack.c.bf16 %v1419, %v1418
        %v1440 = vpack.c.bf16 %v1421, %v1420
        %v1441 = vpack.c.bf16 %v1423, %v1422
        %v1442 = vpack.c.bf16 %v1425, %v1424
        %v1443 = vpack.c.bf16 %v1427, %v1426
        %v1460 = vunpack.c.l.b16 %v1428
        %v1461 = vunpack.c.h.b16 %v1428
        %v1462 = vunpack.c.l.b16 %v1429
        %v1463 = vunpack.c.h.b16 %v1429
        %v1464 = vunpack.c.l.b16 %v1430
        %v1465 = vunpack.c.h.b16 %v1430
        %v1466 = vunpack.c.l.b16 %v1431
        %v1467 = vunpack.c.h.b16 %v1431
        %v1468 = vunpack.c.l.b16 %v1432
        %v1469 = vunpack.c.h.b16 %v1432
        %v1470 = vunpack.c.l.b16 %v1433
        %v1471 = vunpack.c.h.b16 %v1433
        %v1472 = vunpack.c.l.b16 %v1434
        %v1473 = vunpack.c.h.b16 %v1434
        %v1474 = vunpack.c.l.b16 %v1435
        %v1475 = vunpack.c.h.b16 %v1435
        %v1476 = vunpack.c.l.b16 %v1436
        %v1477 = vunpack.c.h.b16 %v1436
        %v1478 = vunpack.c.l.b16 %v1437
        %v1479 = vunpack.c.h.b16 %v1437
        %v1480 = vunpack.c.l.b16 %v1438
        %v1481 = vunpack.c.h.b16 %v1438
        %v1482 = vunpack.c.l.b16 %v1439
        %v1483 = vunpack.c.h.b16 %v1439
        %v1484 = vunpack.c.l.b16 %v1440
        %v1485 = vunpack.c.h.b16 %v1440
        %v1486 = vunpack.c.l.b16 %v1441
        %v1487 = vunpack.c.h.b16 %v1441
        %v1488 = vunpack.c.l.b16 %v1442
        %v1489 = vunpack.c.h.b16 %v1442
        %v1490 = vunpack.c.l.b16 %v1443
        %v1491 = vunpack.c.h.b16 %v1443
        %v1492 = vpack.c.b16 %v1460, %v1460
        %v1493 = vpack.c.b16 %v1461, %v1461
        %v1494 = vpack.c.b16 %v1462, %v1462
        %v1495 = vpack.c.b16 %v1463, %v1463
        %v1496 = vpack.c.b16 %v1464, %v1464
        %v1497 = vpack.c.b16 %v1465, %v1465
        %v1498 = vpack.c.b16 %v1466, %v1466
        %v1499 = vpack.c.b16 %v1467, %v1467
        %v1500 = vpack.c.b16 %v1468, %v1468
        %v1501 = vpack.c.b16 %v1469, %v1469
        %v1502 = vpack.c.b16 %v1470, %v1470
        %v1503 = vpack.c.b16 %v1471, %v1471
        %v1504 = vpack.c.b16 %v1472, %v1472
        %v1505 = vpack.c.b16 %v1473, %v1473
        %v1506 = vpack.c.b16 %v1474, %v1474
        %v1507 = vpack.c.b16 %v1475, %v1475
        %v1508 = vpack.c.b16 %v1476, %v1476
        %v1509 = vpack.c.b16 %v1477, %v1477
        %v1510 = vpack.c.b16 %v1478, %v1478
        %v1511 = vpack.c.b16 %v1479, %v1479
        %v1512 = vpack.c.b16 %v1480, %v1480
        %v1513 = vpack.c.b16 %v1481, %v1481
        %v1514 = vpack.c.b16 %v1482, %v1482
        %v1515 = vpack.c.b16 %v1483, %v1483
        %v1516 = vpack.c.b16 %v1484, %v1484
        %v1517 = vpack.c.b16 %v1485, %v1485
        %v1518 = vpack.c.b16 %v1486, %v1486
        %v1519 = vpack.c.b16 %v1487, %v1487
        %v1520 = vpack.c.b16 %v1488, %v1488
        %v1521 = vpack.c.b16 %v1489, %v1489
        %v1522 = vpack.c.b16 %v1490, %v1490
        %v1523 = vpack.c.b16 %v1491, %v1491
        %1556 = vst [vmem:[%s225] sm:$0xf] %v1492
        %1557 = vst [vmem:[%s225 + $0x4] sm:$0xf] %v1493
        %1558 = vst [vmem:[%s225 + $0x8] sm:$0xf] %v1494
        %1559 = vst [vmem:[%s225 + $0xc] sm:$0xf] %v1495
        %1560 = vst [vmem:[%s225 + $0x10] sm:$0xf] %v1496
        %1561 = vst [vmem:[%s225 + $0x14] sm:$0xf] %v1497
        %1562 = vst [vmem:[%s225 + $0x18] sm:$0xf] %v1498
        %1563 = vst [vmem:[%s225 + $0x1c] sm:$0xf] %v1499
        %1564 = vst [vmem:[%s225 + $0x20] sm:$0xf] %v1500
        %1565 = vst [vmem:[%s225 + $0x24] sm:$0xf] %v1501
        %1566 = vst [vmem:[%s225 + $0x28] sm:$0xf] %v1502
        %1567 = vst [vmem:[%s225 + $0x2c] sm:$0xf] %v1503
        %1568 = vst [vmem:[%s225 + $0x30] sm:$0xf] %v1504
        %1569 = vst [vmem:[%s225 + $0x34] sm:$0xf] %v1505
        %1570 = vst [vmem:[%s225 + $0x38] sm:$0xf] %v1506
        %1571 = vst [vmem:[%s225 + $0x3c] sm:$0xf] %v1507
        %1572 = vst [vmem:[%s225 + $0x40] sm:$0xf] %v1508
        %1573 = vst [vmem:[%s225 + $0x44] sm:$0xf] %v1509
        %1574 = vst [vmem:[%s225 + $0x48] sm:$0xf] %v1510
        %1575 = vst [vmem:[%s225 + $0x4c] sm:$0xf] %v1511
        %1576 = vst [vmem:[%s225 + $0x50] sm:$0xf] %v1512
        %1577 = vst [vmem:[%s225 + $0x54] sm:$0xf] %v1513
        %1578 = vst [vmem:[%s225 + $0x58] sm:$0xf] %v1514
        %1579 = vst [vmem:[%s225 + $0x5c] sm:$0xf] %v1515
        %1580 = vst [vmem:[%s225 + $0x60] sm:$0xf] %v1516
        %1581 = vst [vmem:[%s225 + $0x64] sm:$0xf] %v1517
        %1582 = vst [vmem:[%s225 + $0x68] sm:$0xf] %v1518
        %1583 = vst [vmem:[%s225 + $0x6c] sm:$0xf] %v1519
        %1584 = vst [vmem:[%s225 + $0x70] sm:$0xf] %v1520
        %1585 = vst [vmem:[%s225 + $0x74] sm:$0xf] %v1521
        %1586 = vst [vmem:[%s225 + $0x78] sm:$0xf] %v1522
        %1587 = vst [vmem:[%s225 + $0x7c] sm:$0xf] %v1523
      $region40: #{network_forward.8} parent=31 // pred_fallthru
        _
      %s1588 = smul.u32 32, %s18
      %p1589 = scmp.lt.s32.totalorder %s1588, 63
      %s1590 = scalar_select %p1589, %s1588, 63
      %s1591 = smul.addr %s1590, 4
      %s1592 = scalar_lea.vmem %s3, %s1591
      // Predicated region
      $region41: #{network_forward.8} parent=31 // pred_check
        %p1593 = pneg %p119
      $region42: #{network_forward.8} parent=31 // pred_check_branch
        %1595 = sbr.rel (%p1593) target = $region44
      $region43: #{network_forward.8} parent=31 // pred_region
        %s1596 = smul.u32 32, %s18
      $region44: #{network_forward.8} parent=31 // pred_fallthru
        _
    $region32: #{network_forward.8} parent=5 // pred_fallthru
      _
    %p1597 = scmp.le.s32.totalorder 2, %s9
    // Predicated region
    $region45: #{network_forward.8} parent=5 // pred_check
      %p1598 = pneg %p1597
    $region46: #{network_forward.8} parent=5 // pred_check_branch
      %1600 = sbr.rel (%p1598) target = $region48
    $region47: #{network_forward.8} parent=5 // pred_region
      %s1601 = ssub.s32 %s9, 2
      // Predicated region
      $region49: #{network_forward.8} parent=47 // pred_check
        %p1602 = pneg %p125
      $region50: #{network_forward.8} parent=47 // pred_check_branch
        %1604 = sbr.rel (%p1602) target = $region52
      $region51: #{network_forward.8} parent=47 // pred_region
        %s1605 = smul.u32 32, %s20
        %p1606 = scmp.lt.s32.totalorder %s1605, 63
        %s1607 = scalar_select %p1606, %s1605, 63
        %s1608 = smul.addr %s1607, 4
        %s1609 = scalar_lea.vmem %s3, %s1608
      $region52: #{network_forward.8} parent=47 // pred_fallthru
        _
    $region48: #{network_forward.8} parent=5 // pred_fallthru
      _
  $region6: #{network_forward.8} parent=0 // loop_footer
    %s13 = sadd.s32 1, %s9
  $region7: #{network_forward.8} parent=0 // loop_footer_branch
    %8 = sbr.rel target = $region3
  $region8: #{network_forward.8} parent=0 // loop_exit
    _

// kernel: network_forward.9
$region0: #{network_forward.9}
  #allocation0 [shape = 'u32[]', space=smem, size = 0x4, offset = 0x4, fixed_abs, tag = 'smem constant byte address 0x4 - core index']
  #allocation1 [shape = 'u32[144,128]{1,0:T(1,128)}', space=vmem, size = 0x12000, scoped, tag = 'internal scratch']
  #allocation2 [shape = 'f32[256,128]{1,0:T(8,128)}', space=vmem, size = 0x20000, scoped, tag = 'scratch operand']
  %s0 = inlined_call_operand.vmem [shape: bf16[512,640], index: 0, kind: input, shape index: {}]
  %s1 = inlined_call_operand.vmem [shape: bf16[640,128], index: 1, kind: input, shape index: {}]
  %s2 = inlined_call_operand.vmem [shape: f32[1,128], index: 2, kind: input, shape index: {}]
  %s3 = inlined_call_operand.vmem [shape: bf16[512,128], index: 3, kind: output, shape index: {}]
  %s4 = sld [smem:[#allocation0]]
  $region53: #{network_forward.9} parent=0
    _
  %s6 = ssub.s32 1, %s4
  %s7 = scalar_select 0, %s6, %s4
  loop: start=0, step=1, limit=4
  $region2: #{network_forward.9} parent=0 // loop_pre_header
    _
  $region3: #{network_forward.9} parent=0 // loop_header
    %s9 = sphi 0, %s13
    %p10 = scmp.ge.s32.totalorder %s9, 4
    %s16 = sphi 0, %s28
    %s17 = sphi 0, %s24
    %s18 = sphi 0, %s16
    %s19 = sphi 0, %s17
    %s20 = sphi 0, %s18
    %s21 = sphi 0, %s19
    %s33 = sphi 0, %s35
    %s36 = sphi 0, %s33
    %s37 = sphi 0, %s36
    %s53 = sphi 0, %s37
    %s59 = sphi 0, %s61
    %s62 = sphi 0, %s59
    %s63 = sphi 0, %s62
    %s79 = sphi 0, %s63
    %s83 = sphi 0, %s83
    %s85 = sphi 0, %s83
    %s86 = sphi 0, %s85
    %s100 = sphi 0, %s86
    %s106 = sphi 0, %s108
    %s109 = sphi 0, %s106
    %s110 = sphi 0, %s109
    %s126 = sphi 0, %s110
  $region4: #{network_forward.9} parent=0 // loop_header_branch
    %12 = sbr.rel (%p10) target = $region8
  $region5: #{network_forward.9} parent=0 // loop_body
    %s14 = ssub.s32 %s9, 1
    %s15 = ssub.s32 %s9, 2
    %s22 = sadd.s32 1, %s17
    %p23 = scmp.ge.s32.totalorder %s22, 1
    %s24 = scalar_select %p23, 0, %s22
    %s25 = sadd.s32 1, %s16
    %s26 = scalar_select %p23, %s25, %s16
    %p27 = scmp.ge.s32.totalorder %s26, 2
    %s28 = scalar_select %p27, 0, %s26
    %s29 = ssub.s32 %s16, %s28
    %s30 = ssub.s32 %s17, %s24
    %s31 = sor.u32 %s29, %s30
    %p32 = scmp.eq.s32.totalorder %s31, 0
    %s34 = sadd.s32 %s33, 1
    %s35 = scalar_select %p32, %s33, %s34
    %p38 = pneg %p32
    %p39 = scmp.eq.s32.totalorder %s9, 1
    %p40 = por %p38, %p39
    %p41 = scmp.ne.s32.totalorder %s33, %s36
    %p42 = scmp.eq.s32.totalorder %s9, 0
    %p43 = por %p41, %p42
    %p44 = scmp.ne.s32.totalorder %s33, %s36
    %p45 = scmp.eq.s32.totalorder %s14, 1
    %p46 = por %p44, %p45
    %p47 = scmp.ne.s32.totalorder %s36, %s37
    %p48 = scmp.eq.s32.totalorder %s14, 0
    %p49 = por %p47, %p48
    %p50 = scmp.ne.s32.totalorder %s36, %s37
    %p51 = scmp.eq.s32.totalorder %s15, 1
    %p52 = por %p50, %p51
    %p54 = scmp.ne.s32.totalorder %s37, %s53
    %p55 = scmp.eq.s32.totalorder %s15, 0
    %p56 = por %p54, %p55
    %s57 = ssub.s32 %s17, %s24
    %p58 = scmp.eq.s32.totalorder %s57, 0
    %s60 = sadd.s32 %s59, 1
    %s61 = scalar_select %p58, %s59, %s60
    %p64 = pneg %p58
    %p65 = scmp.eq.s32.totalorder %s9, 1
    %p66 = por %p64, %p65
    %p67 = scmp.ne.s32.totalorder %s59, %s62
    %p68 = scmp.eq.s32.totalorder %s9, 0
    %p69 = por %p67, %p68
    %p70 = scmp.ne.s32.totalorder %s59, %s62
    %p71 = scmp.eq.s32.totalorder %s14, 1
    %p72 = por %p70, %p71
    %p73 = scmp.ne.s32.totalorder %s62, %s63
    %p74 = scmp.eq.s32.totalorder %s14, 0
    %p75 = por %p73, %p74
    %p76 = scmp.ne.s32.totalorder %s62, %s63
    %p77 = scmp.eq.s32.totalorder %s15, 1
    %p78 = por %p76, %p77
    %p80 = scmp.ne.s32.totalorder %s63, %s79
    %p81 = scmp.eq.s32.totalorder %s15, 0
    %p82 = por %p80, %p81
    %s84 = sadd.s32 %s83, 1
    %p87 = scmp.eq.s32.totalorder %s9, 1
    %p88 = scmp.ne.s32.totalorder %s83, %s85
    %p89 = scmp.eq.s32.totalorder %s9, 0
    %p90 = por %p88, %p89
    %p91 = scmp.ne.s32.totalorder %s83, %s85
    %p92 = scmp.eq.s32.totalorder %s14, 1
    %p93 = por %p91, %p92
    %p94 = scmp.ne.s32.totalorder %s85, %s86
    %p95 = scmp.eq.s32.totalorder %s14, 0
    %p96 = por %p94, %p95
    %p97 = scmp.ne.s32.totalorder %s85, %s86
    %p98 = scmp.eq.s32.totalorder %s15, 1
    %p99 = por %p97, %p98
    %p101 = scmp.ne.s32.totalorder %s86, %s100
    %p102 = scmp.eq.s32.totalorder %s15, 0
    %p103 = por %p101, %p102
    %s104 = ssub.s32 %s16, %s28
    %p105 = scmp.eq.s32.totalorder %s104, 0
    %s107 = sadd.s32 %s106, 1
    %s108 = scalar_select %p105, %s106, %s107
    %p111 = pneg %p105
    %p112 = scmp.eq.s32.totalorder %s9, 1
    %p113 = por %p111, %p112
    %p114 = scmp.ne.s32.totalorder %s106, %s109
    %p115 = scmp.eq.s32.totalorder %s9, 0
    %p116 = por %p114, %p115
    %p117 = scmp.ne.s32.totalorder %s106, %s109
    %p118 = scmp.eq.s32.totalorder %s14, 1
    %p119 = por %p117, %p118
    %p120 = scmp.ne.s32.totalorder %s109, %s110
    %p121 = scmp.eq.s32.totalorder %s14, 0
    %p122 = por %p120, %p121
    %p123 = scmp.ne.s32.totalorder %s109, %s110
    %p124 = scmp.eq.s32.totalorder %s15, 1
    %p125 = por %p123, %p124
    %p127 = scmp.ne.s32.totalorder %s110, %s126
    %p128 = scmp.eq.s32.totalorder %s15, 0
    %p129 = por %p127, %p128
    %p130 = scmp.le.s32.totalorder 1, %s9
    %p131 = scmp.lt.s32.totalorder %s9, 3
    %p132 = pnand %p130, %p131
    %p133 = pneg %p132
    // Predicated region
    $region9: #{network_forward.9} parent=5 // pred_check
      _
    $region10: #{network_forward.9} parent=5 // pred_check_branch
      %135 = sbr.rel (%p132) target = $region12
    $region11: #{network_forward.9} parent=5 // pred_region
      %s136 = ssub.s32 %s9, 1
      // Predicated region
      $region13: #{network_forward.9} parent=11 // pred_check
        %p137 = pneg %p75
      $region14: #{network_forward.9} parent=11 // pred_check_branch
        %139 = sbr.rel (%p137) target = $region16
      $region15: #{network_forward.9} parent=11 // pred_region
        %s140 = smul.u32 80, %s19
        %p141 = scmp.lt.s32.totalorder %s140, 79
        %s142 = scalar_select %p141, %s140, 79
        %s143 = smul.addr %s142, 4
        %s144 = scalar_lea.vmem %s1, %s143
        %s145 = smul.u32 80, %s19
      $region16: #{network_forward.9} parent=11 // pred_fallthru
        _
      // Predicated region
      $region17: #{network_forward.9} parent=11 // pred_check
        %p146 = pneg %p96
      $region18: #{network_forward.9} parent=11 // pred_check_branch
        %148 = sbr.rel (%p146) target = $region20
      $region19: #{network_forward.9} parent=11 // pred_region
        _
      $region20: #{network_forward.9} parent=11 // pred_fallthru
        _
    $region12: #{network_forward.9} parent=5 // pred_fallthru
      _
    %p149 = scmp.lt.s32.totalorder %s9, 2
    // Predicated region
    $region21: #{network_forward.9} parent=5 // pred_check
      %p150 = pneg %p149
    $region22: #{network_forward.9} parent=5 // pred_check_branch
      %152 = sbr.rel (%p150) target = $region24
    $region23: #{network_forward.9} parent=5 // pred_region
      // Predicated region
      $region25: #{network_forward.9} parent=23 // pred_check
        %p153 = pneg %p43
      $region26: #{network_forward.9} parent=23 // pred_check_branch
        %155 = sbr.rel (%p153) target = $region28
      $region27: #{network_forward.9} parent=23 // pred_region
        %s156 = smul.u32 32, %s16
        %s157 = smul.u32 5, %s17
        %p158 = scmp.lt.s32.totalorder %s156, 63
        %s159 = scalar_select %p158, %s156, 63
        %p160 = scmp.lt.s32.totalorder %s157, 4
        %s161 = scalar_select %p160, %s157, 4
        %s162 = smul.addr %s159, 5
        %s163 = sadd.s32 %s161, %s162
        %s164 = smul.addr %s163, 4
        %s165 = scalar_lea.vmem %s0, %s164
        %s166 = smul.u32 32, %s16
        %s167 = smul.u32 5, %s17
      $region28: #{network_forward.9} parent=23 // pred_fallthru
        _
    $region24: #{network_forward.9} parent=5 // pred_fallthru
      _
    %p168 = scmp.le.s32.totalorder 1, %s9
    %p169 = scmp.lt.s32.totalorder %s9, 3
    %p170 = pnand %p168, %p169
    %p171 = pneg %p170
    // Predicated region
    $region29: #{network_forward.9} parent=5 // pred_check
      _
    $region30: #{network_forward.9} parent=5 // pred_check_branch
      %173 = sbr.rel (%p170) target = $region32
    $region31: #{network_forward.9} parent=5 // pred_region
      %s174 = ssub.s32 %s9, 1
      %s175 = smul.u32 32, %s18
      %s176 = smul.u32 5, %s19
      %p177 = scmp.lt.s32.totalorder %s175, 63
      %s178 = scalar_select %p177, %s175, 63
      %p179 = scmp.lt.s32.totalorder %s176, 4
      %s180 = scalar_select %p179, %s176, 4
      %s181 = smul.addr %s178, 5
      %s182 = sadd.s32 %s180, %s181
      %s183 = smul.addr %s182, 4
      %s184 = scalar_lea.vmem %s0, %s183
      %p185 = pneg %p49
      %p186 = pneg %p46
      %s187 = smul.u32 80, %s19
      %p188 = scmp.lt.s32.totalorder %s187, 79
      %s189 = scalar_select %p188, %s187, 79
      %s190 = smul.addr %s189, 4
      %s191 = scalar_lea.vmem %s1, %s190
      %p192 = pneg %p75
      %p193 = pneg %p72
      %p194 = pneg %p96
      %p195 = pneg %p93
      %p196 = pneg %p122
      %p197 = pneg %p119
      %s198 = smul.u32 32, %s18
      %p199 = scmp.lt.s32.totalorder %s198, 63
      %s200 = scalar_select %p199, %s198, 63
      %s201 = smul.addr %s200, 4
      %s202 = scalar_lea.vmem %s3, %s201
      %s203 = smul.u32 32, %s18
      %s204 = smul.u32 5, %s19
      %p205 = scmp.lt.s32.totalorder %s203, 63
      %s206 = scalar_select %p205, %s203, 63
      %p207 = scmp.lt.s32.totalorder %s204, 4
      %s208 = scalar_select %p207, %s204, 4
      %s209 = smul.addr %s206, 5
      %s210 = sadd.s32 %s208, %s209
      %s211 = smul.addr %s210, 4
      %s212 = scalar_lea.vmem %s0, %s211
      %s213 = smul.u32 32, %s18
      %s214 = smul.u32 5, %s19
      %s215 = smul.u32 80, %s19
      %p216 = scmp.lt.s32.totalorder %s215, 79
      %s217 = scalar_select %p216, %s215, 79
      %s218 = smul.addr %s217, 4
      %s219 = scalar_lea.vmem %s1, %s218
      %s220 = smul.u32 80, %s19
      %s221 = smul.u32 32, %s18
      %p222 = scmp.lt.s32.totalorder %s221, 63
      %s223 = scalar_select %p222, %s221, 63
      %s224 = smul.addr %s223, 4
      %s225 = scalar_lea.vmem %s3, %s224
      %s226 = smul.u32 32, %s18
      %p228 = scmp.eq.s32.totalorder %s19, 0
      // Predicated region
      $region33: #{network_forward.9} parent=31 // pred_check
        %p229 = pneg %p228
      $region34: #{network_forward.9} parent=31 // pred_check_branch
        %231 = sbr.rel (%p229) target = $region36
      $region35: #{network_forward.9} parent=31 // pred_region
        %232 = vst [vmem:[#allocation2] sm:$0xff] 0.0
        %233 = vst [vmem:[#allocation2 + $0x8] sm:$0xff] 0.0
        %234 = vst [vmem:[#allocation2 + $0x10] sm:$0xff] 0.0
        %235 = vst [vmem:[#allocation2 + $0x18] sm:$0xff] 0.0
        %236 = vst [vmem:[#allocation2 + $0x20] sm:$0xff] 0.0
        %237 = vst [vmem:[#allocation2 + $0x28] sm:$0xff] 0.0
        %238 = vst [vmem:[#allocation2 + $0x30] sm:$0xff] 0.0
        %239 = vst [vmem:[#allocation2 + $0x38] sm:$0xff] 0.0
        %240 = vst [vmem:[#allocation2 + $0x40] sm:$0xff] 0.0
        %241 = vst [vmem:[#allocation2 + $0x48] sm:$0xff] 0.0
        %242 = vst [vmem:[#allocation2 + $0x50] sm:$0xff] 0.0
        %243 = vst [vmem:[#allocation2 + $0x58] sm:$0xff] 0.0
        %244 = vst [vmem:[#allocation2 + $0x60] sm:$0xff] 0.0
        %245 = vst [vmem:[#allocation2 + $0x68] sm:$0xff] 0.0
        %246 = vst [vmem:[#allocation2 + $0x70] sm:$0xff] 0.0
        %247 = vst [vmem:[#allocation2 + $0x78] sm:$0xff] 0.0
        %248 = vst [vmem:[#allocation2 + $0x80] sm:$0xff] 0.0
        %249 = vst [vmem:[#allocation2 + $0x88] sm:$0xff] 0.0
        %250 = vst [vmem:[#allocation2 + $0x90] sm:$0xff] 0.0
        %251 = vst [vmem:[#allocation2 + $0x98] sm:$0xff] 0.0
        %252 = vst [vmem:[#allocation2 + $0xa0] sm:$0xff] 0.0
        %253 = vst [vmem:[#allocation2 + $0xa8] sm:$0xff] 0.0
        %254 = vst [vmem:[#allocation2 + $0xb0] sm:$0xff] 0.0
        %255 = vst [vmem:[#allocation2 + $0xb8] sm:$0xff] 0.0
        %256 = vst [vmem:[#allocation2 + $0xc0] sm:$0xff] 0.0
        %257 = vst [vmem:[#allocation2 + $0xc8] sm:$0xff] 0.0
        %258 = vst [vmem:[#allocation2 + $0xd0] sm:$0xff] 0.0
        %259 = vst [vmem:[#allocation2 + $0xd8] sm:$0xff] 0.0
        %260 = vst [vmem:[#allocation2 + $0xe0] sm:$0xff] 0.0
        %261 = vst [vmem:[#allocation2 + $0xe8] sm:$0xff] 0.0
        %262 = vst [vmem:[#allocation2 + $0xf0] sm:$0xff] 0.0
        %263 = vst [vmem:[#allocation2 + $0xf8] sm:$0xff] 0.0
      $region36: #{network_forward.9} parent=31 // pred_fallthru
        _
      %v264 = vld [vmem:[#allocation2] sm:$0xff]
      %v265 = vld [vmem:[#allocation2 + $0x8] sm:$0xff]
      %v266 = vld [vmem:[#allocation2 + $0x10] sm:$0xff]
      %v267 = vld [vmem:[#allocation2 + $0x18] sm:$0xff]
      %v268 = vld [vmem:[#allocation2 + $0x20] sm:$0xff]
      %v269 = vld [vmem:[#allocation2 + $0x28] sm:$0xff]
      %v270 = vld [vmem:[#allocation2 + $0x30] sm:$0xff]
      %v271 = vld [vmem:[#allocation2 + $0x38] sm:$0xff]
      %v272 = vld [vmem:[#allocation2 + $0x40] sm:$0xff]
      %v273 = vld [vmem:[#allocation2 + $0x48] sm:$0xff]
      %v274 = vld [vmem:[#allocation2 + $0x50] sm:$0xff]
      %v275 = vld [vmem:[#allocation2 + $0x58] sm:$0xff]
      %v276 = vld [vmem:[#allocation2 + $0x60] sm:$0xff]
      %v277 = vld [vmem:[#allocation2 + $0x68] sm:$0xff]
      %v278 = vld [vmem:[#allocation2 + $0x70] sm:$0xff]
      %v279 = vld [vmem:[#allocation2 + $0x78] sm:$0xff]
      %v280 = vld [vmem:[#allocation2 + $0x80] sm:$0xff]
      %v281 = vld [vmem:[#allocation2 + $0x88] sm:$0xff]
      %v282 = vld [vmem:[#allocation2 + $0x90] sm:$0xff]
      %v283 = vld [vmem:[#allocation2 + $0x98] sm:$0xff]
      %v284 = vld [vmem:[#allocation2 + $0xa0] sm:$0xff]
      %v285 = vld [vmem:[#allocation2 + $0xa8] sm:$0xff]
      %v286 = vld [vmem:[#allocation2 + $0xb0] sm:$0xff]
      %v287 = vld [vmem:[#allocation2 + $0xb8] sm:$0xff]
      %v288 = vld [vmem:[#allocation2 + $0xc0] sm:$0xff]
      %v289 = vld [vmem:[#allocation2 + $0xc8] sm:$0xff]
      %v290 = vld [vmem:[#allocation2 + $0xd0] sm:$0xff]
      %v291 = vld [vmem:[#allocation2 + $0xd8] sm:$0xff]
      %v292 = vld [vmem:[#allocation2 + $0xe0] sm:$0xff]
      %v293 = vld [vmem:[#allocation2 + $0xe8] sm:$0xff]
      %v294 = vld [vmem:[#allocation2 + $0xf0] sm:$0xff]
      %v295 = vld [vmem:[#allocation2 + $0xf8] sm:$0xff]
      %v296 = vld [vmem:[%s212] sm:$0xff]
      %v297 = vld [vmem:[%s212 + $0x8] sm:$0xff]
      %v298 = vld [vmem:[%s212 + $0x10] sm:$0xf]
      %v299 = vld [vmem:[%s212 + $0x14] sm:$0xff]
      %v300 = vld [vmem:[%s212 + $0x1c] sm:$0xff]
      %v301 = vld [vmem:[%s212 + $0x24] sm:$0xf]
      %v302 = vld [vmem:[%s212 + $0x28] sm:$0xff]
      %v303 = vld [vmem:[%s212 + $0x30] sm:$0xff]
      %v304 = vld [vmem:[%s212 + $0x38] sm:$0xf]
      %v305 = vld [vmem:[%s212 + $0x3c] sm:$0xff]
      %v306 = vld [vmem:[%s212 + $0x44] sm:$0xff]
      %v307 = vld [vmem:[%s212 + $0x4c] sm:$0xf]
      %v308 = vld [vmem:[%s212 + $0x50] sm:$0xff]
      %v309 = vld [vmem:[%s212 + $0x58] sm:$0xff]
      %v310 = vld [vmem:[%s212 + $0x60] sm:$0xf]
      %v311 = vld [vmem:[%s212 + $0x64] sm:$0xff]
      %v312 = vld [vmem:[%s212 + $0x6c] sm:$0xff]
      %v313 = vld [vmem:[%s212 + $0x74] sm:$0xf]
      %v314 = vld [vmem:[%s212 + $0x78] sm:$0xff]
      %v315 = vld [vmem:[%s212 + $0x80] sm:$0xff]
      %v316 = vld [vmem:[%s212 + $0x88] sm:$0xf]
      %v317 = vld [vmem:[%s212 + $0x8c] sm:$0xff]
      %v318 = vld [vmem:[%s212 + $0x94] sm:$0xff]
      %v319 = vld [vmem:[%s212 + $0x9c] sm:$0xf]
      %v320 = vld [vmem:[%s212 + $0xa0] sm:$0xff]
      %v321 = vld [vmem:[%s212 + $0xa8] sm:$0xff]
      %v322 = vld [vmem:[%s212 + $0xb0] sm:$0xf]
      %v323 = vld [vmem:[%s212 + $0xb4] sm:$0xff]
      %v324 = vld [vmem:[%s212 + $0xbc] sm:$0xff]
      %v325 = vld [vmem:[%s212 + $0xc4] sm:$0xf]
      %v326 = vld [vmem:[%s212 + $0xc8] sm:$0xff]
      %v327 = vld [vmem:[%s212 + $0xd0] sm:$0xff]
      %v328 = vld [vmem:[%s212 + $0xd8] sm:$0xf]
      %v329 = vld [vmem:[%s212 + $0xdc] sm:$0xff]
      %v330 = vld [vmem:[%s212 + $0xe4] sm:$0xff]
      %v331 = vld [vmem:[%s212 + $0xec] sm:$0xf]
      %v332 = vld [vmem:[%s212 + $0xf0] sm:$0xff]
      %v333 = vld [vmem:[%s212 + $0xf8] sm:$0xff]
      %v334 = vld [vmem:[%s212 + $0x100] sm:$0xf]
      %v335 = vld [vmem:[%s212 + $0x104] sm:$0xff]
      %v336 = vld [vmem:[%s212 + $0x10c] sm:$0xff]
      %v337 = vld [vmem:[%s212 + $0x114] sm:$0xf]
      %v338 = vld [vmem:[%s212 + $0x118] sm:$0xff]
      %v339 = vld [vmem:[%s212 + $0x120] sm:$0xff]
      %v340 = vld [vmem:[%s212 + $0x128] sm:$0xf]
      %v341 = vld [vmem:[%s212 + $0x12c] sm:$0xff]
      %v342 = vld [vmem:[%s212 + $0x134] sm:$0xff]
      %v343 = vld [vmem:[%s212 + $0x13c] sm:$0xf]
      %v344 = vld [vmem:[%s212 + $0x140] sm:$0xff]
      %v345 = vld [vmem:[%s212 + $0x148] sm:$0xff]
      %v346 = vld [vmem:[%s212 + $0x150] sm:$0xf]
      %v347 = vld [vmem:[%s212 + $0x154] sm:$0xff]
      %v348 = vld [vmem:[%s212 + $0x15c] sm:$0xff]
      %v349 = vld [vmem:[%s212 + $0x164] sm:$0xf]
      %v350 = vld [vmem:[%s212 + $0x168] sm:$0xff]
      %v351 = vld [vmem:[%s212 + $0x170] sm:$0xff]
      %v352 = vld [vmem:[%s212 + $0x178] sm:$0xf]
      %v353 = vld [vmem:[%s212 + $0x17c] sm:$0xff]
      %v354 = vld [vmem:[%s212 + $0x184] sm:$0xff]
      %v355 = vld [vmem:[%s212 + $0x18c] sm:$0xf]
      %v356 = vld [vmem:[%s212 + $0x190] sm:$0xff]
      %v357 = vld [vmem:[%s212 + $0x198] sm:$0xff]
      %v358 = vld [vmem:[%s212 + $0x1a0] sm:$0xf]
      %v359 = vld [vmem:[%s212 + $0x1a4] sm:$0xff]
      %v360 = vld [vmem:[%s212 + $0x1ac] sm:$0xff]
      %v361 = vld [vmem:[%s212 + $0x1b4] sm:$0xf]
      %v362 = vld [vmem:[%s212 + $0x1b8] sm:$0xff]
      %v363 = vld [vmem:[%s212 + $0x1c0] sm:$0xff]
      %v364 = vld [vmem:[%s212 + $0x1c8] sm:$0xf]
      %v365 = vld [vmem:[%s212 + $0x1cc] sm:$0xff]
      %v366 = vld [vmem:[%s212 + $0x1d4] sm:$0xff]
      %v367 = vld [vmem:[%s212 + $0x1dc] sm:$0xf]
      %v368 = vld [vmem:[%s212 + $0x1e0] sm:$0xff]
      %v369 = vld [vmem:[%s212 + $0x1e8] sm:$0xff]
      %v370 = vld [vmem:[%s212 + $0x1f0] sm:$0xf]
      %v371 = vld [vmem:[%s212 + $0x1f4] sm:$0xff]
      %v372 = vld [vmem:[%s212 + $0x1fc] sm:$0xff]
      %v373 = vld [vmem:[%s212 + $0x204] sm:$0xf]
      %v374 = vld [vmem:[%s212 + $0x208] sm:$0xff]
      %v375 = vld [vmem:[%s212 + $0x210] sm:$0xff]
      %v376 = vld [vmem:[%s212 + $0x218] sm:$0xf]
      %v377 = vld [vmem:[%s212 + $0x21c] sm:$0xff]
      %v378 = vld [vmem:[%s212 + $0x224] sm:$0xff]
      %v379 = vld [vmem:[%s212 + $0x22c] sm:$0xf]
      %v380 = vld [vmem:[%s212 + $0x230] sm:$0xff]
      %v381 = vld [vmem:[%s212 + $0x238] sm:$0xff]
      %v382 = vld [vmem:[%s212 + $0x240] sm:$0xf]
      %v383 = vld [vmem:[%s212 + $0x244] sm:$0xff]
      %v384 = vld [vmem:[%s212 + $0x24c] sm:$0xff]
      %v385 = vld [vmem:[%s212 + $0x254] sm:$0xf]
      %v386 = vld [vmem:[%s212 + $0x258] sm:$0xff]
      %v387 = vld [vmem:[%s212 + $0x260] sm:$0xff]
      %v388 = vld [vmem:[%s212 + $0x268] sm:$0xf]
      %v389 = vld [vmem:[%s212 + $0x26c] sm:$0xff]
      %v390 = vld [vmem:[%s212 + $0x274] sm:$0xff]
      %v391 = vld [vmem:[%s212 + $0x27c] sm:$0xf]
      %v392 = vld [vmem:[%s219] sm:$0xf]
      %v393 = vld [vmem:[%s219 + $0x4] sm:$0xf]
      %v394 = vld [vmem:[%s219 + $0x8] sm:$0xf]
      %v395 = vld [vmem:[%s219 + $0xc] sm:$0xf]
      %v396 = vld [vmem:[%s219 + $0x10] sm:$0xf]
      %v397 = vld [vmem:[%s219 + $0x14] sm:$0xf]
      %v398 = vld [vmem:[%s219 + $0x18] sm:$0xf]
      %v399 = vld [vmem:[%s219 + $0x1c] sm:$0xf]
      %v400 = vld [vmem:[%s219 + $0x20] sm:$0xf]
      %v401 = vld [vmem:[%s219 + $0x24] sm:$0xf]
      %v402 = vld [vmem:[%s219 + $0x28] sm:$0xf]
      %v403 = vld [vmem:[%s219 + $0x2c] sm:$0xf]
      %v404 = vld [vmem:[%s219 + $0x30] sm:$0xf]
      %v405 = vld [vmem:[%s219 + $0x34] sm:$0xf]
      %v406 = vld [vmem:[%s219 + $0x38] sm:$0xf]
      %v407 = vld [vmem:[%s219 + $0x3c] sm:$0xf]
      %v408 = vld [vmem:[%s219 + $0x40] sm:$0xf]
      %v409 = vld [vmem:[%s219 + $0x44] sm:$0xf]
      %v410 = vld [vmem:[%s219 + $0x48] sm:$0xf]
      %v411 = vld [vmem:[%s219 + $0x4c] sm:$0xf]
      %v412 = vld [vmem:[%s219 + $0x50] sm:$0xf]
      %v413 = vld [vmem:[%s219 + $0x54] sm:$0xf]
      %v414 = vld [vmem:[%s219 + $0x58] sm:$0xf]
      %v415 = vld [vmem:[%s219 + $0x5c] sm:$0xf]
      %v416 = vld [vmem:[%s219 + $0x60] sm:$0xf]
      %v417 = vld [vmem:[%s219 + $0x64] sm:$0xf]
      %v418 = vld [vmem:[%s219 + $0x68] sm:$0xf]
      %v419 = vld [vmem:[%s219 + $0x6c] sm:$0xf]
      %v420 = vld [vmem:[%s219 + $0x70] sm:$0xf]
      %v421 = vld [vmem:[%s219 + $0x74] sm:$0xf]
      %v422 = vld [vmem:[%s219 + $0x78] sm:$0xf]
      %v423 = vld [vmem:[%s219 + $0x7c] sm:$0xf]
      %v424 = vld [vmem:[%s219 + $0x80] sm:$0xf]
      %v425 = vld [vmem:[%s219 + $0x84] sm:$0xf]
      %v426 = vld [vmem:[%s219 + $0x88] sm:$0xf]
      %v427 = vld [vmem:[%s219 + $0x8c] sm:$0xf]
      %v428 = vld [vmem:[%s219 + $0x90] sm:$0xf]
      %v429 = vld [vmem:[%s219 + $0x94] sm:$0xf]
      %v430 = vld [vmem:[%s219 + $0x98] sm:$0xf]
      %v431 = vld [vmem:[%s219 + $0x9c] sm:$0xf]
      %v432 = vld [vmem:[%s219 + $0xa0] sm:$0xf]
      %v433 = vld [vmem:[%s219 + $0xa4] sm:$0xf]
      %v434 = vld [vmem:[%s219 + $0xa8] sm:$0xf]
      %v435 = vld [vmem:[%s219 + $0xac] sm:$0xf]
      %v436 = vld [vmem:[%s219 + $0xb0] sm:$0xf]
      %v437 = vld [vmem:[%s219 + $0xb4] sm:$0xf]
      %v438 = vld [vmem:[%s219 + $0xb8] sm:$0xf]
      %v439 = vld [vmem:[%s219 + $0xbc] sm:$0xf]
      %v440 = vld [vmem:[%s219 + $0xc0] sm:$0xf]
      %v441 = vld [vmem:[%s219 + $0xc4] sm:$0xf]
      %v442 = vld [vmem:[%s219 + $0xc8] sm:$0xf]
      %v443 = vld [vmem:[%s219 + $0xcc] sm:$0xf]
      %v444 = vld [vmem:[%s219 + $0xd0] sm:$0xf]
      %v445 = vld [vmem:[%s219 + $0xd4] sm:$0xf]
      %v446 = vld [vmem:[%s219 + $0xd8] sm:$0xf]
      %v447 = vld [vmem:[%s219 + $0xdc] sm:$0xf]
      %v448 = vld [vmem:[%s219 + $0xe0] sm:$0xf]
      %v449 = vld [vmem:[%s219 + $0xe4] sm:$0xf]
      %v450 = vld [vmem:[%s219 + $0xe8] sm:$0xf]
      %v451 = vld [vmem:[%s219 + $0xec] sm:$0xf]
      %v452 = vld [vmem:[%s219 + $0xf0] sm:$0xf]
      %v453 = vld [vmem:[%s219 + $0xf4] sm:$0xf]
      %v454 = vld [vmem:[%s219 + $0xf8] sm:$0xf]
      %v455 = vld [vmem:[%s219 + $0xfc] sm:$0xf]
      %v456 = vld [vmem:[%s219 + $0x100] sm:$0xf]
      %v457 = vld [vmem:[%s219 + $0x104] sm:$0xf]
      %v458 = vld [vmem:[%s219 + $0x108] sm:$0xf]
      %v459 = vld [vmem:[%s219 + $0x10c] sm:$0xf]
      %v460 = vld [vmem:[%s219 + $0x110] sm:$0xf]
      %v461 = vld [vmem:[%s219 + $0x114] sm:$0xf]
      %v462 = vld [vmem:[%s219 + $0x118] sm:$0xf]
      %v463 = vld [vmem:[%s219 + $0x11c] sm:$0xf]
      %v464 = vld [vmem:[%s219 + $0x120] sm:$0xf]
      %v465 = vld [vmem:[%s219 + $0x124] sm:$0xf]
      %v466 = vld [vmem:[%s219 + $0x128] sm:$0xf]
      %v467 = vld [vmem:[%s219 + $0x12c] sm:$0xf]
      %v468 = vld [vmem:[%s219 + $0x130] sm:$0xf]
      %v469 = vld [vmem:[%s219 + $0x134] sm:$0xf]
      %v470 = vld [vmem:[%s219 + $0x138] sm:$0xf]
      %v471 = vld [vmem:[%s219 + $0x13c] sm:$0xf]
      %v568 = vunpack.c.l.b16 %v296
      %v569 = vunpack.c.h.b16 %v296
      %v570 = vunpack.c.l.b16 %v297
      %v571 = vunpack.c.h.b16 %v297
      %v572 = vunpack.c.l.b16 %v298
      %v573 = vunpack.c.l.b16 %v299
      %v574 = vunpack.c.h.b16 %v299
      %v575 = vunpack.c.l.b16 %v300
      %v576 = vunpack.c.h.b16 %v300
      %v577 = vunpack.c.l.b16 %v301
      %v578 = vunpack.c.l.b16 %v302
      %v579 = vunpack.c.h.b16 %v302
      %v580 = vunpack.c.l.b16 %v303
      %v581 = vunpack.c.h.b16 %v303
      %v582 = vunpack.c.l.b16 %v304
      %v583 = vunpack.c.l.b16 %v305
      %v584 = vunpack.c.h.b16 %v305
      %v585 = vunpack.c.l.b16 %v306
      %v586 = vunpack.c.h.b16 %v306
      %v587 = vunpack.c.l.b16 %v307
      %v588 = vunpack.c.l.b16 %v308
      %v589 = vunpack.c.h.b16 %v308
      %v590 = vunpack.c.l.b16 %v309
      %v591 = vunpack.c.h.b16 %v309
      %v592 = vunpack.c.l.b16 %v310
      %v593 = vunpack.c.l.b16 %v311
      %v594 = vunpack.c.h.b16 %v311
      %v595 = vunpack.c.l.b16 %v312
      %v596 = vunpack.c.h.b16 %v312
      %v597 = vunpack.c.l.b16 %v313
      %v598 = vunpack.c.l.b16 %v314
      %v599 = vunpack.c.h.b16 %v314
      %v600 = vunpack.c.l.b16 %v315
      %v601 = vunpack.c.h.b16 %v315
      %v602 = vunpack.c.l.b16 %v316
      %v603 = vunpack.c.l.b16 %v317
      %v604 = vunpack.c.h.b16 %v317
      %v605 = vunpack.c.l.b16 %v318
      %v606 = vunpack.c.h.b16 %v318
      %v607 = vunpack.c.l.b16 %v319
      %v608 = vunpack.c.l.b16 %v320
      %v609 = vunpack.c.h.b16 %v320
      %v610 = vunpack.c.l.b16 %v321
      %v611 = vunpack.c.h.b16 %v321
      %v612 = vunpack.c.l.b16 %v322
      %v613 = vunpack.c.l.b16 %v323
      %v614 = vunpack.c.h.b16 %v323
      %v615 = vunpack.c.l.b16 %v324
      %v616 = vunpack.c.h.b16 %v324
      %v617 = vunpack.c.l.b16 %v325
      %v618 = vunpack.c.l.b16 %v326
      %v619 = vunpack.c.h.b16 %v326
      %v620 = vunpack.c.l.b16 %v327
      %v621 = vunpack.c.h.b16 %v327
      %v622 = vunpack.c.l.b16 %v328
      %v623 = vunpack.c.l.b16 %v329
      %v624 = vunpack.c.h.b16 %v329
      %v625 = vunpack.c.l.b16 %v330
      %v626 = vunpack.c.h.b16 %v330
      %v627 = vunpack.c.l.b16 %v331
      %v628 = vunpack.c.l.b16 %v332
      %v629 = vunpack.c.h.b16 %v332
      %v630 = vunpack.c.l.b16 %v333
      %v631 = vunpack.c.h.b16 %v333
      %v632 = vunpack.c.l.b16 %v334
      %v633 = vunpack.c.l.b16 %v335
      %v634 = vunpack.c.h.b16 %v335
      %v635 = vunpack.c.l.b16 %v336
      %v636 = vunpack.c.h.b16 %v336
      %v637 = vunpack.c.l.b16 %v337
      %v638 = vunpack.c.l.b16 %v338
      %v639 = vunpack.c.h.b16 %v338
      %v640 = vunpack.c.l.b16 %v339
      %v641 = vunpack.c.h.b16 %v339
      %v642 = vunpack.c.l.b16 %v340
      %v643 = vunpack.c.l.b16 %v341
      %v644 = vunpack.c.h.b16 %v341
      %v645 = vunpack.c.l.b16 %v342
      %v646 = vunpack.c.h.b16 %v342
      %v647 = vunpack.c.l.b16 %v343
      %v648 = vunpack.c.l.b16 %v344
      %v649 = vunpack.c.h.b16 %v344
      %v650 = vunpack.c.l.b16 %v345
      %v651 = vunpack.c.h.b16 %v345
      %v652 = vunpack.c.l.b16 %v346
      %v653 = vunpack.c.l.b16 %v347
      %v654 = vunpack.c.h.b16 %v347
      %v655 = vunpack.c.l.b16 %v348
      %v656 = vunpack.c.h.b16 %v348
      %v657 = vunpack.c.l.b16 %v349
      %v658 = vunpack.c.l.b16 %v350
      %v659 = vunpack.c.h.b16 %v350
      %v660 = vunpack.c.l.b16 %v351
      %v661 = vunpack.c.h.b16 %v351
      %v662 = vunpack.c.l.b16 %v352
      %v663 = vunpack.c.l.b16 %v353
      %v664 = vunpack.c.h.b16 %v353
      %v665 = vunpack.c.l.b16 %v354
      %v666 = vunpack.c.h.b16 %v354
      %v667 = vunpack.c.l.b16 %v355
      %v668 = vunpack.c.l.b16 %v356
      %v669 = vunpack.c.h.b16 %v356
      %v670 = vunpack.c.l.b16 %v357
      %v671 = vunpack.c.h.b16 %v357
      %v672 = vunpack.c.l.b16 %v358
      %v673 = vunpack.c.l.b16 %v359
      %v674 = vunpack.c.h.b16 %v359
      %v675 = vunpack.c.l.b16 %v360
      %v676 = vunpack.c.h.b16 %v360
      %v677 = vunpack.c.l.b16 %v361
      %v678 = vunpack.c.l.b16 %v362
      %v679 = vunpack.c.h.b16 %v362
      %v680 = vunpack.c.l.b16 %v363
      %v681 = vunpack.c.h.b16 %v363
      %v682 = vunpack.c.l.b16 %v364
      %v683 = vunpack.c.l.b16 %v365
      %v684 = vunpack.c.h.b16 %v365
      %v685 = vunpack.c.l.b16 %v366
      %v686 = vunpack.c.h.b16 %v366
      %v687 = vunpack.c.l.b16 %v367
      %v688 = vunpack.c.l.b16 %v368
      %v689 = vunpack.c.h.b16 %v368
      %v690 = vunpack.c.l.b16 %v369
      %v691 = vunpack.c.h.b16 %v369
      %v692 = vunpack.c.l.b16 %v370
      %v693 = vunpack.c.l.b16 %v371
      %v694 = vunpack.c.h.b16 %v371
      %v695 = vunpack.c.l.b16 %v372
      %v696 = vunpack.c.h.b16 %v372
      %v697 = vunpack.c.l.b16 %v373
      %v698 = vunpack.c.l.b16 %v374
      %v699 = vunpack.c.h.b16 %v374
      %v700 = vunpack.c.l.b16 %v375
      %v701 = vunpack.c.h.b16 %v375
      %v702 = vunpack.c.l.b16 %v376
      %v703 = vunpack.c.l.b16 %v377
      %v704 = vunpack.c.h.b16 %v377
      %v705 = vunpack.c.l.b16 %v378
      %v706 = vunpack.c.h.b16 %v378
      %v707 = vunpack.c.l.b16 %v379
      %v708 = vunpack.c.l.b16 %v380
      %v709 = vunpack.c.h.b16 %v380
      %v710 = vunpack.c.l.b16 %v381
      %v711 = vunpack.c.h.b16 %v381
      %v712 = vunpack.c.l.b16 %v382
      %v713 = vunpack.c.l.b16 %v383
      %v714 = vunpack.c.h.b16 %v383
      %v715 = vunpack.c.l.b16 %v384
      %v716 = vunpack.c.h.b16 %v384
      %v717 = vunpack.c.l.b16 %v385
      %v718 = vunpack.c.l.b16 %v386
      %v719 = vunpack.c.h.b16 %v386
      %v720 = vunpack.c.l.b16 %v387
      %v721 = vunpack.c.h.b16 %v387
      %v722 = vunpack.c.l.b16 %v388
      %v723 = vunpack.c.l.b16 %v389
      %v724 = vunpack.c.h.b16 %v389
      %v725 = vunpack.c.l.b16 %v390
      %v726 = vunpack.c.h.b16 %v390
      %v727 = vunpack.c.l.b16 %v391
      %v728 = vpack.c.b16 %v573, %v568
      %v729 = vpack.c.b16 %v574, %v569
      %v730 = vpack.c.b16 %v575, %v570
      %v731 = vpack.c.b16 %v576, %v571
      %v732 = vpack.c.b16 %v577, %v572
      %v733 = vpack.c.b16 %v583, %v578
      %v734 = vpack.c.b16 %v584, %v579
      %v735 = vpack.c.b16 %v585, %v580
      %v736 = vpack.c.b16 %v586, %v581
      %v737 = vpack.c.b16 %v587, %v582
      %v738 = vpack.c.b16 %v593, %v588
      %v739 = vpack.c.b16 %v594, %v589
      %v740 = vpack.c.b16 %v595, %v590
      %v741 = vpack.c.b16 %v596, %v591
      %v742 = vpack.c.b16 %v597, %v592
      %v743 = vpack.c.b16 %v603, %v598
      %v744 = vpack.c.b16 %v604, %v599
      %v745 = vpack.c.b16 %v605, %v600
      %v746 = vpack.c.b16 %v606, %v601
      %v747 = vpack.c.b16 %v607, %v602
      %v748 = vpack.c.b16 %v613, %v608
      %v749 = vpack.c.b16 %v614, %v609
      %v750 = vpack.c.b16 %v615, %v610
      %v751 = vpack.c.b16 %v616, %v611
      %v752 = vpack.c.b16 %v617, %v612
      %v753 = vpack.c.b16 %v623, %v618
      %v754 = vpack.c.b16 %v624, %v619
      %v755 = vpack.c.b16 %v625, %v620
      %v756 = vpack.c.b16 %v626, %v621
      %v757 = vpack.c.b16 %v627, %v622
      %v758 = vpack.c.b16 %v633, %v628
      %v759 = vpack.c.b16 %v634, %v629
      %v760 = vpack.c.b16 %v635, %v630
      %v761 = vpack.c.b16 %v636, %v631
      %v762 = vpack.c.b16 %v637, %v632
      %v763 = vpack.c.b16 %v643, %v638
      %v764 = vpack.c.b16 %v644, %v639
      %v765 = vpack.c.b16 %v645, %v640
      %v766 = vpack.c.b16 %v646, %v641
      %v767 = vpack.c.b16 %v647, %v642
      %v768 = vpack.c.b16 %v653, %v648
      %v769 = vpack.c.b16 %v654, %v649
      %v770 = vpack.c.b16 %v655, %v650
      %v771 = vpack.c.b16 %v656, %v651
      %v772 = vpack.c.b16 %v657, %v652
      %v773 = vpack.c.b16 %v663, %v658
      %v774 = vpack.c.b16 %v664, %v659
      %v775 = vpack.c.b16 %v665, %v660
      %v776 = vpack.c.b16 %v666, %v661
      %v777 = vpack.c.b16 %v667, %v662
      %v778 = vpack.c.b16 %v673, %v668
      %v779 = vpack.c.b16 %v674, %v669
      %v780 = vpack.c.b16 %v675, %v670
      %v781 = vpack.c.b16 %v676, %v671
      %v782 = vpack.c.b16 %v677, %v672
      %v783 = vpack.c.b16 %v683, %v678
      %v784 = vpack.c.b16 %v684, %v679
      %v785 = vpack.c.b16 %v685, %v680
      %v786 = vpack.c.b16 %v686, %v681
      %v787 = vpack.c.b16 %v687, %v682
      %v788 = vpack.c.b16 %v693, %v688
      %v789 = vpack.c.b16 %v694, %v689
      %v790 = vpack.c.b16 %v695, %v690
      %v791 = vpack.c.b16 %v696, %v691
      %v792 = vpack.c.b16 %v697, %v692
      %v793 = vpack.c.b16 %v703, %v698
      %v794 = vpack.c.b16 %v704, %v699
      %v795 = vpack.c.b16 %v705, %v700
      %v796 = vpack.c.b16 %v706, %v701
      %v797 = vpack.c.b16 %v707, %v702
      %v798 = vpack.c.b16 %v713, %v708
      %v799 = vpack.c.b16 %v714, %v709
      %v800 = vpack.c.b16 %v715, %v710
      %v801 = vpack.c.b16 %v716, %v711
      %v802 = vpack.c.b16 %v717, %v712
      %v803 = vpack.c.b16 %v723, %v718
      %v804 = vpack.c.b16 %v724, %v719
      %v805 = vpack.c.b16 %v725, %v720
      %v806 = vpack.c.b16 %v726, %v721
      %v807 = vpack.c.b16 %v727, %v722
      %v968 = vunpack.c.l.b16 %v392
      %v969 = vunpack.c.l.b16 %v393
      %v970 = vunpack.c.l.b16 %v394
      %v971 = vunpack.c.l.b16 %v395
      %v972 = vunpack.c.l.b16 %v396
      %v973 = vunpack.c.l.b16 %v397
      %v974 = vunpack.c.l.b16 %v398
      %v975 = vunpack.c.l.b16 %v399
      %v976 = vunpack.c.l.b16 %v400
      %v977 = vunpack.c.l.b16 %v401
      %v978 = vunpack.c.l.b16 %v402
      %v979 = vunpack.c.l.b16 %v403
      %v980 = vunpack.c.l.b16 %v404
      %v981 = vunpack.c.l.b16 %v405
      %v982 = vunpack.c.l.b16 %v406
      %v983 = vunpack.c.l.b16 %v407
      %v984 = vunpack.c.l.b16 %v408
      %v985 = vunpack.c.l.b16 %v409
      %v986 = vunpack.c.l.b16 %v410
      %v987 = vunpack.c.l.b16 %v411
      %v988 = vunpack.c.l.b16 %v412
      %v989 = vunpack.c.l.b16 %v413
      %v990 = vunpack.c.l.b16 %v414
      %v991 = vunpack.c.l.b16 %v415
      %v992 = vunpack.c.l.b16 %v416
      %v993 = vunpack.c.l.b16 %v417
      %v994 = vunpack.c.l.b16 %v418
      %v995 = vunpack.c.l.b16 %v419
      %v996 = vunpack.c.l.b16 %v420
      %v997 = vunpack.c.l.b16 %v421
      %v998 = vunpack.c.l.b16 %v422
      %v999 = vunpack.c.l.b16 %v423
      %v1000 = vunpack.c.l.b16 %v424
      %v1001 = vunpack.c.l.b16 %v425
      %v1002 = vunpack.c.l.b16 %v426
      %v1003 = vunpack.c.l.b16 %v427
      %v1004 = vunpack.c.l.b16 %v428
      %v1005 = vunpack.c.l.b16 %v429
      %v1006 = vunpack.c.l.b16 %v430
      %v1007 = vunpack.c.l.b16 %v431
      %v1008 = vunpack.c.l.b16 %v432
      %v1009 = vunpack.c.l.b16 %v433
      %v1010 = vunpack.c.l.b16 %v434
      %v1011 = vunpack.c.l.b16 %v435
      %v1012 = vunpack.c.l.b16 %v436
      %v1013 = vunpack.c.l.b16 %v437
      %v1014 = vunpack.c.l.b16 %v438
      %v1015 = vunpack.c.l.b16 %v439
      %v1016 = vunpack.c.l.b16 %v440
      %v1017 = vunpack.c.l.b16 %v441
      %v1018 = vunpack.c.l.b16 %v442
      %v1019 = vunpack.c.l.b16 %v443
      %v1020 = vunpack.c.l.b16 %v444
      %v1021 = vunpack.c.l.b16 %v445
      %v1022 = vunpack.c.l.b16 %v446
      %v1023 = vunpack.c.l.b16 %v447
      %v1024 = vunpack.c.l.b16 %v448
      %v1025 = vunpack.c.l.b16 %v449
      %v1026 = vunpack.c.l.b16 %v450
      %v1027 = vunpack.c.l.b16 %v451
      %v1028 = vunpack.c.l.b16 %v452
      %v1029 = vunpack.c.l.b16 %v453
      %v1030 = vunpack.c.l.b16 %v454
      %v1031 = vunpack.c.l.b16 %v455
      %v1032 = vunpack.c.l.b16 %v456
      %v1033 = vunpack.c.l.b16 %v457
      %v1034 = vunpack.c.l.b16 %v458
      %v1035 = vunpack.c.l.b16 %v459
      %v1036 = vunpack.c.l.b16 %v460
      %v1037 = vunpack.c.l.b16 %v461
      %v1038 = vunpack.c.l.b16 %v462
      %v1039 = vunpack.c.l.b16 %v463
      %v1040 = vunpack.c.l.b16 %v464
      %v1041 = vunpack.c.l.b16 %v465
      %v1042 = vunpack.c.l.b16 %v466
      %v1043 = vunpack.c.l.b16 %v467
      %v1044 = vunpack.c.l.b16 %v468
      %v1045 = vunpack.c.l.b16 %v469
      %v1046 = vunpack.c.l.b16 %v470
      %v1047 = vunpack.c.l.b16 %v471
      %v1048 = vpack.c.b16 %v969, %v968
      %v1049 = vpack.c.b16 %v971, %v970
      %v1050 = vpack.c.b16 %v973, %v972
      %v1051 = vpack.c.b16 %v975, %v974
      %v1052 = vpack.c.b16 %v977, %v976
      %v1053 = vpack.c.b16 %v979, %v978
      %v1054 = vpack.c.b16 %v981, %v980
      %v1055 = vpack.c.b16 %v983, %v982
      %v1056 = vpack.c.b16 %v985, %v984
      %v1057 = vpack.c.b16 %v987, %v986
      %v1058 = vpack.c.b16 %v989, %v988
      %v1059 = vpack.c.b16 %v991, %v990
      %v1060 = vpack.c.b16 %v993, %v992
      %v1061 = vpack.c.b16 %v995, %v994
      %v1062 = vpack.c.b16 %v997, %v996
      %v1063 = vpack.c.b16 %v999, %v998
      %v1064 = vpack.c.b16 %v1001, %v1000
      %v1065 = vpack.c.b16 %v1003, %v1002
      %v1066 = vpack.c.b16 %v1005, %v1004
      %v1067 = vpack.c.b16 %v1007, %v1006
      %v1068 = vpack.c.b16 %v1009, %v1008
      %v1069 = vpack.c.b16 %v1011, %v1010
      %v1070 = vpack.c.b16 %v1013, %v1012
      %v1071 = vpack.c.b16 %v1015, %v1014
      %v1072 = vpack.c.b16 %v1017, %v1016
      %v1073 = vpack.c.b16 %v1019, %v1018
      %v1074 = vpack.c.b16 %v1021, %v1020
      %v1075 = vpack.c.b16 %v1023, %v1022
      %v1076 = vpack.c.b16 %v1025, %v1024
      %v1077 = vpack.c.b16 %v1027, %v1026
      %v1078 = vpack.c.b16 %v1029, %v1028
      %v1079 = vpack.c.b16 %v1031, %v1030
      %v1080 = vpack.c.b16 %v1033, %v1032
      %v1081 = vpack.c.b16 %v1035, %v1034
      %v1082 = vpack.c.b16 %v1037, %v1036
      %v1083 = vpack.c.b16 %v1039, %v1038
      %v1084 = vpack.c.b16 %v1041, %v1040
      %v1085 = vpack.c.b16 %v1043, %v1042
      %v1086 = vpack.c.b16 %v1045, %v1044
      %v1087 = vpack.c.b16 %v1047, %v1046
      %1128 = vmatprep.subr.bf16.mxu0 0
      %1129 = vmatpush1.bf16.msra.mxu0 %v1048
      %1130 = vmatprep.subr.bf16.mxu0 0
      %1131 = vmatpush1.bf16.msra.mxu0 %v1049
      %1132 = vmatprep.subr.bf16.mxu0 0
      %1133 = vmatpush1.bf16.msra.mxu0 %v1050
      %1134 = vmatprep.subr.bf16.mxu0 0
      %1135 = vmatpush1.bf16.msra.mxu0 %v1051
      %1136 = vmatprep.subr.bf16.mxu0 0
      %1137 = vmatpush1.bf16.msra.mxu0 %v1052
      %1138 = vmatprep.subr.bf16.mxu0 0
      %1139 = vmatpush1.bf16.msra.mxu0 %v1053
      %1140 = vmatprep.subr.bf16.mxu0 0
      %1141 = vmatpush1.bf16.msra.mxu0 %v1054
      %1142 = vmatprep.subr.bf16.mxu0 0
      %1143 = vmatpush1.bf16.msra.mxu0 %v1055
      %1144 = vmatprep.subr.bf16.mxu0 0
      %1145 = vmatpush1.bf16.msra.mxu0 %v1056
      %1146 = vmatprep.subr.bf16.mxu0 0
      %1147 = vmatpush1.bf16.msra.mxu0 %v1057
      %1148 = vmatprep.subr.bf16.mxu0 0
      %1149 = vmatpush1.bf16.msra.mxu0 %v1058
      %1150 = vmatprep.subr.bf16.mxu0 0
      %1151 = vmatpush1.bf16.msra.mxu0 %v1059
      %1152 = vmatprep.subr.bf16.mxu0 0
      %1153 = vmatpush1.bf16.msra.mxu0 %v1060
      %1154 = vmatprep.subr.bf16.mxu0 0
      %1155 = vmatpush1.bf16.msra.mxu0 %v1061
      %1156 = vmatprep.subr.bf16.mxu0 0
      %1157 = vmatpush1.bf16.msra.mxu0 %v1062
      %1158 = vmatprep.subr.bf16.mxu0 0
      %1159 = vmatpush1.bf16.msra.mxu0 %v1063
      %1160 = vmatprep.mubr.bf16.mxu0 %v729
      %1161 = vmatmul.mubr.bf16.gmra.mrb[0].mxu0 %v728
      %v1162 = vpop.f32.mrb[0].mxu0
      %v1163 = vadd.f32 0.0, %v1162
      %v1164 = vpop.f32.mrb[0].mxu0
      %v1165 = vpop.f32.mrb[0].mxu0
      %v1166 = vadd.f32 0.0, %v1165
      %v1167 = vpop.f32.mrb[0].mxu0
      %1168 = vmatprep.mubr.bf16.mxu0 %v734
      %1169 = vmatmul.mubr.bf16.gmra.mrb[0].mxu0 %v733
      %v1170 = vpop.f32.mrb[0].mxu0
      %v1171 = vadd.f32 0.0, %v1170
      %v1172 = vpop.f32.mrb[0].mxu0
      %v1173 = vpop.f32.mrb[0].mxu0
      %v1174 = vadd.f32 0.0, %v1173
      %v1175 = vpop.f32.mrb[0].mxu0
      %1176 = vmatprep.mubr.bf16.mxu0 %v739
      %1177 = vmatmul.mubr.bf16.gmra.mrb[0].mxu0 %v738
      %v1178 = vpop.f32.mrb[0].mxu0
      %v1179 = vadd.f32 0.0, %v1178
      %v1180 = vpop.f32.mrb[0].mxu0
      %v1181 = vpop.f32.mrb[0].mxu0
      %v1182 = vadd.f32 0.0, %v1181
      %v1183 = vpop.f32.mrb[0].mxu0
      %1184 = vmatprep.mubr.bf16.mxu0 %v744
      %1185 = vmatmul.mubr.bf16.gmra.mrb[0].mxu0 %v743
      %v1186 = vpop.f32.mrb[0].mxu0
      %v1187 = vadd.f32 0.0, %v1186
      %v1188 = vpop.f32.mrb[0].mxu0
      %v1189 = vpop.f32.mrb[0].mxu0
      %v1190 = vadd.f32 0.0, %v1189
      %v1191 = vpop.f32.mrb[0].mxu0
      %1192 = vmatprep.mubr.bf16.mxu0 %v749
      %1193 = vmatmul.mubr.bf16.gmra.mrb[0].mxu0 %v748
      %v1194 = vpop.f32.mrb[0].mxu0
      %v1195 = vadd.f32 0.0, %v1194
      %v1196 = vpop.f32.mrb[0].mxu0
      %v1197 = vpop.f32.mrb[0].mxu0
      %v1198 = vadd.f32 0.0, %v1197
      %v1199 = vpop.f32.mrb[0].mxu0
      %1200 = vmatprep.mubr.bf16.mxu0 %v754
      %1201 = vmatmul.mubr.bf16.gmra.mrb[0].mxu0 %v753
      %v1202 = vpop.f32.mrb[0].mxu0
      %v1203 = vadd.f32 0.0, %v1202
      %v1204 = vpop.f32.mrb[0].mxu0
      %v1205 = vpop.f32.mrb[0].mxu0
      %v1206 = vadd.f32 0.0, %v1205
      %v1207 = vpop.f32.mrb[0].mxu0
      %1208 = vmatprep.mubr.bf16.mxu0 %v759
      %1209 = vmatmul.mubr.bf16.gmra.mrb[0].mxu0 %v758
      %v1210 = vpop.f32.mrb[0].mxu0
      %v1211 = vadd.f32 0.0, %v1210
      %v1212 = vpop.f32.mrb[0].mxu0
      %v1213 = vpop.f32.mrb[0].mxu0
      %v1214 = vadd.f32 0.0, %v1213
      %v1215 = vpop.f32.mrb[0].mxu0
      %1216 = vmatprep.mubr.bf16.mxu0 %v764
      %1217 = vmatmul.mubr.bf16.gmra.mrb[0].mxu0 %v763
      %v1218 = vpop.f32.mrb[0].mxu0
      %v1219 = vadd.f32 0.0, %v1218
      %v1220 = vpop.f32.mrb[0].mxu0
      %v1221 = vpop.f32.mrb[0].mxu0
      %v1222 = vadd.f32 0.0, %v1221
      %v1223 = vpop.f32.mrb[0].mxu0
      %1224 = vmatprep.mubr.bf16.mxu0 %v769
      %1225 = vmatmul.mubr.bf16.gmra.mrb[0].mxu0 %v768
      %v1226 = vpop.f32.mrb[0].mxu0
      %v1227 = vadd.f32 0.0, %v1226
      %v1228 = vpop.f32.mrb[0].mxu0
      %v1229 = vpop.f32.mrb[0].mxu0
      %v1230 = vadd.f32 0.0, %v1229
      %v1231 = vpop.f32.mrb[0].mxu0
      %1232 = vmatprep.mubr.bf16.mxu0 %v774
      %1233 = vmatmul.mubr.bf16.gmra.mrb[0].mxu0 %v773
      %v1234 = vpop.f32.mrb[0].mxu0
      %v1235 = vadd.f32 0.0, %v1234
      %v1236 = vpop.f32.mrb[0].mxu0
      %v1237 = vpop.f32.mrb[0].mxu0
      %v1238 = vadd.f32 0.0, %v1237
      %v1239 = vpop.f32.mrb[0].mxu0
      %1240 = vmatprep.mubr.bf16.mxu0 %v779
      %1241 = vmatmul.mubr.bf16.gmra.mrb[0].mxu0 %v778
      %v1242 = vpop.f32.mrb[0].mxu0
      %v1243 = vadd.f32 0.0, %v1242
      %v1244 = vpop.f32.mrb[0].mxu0
      %v1245 = vpop.f32.mrb[0].mxu0
      %v1246 = vadd.f32 0.0, %v1245
      %v1247 = vpop.f32.mrb[0].mxu0
      %1248 = vmatprep.mubr.bf16.mxu0 %v784
      %1249 = vmatmul.mubr.bf16.gmra.mrb[0].mxu0 %v783
      %v1250 = vpop.f32.mrb[0].mxu0
      %v1251 = vadd.f32 0.0, %v1250
      %v1252 = vpop.f32.mrb[0].mxu0
      %v1253 = vpop.f32.mrb[0].mxu0
      %v1254 = vadd.f32 0.0, %v1253
      %v1255 = vpop.f32.mrb[0].mxu0
      %1256 = vmatprep.mubr.bf16.mxu0 %v789
      %1257 = vmatmul.mubr.bf16.gmra.mrb[0].mxu0 %v788
      %v1258 = vpop.f32.mrb[0].mxu0
      %v1259 = vadd.f32 0.0, %v1258
      %v1260 = vpop.f32.mrb[0].mxu0
      %v1261 = vpop.f32.mrb[0].mxu0
      %v1262 = vadd.f32 0.0, %v1261
      %v1263 = vpop.f32.mrb[0].mxu0
      %1264 = vmatprep.mubr.bf16.mxu0 %v794
      %1265 = vmatmul.mubr.bf16.gmra.mrb[0].mxu0 %v793
      %v1266 = vpop.f32.mrb[0].mxu0
      %v1267 = vadd.f32 0.0, %v1266
      %v1268 = vpop.f32.mrb[0].mxu0
      %v1269 = vpop.f32.mrb[0].mxu0
      %v1270 = vadd.f32 0.0, %v1269
      %v1271 = vpop.f32.mrb[0].mxu0
      %1272 = vmatprep.mubr.bf16.mxu0 %v799
      %1273 = vmatmul.mubr.bf16.gmra.mrb[0].mxu0 %v798
      %v1274 = vpop.f32.mrb[0].mxu0
      %v1275 = vadd.f32 0.0, %v1274
      %v1276 = vpop.f32.mrb[0].mxu0
      %v1277 = vpop.f32.mrb[0].mxu0
      %v1278 = vadd.f32 0.0, %v1277
      %v1279 = vpop.f32.mrb[0].mxu0
      %1280 = vmatprep.mubr.bf16.mxu0 %v804
      %1281 = vmatmul.mubr.bf16.gmra.mrb[0].mxu0 %v803
      %v1282 = vpop.f32.mrb[0].mxu0
      %v1283 = vadd.f32 0.0, %v1282
      %v1284 = vpop.f32.mrb[0].mxu0
      %v1285 = vpop.f32.mrb[0].mxu0
      %v1286 = vadd.f32 0.0, %v1285
      %v1287 = vpop.f32.mrb[0].mxu0
      %1288 = vdwg.mxu0
      %1289 = vmatprep.subr.bf16.mxu0 0
      %1290 = vmatpush1.bf16.msra.mxu0 %v1064
      %1291 = vmatprep.subr.bf16.mxu0 0
      %1292 = vmatpush1.bf16.msra.mxu0 %v1065
      %1293 = vmatprep.subr.bf16.mxu0 0
      %1294 = vmatpush1.bf16.msra.mxu0 %v1066
      %1295 = vmatprep.subr.bf16.mxu0 0
      %1296 = vmatpush1.bf16.msra.mxu0 %v1067
      %1297 = vmatprep.subr.bf16.mxu0 0
      %1298 = vmatpush1.bf16.msra.mxu0 %v1068
      %1299 = vmatprep.subr.bf16.mxu0 0
      %1300 = vmatpush1.bf16.msra.mxu0 %v1069
      %1301 = vmatprep.subr.bf16.mxu0 0
      %1302 = vmatpush1.bf16.msra.mxu0 %v1070
      %1303 = vmatprep.subr.bf16.mxu0 0
      %1304 = vmatpush1.bf16.msra.mxu0 %v1071
      %1305 = vmatprep.subr.bf16.mxu0 0
      %1306 = vmatpush1.bf16.msra.mxu0 %v1072
      %1307 = vmatprep.subr.bf16.mxu0 0
      %1308 = vmatpush1.bf16.msra.mxu0 %v1073
      %1309 = vmatprep.subr.bf16.mxu0 0
      %1310 = vmatpush1.bf16.msra.mxu0 %v1074
      %1311 = vmatprep.subr.bf16.mxu0 0
      %1312 = vmatpush1.bf16.msra.mxu0 %v1075
      %1313 = vmatprep.subr.bf16.mxu0 0
      %1314 = vmatpush1.bf16.msra.mxu0 %v1076
      %1315 = vmatprep.subr.bf16.mxu0 0
      %1316 = vmatpush1.bf16.msra.mxu0 %v1077
      %1317 = vmatprep.subr.bf16.mxu0 0
      %1318 = vmatpush1.bf16.msra.mxu0 %v1078
      %1319 = vmatprep.subr.bf16.mxu0 0
      %1320 = vmatpush1.bf16.msra.mxu0 %v1079
      %1321 = vmatprep.mubr.bf16.mxu0 %v731
      %1322 = vmatmul.mubr.bf16.gmra.mrb[0].mxu0 %v730
      %v1323 = vpop.f32.mrb[0].mxu0
      %v1324 = vadd.f32 %v1163, %v1323
      %v1325 = vpop.f32.mrb[0].mxu0
      %v1326 = vpop.f32.mrb[0].mxu0
      %v1327 = vadd.f32 %v1166, %v1326
      %v1328 = vpop.f32.mrb[0].mxu0
      %1329 = vmatprep.mubr.bf16.mxu0 %v736
      %1330 = vmatmul.mubr.bf16.gmra.mrb[0].mxu0 %v735
      %v1331 = vpop.f32.mrb[0].mxu0
      %v1332 = vadd.f32 %v1171, %v1331
      %v1333 = vpop.f32.mrb[0].mxu0
      %v1334 = vpop.f32.mrb[0].mxu0
      %v1335 = vadd.f32 %v1174, %v1334
      %v1336 = vpop.f32.mrb[0].mxu0
      %1337 = vmatprep.mubr.bf16.mxu0 %v741
      %1338 = vmatmul.mubr.bf16.gmra.mrb[0].mxu0 %v740
      %v1339 = vpop.f32.mrb[0].mxu0
      %v1340 = vadd.f32 %v1179, %v1339
      %v1341 = vpop.f32.mrb[0].mxu0
      %v1342 = vpop.f32.mrb[0].mxu0
      %v1343 = vadd.f32 %v1182, %v1342
      %v1344 = vpop.f32.mrb[0].mxu0
      %1345 = vmatprep.mubr.bf16.mxu0 %v746
      %1346 = vmatmul.mubr.bf16.gmra.mrb[0].mxu0 %v745
      %v1347 = vpop.f32.mrb[0].mxu0
      %v1348 = vadd.f32 %v1187, %v1347
      %v1349 = vpop.f32.mrb[0].mxu0
      %v1350 = vpop.f32.mrb[0].mxu0
      %v1351 = vadd.f32 %v1190, %v1350
      %v1352 = vpop.f32.mrb[0].mxu0
      %1353 = vmatprep.mubr.bf16.mxu0 %v751
      %1354 = vmatmul.mubr.bf16.gmra.mrb[0].mxu0 %v750
      %v1355 = vpop.f32.mrb[0].mxu0
      %v1356 = vadd.f32 %v1195, %v1355
      %v1357 = vpop.f32.mrb[0].mxu0
      %v1358 = vpop.f32.mrb[0].mxu0
      %v1359 = vadd.f32 %v1198, %v1358
      %v1360 = vpop.f32.mrb[0].mxu0
      %1361 = vmatprep.mubr.bf16.mxu0 %v756
      %1362 = vmatmul.mubr.bf16.gmra.mrb[0].mxu0 %v755
      %v1363 = vpop.f32.mrb[0].mxu0
      %v1364 = vadd.f32 %v1203, %v1363
      %v1365 = vpop.f32.mrb[0].mxu0
      %v1366 = vpop.f32.mrb[0].mxu0
      %v1367 = vadd.f32 %v1206, %v1366
      %v1368 = vpop.f32.mrb[0].mxu0
      %1369 = vmatprep.mubr.bf16.mxu0 %v761
      %1370 = vmatmul.mubr.bf16.gmra.mrb[0].mxu0 %v760
      %v1371 = vpop.f32.mrb[0].mxu0
      %v1372 = vadd.f32 %v1211, %v1371
      %v1373 = vpop.f32.mrb[0].mxu0
      %v1374 = vpop.f32.mrb[0].mxu0
      %v1375 = vadd.f32 %v1214, %v1374
      %v1376 = vpop.f32.mrb[0].mxu0
      %1377 = vmatprep.mubr.bf16.mxu0 %v766
      %1378 = vmatmul.mubr.bf16.gmra.mrb[0].mxu0 %v765
      %v1379 = vpop.f32.mrb[0].mxu0
      %v1380 = vadd.f32 %v1219, %v1379
      %v1381 = vpop.f32.mrb[0].mxu0
      %v1382 = vpop.f32.mrb[0].mxu0
      %v1383 = vadd.f32 %v1222, %v1382
      %v1384 = vpop.f32.mrb[0].mxu0
      %1385 = vmatprep.mubr.bf16.mxu0 %v771
      %1386 = vmatmul.mubr.bf16.gmra.mrb[0].mxu0 %v770
      %v1387 = vpop.f32.mrb[0].mxu0
      %v1388 = vadd.f32 %v1227, %v1387
      %v1389 = vpop.f32.mrb[0].mxu0
      %v1390 = vpop.f32.mrb[0].mxu0
      %v1391 = vadd.f32 %v1230, %v1390
      %v1392 = vpop.f32.mrb[0].mxu0
      %1393 = vmatprep.mubr.bf16.mxu0 %v776
      %1394 = vmatmul.mubr.bf16.gmra.mrb[0].mxu0 %v775
      %v1395 = vpop.f32.mrb[0].mxu0
      %v1396 = vadd.f32 %v1235, %v1395
      %v1397 = vpop.f32.mrb[0].mxu0
      %v1398 = vpop.f32.mrb[0].mxu0
      %v1399 = vadd.f32 %v1238, %v1398
      %v1400 = vpop.f32.mrb[0].mxu0
      %1401 = vmatprep.mubr.bf16.mxu0 %v781
      %1402 = vmatmul.mubr.bf16.gmra.mrb[0].mxu0 %v780
      %v1403 = vpop.f32.mrb[0].mxu0
      %v1404 = vadd.f32 %v1243, %v1403
      %v1405 = vpop.f32.mrb[0].mxu0
      %v1406 = vpop.f32.mrb[0].mxu0
      %v1407 = vadd.f32 %v1246, %v1406
      %v1408 = vpop.f32.mrb[0].mxu0
      %1409 = vmatprep.mubr.bf16.mxu0 %v786
      %1410 = vmatmul.mubr.bf16.gmra.mrb[0].mxu0 %v785
      %v1411 = vpop.f32.mrb[0].mxu0
      %v1412 = vadd.f32 %v1251, %v1411
      %v1413 = vpop.f32.mrb[0].mxu0
      %v1414 = vpop.f32.mrb[0].mxu0
      %v1415 = vadd.f32 %v1254, %v1414
      %v1416 = vpop.f32.mrb[0].mxu0
      %1417 = vmatprep.mubr.bf16.mxu0 %v791
      %1418 = vmatmul.mubr.bf16.gmra.mrb[0].mxu0 %v790
      %v1419 = vpop.f32.mrb[0].mxu0
      %v1420 = vadd.f32 %v1259, %v1419
      %v1421 = vpop.f32.mrb[0].mxu0
      %v1422 = vpop.f32.mrb[0].mxu0
      %v1423 = vadd.f32 %v1262, %v1422
      %v1424 = vpop.f32.mrb[0].mxu0
      %1425 = vmatprep.mubr.bf16.mxu0 %v796
      %1426 = vmatmul.mubr.bf16.gmra.mrb[0].mxu0 %v795
      %v1427 = vpop.f32.mrb[0].mxu0
      %v1428 = vadd.f32 %v1267, %v1427
      %v1429 = vpop.f32.mrb[0].mxu0
      %v1430 = vpop.f32.mrb[0].mxu0
      %v1431 = vadd.f32 %v1270, %v1430
      %v1432 = vpop.f32.mrb[0].mxu0
      %1433 = vmatprep.mubr.bf16.mxu0 %v801
      %1434 = vmatmul.mubr.bf16.gmra.mrb[0].mxu0 %v800
      %v1435 = vpop.f32.mrb[0].mxu0
      %v1436 = vadd.f32 %v1275, %v1435
      %v1437 = vpop.f32.mrb[0].mxu0
      %v1438 = vpop.f32.mrb[0].mxu0
      %v1439 = vadd.f32 %v1278, %v1438
      %v1440 = vpop.f32.mrb[0].mxu0
      %1441 = vmatprep.mubr.bf16.mxu0 %v806
      %1442 = vmatmul.mubr.bf16.gmra.mrb[0].mxu0 %v805
      %v1443 = vpop.f32.mrb[0].mxu0
      %v1444 = vadd.f32 %v1283, %v1443
      %v1445 = vpop.f32.mrb[0].mxu0
      %v1446 = vpop.f32.mrb[0].mxu0
      %v1447 = vadd.f32 %v1286, %v1446
      %v1448 = vpop.f32.mrb[0].mxu0
      %1449 = vdwg.mxu0
      %1450 = vmatprep.subr.bf16.mxu0 0
      %1451 = vmatpush1.bf16.msra.mxu0 %v1080
      %1452 = vmatprep.subr.bf16.mxu0 0
      %1453 = vmatpush1.bf16.msra.mxu0 %v1081
      %1454 = vmatprep.subr.bf16.mxu0 0
      %1455 = vmatpush1.bf16.msra.mxu0 %v1082
      %1456 = vmatprep.subr.bf16.mxu0 0
      %1457 = vmatpush1.bf16.msra.mxu0 %v1083
      %1458 = vmatprep.subr.bf16.mxu0 0
      %1459 = vmatpush1.bf16.msra.mxu0 %v1084
      %1460 = vmatprep.subr.bf16.mxu0 0
      %1461 = vmatpush1.bf16.msra.mxu0 %v1085
      %1462 = vmatprep.subr.bf16.mxu0 0
      %1463 = vmatpush1.bf16.msra.mxu0 %v1086
      %1464 = vmatprep.subr.bf16.mxu0 0
      %1465 = vmatpush1.bf16.msra.mxu0 %v1087
      %1466 = vmatprep.subr.bf16.mxu0 0
      %1467 = vmatpush1.bf16.msra.mxu0 0
      %1468 = vmatprep.subr.bf16.mxu0 0
      %1469 = vmatpush1.bf16.msra.mxu0 0
      %1470 = vmatprep.subr.bf16.mxu0 0
      %1471 = vmatpush1.bf16.msra.mxu0 0
      %1472 = vmatprep.subr.bf16.mxu0 0
      %1473 = vmatpush1.bf16.msra.mxu0 0
      %1474 = vmatprep.subr.bf16.mxu0 0
      %1475 = vmatpush1.bf16.msra.mxu0 0
      %1476 = vmatprep.subr.bf16.mxu0 0
      %1477 = vmatpush1.bf16.msra.mxu0 0
      %1478 = vmatprep.subr.bf16.mxu0 0
      %1479 = vmatpush1.bf16.msra.mxu0 0
      %1480 = vmatprep.subr.bf16.mxu0 0
      %1481 = vmatpush1.bf16.msra.mxu0 0
      %1482 = vmatprep.mubr.bf16.mxu0 0
      %1483 = vmatmul.mubr.bf16.gmra.mrb[0].mxu0 %v732
      %v1484 = vpop.f32.mrb[0].mxu0
      %v1485 = vadd.f32 %v1324, %v1484
      %v1486 = vpop.f32.mrb[0].mxu0
      %v1487 = vpop.f32.mrb[0].mxu0
      %v1488 = vadd.f32 %v1327, %v1487
      %v1489 = vpop.f32.mrb[0].mxu0
      %1490 = vmatprep.mubr.bf16.mxu0 0
      %1491 = vmatmul.mubr.bf16.gmra.mrb[0].mxu0 %v737
      %v1492 = vpop.f32.mrb[0].mxu0
      %v1493 = vadd.f32 %v1332, %v1492
      %v1494 = vpop.f32.mrb[0].mxu0
      %v1495 = vpop.f32.mrb[0].mxu0
      %v1496 = vadd.f32 %v1335, %v1495
      %v1497 = vpop.f32.mrb[0].mxu0
      %1498 = vmatprep.mubr.bf16.mxu0 0
      %1499 = vmatmul.mubr.bf16.gmra.mrb[0].mxu0 %v742
      %v1500 = vpop.f32.mrb[0].mxu0
      %v1501 = vadd.f32 %v1340, %v1500
      %v1502 = vpop.f32.mrb[0].mxu0
      %v1503 = vpop.f32.mrb[0].mxu0
      %v1504 = vadd.f32 %v1343, %v1503
      %v1505 = vpop.f32.mrb[0].mxu0
      %1506 = vmatprep.mubr.bf16.mxu0 0
      %1507 = vmatmul.mubr.bf16.gmra.mrb[0].mxu0 %v747
      %v1508 = vpop.f32.mrb[0].mxu0
      %v1509 = vadd.f32 %v1348, %v1508
      %v1510 = vpop.f32.mrb[0].mxu0
      %v1511 = vpop.f32.mrb[0].mxu0
      %v1512 = vadd.f32 %v1351, %v1511
      %v1513 = vpop.f32.mrb[0].mxu0
      %1514 = vmatprep.mubr.bf16.mxu0 0
      %1515 = vmatmul.mubr.bf16.gmra.mrb[0].mxu0 %v752
      %v1516 = vpop.f32.mrb[0].mxu0
      %v1517 = vadd.f32 %v1356, %v1516
      %v1518 = vpop.f32.mrb[0].mxu0
      %v1519 = vpop.f32.mrb[0].mxu0
      %v1520 = vadd.f32 %v1359, %v1519
      %v1521 = vpop.f32.mrb[0].mxu0
      %1522 = vmatprep.mubr.bf16.mxu0 0
      %1523 = vmatmul.mubr.bf16.gmra.mrb[0].mxu0 %v757
      %v1524 = vpop.f32.mrb[0].mxu0
      %v1525 = vadd.f32 %v1364, %v1524
      %v1526 = vpop.f32.mrb[0].mxu0
      %v1527 = vpop.f32.mrb[0].mxu0
      %v1528 = vadd.f32 %v1367, %v1527
      %v1529 = vpop.f32.mrb[0].mxu0
      %1530 = vmatprep.mubr.bf16.mxu0 0
      %1531 = vmatmul.mubr.bf16.gmra.mrb[0].mxu0 %v762
      %v1532 = vpop.f32.mrb[0].mxu0
      %v1533 = vadd.f32 %v1372, %v1532
      %v1534 = vpop.f32.mrb[0].mxu0
      %v1535 = vpop.f32.mrb[0].mxu0
      %v1536 = vadd.f32 %v1375, %v1535
      %v1537 = vpop.f32.mrb[0].mxu0
      %1538 = vmatprep.mubr.bf16.mxu0 0
      %1539 = vmatmul.mubr.bf16.gmra.mrb[0].mxu0 %v767
      %v1540 = vpop.f32.mrb[0].mxu0
      %v1541 = vadd.f32 %v1380, %v1540
      %v1542 = vpop.f32.mrb[0].mxu0
      %v1543 = vpop.f32.mrb[0].mxu0
      %v1544 = vadd.f32 %v1383, %v1543
      %v1545 = vpop.f32.mrb[0].mxu0
      %1546 = vmatprep.mubr.bf16.mxu0 0
      %1547 = vmatmul.mubr.bf16.gmra.mrb[0].mxu0 %v772
      %v1548 = vpop.f32.mrb[0].mxu0
      %v1549 = vadd.f32 %v1388, %v1548
      %v1550 = vpop.f32.mrb[0].mxu0
      %v1551 = vpop.f32.mrb[0].mxu0
      %v1552 = vadd.f32 %v1391, %v1551
      %v1553 = vpop.f32.mrb[0].mxu0
      %1554 = vmatprep.mubr.bf16.mxu0 0
      %1555 = vmatmul.mubr.bf16.gmra.mrb[0].mxu0 %v777
      %v1556 = vpop.f32.mrb[0].mxu0
      %v1557 = vadd.f32 %v1396, %v1556
      %v1558 = vpop.f32.mrb[0].mxu0
      %v1559 = vpop.f32.mrb[0].mxu0
      %v1560 = vadd.f32 %v1399, %v1559
      %v1561 = vpop.f32.mrb[0].mxu0
      %1562 = vmatprep.mubr.bf16.mxu0 0
      %1563 = vmatmul.mubr.bf16.gmra.mrb[0].mxu0 %v782
      %v1564 = vpop.f32.mrb[0].mxu0
      %v1565 = vadd.f32 %v1404, %v1564
      %v1566 = vpop.f32.mrb[0].mxu0
      %v1567 = vpop.f32.mrb[0].mxu0
      %v1568 = vadd.f32 %v1407, %v1567
      %v1569 = vpop.f32.mrb[0].mxu0
      %1570 = vmatprep.mubr.bf16.mxu0 0
      %1571 = vmatmul.mubr.bf16.gmra.mrb[0].mxu0 %v787
      %v1572 = vpop.f32.mrb[0].mxu0
      %v1573 = vadd.f32 %v1412, %v1572
      %v1574 = vpop.f32.mrb[0].mxu0
      %v1575 = vpop.f32.mrb[0].mxu0
      %v1576 = vadd.f32 %v1415, %v1575
      %v1577 = vpop.f32.mrb[0].mxu0
      %1578 = vmatprep.mubr.bf16.mxu0 0
      %1579 = vmatmul.mubr.bf16.gmra.mrb[0].mxu0 %v792
      %v1580 = vpop.f32.mrb[0].mxu0
      %v1581 = vadd.f32 %v1420, %v1580
      %v1582 = vpop.f32.mrb[0].mxu0
      %v1583 = vpop.f32.mrb[0].mxu0
      %v1584 = vadd.f32 %v1423, %v1583
      %v1585 = vpop.f32.mrb[0].mxu0
      %1586 = vmatprep.mubr.bf16.mxu0 0
      %1587 = vmatmul.mubr.bf16.gmra.mrb[0].mxu0 %v797
      %v1588 = vpop.f32.mrb[0].mxu0
      %v1589 = vadd.f32 %v1428, %v1588
      %v1590 = vpop.f32.mrb[0].mxu0
      %v1591 = vpop.f32.mrb[0].mxu0
      %v1592 = vadd.f32 %v1431, %v1591
      %v1593 = vpop.f32.mrb[0].mxu0
      %1594 = vmatprep.mubr.bf16.mxu0 0
      %1595 = vmatmul.mubr.bf16.gmra.mrb[0].mxu0 %v802
      %v1596 = vpop.f32.mrb[0].mxu0
      %v1597 = vadd.f32 %v1436, %v1596
      %v1598 = vpop.f32.mrb[0].mxu0
      %v1599 = vpop.f32.mrb[0].mxu0
      %v1600 = vadd.f32 %v1439, %v1599
      %v1601 = vpop.f32.mrb[0].mxu0
      %1602 = vmatprep.mubr.bf16.mxu0 0
      %1603 = vmatmul.mubr.bf16.gmra.mrb[0].mxu0 %v807
      %v1604 = vpop.f32.mrb[0].mxu0
      %v1605 = vadd.f32 %v1444, %v1604
      %v1606 = vpop.f32.mrb[0].mxu0
      %v1607 = vpop.f32.mrb[0].mxu0
      %v1608 = vadd.f32 %v1447, %v1607
      %v1609 = vpop.f32.mrb[0].mxu0
      %1610 = vdwg.mxu0
      %v1611 = vadd.f32 %v264, %v1485
      %v1612 = vadd.f32 %v265, %v1488
      %v1613 = vadd.f32 %v266, %v1493
      %v1614 = vadd.f32 %v267, %v1496
      %v1615 = vadd.f32 %v268, %v1501
      %v1616 = vadd.f32 %v269, %v1504
      %v1617 = vadd.f32 %v270, %v1509
      %v1618 = vadd.f32 %v271, %v1512
      %v1619 = vadd.f32 %v272, %v1517
      %v1620 = vadd.f32 %v273, %v1520
      %v1621 = vadd.f32 %v274, %v1525
      %v1622 = vadd.f32 %v275, %v1528
      %v1623 = vadd.f32 %v276, %v1533
      %v1624 = vadd.f32 %v277, %v1536
      %v1625 = vadd.f32 %v278, %v1541
      %v1626 = vadd.f32 %v279, %v1544
      %v1627 = vadd.f32 %v280, %v1549
      %v1628 = vadd.f32 %v281, %v1552
      %v1629 = vadd.f32 %v282, %v1557
      %v1630 = vadd.f32 %v283, %v1560
      %v1631 = vadd.f32 %v284, %v1565
      %v1632 = vadd.f32 %v285, %v1568
      %v1633 = vadd.f32 %v286, %v1573
      %v1634 = vadd.f32 %v287, %v1576
      %v1635 = vadd.f32 %v288, %v1581
      %v1636 = vadd.f32 %v289, %v1584
      %v1637 = vadd.f32 %v290, %v1589
      %v1638 = vadd.f32 %v291, %v1592
      %v1639 = vadd.f32 %v292, %v1597
      %v1640 = vadd.f32 %v293, %v1600
      %v1641 = vadd.f32 %v294, %v1605
      %v1642 = vadd.f32 %v295, %v1608
      %1643 = vst [vmem:[#allocation2] sm:$0xff] %v1611
      %1644 = vst [vmem:[#allocation2 + $0x8] sm:$0xff] %v1612
      %1645 = vst [vmem:[#allocation2 + $0x10] sm:$0xff] %v1613
      %1646 = vst [vmem:[#allocation2 + $0x18] sm:$0xff] %v1614
      %1647 = vst [vmem:[#allocation2 + $0x20] sm:$0xff] %v1615
      %1648 = vst [vmem:[#allocation2 + $0x28] sm:$0xff] %v1616
      %1649 = vst [vmem:[#allocation2 + $0x30] sm:$0xff] %v1617
      %1650 = vst [vmem:[#allocation2 + $0x38] sm:$0xff] %v1618
      %1651 = vst [vmem:[#allocation2 + $0x40] sm:$0xff] %v1619
      %1652 = vst [vmem:[#allocation2 + $0x48] sm:$0xff] %v1620
      %1653 = vst [vmem:[#allocation2 + $0x50] sm:$0xff] %v1621
      %1654 = vst [vmem:[#allocation2 + $0x58] sm:$0xff] %v1622
      %1655 = vst [vmem:[#allocation2 + $0x60] sm:$0xff] %v1623
      %1656 = vst [vmem:[#allocation2 + $0x68] sm:$0xff] %v1624
      %1657 = vst [vmem:[#allocation2 + $0x70] sm:$0xff] %v1625
      %1658 = vst [vmem:[#allocation2 + $0x78] sm:$0xff] %v1626
      %1659 = vst [vmem:[#allocation2 + $0x80] sm:$0xff] %v1627
      %1660 = vst [vmem:[#allocation2 + $0x88] sm:$0xff] %v1628
      %1661 = vst [vmem:[#allocation2 + $0x90] sm:$0xff] %v1629
      %1662 = vst [vmem:[#allocation2 + $0x98] sm:$0xff] %v1630
      %1663 = vst [vmem:[#allocation2 + $0xa0] sm:$0xff] %v1631
      %1664 = vst [vmem:[#allocation2 + $0xa8] sm:$0xff] %v1632
      %1665 = vst [vmem:[#allocation2 + $0xb0] sm:$0xff] %v1633
      %1666 = vst [vmem:[#allocation2 + $0xb8] sm:$0xff] %v1634
      %1667 = vst [vmem:[#allocation2 + $0xc0] sm:$0xff] %v1635
      %1668 = vst [vmem:[#allocation2 + $0xc8] sm:$0xff] %v1636
      %1669 = vst [vmem:[#allocation2 + $0xd0] sm:$0xff] %v1637
      %1670 = vst [vmem:[#allocation2 + $0xd8] sm:$0xff] %v1638
      %1671 = vst [vmem:[#allocation2 + $0xe0] sm:$0xff] %v1639
      %1672 = vst [vmem:[#allocation2 + $0xe8] sm:$0xff] %v1640
      %1673 = vst [vmem:[#allocation2 + $0xf0] sm:$0xff] %v1641
      %1674 = vst [vmem:[#allocation2 + $0xf8] sm:$0xff] %v1642
      // Predicated region
      $region37: #{network_forward.9} parent=31 // pred_check
        %p1675 = pneg %p228
      $region38: #{network_forward.9} parent=31 // pred_check_branch
        %1677 = sbr.rel (%p1675) target = $region40
      $region39: #{network_forward.9} parent=31 // pred_region
        %v1678 = vld [vmem:[#allocation2] sm:$0xff]
        %v1679 = vld [vmem:[#allocation2 + $0x8] sm:$0xff]
        %v1680 = vld [vmem:[#allocation2 + $0x10] sm:$0xff]
        %v1681 = vld [vmem:[#allocation2 + $0x18] sm:$0xff]
        %v1682 = vld [vmem:[#allocation2 + $0x20] sm:$0xff]
        %v1683 = vld [vmem:[#allocation2 + $0x28] sm:$0xff]
        %v1684 = vld [vmem:[#allocation2 + $0x30] sm:$0xff]
        %v1685 = vld [vmem:[#allocation2 + $0x38] sm:$0xff]
        %v1686 = vld [vmem:[#allocation2 + $0x40] sm:$0xff]
        %v1687 = vld [vmem:[#allocation2 + $0x48] sm:$0xff]
        %v1688 = vld [vmem:[#allocation2 + $0x50] sm:$0xff]
        %v1689 = vld [vmem:[#allocation2 + $0x58] sm:$0xff]
        %v1690 = vld [vmem:[#allocation2 + $0x60] sm:$0xff]
        %v1691 = vld [vmem:[#allocation2 + $0x68] sm:$0xff]
        %v1692 = vld [vmem:[#allocation2 + $0x70] sm:$0xff]
        %v1693 = vld [vmem:[#allocation2 + $0x78] sm:$0xff]
        %v1694 = vld [vmem:[#allocation2 + $0x80] sm:$0xff]
        %v1695 = vld [vmem:[#allocation2 + $0x88] sm:$0xff]
        %v1696 = vld [vmem:[#allocation2 + $0x90] sm:$0xff]
        %v1697 = vld [vmem:[#allocation2 + $0x98] sm:$0xff]
        %v1698 = vld [vmem:[#allocation2 + $0xa0] sm:$0xff]
        %v1699 = vld [vmem:[#allocation2 + $0xa8] sm:$0xff]
        %v1700 = vld [vmem:[#allocation2 + $0xb0] sm:$0xff]
        %v1701 = vld [vmem:[#allocation2 + $0xb8] sm:$0xff]
        %v1702 = vld [vmem:[#allocation2 + $0xc0] sm:$0xff]
        %v1703 = vld [vmem:[#allocation2 + $0xc8] sm:$0xff]
        %v1704 = vld [vmem:[#allocation2 + $0xd0] sm:$0xff]
        %v1705 = vld [vmem:[#allocation2 + $0xd8] sm:$0xff]
        %v1706 = vld [vmem:[#allocation2 + $0xe0] sm:$0xff]
        %v1707 = vld [vmem:[#allocation2 + $0xe8] sm:$0xff]
        %v1708 = vld [vmem:[#allocation2 + $0xf0] sm:$0xff]
        %v1709 = vld [vmem:[#allocation2 + $0xf8] sm:$0xff]
        %v1710 = vld [vmem:[%s2] sm:$0x1]
        %v1712 = vlaneseq
        %v1713 = vshrl.u32 %v1712, 7
        %v1714 = vsub.s32 0, %v1713
        %v1715 = vrot.slane %v1710, %v1714
        %v1717 = vadd.f32 %v1678, %v1715
        %v1718 = vadd.f32 %v1679, %v1715
        %v1719 = vadd.f32 %v1680, %v1715
        %v1720 = vadd.f32 %v1681, %v1715
        %v1721 = vadd.f32 %v1682, %v1715
        %v1722 = vadd.f32 %v1683, %v1715
        %v1723 = vadd.f32 %v1684, %v1715
        %v1724 = vadd.f32 %v1685, %v1715
        %v1725 = vadd.f32 %v1686, %v1715
        %v1726 = vadd.f32 %v1687, %v1715
        %v1727 = vadd.f32 %v1688, %v1715
        %v1728 = vadd.f32 %v1689, %v1715
        %v1729 = vadd.f32 %v1690, %v1715
        %v1730 = vadd.f32 %v1691, %v1715
        %v1731 = vadd.f32 %v1692, %v1715
        %v1732 = vadd.f32 %v1693, %v1715
        %v1733 = vadd.f32 %v1694, %v1715
        %v1734 = vadd.f32 %v1695, %v1715
        %v1735 = vadd.f32 %v1696, %v1715
        %v1736 = vadd.f32 %v1697, %v1715
        %v1737 = vadd.f32 %v1698, %v1715
        %v1738 = vadd.f32 %v1699, %v1715
        %v1739 = vadd.f32 %v1700, %v1715
        %v1740 = vadd.f32 %v1701, %v1715
        %v1741 = vadd.f32 %v1702, %v1715
        %v1742 = vadd.f32 %v1703, %v1715
        %v1743 = vadd.f32 %v1704, %v1715
        %v1744 = vadd.f32 %v1705, %v1715
        %v1745 = vadd.f32 %v1706, %v1715
        %v1746 = vadd.f32 %v1707, %v1715
        %v1747 = vadd.f32 %v1708, %v1715
        %v1748 = vadd.f32 %v1709, %v1715
        %v1749 = vmax.f32 %v1717, 0.0
        %v1750 = vmax.f32 %v1718, 0.0
        %v1751 = vmax.f32 %v1719, 0.0
        %v1752 = vmax.f32 %v1720, 0.0
        %v1753 = vmax.f32 %v1721, 0.0
        %v1754 = vmax.f32 %v1722, 0.0
        %v1755 = vmax.f32 %v1723, 0.0
        %v1756 = vmax.f32 %v1724, 0.0
        %v1757 = vmax.f32 %v1725, 0.0
        %v1758 = vmax.f32 %v1726, 0.0
        %v1759 = vmax.f32 %v1727, 0.0
        %v1760 = vmax.f32 %v1728, 0.0
        %v1761 = vmax.f32 %v1729, 0.0
        %v1762 = vmax.f32 %v1730, 0.0
        %v1763 = vmax.f32 %v1731, 0.0
        %v1764 = vmax.f32 %v1732, 0.0
        %v1765 = vmax.f32 %v1733, 0.0
        %v1766 = vmax.f32 %v1734, 0.0
        %v1767 = vmax.f32 %v1735, 0.0
        %v1768 = vmax.f32 %v1736, 0.0
        %v1769 = vmax.f32 %v1737, 0.0
        %v1770 = vmax.f32 %v1738, 0.0
        %v1771 = vmax.f32 %v1739, 0.0
        %v1772 = vmax.f32 %v1740, 0.0
        %v1773 = vmax.f32 %v1741, 0.0
        %v1774 = vmax.f32 %v1742, 0.0
        %v1775 = vmax.f32 %v1743, 0.0
        %v1776 = vmax.f32 %v1744, 0.0
        %v1777 = vmax.f32 %v1745, 0.0
        %v1778 = vmax.f32 %v1746, 0.0
        %v1779 = vmax.f32 %v1747, 0.0
        %v1780 = vmax.f32 %v1748, 0.0
        %v1781 = vpack.c.bf16 %v1750, %v1749
        %v1782 = vpack.c.bf16 %v1752, %v1751
        %v1783 = vpack.c.bf16 %v1754, %v1753
        %v1784 = vpack.c.bf16 %v1756, %v1755
        %v1785 = vpack.c.bf16 %v1758, %v1757
        %v1786 = vpack.c.bf16 %v1760, %v1759
        %v1787 = vpack.c.bf16 %v1762, %v1761
        %v1788 = vpack.c.bf16 %v1764, %v1763
        %v1789 = vpack.c.bf16 %v1766, %v1765
        %v1790 = vpack.c.bf16 %v1768, %v1767
        %v1791 = vpack.c.bf16 %v1770, %v1769
        %v1792 = vpack.c.bf16 %v1772, %v1771
        %v1793 = vpack.c.bf16 %v1774, %v1773
        %v1794 = vpack.c.bf16 %v1776, %v1775
        %v1795 = vpack.c.bf16 %v1778, %v1777
        %v1796 = vpack.c.bf16 %v1780, %v1779
        %v1813 = vunpack.c.l.b16 %v1781
        %v1814 = vunpack.c.h.b16 %v1781
        %v1815 = vunpack.c.l.b16 %v1782
        %v1816 = vunpack.c.h.b16 %v1782
        %v1817 = vunpack.c.l.b16 %v1783
        %v1818 = vunpack.c.h.b16 %v1783
        %v1819 = vunpack.c.l.b16 %v1784
        %v1820 = vunpack.c.h.b16 %v1784
        %v1821 = vunpack.c.l.b16 %v1785
        %v1822 = vunpack.c.h.b16 %v1785
        %v1823 = vunpack.c.l.b16 %v1786
        %v1824 = vunpack.c.h.b16 %v1786
        %v1825 = vunpack.c.l.b16 %v1787
        %v1826 = vunpack.c.h.b16 %v1787
        %v1827 = vunpack.c.l.b16 %v1788
        %v1828 = vunpack.c.h.b16 %v1788
        %v1829 = vunpack.c.l.b16 %v1789
        %v1830 = vunpack.c.h.b16 %v1789
        %v1831 = vunpack.c.l.b16 %v1790
        %v1832 = vunpack.c.h.b16 %v1790
        %v1833 = vunpack.c.l.b16 %v1791
        %v1834 = vunpack.c.h.b16 %v1791
        %v1835 = vunpack.c.l.b16 %v1792
        %v1836 = vunpack.c.h.b16 %v1792
        %v1837 = vunpack.c.l.b16 %v1793
        %v1838 = vunpack.c.h.b16 %v1793
        %v1839 = vunpack.c.l.b16 %v1794
        %v1840 = vunpack.c.h.b16 %v1794
        %v1841 = vunpack.c.l.b16 %v1795
        %v1842 = vunpack.c.h.b16 %v1795
        %v1843 = vunpack.c.l.b16 %v1796
        %v1844 = vunpack.c.h.b16 %v1796
        %v1845 = vpack.c.b16 %v1813, %v1813
        %v1846 = vpack.c.b16 %v1814, %v1814
        %v1847 = vpack.c.b16 %v1815, %v1815
        %v1848 = vpack.c.b16 %v1816, %v1816
        %v1849 = vpack.c.b16 %v1817, %v1817
        %v1850 = vpack.c.b16 %v1818, %v1818
        %v1851 = vpack.c.b16 %v1819, %v1819
        %v1852 = vpack.c.b16 %v1820, %v1820
        %v1853 = vpack.c.b16 %v1821, %v1821
        %v1854 = vpack.c.b16 %v1822, %v1822
        %v1855 = vpack.c.b16 %v1823, %v1823
        %v1856 = vpack.c.b16 %v1824, %v1824
        %v1857 = vpack.c.b16 %v1825, %v1825
        %v1858 = vpack.c.b16 %v1826, %v1826
        %v1859 = vpack.c.b16 %v1827, %v1827
        %v1860 = vpack.c.b16 %v1828, %v1828
        %v1861 = vpack.c.b16 %v1829, %v1829
        %v1862 = vpack.c.b16 %v1830, %v1830
        %v1863 = vpack.c.b16 %v1831, %v1831
        %v1864 = vpack.c.b16 %v1832, %v1832
        %v1865 = vpack.c.b16 %v1833, %v1833
        %v1866 = vpack.c.b16 %v1834, %v1834
        %v1867 = vpack.c.b16 %v1835, %v1835
        %v1868 = vpack.c.b16 %v1836, %v1836
        %v1869 = vpack.c.b16 %v1837, %v1837
        %v1870 = vpack.c.b16 %v1838, %v1838
        %v1871 = vpack.c.b16 %v1839, %v1839
        %v1872 = vpack.c.b16 %v1840, %v1840
        %v1873 = vpack.c.b16 %v1841, %v1841
        %v1874 = vpack.c.b16 %v1842, %v1842
        %v1875 = vpack.c.b16 %v1843, %v1843
        %v1876 = vpack.c.b16 %v1844, %v1844
        %1909 = vst [vmem:[%s225] sm:$0xf] %v1845
        %1910 = vst [vmem:[%s225 + $0x4] sm:$0xf] %v1846
        %1911 = vst [vmem:[%s225 + $0x8] sm:$0xf] %v1847
        %1912 = vst [vmem:[%s225 + $0xc] sm:$0xf] %v1848
        %1913 = vst [vmem:[%s225 + $0x10] sm:$0xf] %v1849
        %1914 = vst [vmem:[%s225 + $0x14] sm:$0xf] %v1850
        %1915 = vst [vmem:[%s225 + $0x18] sm:$0xf] %v1851
        %1916 = vst [vmem:[%s225 + $0x1c] sm:$0xf] %v1852
        %1917 = vst [vmem:[%s225 + $0x20] sm:$0xf] %v1853
        %1918 = vst [vmem:[%s225 + $0x24] sm:$0xf] %v1854
        %1919 = vst [vmem:[%s225 + $0x28] sm:$0xf] %v1855
        %1920 = vst [vmem:[%s225 + $0x2c] sm:$0xf] %v1856
        %1921 = vst [vmem:[%s225 + $0x30] sm:$0xf] %v1857
        %1922 = vst [vmem:[%s225 + $0x34] sm:$0xf] %v1858
        %1923 = vst [vmem:[%s225 + $0x38] sm:$0xf] %v1859
        %1924 = vst [vmem:[%s225 + $0x3c] sm:$0xf] %v1860
        %1925 = vst [vmem:[%s225 + $0x40] sm:$0xf] %v1861
        %1926 = vst [vmem:[%s225 + $0x44] sm:$0xf] %v1862
        %1927 = vst [vmem:[%s225 + $0x48] sm:$0xf] %v1863
        %1928 = vst [vmem:[%s225 + $0x4c] sm:$0xf] %v1864
        %1929 = vst [vmem:[%s225 + $0x50] sm:$0xf] %v1865
        %1930 = vst [vmem:[%s225 + $0x54] sm:$0xf] %v1866
        %1931 = vst [vmem:[%s225 + $0x58] sm:$0xf] %v1867
        %1932 = vst [vmem:[%s225 + $0x5c] sm:$0xf] %v1868
        %1933 = vst [vmem:[%s225 + $0x60] sm:$0xf] %v1869
        %1934 = vst [vmem:[%s225 + $0x64] sm:$0xf] %v1870
        %1935 = vst [vmem:[%s225 + $0x68] sm:$0xf] %v1871
        %1936 = vst [vmem:[%s225 + $0x6c] sm:$0xf] %v1872
        %1937 = vst [vmem:[%s225 + $0x70] sm:$0xf] %v1873
        %1938 = vst [vmem:[%s225 + $0x74] sm:$0xf] %v1874
        %1939 = vst [vmem:[%s225 + $0x78] sm:$0xf] %v1875
        %1940 = vst [vmem:[%s225 + $0x7c] sm:$0xf] %v1876
      $region40: #{network_forward.9} parent=31 // pred_fallthru
        _
      %s1941 = smul.u32 32, %s18
      %p1942 = scmp.lt.s32.totalorder %s1941, 63
      %s1943 = scalar_select %p1942, %s1941, 63
      %s1944 = smul.addr %s1943, 4
      %s1945 = scalar_lea.vmem %s3, %s1944
      // Predicated region
      $region41: #{network_forward.9} parent=31 // pred_check
        %p1946 = pneg %p119
      $region42: #{network_forward.9} parent=31 // pred_check_branch
        %1948 = sbr.rel (%p1946) target = $region44
      $region43: #{network_forward.9} parent=31 // pred_region
        %s1949 = smul.u32 32, %s18
      $region44: #{network_forward.9} parent=31 // pred_fallthru
        _
    $region32: #{network_forward.9} parent=5 // pred_fallthru
      _
    %p1950 = scmp.le.s32.totalorder 2, %s9
    // Predicated region
    $region45: #{network_forward.9} parent=5 // pred_check
      %p1951 = pneg %p1950
    $region46: #{network_forward.9} parent=5 // pred_check_branch
      %1953 = sbr.rel (%p1951) target = $region48
    $region47: #{network_forward.9} parent=5 // pred_region
      %s1954 = ssub.s32 %s9, 2
      // Predicated region
      $region49: #{network_forward.9} parent=47 // pred_check
        %p1955 = pneg %p125
      $region50: #{network_forward.9} parent=47 // pred_check_branch
        %1957 = sbr.rel (%p1955) target = $region52
      $region51: #{network_forward.9} parent=47 // pred_region
        %s1958 = smul.u32 32, %s20
        %p1959 = scmp.lt.s32.totalorder %s1958, 63
        %s1960 = scalar_select %p1959, %s1958, 63
        %s1961 = smul.addr %s1960, 4
        %s1962 = scalar_lea.vmem %s3, %s1961
      $region52: #{network_forward.9} parent=47 // pred_fallthru
        _
    $region48: #{network_forward.9} parent=5 // pred_fallthru
      _
  $region6: #{network_forward.9} parent=0 // loop_footer
    %s13 = sadd.s32 1, %s9
  $region7: #{network_forward.9} parent=0 // loop_footer_branch
    %8 = sbr.rel target = $region3
  $region8: #{network_forward.9} parent=0 // loop_exit
    _

// kernel: network_forward.10
$region0: #{network_forward.10}
  #allocation0 [shape = 'u32[]', space=smem, size = 0x4, offset = 0x4, fixed_abs, tag = 'smem constant byte address 0x4 - core index']
  #allocation1 [shape = 'u32[144,128]{1,0:T(1,128)}', space=vmem, size = 0x12000, scoped, tag = 'internal scratch']
  #allocation2 [shape = 'f32[208,128]{1,0:T(8,128)}', space=vmem, size = 0x1a000, scoped, tag = 'scratch operand']
  %s0 = inlined_call_operand.vmem [shape: bf16[208,640], index: 0, kind: input, shape index: {}]
  %s1 = inlined_call_operand.vmem [shape: bf16[640,128], index: 1, kind: input, shape index: {}]
  %s2 = inlined_call_operand.vmem [shape: f32[1,128], index: 2, kind: input, shape index: {}]
  %s3 = inlined_call_operand.vmem [shape: bf16[208,128], index: 3, kind: output, shape index: {}]
  %s4 = sld [smem:[#allocation0]]
  $region30: #{network_forward.10} parent=0
    _
  %s6 = ssub.s32 1, %s4
  %s7 = scalar_select 0, %s6, %s4
  // Predicated region
  $region2: #{network_forward.10} parent=0 // pred_check
    _
  $region3: #{network_forward.10} parent=0 // pred_check_branch
    %9 = sbr.rel (0) target = $region5
  $region4: #{network_forward.10} parent=0 // pred_region
    _
  $region5: #{network_forward.10} parent=0 // pred_fallthru
    _
  // Predicated region
  $region6: #{network_forward.10} parent=0 // pred_check
    _
  $region7: #{network_forward.10} parent=0 // pred_check_branch
    %11 = sbr.rel (0) target = $region9
  $region8: #{network_forward.10} parent=0 // pred_region
    _
  $region9: #{network_forward.10} parent=0 // pred_fallthru
    _
  // Predicated region
  $region10: #{network_forward.10} parent=0 // pred_check
    _
  $region11: #{network_forward.10} parent=0 // pred_check_branch
    %13 = sbr.rel (0) target = $region13
  $region12: #{network_forward.10} parent=0 // pred_region
    _
  $region13: #{network_forward.10} parent=0 // pred_fallthru
    _
  %p15 = scmp.eq.s32.totalorder 0, 0
  // Predicated region
  $region14: #{network_forward.10} parent=0 // pred_check
    %p16 = pneg %p15
  $region15: #{network_forward.10} parent=0 // pred_check_branch
    %18 = sbr.rel (%p16) target = $region17
  $region16: #{network_forward.10} parent=0 // pred_region
    %19 = vst [vmem:[#allocation2] sm:$0xff] 0.0
    %20 = vst [vmem:[#allocation2 + $0x8] sm:$0xff] 0.0
    %21 = vst [vmem:[#allocation2 + $0x10] sm:$0xff] 0.0
    %22 = vst [vmem:[#allocation2 + $0x18] sm:$0xff] 0.0
    %23 = vst [vmem:[#allocation2 + $0x20] sm:$0xff] 0.0
    %24 = vst [vmem:[#allocation2 + $0x28] sm:$0xff] 0.0
    %25 = vst [vmem:[#allocation2 + $0x30] sm:$0xff] 0.0
    %26 = vst [vmem:[#allocation2 + $0x38] sm:$0xff] 0.0
    %27 = vst [vmem:[#allocation2 + $0x40] sm:$0xff] 0.0
    %28 = vst [vmem:[#allocation2 + $0x48] sm:$0xff] 0.0
    %29 = vst [vmem:[#allocation2 + $0x50] sm:$0xff] 0.0
    %30 = vst [vmem:[#allocation2 + $0x58] sm:$0xff] 0.0
    %31 = vst [vmem:[#allocation2 + $0x60] sm:$0xff] 0.0
    %32 = vst [vmem:[#allocation2 + $0x68] sm:$0xff] 0.0
    %33 = vst [vmem:[#allocation2 + $0x70] sm:$0xff] 0.0
    %34 = vst [vmem:[#allocation2 + $0x78] sm:$0xff] 0.0
    %35 = vst [vmem:[#allocation2 + $0x80] sm:$0xff] 0.0
    %36 = vst [vmem:[#allocation2 + $0x88] sm:$0xff] 0.0
    %37 = vst [vmem:[#allocation2 + $0x90] sm:$0xff] 0.0
    %38 = vst [vmem:[#allocation2 + $0x98] sm:$0xff] 0.0
    %39 = vst [vmem:[#allocation2 + $0xa0] sm:$0xff] 0.0
    %40 = vst [vmem:[#allocation2 + $0xa8] sm:$0xff] 0.0
    %41 = vst [vmem:[#allocation2 + $0xb0] sm:$0xff] 0.0
    %42 = vst [vmem:[#allocation2 + $0xb8] sm:$0xff] 0.0
    %43 = vst [vmem:[#allocation2 + $0xc0] sm:$0xff] 0.0
    %44 = vst [vmem:[#allocation2 + $0xc8] sm:$0xff] 0.0
  $region17: #{network_forward.10} parent=0 // pred_fallthru
    _
  %v45 = vld [vmem:[#allocation2] sm:$0xff]
  %v46 = vld [vmem:[#allocation2 + $0x8] sm:$0xff]
  %v47 = vld [vmem:[#allocation2 + $0x10] sm:$0xff]
  %v48 = vld [vmem:[#allocation2 + $0x18] sm:$0xff]
  %v49 = vld [vmem:[#allocation2 + $0x20] sm:$0xff]
  %v50 = vld [vmem:[#allocation2 + $0x28] sm:$0xff]
  %v51 = vld [vmem:[#allocation2 + $0x30] sm:$0xff]
  %v52 = vld [vmem:[#allocation2 + $0x38] sm:$0xff]
  %v53 = vld [vmem:[#allocation2 + $0x40] sm:$0xff]
  %v54 = vld [vmem:[#allocation2 + $0x48] sm:$0xff]
  %v55 = vld [vmem:[#allocation2 + $0x50] sm:$0xff]
  %v56 = vld [vmem:[#allocation2 + $0x58] sm:$0xff]
  %v57 = vld [vmem:[#allocation2 + $0x60] sm:$0xff]
  %v58 = vld [vmem:[#allocation2 + $0x68] sm:$0xff]
  %v59 = vld [vmem:[#allocation2 + $0x70] sm:$0xff]
  %v60 = vld [vmem:[#allocation2 + $0x78] sm:$0xff]
  %v61 = vld [vmem:[#allocation2 + $0x80] sm:$0xff]
  %v62 = vld [vmem:[#allocation2 + $0x88] sm:$0xff]
  %v63 = vld [vmem:[#allocation2 + $0x90] sm:$0xff]
  %v64 = vld [vmem:[#allocation2 + $0x98] sm:$0xff]
  %v65 = vld [vmem:[#allocation2 + $0xa0] sm:$0xff]
  %v66 = vld [vmem:[#allocation2 + $0xa8] sm:$0xff]
  %v67 = vld [vmem:[#allocation2 + $0xb0] sm:$0xff]
  %v68 = vld [vmem:[#allocation2 + $0xb8] sm:$0xff]
  %v69 = vld [vmem:[#allocation2 + $0xc0] sm:$0xff]
  %v70 = vld [vmem:[#allocation2 + $0xc8] sm:$0xff]
  %v71 = vld [vmem:[%s0] sm:$0xff]
  %v72 = vld [vmem:[%s0 + $0x8] sm:$0xff]
  %v73 = vld [vmem:[%s0 + $0x10] sm:$0xf]
  %v74 = vld [vmem:[%s0 + $0x14] sm:$0xff]
  %v75 = vld [vmem:[%s0 + $0x1c] sm:$0xff]
  %v76 = vld [vmem:[%s0 + $0x24] sm:$0xf]
  %v77 = vld [vmem:[%s0 + $0x28] sm:$0xff]
  %v78 = vld [vmem:[%s0 + $0x30] sm:$0xff]
  %v79 = vld [vmem:[%s0 + $0x38] sm:$0xf]
  %v80 = vld [vmem:[%s0 + $0x3c] sm:$0xff]
  %v81 = vld [vmem:[%s0 + $0x44] sm:$0xff]
  %v82 = vld [vmem:[%s0 + $0x4c] sm:$0xf]
  %v83 = vld [vmem:[%s0 + $0x50] sm:$0xff]
  %v84 = vld [vmem:[%s0 + $0x58] sm:$0xff]
  %v85 = vld [vmem:[%s0 + $0x60] sm:$0xf]
  %v86 = vld [vmem:[%s0 + $0x64] sm:$0xff]
  %v87 = vld [vmem:[%s0 + $0x6c] sm:$0xff]
  %v88 = vld [vmem:[%s0 + $0x74] sm:$0xf]
  %v89 = vld [vmem:[%s0 + $0x78] sm:$0xff]
  %v90 = vld [vmem:[%s0 + $0x80] sm:$0xff]
  %v91 = vld [vmem:[%s0 + $0x88] sm:$0xf]
  %v92 = vld [vmem:[%s0 + $0x8c] sm:$0xff]
  %v93 = vld [vmem:[%s0 + $0x94] sm:$0xff]
  %v94 = vld [vmem:[%s0 + $0x9c] sm:$0xf]
  %v95 = vld [vmem:[%s0 + $0xa0] sm:$0xff]
  %v96 = vld [vmem:[%s0 + $0xa8] sm:$0xff]
  %v97 = vld [vmem:[%s0 + $0xb0] sm:$0xf]
  %v98 = vld [vmem:[%s0 + $0xb4] sm:$0xff]
  %v99 = vld [vmem:[%s0 + $0xbc] sm:$0xff]
  %v100 = vld [vmem:[%s0 + $0xc4] sm:$0xf]
  %v101 = vld [vmem:[%s0 + $0xc8] sm:$0xff]
  %v102 = vld [vmem:[%s0 + $0xd0] sm:$0xff]
  %v103 = vld [vmem:[%s0 + $0xd8] sm:$0xf]
  %v104 = vld [vmem:[%s0 + $0xdc] sm:$0xff]
  %v105 = vld [vmem:[%s0 + $0xe4] sm:$0xff]
  %v106 = vld [vmem:[%s0 + $0xec] sm:$0xf]
  %v107 = vld [vmem:[%s0 + $0xf0] sm:$0xff]
  %v108 = vld [vmem:[%s0 + $0xf8] sm:$0xff]
  %v109 = vld [vmem:[%s0 + $0x100] sm:$0xf]
  %v110 = vld [vmem:[%s0 + $0x104] sm:$0xff]
  %v111 = vld [vmem:[%s0 + $0x10c] sm:$0xff]
  %v112 = vld [vmem:[%s0 + $0x114] sm:$0xf]
  %v113 = vld [vmem:[%s0 + $0x118] sm:$0xff]
  %v114 = vld [vmem:[%s0 + $0x120] sm:$0xff]
  %v115 = vld [vmem:[%s0 + $0x128] sm:$0xf]
  %v116 = vld [vmem:[%s0 + $0x12c] sm:$0xff]
  %v117 = vld [vmem:[%s0 + $0x134] sm:$0xff]
  %v118 = vld [vmem:[%s0 + $0x13c] sm:$0xf]
  %v119 = vld [vmem:[%s0 + $0x140] sm:$0xff]
  %v120 = vld [vmem:[%s0 + $0x148] sm:$0xff]
  %v121 = vld [vmem:[%s0 + $0x150] sm:$0xf]
  %v122 = vld [vmem:[%s0 + $0x154] sm:$0xff]
  %v123 = vld [vmem:[%s0 + $0x15c] sm:$0xff]
  %v124 = vld [vmem:[%s0 + $0x164] sm:$0xf]
  %v125 = vld [vmem:[%s0 + $0x168] sm:$0xff]
  %v126 = vld [vmem:[%s0 + $0x170] sm:$0xff]
  %v127 = vld [vmem:[%s0 + $0x178] sm:$0xf]
  %v128 = vld [vmem:[%s0 + $0x17c] sm:$0xff]
  %v129 = vld [vmem:[%s0 + $0x184] sm:$0xff]
  %v130 = vld [vmem:[%s0 + $0x18c] sm:$0xf]
  %v131 = vld [vmem:[%s0 + $0x190] sm:$0xff]
  %v132 = vld [vmem:[%s0 + $0x198] sm:$0xff]
  %v133 = vld [vmem:[%s0 + $0x1a0] sm:$0xf]
  %v134 = vld [vmem:[%s0 + $0x1a4] sm:$0xff]
  %v135 = vld [vmem:[%s0 + $0x1ac] sm:$0xff]
  %v136 = vld [vmem:[%s0 + $0x1b4] sm:$0xf]
  %v137 = vld [vmem:[%s0 + $0x1b8] sm:$0xff]
  %v138 = vld [vmem:[%s0 + $0x1c0] sm:$0xff]
  %v139 = vld [vmem:[%s0 + $0x1c8] sm:$0xf]
  %v140 = vld [vmem:[%s0 + $0x1cc] sm:$0xff]
  %v141 = vld [vmem:[%s0 + $0x1d4] sm:$0xff]
  %v142 = vld [vmem:[%s0 + $0x1dc] sm:$0xf]
  %v143 = vld [vmem:[%s0 + $0x1e0] sm:$0xff]
  %v144 = vld [vmem:[%s0 + $0x1e8] sm:$0xff]
  %v145 = vld [vmem:[%s0 + $0x1f0] sm:$0xf]
  %v146 = vld [vmem:[%s0 + $0x1f4] sm:$0xff]
  %v147 = vld [vmem:[%s0 + $0x1fc] sm:$0xff]
  %v148 = vld [vmem:[%s0 + $0x204] sm:$0xf]
  %v149 = vld [vmem:[%s1] sm:$0xf]
  %v150 = vld [vmem:[%s1 + $0x4] sm:$0xf]
  %v151 = vld [vmem:[%s1 + $0x8] sm:$0xf]
  %v152 = vld [vmem:[%s1 + $0xc] sm:$0xf]
  %v153 = vld [vmem:[%s1 + $0x10] sm:$0xf]
  %v154 = vld [vmem:[%s1 + $0x14] sm:$0xf]
  %v155 = vld [vmem:[%s1 + $0x18] sm:$0xf]
  %v156 = vld [vmem:[%s1 + $0x1c] sm:$0xf]
  %v157 = vld [vmem:[%s1 + $0x20] sm:$0xf]
  %v158 = vld [vmem:[%s1 + $0x24] sm:$0xf]
  %v159 = vld [vmem:[%s1 + $0x28] sm:$0xf]
  %v160 = vld [vmem:[%s1 + $0x2c] sm:$0xf]
  %v161 = vld [vmem:[%s1 + $0x30] sm:$0xf]
  %v162 = vld [vmem:[%s1 + $0x34] sm:$0xf]
  %v163 = vld [vmem:[%s1 + $0x38] sm:$0xf]
  %v164 = vld [vmem:[%s1 + $0x3c] sm:$0xf]
  %v165 = vld [vmem:[%s1 + $0x40] sm:$0xf]
  %v166 = vld [vmem:[%s1 + $0x44] sm:$0xf]
  %v167 = vld [vmem:[%s1 + $0x48] sm:$0xf]
  %v168 = vld [vmem:[%s1 + $0x4c] sm:$0xf]
  %v169 = vld [vmem:[%s1 + $0x50] sm:$0xf]
  %v170 = vld [vmem:[%s1 + $0x54] sm:$0xf]
  %v171 = vld [vmem:[%s1 + $0x58] sm:$0xf]
  %v172 = vld [vmem:[%s1 + $0x5c] sm:$0xf]
  %v173 = vld [vmem:[%s1 + $0x60] sm:$0xf]
  %v174 = vld [vmem:[%s1 + $0x64] sm:$0xf]
  %v175 = vld [vmem:[%s1 + $0x68] sm:$0xf]
  %v176 = vld [vmem:[%s1 + $0x6c] sm:$0xf]
  %v177 = vld [vmem:[%s1 + $0x70] sm:$0xf]
  %v178 = vld [vmem:[%s1 + $0x74] sm:$0xf]
  %v179 = vld [vmem:[%s1 + $0x78] sm:$0xf]
  %v180 = vld [vmem:[%s1 + $0x7c] sm:$0xf]
  %v181 = vld [vmem:[%s1 + $0x80] sm:$0xf]
  %v182 = vld [vmem:[%s1 + $0x84] sm:$0xf]
  %v183 = vld [vmem:[%s1 + $0x88] sm:$0xf]
  %v184 = vld [vmem:[%s1 + $0x8c] sm:$0xf]
  %v185 = vld [vmem:[%s1 + $0x90] sm:$0xf]
  %v186 = vld [vmem:[%s1 + $0x94] sm:$0xf]
  %v187 = vld [vmem:[%s1 + $0x98] sm:$0xf]
  %v188 = vld [vmem:[%s1 + $0x9c] sm:$0xf]
  %v189 = vld [vmem:[%s1 + $0xa0] sm:$0xf]
  %v190 = vld [vmem:[%s1 + $0xa4] sm:$0xf]
  %v191 = vld [vmem:[%s1 + $0xa8] sm:$0xf]
  %v192 = vld [vmem:[%s1 + $0xac] sm:$0xf]
  %v193 = vld [vmem:[%s1 + $0xb0] sm:$0xf]
  %v194 = vld [vmem:[%s1 + $0xb4] sm:$0xf]
  %v195 = vld [vmem:[%s1 + $0xb8] sm:$0xf]
  %v196 = vld [vmem:[%s1 + $0xbc] sm:$0xf]
  %v197 = vld [vmem:[%s1 + $0xc0] sm:$0xf]
  %v198 = vld [vmem:[%s1 + $0xc4] sm:$0xf]
  %v199 = vld [vmem:[%s1 + $0xc8] sm:$0xf]
  %v200 = vld [vmem:[%s1 + $0xcc] sm:$0xf]
  %v201 = vld [vmem:[%s1 + $0xd0] sm:$0xf]
  %v202 = vld [vmem:[%s1 + $0xd4] sm:$0xf]
  %v203 = vld [vmem:[%s1 + $0xd8] sm:$0xf]
  %v204 = vld [vmem:[%s1 + $0xdc] sm:$0xf]
  %v205 = vld [vmem:[%s1 + $0xe0] sm:$0xf]
  %v206 = vld [vmem:[%s1 + $0xe4] sm:$0xf]
  %v207 = vld [vmem:[%s1 + $0xe8] sm:$0xf]
  %v208 = vld [vmem:[%s1 + $0xec] sm:$0xf]
  %v209 = vld [vmem:[%s1 + $0xf0] sm:$0xf]
  %v210 = vld [vmem:[%s1 + $0xf4] sm:$0xf]
  %v211 = vld [vmem:[%s1 + $0xf8] sm:$0xf]
  %v212 = vld [vmem:[%s1 + $0xfc] sm:$0xf]
  %v213 = vld [vmem:[%s1 + $0x100] sm:$0xf]
  %v214 = vld [vmem:[%s1 + $0x104] sm:$0xf]
  %v215 = vld [vmem:[%s1 + $0x108] sm:$0xf]
  %v216 = vld [vmem:[%s1 + $0x10c] sm:$0xf]
  %v217 = vld [vmem:[%s1 + $0x110] sm:$0xf]
  %v218 = vld [vmem:[%s1 + $0x114] sm:$0xf]
  %v219 = vld [vmem:[%s1 + $0x118] sm:$0xf]
  %v220 = vld [vmem:[%s1 + $0x11c] sm:$0xf]
  %v221 = vld [vmem:[%s1 + $0x120] sm:$0xf]
  %v222 = vld [vmem:[%s1 + $0x124] sm:$0xf]
  %v223 = vld [vmem:[%s1 + $0x128] sm:$0xf]
  %v224 = vld [vmem:[%s1 + $0x12c] sm:$0xf]
  %v225 = vld [vmem:[%s1 + $0x130] sm:$0xf]
  %v226 = vld [vmem:[%s1 + $0x134] sm:$0xf]
  %v227 = vld [vmem:[%s1 + $0x138] sm:$0xf]
  %v228 = vld [vmem:[%s1 + $0x13c] sm:$0xf]
  %v307 = vunpack.c.l.b16 %v71
  %v308 = vunpack.c.h.b16 %v71
  %v309 = vunpack.c.l.b16 %v72
  %v310 = vunpack.c.h.b16 %v72
  %v311 = vunpack.c.l.b16 %v73
  %v312 = vunpack.c.l.b16 %v74
  %v313 = vunpack.c.h.b16 %v74
  %v314 = vunpack.c.l.b16 %v75
  %v315 = vunpack.c.h.b16 %v75
  %v316 = vunpack.c.l.b16 %v76
  %v317 = vunpack.c.l.b16 %v77
  %v318 = vunpack.c.h.b16 %v77
  %v319 = vunpack.c.l.b16 %v78
  %v320 = vunpack.c.h.b16 %v78
  %v321 = vunpack.c.l.b16 %v79
  %v322 = vunpack.c.l.b16 %v80
  %v323 = vunpack.c.h.b16 %v80
  %v324 = vunpack.c.l.b16 %v81
  %v325 = vunpack.c.h.b16 %v81
  %v326 = vunpack.c.l.b16 %v82
  %v327 = vunpack.c.l.b16 %v83
  %v328 = vunpack.c.h.b16 %v83
  %v329 = vunpack.c.l.b16 %v84
  %v330 = vunpack.c.h.b16 %v84
  %v331 = vunpack.c.l.b16 %v85
  %v332 = vunpack.c.l.b16 %v86
  %v333 = vunpack.c.h.b16 %v86
  %v334 = vunpack.c.l.b16 %v87
  %v335 = vunpack.c.h.b16 %v87
  %v336 = vunpack.c.l.b16 %v88
  %v337 = vunpack.c.l.b16 %v89
  %v338 = vunpack.c.h.b16 %v89
  %v339 = vunpack.c.l.b16 %v90
  %v340 = vunpack.c.h.b16 %v90
  %v341 = vunpack.c.l.b16 %v91
  %v342 = vunpack.c.l.b16 %v92
  %v343 = vunpack.c.h.b16 %v92
  %v344 = vunpack.c.l.b16 %v93
  %v345 = vunpack.c.h.b16 %v93
  %v346 = vunpack.c.l.b16 %v94
  %v347 = vunpack.c.l.b16 %v95
  %v348 = vunpack.c.h.b16 %v95
  %v349 = vunpack.c.l.b16 %v96
  %v350 = vunpack.c.h.b16 %v96
  %v351 = vunpack.c.l.b16 %v97
  %v352 = vunpack.c.l.b16 %v98
  %v353 = vunpack.c.h.b16 %v98
  %v354 = vunpack.c.l.b16 %v99
  %v355 = vunpack.c.h.b16 %v99
  %v356 = vunpack.c.l.b16 %v100
  %v357 = vunpack.c.l.b16 %v101
  %v358 = vunpack.c.h.b16 %v101
  %v359 = vunpack.c.l.b16 %v102
  %v360 = vunpack.c.h.b16 %v102
  %v361 = vunpack.c.l.b16 %v103
  %v362 = vunpack.c.l.b16 %v104
  %v363 = vunpack.c.h.b16 %v104
  %v364 = vunpack.c.l.b16 %v105
  %v365 = vunpack.c.h.b16 %v105
  %v366 = vunpack.c.l.b16 %v106
  %v367 = vunpack.c.l.b16 %v107
  %v368 = vunpack.c.h.b16 %v107
  %v369 = vunpack.c.l.b16 %v108
  %v370 = vunpack.c.h.b16 %v108
  %v371 = vunpack.c.l.b16 %v109
  %v372 = vunpack.c.l.b16 %v110
  %v373 = vunpack.c.h.b16 %v110
  %v374 = vunpack.c.l.b16 %v111
  %v375 = vunpack.c.h.b16 %v111
  %v376 = vunpack.c.l.b16 %v112
  %v377 = vunpack.c.l.b16 %v113
  %v378 = vunpack.c.h.b16 %v113
  %v379 = vunpack.c.l.b16 %v114
  %v380 = vunpack.c.h.b16 %v114
  %v381 = vunpack.c.l.b16 %v115
  %v382 = vunpack.c.l.b16 %v116
  %v383 = vunpack.c.h.b16 %v116
  %v384 = vunpack.c.l.b16 %v117
  %v385 = vunpack.c.h.b16 %v117
  %v386 = vunpack.c.l.b16 %v118
  %v387 = vunpack.c.l.b16 %v119
  %v388 = vunpack.c.h.b16 %v119
  %v389 = vunpack.c.l.b16 %v120
  %v390 = vunpack.c.h.b16 %v120
  %v391 = vunpack.c.l.b16 %v121
  %v392 = vunpack.c.l.b16 %v122
  %v393 = vunpack.c.h.b16 %v122
  %v394 = vunpack.c.l.b16 %v123
  %v395 = vunpack.c.h.b16 %v123
  %v396 = vunpack.c.l.b16 %v124
  %v397 = vunpack.c.l.b16 %v125
  %v398 = vunpack.c.h.b16 %v125
  %v399 = vunpack.c.l.b16 %v126
  %v400 = vunpack.c.h.b16 %v126
  %v401 = vunpack.c.l.b16 %v127
  %v402 = vunpack.c.l.b16 %v128
  %v403 = vunpack.c.h.b16 %v128
  %v404 = vunpack.c.l.b16 %v129
  %v405 = vunpack.c.h.b16 %v129
  %v406 = vunpack.c.l.b16 %v130
  %v407 = vunpack.c.l.b16 %v131
  %v408 = vunpack.c.h.b16 %v131
  %v409 = vunpack.c.l.b16 %v132
  %v410 = vunpack.c.h.b16 %v132
  %v411 = vunpack.c.l.b16 %v133
  %v412 = vunpack.c.l.b16 %v134
  %v413 = vunpack.c.h.b16 %v134
  %v414 = vunpack.c.l.b16 %v135
  %v415 = vunpack.c.h.b16 %v135
  %v416 = vunpack.c.l.b16 %v136
  %v417 = vunpack.c.l.b16 %v137
  %v418 = vunpack.c.h.b16 %v137
  %v419 = vunpack.c.l.b16 %v138
  %v420 = vunpack.c.h.b16 %v138
  %v421 = vunpack.c.l.b16 %v139
  %v422 = vunpack.c.l.b16 %v140
  %v423 = vunpack.c.h.b16 %v140
  %v424 = vunpack.c.l.b16 %v141
  %v425 = vunpack.c.h.b16 %v141
  %v426 = vunpack.c.l.b16 %v142
  %v427 = vunpack.c.l.b16 %v143
  %v428 = vunpack.c.h.b16 %v143
  %v429 = vunpack.c.l.b16 %v144
  %v430 = vunpack.c.h.b16 %v144
  %v431 = vunpack.c.l.b16 %v145
  %v432 = vunpack.c.l.b16 %v146
  %v433 = vunpack.c.h.b16 %v146
  %v434 = vunpack.c.l.b16 %v147
  %v435 = vunpack.c.h.b16 %v147
  %v436 = vunpack.c.l.b16 %v148
  %v437 = vpack.c.b16 %v312, %v307
  %v438 = vpack.c.b16 %v313, %v308
  %v439 = vpack.c.b16 %v314, %v309
  %v440 = vpack.c.b16 %v315, %v310
  %v441 = vpack.c.b16 %v316, %v311
  %v442 = vpack.c.b16 %v322, %v317
  %v443 = vpack.c.b16 %v323, %v318
  %v444 = vpack.c.b16 %v324, %v319
  %v445 = vpack.c.b16 %v325, %v320
  %v446 = vpack.c.b16 %v326, %v321
  %v447 = vpack.c.b16 %v332, %v327
  %v448 = vpack.c.b16 %v333, %v328
  %v449 = vpack.c.b16 %v334, %v329
  %v450 = vpack.c.b16 %v335, %v330
  %v451 = vpack.c.b16 %v336, %v331
  %v452 = vpack.c.b16 %v342, %v337
  %v453 = vpack.c.b16 %v343, %v338
  %v454 = vpack.c.b16 %v344, %v339
  %v455 = vpack.c.b16 %v345, %v340
  %v456 = vpack.c.b16 %v346, %v341
  %v457 = vpack.c.b16 %v352, %v347
  %v458 = vpack.c.b16 %v353, %v348
  %v459 = vpack.c.b16 %v354, %v349
  %v460 = vpack.c.b16 %v355, %v350
  %v461 = vpack.c.b16 %v356, %v351
  %v462 = vpack.c.b16 %v362, %v357
  %v463 = vpack.c.b16 %v363, %v358
  %v464 = vpack.c.b16 %v364, %v359
  %v465 = vpack.c.b16 %v365, %v360
  %v466 = vpack.c.b16 %v366, %v361
  %v467 = vpack.c.b16 %v372, %v367
  %v468 = vpack.c.b16 %v373, %v368
  %v469 = vpack.c.b16 %v374, %v369
  %v470 = vpack.c.b16 %v375, %v370
  %v471 = vpack.c.b16 %v376, %v371
  %v472 = vpack.c.b16 %v382, %v377
  %v473 = vpack.c.b16 %v383, %v378
  %v474 = vpack.c.b16 %v384, %v379
  %v475 = vpack.c.b16 %v385, %v380
  %v476 = vpack.c.b16 %v386, %v381
  %v477 = vpack.c.b16 %v392, %v387
  %v478 = vpack.c.b16 %v393, %v388
  %v479 = vpack.c.b16 %v394, %v389
  %v480 = vpack.c.b16 %v395, %v390
  %v481 = vpack.c.b16 %v396, %v391
  %v482 = vpack.c.b16 %v402, %v397
  %v483 = vpack.c.b16 %v403, %v398
  %v484 = vpack.c.b16 %v404, %v399
  %v485 = vpack.c.b16 %v405, %v400
  %v486 = vpack.c.b16 %v406, %v401
  %v487 = vpack.c.b16 %v412, %v407
  %v488 = vpack.c.b16 %v413, %v408
  %v489 = vpack.c.b16 %v414, %v409
  %v490 = vpack.c.b16 %v415, %v410
  %v491 = vpack.c.b16 %v416, %v411
  %v492 = vpack.c.b16 %v422, %v417
  %v493 = vpack.c.b16 %v423, %v418
  %v494 = vpack.c.b16 %v424, %v419
  %v495 = vpack.c.b16 %v425, %v420
  %v496 = vpack.c.b16 %v426, %v421
  %v497 = vpack.c.b16 %v432, %v427
  %v498 = vpack.c.b16 %v433, %v428
  %v499 = vpack.c.b16 %v434, %v429
  %v500 = vpack.c.b16 %v435, %v430
  %v501 = vpack.c.b16 %v436, %v431
  %v647 = vunpack.c.l.b16 %v149
  %v648 = vunpack.c.l.b16 %v150
  %v649 = vunpack.c.l.b16 %v151
  %v650 = vunpack.c.l.b16 %v152
  %v651 = vunpack.c.l.b16 %v153
  %v652 = vunpack.c.l.b16 %v154
  %v653 = vunpack.c.l.b16 %v155
  %v654 = vunpack.c.l.b16 %v156
  %v655 = vunpack.c.l.b16 %v157
  %v656 = vunpack.c.l.b16 %v158
  %v657 = vunpack.c.l.b16 %v159
  %v658 = vunpack.c.l.b16 %v160
  %v659 = vunpack.c.l.b16 %v161
  %v660 = vunpack.c.l.b16 %v162
  %v661 = vunpack.c.l.b16 %v163
  %v662 = vunpack.c.l.b16 %v164
  %v663 = vunpack.c.l.b16 %v165
  %v664 = vunpack.c.l.b16 %v166
  %v665 = vunpack.c.l.b16 %v167
  %v666 = vunpack.c.l.b16 %v168
  %v667 = vunpack.c.l.b16 %v169
  %v668 = vunpack.c.l.b16 %v170
  %v669 = vunpack.c.l.b16 %v171
  %v670 = vunpack.c.l.b16 %v172
  %v671 = vunpack.c.l.b16 %v173
  %v672 = vunpack.c.l.b16 %v174
  %v673 = vunpack.c.l.b16 %v175
  %v674 = vunpack.c.l.b16 %v176
  %v675 = vunpack.c.l.b16 %v177
  %v676 = vunpack.c.l.b16 %v178
  %v677 = vunpack.c.l.b16 %v179
  %v678 = vunpack.c.l.b16 %v180
  %v679 = vunpack.c.l.b16 %v181
  %v680 = vunpack.c.l.b16 %v182
  %v681 = vunpack.c.l.b16 %v183
  %v682 = vunpack.c.l.b16 %v184
  %v683 = vunpack.c.l.b16 %v185
  %v684 = vunpack.c.l.b16 %v186
  %v685 = vunpack.c.l.b16 %v187
  %v686 = vunpack.c.l.b16 %v188
  %v687 = vunpack.c.l.b16 %v189
  %v688 = vunpack.c.l.b16 %v190
  %v689 = vunpack.c.l.b16 %v191
  %v690 = vunpack.c.l.b16 %v192
  %v691 = vunpack.c.l.b16 %v193
  %v692 = vunpack.c.l.b16 %v194
  %v693 = vunpack.c.l.b16 %v195
  %v694 = vunpack.c.l.b16 %v196
  %v695 = vunpack.c.l.b16 %v197
  %v696 = vunpack.c.l.b16 %v198
  %v697 = vunpack.c.l.b16 %v199
  %v698 = vunpack.c.l.b16 %v200
  %v699 = vunpack.c.l.b16 %v201
  %v700 = vunpack.c.l.b16 %v202
  %v701 = vunpack.c.l.b16 %v203
  %v702 = vunpack.c.l.b16 %v204
  %v703 = vunpack.c.l.b16 %v205
  %v704 = vunpack.c.l.b16 %v206
  %v705 = vunpack.c.l.b16 %v207
  %v706 = vunpack.c.l.b16 %v208
  %v707 = vunpack.c.l.b16 %v209
  %v708 = vunpack.c.l.b16 %v210
  %v709 = vunpack.c.l.b16 %v211
  %v710 = vunpack.c.l.b16 %v212
  %v711 = vunpack.c.l.b16 %v213
  %v712 = vunpack.c.l.b16 %v214
  %v713 = vunpack.c.l.b16 %v215
  %v714 = vunpack.c.l.b16 %v216
  %v715 = vunpack.c.l.b16 %v217
  %v716 = vunpack.c.l.b16 %v218
  %v717 = vunpack.c.l.b16 %v219
  %v718 = vunpack.c.l.b16 %v220
  %v719 = vunpack.c.l.b16 %v221
  %v720 = vunpack.c.l.b16 %v222
  %v721 = vunpack.c.l.b16 %v223
  %v722 = vunpack.c.l.b16 %v224
  %v723 = vunpack.c.l.b16 %v225
  %v724 = vunpack.c.l.b16 %v226
  %v725 = vunpack.c.l.b16 %v227
  %v726 = vunpack.c.l.b16 %v228
  %v727 = vpack.c.b16 %v648, %v647
  %v728 = vpack.c.b16 %v650, %v649
  %v729 = vpack.c.b16 %v652, %v651
  %v730 = vpack.c.b16 %v654, %v653
  %v731 = vpack.c.b16 %v656, %v655
  %v732 = vpack.c.b16 %v658, %v657
  %v733 = vpack.c.b16 %v660, %v659
  %v734 = vpack.c.b16 %v662, %v661
  %v735 = vpack.c.b16 %v664, %v663
  %v736 = vpack.c.b16 %v666, %v665
  %v737 = vpack.c.b16 %v668, %v667
  %v738 = vpack.c.b16 %v670, %v669
  %v739 = vpack.c.b16 %v672, %v671
  %v740 = vpack.c.b16 %v674, %v673
  %v741 = vpack.c.b16 %v676, %v675
  %v742 = vpack.c.b16 %v678, %v677
  %v743 = vpack.c.b16 %v680, %v679
  %v744 = vpack.c.b16 %v682, %v681
  %v745 = vpack.c.b16 %v684, %v683
  %v746 = vpack.c.b16 %v686, %v685
  %v747 = vpack.c.b16 %v688, %v687
  %v748 = vpack.c.b16 %v690, %v689
  %v749 = vpack.c.b16 %v692, %v691
  %v750 = vpack.c.b16 %v694, %v693
  %v751 = vpack.c.b16 %v696, %v695
  %v752 = vpack.c.b16 %v698, %v697
  %v753 = vpack.c.b16 %v700, %v699
  %v754 = vpack.c.b16 %v702, %v701
  %v755 = vpack.c.b16 %v704, %v703
  %v756 = vpack.c.b16 %v706, %v705
  %v757 = vpack.c.b16 %v708, %v707
  %v758 = vpack.c.b16 %v710, %v709
  %v759 = vpack.c.b16 %v712, %v711
  %v760 = vpack.c.b16 %v714, %v713
  %v761 = vpack.c.b16 %v716, %v715
  %v762 = vpack.c.b16 %v718, %v717
  %v763 = vpack.c.b16 %v720, %v719
  %v764 = vpack.c.b16 %v722, %v721
  %v765 = vpack.c.b16 %v724, %v723
  %v766 = vpack.c.b16 %v726, %v725
  %807 = vmatprep.subr.bf16.mxu0 0
  %808 = vmatpush1.bf16.msra.mxu0 %v727
  %809 = vmatprep.subr.bf16.mxu0 0
  %810 = vmatpush1.bf16.msra.mxu0 %v728
  %811 = vmatprep.subr.bf16.mxu0 0
  %812 = vmatpush1.bf16.msra.mxu0 %v729
  %813 = vmatprep.subr.bf16.mxu0 0
  %814 = vmatpush1.bf16.msra.mxu0 %v730
  %815 = vmatprep.subr.bf16.mxu0 0
  %816 = vmatpush1.bf16.msra.mxu0 %v731
  %817 = vmatprep.subr.bf16.mxu0 0
  %818 = vmatpush1.bf16.msra.mxu0 %v732
  %819 = vmatprep.subr.bf16.mxu0 0
  %820 = vmatpush1.bf16.msra.mxu0 %v733
  %821 = vmatprep.subr.bf16.mxu0 0
  %822 = vmatpush1.bf16.msra.mxu0 %v734
  %823 = vmatprep.subr.bf16.mxu0 0
  %824 = vmatpush1.bf16.msra.mxu0 %v735
  %825 = vmatprep.subr.bf16.mxu0 0
  %826 = vmatpush1.bf16.msra.mxu0 %v736
  %827 = vmatprep.subr.bf16.mxu0 0
  %828 = vmatpush1.bf16.msra.mxu0 %v737
  %829 = vmatprep.subr.bf16.mxu0 0
  %830 = vmatpush1.bf16.msra.mxu0 %v738
  %831 = vmatprep.subr.bf16.mxu0 0
  %832 = vmatpush1.bf16.msra.mxu0 %v739
  %833 = vmatprep.subr.bf16.mxu0 0
  %834 = vmatpush1.bf16.msra.mxu0 %v740
  %835 = vmatprep.subr.bf16.mxu0 0
  %836 = vmatpush1.bf16.msra.mxu0 %v741
  %837 = vmatprep.subr.bf16.mxu0 0
  %838 = vmatpush1.bf16.msra.mxu0 %v742
  %839 = vmatprep.mubr.bf16.mxu0 %v438
  %840 = vmatmul.mubr.bf16.gmra.mrb[0].mxu0 %v437
  %v841 = vpop.f32.mrb[0].mxu0
  %v842 = vadd.f32 0.0, %v841
  %v843 = vpop.f32.mrb[0].mxu0
  %v844 = vpop.f32.mrb[0].mxu0
  %v845 = vadd.f32 0.0, %v844
  %v846 = vpop.f32.mrb[0].mxu0
  %847 = vmatprep.mubr.bf16.mxu0 %v443
  %848 = vmatmul.mubr.bf16.gmra.mrb[0].mxu0 %v442
  %v849 = vpop.f32.mrb[0].mxu0
  %v850 = vadd.f32 0.0, %v849
  %v851 = vpop.f32.mrb[0].mxu0
  %v852 = vpop.f32.mrb[0].mxu0
  %v853 = vadd.f32 0.0, %v852
  %v854 = vpop.f32.mrb[0].mxu0
  %855 = vmatprep.mubr.bf16.mxu0 %v448
  %856 = vmatmul.mubr.bf16.gmra.mrb[0].mxu0 %v447
  %v857 = vpop.f32.mrb[0].mxu0
  %v858 = vadd.f32 0.0, %v857
  %v859 = vpop.f32.mrb[0].mxu0
  %v860 = vpop.f32.mrb[0].mxu0
  %v861 = vadd.f32 0.0, %v860
  %v862 = vpop.f32.mrb[0].mxu0
  %863 = vmatprep.mubr.bf16.mxu0 %v453
  %864 = vmatmul.mubr.bf16.gmra.mrb[0].mxu0 %v452
  %v865 = vpop.f32.mrb[0].mxu0
  %v866 = vadd.f32 0.0, %v865
  %v867 = vpop.f32.mrb[0].mxu0
  %v868 = vpop.f32.mrb[0].mxu0
  %v869 = vadd.f32 0.0, %v868
  %v870 = vpop.f32.mrb[0].mxu0
  %871 = vmatprep.mubr.bf16.mxu0 %v458
  %872 = vmatmul.mubr.bf16.gmra.mrb[0].mxu0 %v457
  %v873 = vpop.f32.mrb[0].mxu0
  %v874 = vadd.f32 0.0, %v873
  %v875 = vpop.f32.mrb[0].mxu0
  %v876 = vpop.f32.mrb[0].mxu0
  %v877 = vadd.f32 0.0, %v876
  %v878 = vpop.f32.mrb[0].mxu0
  %879 = vmatprep.mubr.bf16.mxu0 %v463
  %880 = vmatmul.mubr.bf16.gmra.mrb[0].mxu0 %v462
  %v881 = vpop.f32.mrb[0].mxu0
  %v882 = vadd.f32 0.0, %v881
  %v883 = vpop.f32.mrb[0].mxu0
  %v884 = vpop.f32.mrb[0].mxu0
  %v885 = vadd.f32 0.0, %v884
  %v886 = vpop.f32.mrb[0].mxu0
  %887 = vmatprep.mubr.bf16.mxu0 %v468
  %888 = vmatmul.mubr.bf16.gmra.mrb[0].mxu0 %v467
  %v889 = vpop.f32.mrb[0].mxu0
  %v890 = vadd.f32 0.0, %v889
  %v891 = vpop.f32.mrb[0].mxu0
  %v892 = vpop.f32.mrb[0].mxu0
  %v893 = vadd.f32 0.0, %v892
  %v894 = vpop.f32.mrb[0].mxu0
  %895 = vmatprep.mubr.bf16.mxu0 %v473
  %896 = vmatmul.mubr.bf16.gmra.mrb[0].mxu0 %v472
  %v897 = vpop.f32.mrb[0].mxu0
  %v898 = vadd.f32 0.0, %v897
  %v899 = vpop.f32.mrb[0].mxu0
  %v900 = vpop.f32.mrb[0].mxu0
  %v901 = vadd.f32 0.0, %v900
  %v902 = vpop.f32.mrb[0].mxu0
  %903 = vmatprep.mubr.bf16.mxu0 %v478
  %904 = vmatmul.mubr.bf16.gmra.mrb[0].mxu0 %v477
  %v905 = vpop.f32.mrb[0].mxu0
  %v906 = vadd.f32 0.0, %v905
  %v907 = vpop.f32.mrb[0].mxu0
  %v908 = vpop.f32.mrb[0].mxu0
  %v909 = vadd.f32 0.0, %v908
  %v910 = vpop.f32.mrb[0].mxu0
  %911 = vmatprep.mubr.bf16.mxu0 %v483
  %912 = vmatmul.mubr.bf16.gmra.mrb[0].mxu0 %v482
  %v913 = vpop.f32.mrb[0].mxu0
  %v914 = vadd.f32 0.0, %v913
  %v915 = vpop.f32.mrb[0].mxu0
  %v916 = vpop.f32.mrb[0].mxu0
  %v917 = vadd.f32 0.0, %v916
  %v918 = vpop.f32.mrb[0].mxu0
  %919 = vmatprep.mubr.bf16.mxu0 %v488
  %920 = vmatmul.mubr.bf16.gmra.mrb[0].mxu0 %v487
  %v921 = vpop.f32.mrb[0].mxu0
  %v922 = vadd.f32 0.0, %v921
  %v923 = vpop.f32.mrb[0].mxu0
  %v924 = vpop.f32.mrb[0].mxu0
  %v925 = vadd.f32 0.0, %v924
  %v926 = vpop.f32.mrb[0].mxu0
  %927 = vmatprep.mubr.bf16.mxu0 %v493
  %928 = vmatmul.mubr.bf16.gmra.mrb[0].mxu0 %v492
  %v929 = vpop.f32.mrb[0].mxu0
  %v930 = vadd.f32 0.0, %v929
  %v931 = vpop.f32.mrb[0].mxu0
  %v932 = vpop.f32.mrb[0].mxu0
  %v933 = vadd.f32 0.0, %v932
  %v934 = vpop.f32.mrb[0].mxu0
  %935 = vmatprep.mubr.bf16.mxu0 %v498
  %936 = vmatmul.mubr.bf16.gmra.mrb[0].mxu0 %v497
  %v937 = vpop.f32.mrb[0].mxu0
  %v938 = vadd.f32 0.0, %v937
  %v939 = vpop.f32.mrb[0].mxu0
  %v940 = vpop.f32.mrb[0].mxu0
  %v941 = vadd.f32 0.0, %v940
  %v942 = vpop.f32.mrb[0].mxu0
  %943 = vdwg.mxu0
  %944 = vmatprep.subr.bf16.mxu0 0
  %945 = vmatpush1.bf16.msra.mxu0 %v743
  %946 = vmatprep.subr.bf16.mxu0 0
  %947 = vmatpush1.bf16.msra.mxu0 %v744
  %948 = vmatprep.subr.bf16.mxu0 0
  %949 = vmatpush1.bf16.msra.mxu0 %v745
  %950 = vmatprep.subr.bf16.mxu0 0
  %951 = vmatpush1.bf16.msra.mxu0 %v746
  %952 = vmatprep.subr.bf16.mxu0 0
  %953 = vmatpush1.bf16.msra.mxu0 %v747
  %954 = vmatprep.subr.bf16.mxu0 0
  %955 = vmatpush1.bf16.msra.mxu0 %v748
  %956 = vmatprep.subr.bf16.mxu0 0
  %957 = vmatpush1.bf16.msra.mxu0 %v749
  %958 = vmatprep.subr.bf16.mxu0 0
  %959 = vmatpush1.bf16.msra.mxu0 %v750
  %960 = vmatprep.subr.bf16.mxu0 0
  %961 = vmatpush1.bf16.msra.mxu0 %v751
  %962 = vmatprep.subr.bf16.mxu0 0
  %963 = vmatpush1.bf16.msra.mxu0 %v752
  %964 = vmatprep.subr.bf16.mxu0 0
  %965 = vmatpush1.bf16.msra.mxu0 %v753
  %966 = vmatprep.subr.bf16.mxu0 0
  %967 = vmatpush1.bf16.msra.mxu0 %v754
  %968 = vmatprep.subr.bf16.mxu0 0
  %969 = vmatpush1.bf16.msra.mxu0 %v755
  %970 = vmatprep.subr.bf16.mxu0 0
  %971 = vmatpush1.bf16.msra.mxu0 %v756
  %972 = vmatprep.subr.bf16.mxu0 0
  %973 = vmatpush1.bf16.msra.mxu0 %v757
  %974 = vmatprep.subr.bf16.mxu0 0
  %975 = vmatpush1.bf16.msra.mxu0 %v758
  %976 = vmatprep.mubr.bf16.mxu0 %v440
  %977 = vmatmul.mubr.bf16.gmra.mrb[0].mxu0 %v439
  %v978 = vpop.f32.mrb[0].mxu0
  %v979 = vadd.f32 %v842, %v978
  %v980 = vpop.f32.mrb[0].mxu0
  %v981 = vpop.f32.mrb[0].mxu0
  %v982 = vadd.f32 %v845, %v981
  %v983 = vpop.f32.mrb[0].mxu0
  %984 = vmatprep.mubr.bf16.mxu0 %v445
  %985 = vmatmul.mubr.bf16.gmra.mrb[0].mxu0 %v444
  %v986 = vpop.f32.mrb[0].mxu0
  %v987 = vadd.f32 %v850, %v986
  %v988 = vpop.f32.mrb[0].mxu0
  %v989 = vpop.f32.mrb[0].mxu0
  %v990 = vadd.f32 %v853, %v989
  %v991 = vpop.f32.mrb[0].mxu0
  %992 = vmatprep.mubr.bf16.mxu0 %v450
  %993 = vmatmul.mubr.bf16.gmra.mrb[0].mxu0 %v449
  %v994 = vpop.f32.mrb[0].mxu0
  %v995 = vadd.f32 %v858, %v994
  %v996 = vpop.f32.mrb[0].mxu0
  %v997 = vpop.f32.mrb[0].mxu0
  %v998 = vadd.f32 %v861, %v997
  %v999 = vpop.f32.mrb[0].mxu0
  %1000 = vmatprep.mubr.bf16.mxu0 %v455
  %1001 = vmatmul.mubr.bf16.gmra.mrb[0].mxu0 %v454
  %v1002 = vpop.f32.mrb[0].mxu0
  %v1003 = vadd.f32 %v866, %v1002
  %v1004 = vpop.f32.mrb[0].mxu0
  %v1005 = vpop.f32.mrb[0].mxu0
  %v1006 = vadd.f32 %v869, %v1005
  %v1007 = vpop.f32.mrb[0].mxu0
  %1008 = vmatprep.mubr.bf16.mxu0 %v460
  %1009 = vmatmul.mubr.bf16.gmra.mrb[0].mxu0 %v459
  %v1010 = vpop.f32.mrb[0].mxu0
  %v1011 = vadd.f32 %v874, %v1010
  %v1012 = vpop.f32.mrb[0].mxu0
  %v1013 = vpop.f32.mrb[0].mxu0
  %v1014 = vadd.f32 %v877, %v1013
  %v1015 = vpop.f32.mrb[0].mxu0
  %1016 = vmatprep.mubr.bf16.mxu0 %v465
  %1017 = vmatmul.mubr.bf16.gmra.mrb[0].mxu0 %v464
  %v1018 = vpop.f32.mrb[0].mxu0
  %v1019 = vadd.f32 %v882, %v1018
  %v1020 = vpop.f32.mrb[0].mxu0
  %v1021 = vpop.f32.mrb[0].mxu0
  %v1022 = vadd.f32 %v885, %v1021
  %v1023 = vpop.f32.mrb[0].mxu0
  %1024 = vmatprep.mubr.bf16.mxu0 %v470
  %1025 = vmatmul.mubr.bf16.gmra.mrb[0].mxu0 %v469
  %v1026 = vpop.f32.mrb[0].mxu0
  %v1027 = vadd.f32 %v890, %v1026
  %v1028 = vpop.f32.mrb[0].mxu0
  %v1029 = vpop.f32.mrb[0].mxu0
  %v1030 = vadd.f32 %v893, %v1029
  %v1031 = vpop.f32.mrb[0].mxu0
  %1032 = vmatprep.mubr.bf16.mxu0 %v475
  %1033 = vmatmul.mubr.bf16.gmra.mrb[0].mxu0 %v474
  %v1034 = vpop.f32.mrb[0].mxu0
  %v1035 = vadd.f32 %v898, %v1034
  %v1036 = vpop.f32.mrb[0].mxu0
  %v1037 = vpop.f32.mrb[0].mxu0
  %v1038 = vadd.f32 %v901, %v1037
  %v1039 = vpop.f32.mrb[0].mxu0
  %1040 = vmatprep.mubr.bf16.mxu0 %v480
  %1041 = vmatmul.mubr.bf16.gmra.mrb[0].mxu0 %v479
  %v1042 = vpop.f32.mrb[0].mxu0
  %v1043 = vadd.f32 %v906, %v1042
  %v1044 = vpop.f32.mrb[0].mxu0
  %v1045 = vpop.f32.mrb[0].mxu0
  %v1046 = vadd.f32 %v909, %v1045
  %v1047 = vpop.f32.mrb[0].mxu0
  %1048 = vmatprep.mubr.bf16.mxu0 %v485
  %1049 = vmatmul.mubr.bf16.gmra.mrb[0].mxu0 %v484
  %v1050 = vpop.f32.mrb[0].mxu0
  %v1051 = vadd.f32 %v914, %v1050
  %v1052 = vpop.f32.mrb[0].mxu0
  %v1053 = vpop.f32.mrb[0].mxu0
  %v1054 = vadd.f32 %v917, %v1053
  %v1055 = vpop.f32.mrb[0].mxu0
  %1056 = vmatprep.mubr.bf16.mxu0 %v490
  %1057 = vmatmul.mubr.bf16.gmra.mrb[0].mxu0 %v489
  %v1058 = vpop.f32.mrb[0].mxu0
  %v1059 = vadd.f32 %v922, %v1058
  %v1060 = vpop.f32.mrb[0].mxu0
  %v1061 = vpop.f32.mrb[0].mxu0
  %v1062 = vadd.f32 %v925, %v1061
  %v1063 = vpop.f32.mrb[0].mxu0
  %1064 = vmatprep.mubr.bf16.mxu0 %v495
  %1065 = vmatmul.mubr.bf16.gmra.mrb[0].mxu0 %v494
  %v1066 = vpop.f32.mrb[0].mxu0
  %v1067 = vadd.f32 %v930, %v1066
  %v1068 = vpop.f32.mrb[0].mxu0
  %v1069 = vpop.f32.mrb[0].mxu0
  %v1070 = vadd.f32 %v933, %v1069
  %v1071 = vpop.f32.mrb[0].mxu0
  %1072 = vmatprep.mubr.bf16.mxu0 %v500
  %1073 = vmatmul.mubr.bf16.gmra.mrb[0].mxu0 %v499
  %v1074 = vpop.f32.mrb[0].mxu0
  %v1075 = vadd.f32 %v938, %v1074
  %v1076 = vpop.f32.mrb[0].mxu0
  %v1077 = vpop.f32.mrb[0].mxu0
  %v1078 = vadd.f32 %v941, %v1077
  %v1079 = vpop.f32.mrb[0].mxu0
  %1080 = vdwg.mxu0
  %1081 = vmatprep.subr.bf16.mxu0 0
  %1082 = vmatpush1.bf16.msra.mxu0 %v759
  %1083 = vmatprep.subr.bf16.mxu0 0
  %1084 = vmatpush1.bf16.msra.mxu0 %v760
  %1085 = vmatprep.subr.bf16.mxu0 0
  %1086 = vmatpush1.bf16.msra.mxu0 %v761
  %1087 = vmatprep.subr.bf16.mxu0 0
  %1088 = vmatpush1.bf16.msra.mxu0 %v762
  %1089 = vmatprep.subr.bf16.mxu0 0
  %1090 = vmatpush1.bf16.msra.mxu0 %v763
  %1091 = vmatprep.subr.bf16.mxu0 0
  %1092 = vmatpush1.bf16.msra.mxu0 %v764
  %1093 = vmatprep.subr.bf16.mxu0 0
  %1094 = vmatpush1.bf16.msra.mxu0 %v765
  %1095 = vmatprep.subr.bf16.mxu0 0
  %1096 = vmatpush1.bf16.msra.mxu0 %v766
  %1097 = vmatprep.subr.bf16.mxu0 0
  %1098 = vmatpush1.bf16.msra.mxu0 0
  %1099 = vmatprep.subr.bf16.mxu0 0
  %1100 = vmatpush1.bf16.msra.mxu0 0
  %1101 = vmatprep.subr.bf16.mxu0 0
  %1102 = vmatpush1.bf16.msra.mxu0 0
  %1103 = vmatprep.subr.bf16.mxu0 0
  %1104 = vmatpush1.bf16.msra.mxu0 0
  %1105 = vmatprep.subr.bf16.mxu0 0
  %1106 = vmatpush1.bf16.msra.mxu0 0
  %1107 = vmatprep.subr.bf16.mxu0 0
  %1108 = vmatpush1.bf16.msra.mxu0 0
  %1109 = vmatprep.subr.bf16.mxu0 0
  %1110 = vmatpush1.bf16.msra.mxu0 0
  %1111 = vmatprep.subr.bf16.mxu0 0
  %1112 = vmatpush1.bf16.msra.mxu0 0
  %1113 = vmatprep.mubr.bf16.mxu0 0
  %1114 = vmatmul.mubr.bf16.gmra.mrb[0].mxu0 %v441
  %v1115 = vpop.f32.mrb[0].mxu0
  %v1116 = vadd.f32 %v979, %v1115
  %v1117 = vpop.f32.mrb[0].mxu0
  %v1118 = vpop.f32.mrb[0].mxu0
  %v1119 = vadd.f32 %v982, %v1118
  %v1120 = vpop.f32.mrb[0].mxu0
  %1121 = vmatprep.mubr.bf16.mxu0 0
  %1122 = vmatmul.mubr.bf16.gmra.mrb[0].mxu0 %v446
  %v1123 = vpop.f32.mrb[0].mxu0
  %v1124 = vadd.f32 %v987, %v1123
  %v1125 = vpop.f32.mrb[0].mxu0
  %v1126 = vpop.f32.mrb[0].mxu0
  %v1127 = vadd.f32 %v990, %v1126
  %v1128 = vpop.f32.mrb[0].mxu0
  %1129 = vmatprep.mubr.bf16.mxu0 0
  %1130 = vmatmul.mubr.bf16.gmra.mrb[0].mxu0 %v451
  %v1131 = vpop.f32.mrb[0].mxu0
  %v1132 = vadd.f32 %v995, %v1131
  %v1133 = vpop.f32.mrb[0].mxu0
  %v1134 = vpop.f32.mrb[0].mxu0
  %v1135 = vadd.f32 %v998, %v1134
  %v1136 = vpop.f32.mrb[0].mxu0
  %1137 = vmatprep.mubr.bf16.mxu0 0
  %1138 = vmatmul.mubr.bf16.gmra.mrb[0].mxu0 %v456
  %v1139 = vpop.f32.mrb[0].mxu0
  %v1140 = vadd.f32 %v1003, %v1139
  %v1141 = vpop.f32.mrb[0].mxu0
  %v1142 = vpop.f32.mrb[0].mxu0
  %v1143 = vadd.f32 %v1006, %v1142
  %v1144 = vpop.f32.mrb[0].mxu0
  %1145 = vmatprep.mubr.bf16.mxu0 0
  %1146 = vmatmul.mubr.bf16.gmra.mrb[0].mxu0 %v461
  %v1147 = vpop.f32.mrb[0].mxu0
  %v1148 = vadd.f32 %v1011, %v1147
  %v1149 = vpop.f32.mrb[0].mxu0
  %v1150 = vpop.f32.mrb[0].mxu0
  %v1151 = vadd.f32 %v1014, %v1150
  %v1152 = vpop.f32.mrb[0].mxu0
  %1153 = vmatprep.mubr.bf16.mxu0 0
  %1154 = vmatmul.mubr.bf16.gmra.mrb[0].mxu0 %v466
  %v1155 = vpop.f32.mrb[0].mxu0
  %v1156 = vadd.f32 %v1019, %v1155
  %v1157 = vpop.f32.mrb[0].mxu0
  %v1158 = vpop.f32.mrb[0].mxu0
  %v1159 = vadd.f32 %v1022, %v1158
  %v1160 = vpop.f32.mrb[0].mxu0
  %1161 = vmatprep.mubr.bf16.mxu0 0
  %1162 = vmatmul.mubr.bf16.gmra.mrb[0].mxu0 %v471
  %v1163 = vpop.f32.mrb[0].mxu0
  %v1164 = vadd.f32 %v1027, %v1163
  %v1165 = vpop.f32.mrb[0].mxu0
  %v1166 = vpop.f32.mrb[0].mxu0
  %v1167 = vadd.f32 %v1030, %v1166
  %v1168 = vpop.f32.mrb[0].mxu0
  %1169 = vmatprep.mubr.bf16.mxu0 0
  %1170 = vmatmul.mubr.bf16.gmra.mrb[0].mxu0 %v476
  %v1171 = vpop.f32.mrb[0].mxu0
  %v1172 = vadd.f32 %v1035, %v1171
  %v1173 = vpop.f32.mrb[0].mxu0
  %v1174 = vpop.f32.mrb[0].mxu0
  %v1175 = vadd.f32 %v1038, %v1174
  %v1176 = vpop.f32.mrb[0].mxu0
  %1177 = vmatprep.mubr.bf16.mxu0 0
  %1178 = vmatmul.mubr.bf16.gmra.mrb[0].mxu0 %v481
  %v1179 = vpop.f32.mrb[0].mxu0
  %v1180 = vadd.f32 %v1043, %v1179
  %v1181 = vpop.f32.mrb[0].mxu0
  %v1182 = vpop.f32.mrb[0].mxu0
  %v1183 = vadd.f32 %v1046, %v1182
  %v1184 = vpop.f32.mrb[0].mxu0
  %1185 = vmatprep.mubr.bf16.mxu0 0
  %1186 = vmatmul.mubr.bf16.gmra.mrb[0].mxu0 %v486
  %v1187 = vpop.f32.mrb[0].mxu0
  %v1188 = vadd.f32 %v1051, %v1187
  %v1189 = vpop.f32.mrb[0].mxu0
  %v1190 = vpop.f32.mrb[0].mxu0
  %v1191 = vadd.f32 %v1054, %v1190
  %v1192 = vpop.f32.mrb[0].mxu0
  %1193 = vmatprep.mubr.bf16.mxu0 0
  %1194 = vmatmul.mubr.bf16.gmra.mrb[0].mxu0 %v491
  %v1195 = vpop.f32.mrb[0].mxu0
  %v1196 = vadd.f32 %v1059, %v1195
  %v1197 = vpop.f32.mrb[0].mxu0
  %v1198 = vpop.f32.mrb[0].mxu0
  %v1199 = vadd.f32 %v1062, %v1198
  %v1200 = vpop.f32.mrb[0].mxu0
  %1201 = vmatprep.mubr.bf16.mxu0 0
  %1202 = vmatmul.mubr.bf16.gmra.mrb[0].mxu0 %v496
  %v1203 = vpop.f32.mrb[0].mxu0
  %v1204 = vadd.f32 %v1067, %v1203
  %v1205 = vpop.f32.mrb[0].mxu0
  %v1206 = vpop.f32.mrb[0].mxu0
  %v1207 = vadd.f32 %v1070, %v1206
  %v1208 = vpop.f32.mrb[0].mxu0
  %1209 = vmatprep.mubr.bf16.mxu0 0
  %1210 = vmatmul.mubr.bf16.gmra.mrb[0].mxu0 %v501
  %v1211 = vpop.f32.mrb[0].mxu0
  %v1212 = vadd.f32 %v1075, %v1211
  %v1213 = vpop.f32.mrb[0].mxu0
  %v1214 = vpop.f32.mrb[0].mxu0
  %v1215 = vadd.f32 %v1078, %v1214
  %v1216 = vpop.f32.mrb[0].mxu0
  %1217 = vdwg.mxu0
  %v1218 = vadd.f32 %v45, %v1116
  %v1219 = vadd.f32 %v46, %v1119
  %v1220 = vadd.f32 %v47, %v1124
  %v1221 = vadd.f32 %v48, %v1127
  %v1222 = vadd.f32 %v49, %v1132
  %v1223 = vadd.f32 %v50, %v1135
  %v1224 = vadd.f32 %v51, %v1140
  %v1225 = vadd.f32 %v52, %v1143
  %v1226 = vadd.f32 %v53, %v1148
  %v1227 = vadd.f32 %v54, %v1151
  %v1228 = vadd.f32 %v55, %v1156
  %v1229 = vadd.f32 %v56, %v1159
  %v1230 = vadd.f32 %v57, %v1164
  %v1231 = vadd.f32 %v58, %v1167
  %v1232 = vadd.f32 %v59, %v1172
  %v1233 = vadd.f32 %v60, %v1175
  %v1234 = vadd.f32 %v61, %v1180
  %v1235 = vadd.f32 %v62, %v1183
  %v1236 = vadd.f32 %v63, %v1188
  %v1237 = vadd.f32 %v64, %v1191
  %v1238 = vadd.f32 %v65, %v1196
  %v1239 = vadd.f32 %v66, %v1199
  %v1240 = vadd.f32 %v67, %v1204
  %v1241 = vadd.f32 %v68, %v1207
  %v1242 = vadd.f32 %v69, %v1212
  %v1243 = vadd.f32 %v70, %v1215
  %1244 = vst [vmem:[#allocation2] sm:$0xff] %v1218
  %1245 = vst [vmem:[#allocation2 + $0x8] sm:$0xff] %v1219
  %1246 = vst [vmem:[#allocation2 + $0x10] sm:$0xff] %v1220
  %1247 = vst [vmem:[#allocation2 + $0x18] sm:$0xff] %v1221
  %1248 = vst [vmem:[#allocation2 + $0x20] sm:$0xff] %v1222
  %1249 = vst [vmem:[#allocation2 + $0x28] sm:$0xff] %v1223
  %1250 = vst [vmem:[#allocation2 + $0x30] sm:$0xff] %v1224
  %1251 = vst [vmem:[#allocation2 + $0x38] sm:$0xff] %v1225
  %1252 = vst [vmem:[#allocation2 + $0x40] sm:$0xff] %v1226
  %1253 = vst [vmem:[#allocation2 + $0x48] sm:$0xff] %v1227
  %1254 = vst [vmem:[#allocation2 + $0x50] sm:$0xff] %v1228
  %1255 = vst [vmem:[#allocation2 + $0x58] sm:$0xff] %v1229
  %1256 = vst [vmem:[#allocation2 + $0x60] sm:$0xff] %v1230
  %1257 = vst [vmem:[#allocation2 + $0x68] sm:$0xff] %v1231
  %1258 = vst [vmem:[#allocation2 + $0x70] sm:$0xff] %v1232
  %1259 = vst [vmem:[#allocation2 + $0x78] sm:$0xff] %v1233
  %1260 = vst [vmem:[#allocation2 + $0x80] sm:$0xff] %v1234
  %1261 = vst [vmem:[#allocation2 + $0x88] sm:$0xff] %v1235
  %1262 = vst [vmem:[#allocation2 + $0x90] sm:$0xff] %v1236
  %1263 = vst [vmem:[#allocation2 + $0x98] sm:$0xff] %v1237
  %1264 = vst [vmem:[#allocation2 + $0xa0] sm:$0xff] %v1238
  %1265 = vst [vmem:[#allocation2 + $0xa8] sm:$0xff] %v1239
  %1266 = vst [vmem:[#allocation2 + $0xb0] sm:$0xff] %v1240
  %1267 = vst [vmem:[#allocation2 + $0xb8] sm:$0xff] %v1241
  %1268 = vst [vmem:[#allocation2 + $0xc0] sm:$0xff] %v1242
  %1269 = vst [vmem:[#allocation2 + $0xc8] sm:$0xff] %v1243
  // Predicated region
  $region18: #{network_forward.10} parent=0 // pred_check
    %p1270 = pneg %p15
  $region19: #{network_forward.10} parent=0 // pred_check_branch
    %1272 = sbr.rel (%p1270) target = $region21
  $region20: #{network_forward.10} parent=0 // pred_region
    %v1273 = vld [vmem:[#allocation2] sm:$0xff]
    %v1274 = vld [vmem:[#allocation2 + $0x8] sm:$0xff]
    %v1275 = vld [vmem:[#allocation2 + $0x10] sm:$0xff]
    %v1276 = vld [vmem:[#allocation2 + $0x18] sm:$0xff]
    %v1277 = vld [vmem:[#allocation2 + $0x20] sm:$0xff]
    %v1278 = vld [vmem:[#allocation2 + $0x28] sm:$0xff]
    %v1279 = vld [vmem:[#allocation2 + $0x30] sm:$0xff]
    %v1280 = vld [vmem:[#allocation2 + $0x38] sm:$0xff]
    %v1281 = vld [vmem:[#allocation2 + $0x40] sm:$0xff]
    %v1282 = vld [vmem:[#allocation2 + $0x48] sm:$0xff]
    %v1283 = vld [vmem:[#allocation2 + $0x50] sm:$0xff]
    %v1284 = vld [vmem:[#allocation2 + $0x58] sm:$0xff]
    %v1285 = vld [vmem:[#allocation2 + $0x60] sm:$0xff]
    %v1286 = vld [vmem:[#allocation2 + $0x68] sm:$0xff]
    %v1287 = vld [vmem:[#allocation2 + $0x70] sm:$0xff]
    %v1288 = vld [vmem:[#allocation2 + $0x78] sm:$0xff]
    %v1289 = vld [vmem:[#allocation2 + $0x80] sm:$0xff]
    %v1290 = vld [vmem:[#allocation2 + $0x88] sm:$0xff]
    %v1291 = vld [vmem:[#allocation2 + $0x90] sm:$0xff]
    %v1292 = vld [vmem:[#allocation2 + $0x98] sm:$0xff]
    %v1293 = vld [vmem:[#allocation2 + $0xa0] sm:$0xff]
    %v1294 = vld [vmem:[#allocation2 + $0xa8] sm:$0xff]
    %v1295 = vld [vmem:[#allocation2 + $0xb0] sm:$0xff]
    %v1296 = vld [vmem:[#allocation2 + $0xb8] sm:$0xff]
    %v1297 = vld [vmem:[#allocation2 + $0xc0] sm:$0xff]
    %v1298 = vld [vmem:[#allocation2 + $0xc8] sm:$0xff]
    %v1299 = vld [vmem:[%s2] sm:$0x1]
    %v1301 = vlaneseq
    %v1302 = vshrl.u32 %v1301, 7
    %v1303 = vsub.s32 0, %v1302
    %v1304 = vrot.slane %v1299, %v1303
    %v1306 = vadd.f32 %v1273, %v1304
    %v1307 = vadd.f32 %v1274, %v1304
    %v1308 = vadd.f32 %v1275, %v1304
    %v1309 = vadd.f32 %v1276, %v1304
    %v1310 = vadd.f32 %v1277, %v1304
    %v1311 = vadd.f32 %v1278, %v1304
    %v1312 = vadd.f32 %v1279, %v1304
    %v1313 = vadd.f32 %v1280, %v1304
    %v1314 = vadd.f32 %v1281, %v1304
    %v1315 = vadd.f32 %v1282, %v1304
    %v1316 = vadd.f32 %v1283, %v1304
    %v1317 = vadd.f32 %v1284, %v1304
    %v1318 = vadd.f32 %v1285, %v1304
    %v1319 = vadd.f32 %v1286, %v1304
    %v1320 = vadd.f32 %v1287, %v1304
    %v1321 = vadd.f32 %v1288, %v1304
    %v1322 = vadd.f32 %v1289, %v1304
    %v1323 = vadd.f32 %v1290, %v1304
    %v1324 = vadd.f32 %v1291, %v1304
    %v1325 = vadd.f32 %v1292, %v1304
    %v1326 = vadd.f32 %v1293, %v1304
    %v1327 = vadd.f32 %v1294, %v1304
    %v1328 = vadd.f32 %v1295, %v1304
    %v1329 = vadd.f32 %v1296, %v1304
    %v1330 = vadd.f32 %v1297, %v1304
    %v1331 = vadd.f32 %v1298, %v1304
    %v1332 = vmax.f32 %v1306, 0.0
    %v1333 = vmax.f32 %v1307, 0.0
    %v1334 = vmax.f32 %v1308, 0.0
    %v1335 = vmax.f32 %v1309, 0.0
    %v1336 = vmax.f32 %v1310, 0.0
    %v1337 = vmax.f32 %v1311, 0.0
    %v1338 = vmax.f32 %v1312, 0.0
    %v1339 = vmax.f32 %v1313, 0.0
    %v1340 = vmax.f32 %v1314, 0.0
    %v1341 = vmax.f32 %v1315, 0.0
    %v1342 = vmax.f32 %v1316, 0.0
    %v1343 = vmax.f32 %v1317, 0.0
    %v1344 = vmax.f32 %v1318, 0.0
    %v1345 = vmax.f32 %v1319, 0.0
    %v1346 = vmax.f32 %v1320, 0.0
    %v1347 = vmax.f32 %v1321, 0.0
    %v1348 = vmax.f32 %v1322, 0.0
    %v1349 = vmax.f32 %v1323, 0.0
    %v1350 = vmax.f32 %v1324, 0.0
    %v1351 = vmax.f32 %v1325, 0.0
    %v1352 = vmax.f32 %v1326, 0.0
    %v1353 = vmax.f32 %v1327, 0.0
    %v1354 = vmax.f32 %v1328, 0.0
    %v1355 = vmax.f32 %v1329, 0.0
    %v1356 = vmax.f32 %v1330, 0.0
    %v1357 = vmax.f32 %v1331, 0.0
    %v1358 = vpack.c.bf16 %v1333, %v1332
    %v1359 = vpack.c.bf16 %v1335, %v1334
    %v1360 = vpack.c.bf16 %v1337, %v1336
    %v1361 = vpack.c.bf16 %v1339, %v1338
    %v1362 = vpack.c.bf16 %v1341, %v1340
    %v1363 = vpack.c.bf16 %v1343, %v1342
    %v1364 = vpack.c.bf16 %v1345, %v1344
    %v1365 = vpack.c.bf16 %v1347, %v1346
    %v1366 = vpack.c.bf16 %v1349, %v1348
    %v1367 = vpack.c.bf16 %v1351, %v1350
    %v1368 = vpack.c.bf16 %v1353, %v1352
    %v1369 = vpack.c.bf16 %v1355, %v1354
    %v1370 = vpack.c.bf16 %v1357, %v1356
    %v1384 = vunpack.c.l.b16 %v1358
    %v1385 = vunpack.c.h.b16 %v1358
    %v1386 = vunpack.c.l.b16 %v1359
    %v1387 = vunpack.c.h.b16 %v1359
    %v1388 = vunpack.c.l.b16 %v1360
    %v1389 = vunpack.c.h.b16 %v1360
    %v1390 = vunpack.c.l.b16 %v1361
    %v1391 = vunpack.c.h.b16 %v1361
    %v1392 = vunpack.c.l.b16 %v1362
    %v1393 = vunpack.c.h.b16 %v1362
    %v1394 = vunpack.c.l.b16 %v1363
    %v1395 = vunpack.c.h.b16 %v1363
    %v1396 = vunpack.c.l.b16 %v1364
    %v1397 = vunpack.c.h.b16 %v1364
    %v1398 = vunpack.c.l.b16 %v1365
    %v1399 = vunpack.c.h.b16 %v1365
    %v1400 = vunpack.c.l.b16 %v1366
    %v1401 = vunpack.c.h.b16 %v1366
    %v1402 = vunpack.c.l.b16 %v1367
    %v1403 = vunpack.c.h.b16 %v1367
    %v1404 = vunpack.c.l.b16 %v1368
    %v1405 = vunpack.c.h.b16 %v1368
    %v1406 = vunpack.c.l.b16 %v1369
    %v1407 = vunpack.c.h.b16 %v1369
    %v1408 = vunpack.c.l.b16 %v1370
    %v1409 = vunpack.c.h.b16 %v1370
    %v1410 = vpack.c.b16 %v1384, %v1384
    %v1411 = vpack.c.b16 %v1385, %v1385
    %v1412 = vpack.c.b16 %v1386, %v1386
    %v1413 = vpack.c.b16 %v1387, %v1387
    %v1414 = vpack.c.b16 %v1388, %v1388
    %v1415 = vpack.c.b16 %v1389, %v1389
    %v1416 = vpack.c.b16 %v1390, %v1390
    %v1417 = vpack.c.b16 %v1391, %v1391
    %v1418 = vpack.c.b16 %v1392, %v1392
    %v1419 = vpack.c.b16 %v1393, %v1393
    %v1420 = vpack.c.b16 %v1394, %v1394
    %v1421 = vpack.c.b16 %v1395, %v1395
    %v1422 = vpack.c.b16 %v1396, %v1396
    %v1423 = vpack.c.b16 %v1397, %v1397
    %v1424 = vpack.c.b16 %v1398, %v1398
    %v1425 = vpack.c.b16 %v1399, %v1399
    %v1426 = vpack.c.b16 %v1400, %v1400
    %v1427 = vpack.c.b16 %v1401, %v1401
    %v1428 = vpack.c.b16 %v1402, %v1402
    %v1429 = vpack.c.b16 %v1403, %v1403
    %v1430 = vpack.c.b16 %v1404, %v1404
    %v1431 = vpack.c.b16 %v1405, %v1405
    %v1432 = vpack.c.b16 %v1406, %v1406
    %v1433 = vpack.c.b16 %v1407, %v1407
    %v1434 = vpack.c.b16 %v1408, %v1408
    %v1435 = vpack.c.b16 %v1409, %v1409
    %1462 = vst [vmem:[%s3] sm:$0xf] %v1410
    %1463 = vst [vmem:[%s3 + $0x4] sm:$0xf] %v1411
    %1464 = vst [vmem:[%s3 + $0x8] sm:$0xf] %v1412
    %1465 = vst [vmem:[%s3 + $0xc] sm:$0xf] %v1413
    %1466 = vst [vmem:[%s3 + $0x10] sm:$0xf] %v1414
    %1467 = vst [vmem:[%s3 + $0x14] sm:$0xf] %v1415
    %1468 = vst [vmem:[%s3 + $0x18] sm:$0xf] %v1416
    %1469 = vst [vmem:[%s3 + $0x1c] sm:$0xf] %v1417
    %1470 = vst [vmem:[%s3 + $0x20] sm:$0xf] %v1418
    %1471 = vst [vmem:[%s3 + $0x24] sm:$0xf] %v1419
    %1472 = vst [vmem:[%s3 + $0x28] sm:$0xf] %v1420
    %1473 = vst [vmem:[%s3 + $0x2c] sm:$0xf] %v1421
    %1474 = vst [vmem:[%s3 + $0x30] sm:$0xf] %v1422
    %1475 = vst [vmem:[%s3 + $0x34] sm:$0xf] %v1423
    %1476 = vst [vmem:[%s3 + $0x38] sm:$0xf] %v1424
    %1477 = vst [vmem:[%s3 + $0x3c] sm:$0xf] %v1425
    %1478 = vst [vmem:[%s3 + $0x40] sm:$0xf] %v1426
    %1479 = vst [vmem:[%s3 + $0x44] sm:$0xf] %v1427
    %1480 = vst [vmem:[%s3 + $0x48] sm:$0xf] %v1428
    %1481 = vst [vmem:[%s3 + $0x4c] sm:$0xf] %v1429
    %1482 = vst [vmem:[%s3 + $0x50] sm:$0xf] %v1430
    %1483 = vst [vmem:[%s3 + $0x54] sm:$0xf] %v1431
    %1484 = vst [vmem:[%s3 + $0x58] sm:$0xf] %v1432
    %1485 = vst [vmem:[%s3 + $0x5c] sm:$0xf] %v1433
    %1486 = vst [vmem:[%s3 + $0x60] sm:$0xf] %v1434
    %1487 = vst [vmem:[%s3 + $0x64] sm:$0xf] %v1435
  $region21: #{network_forward.10} parent=0 // pred_fallthru
    _
  // Predicated region
  $region22: #{network_forward.10} parent=0 // pred_check
    _
  $region23: #{network_forward.10} parent=0 // pred_check_branch
    %1489 = sbr.rel (0) target = $region25
  $region24: #{network_forward.10} parent=0 // pred_region
    _
  $region25: #{network_forward.10} parent=0 // pred_fallthru
    _
  // Predicated region
  $region26: #{network_forward.10} parent=0 // pred_check
    _
  $region27: #{network_forward.10} parent=0 // pred_check_branch
    %1491 = sbr.rel (0) target = $region29
  $region28: #{network_forward.10} parent=0 // pred_region
    _
  $region29: #{network_forward.10} parent=0 // pred_fallthru
    _

// kernel: network_forward.12
$region0: #{network_forward.12}
  #allocation0 [shape = 'u32[]', space=smem, size = 0x4, offset = 0x4, fixed_abs, tag = 'smem constant byte address 0x4 - core index']
  #allocation1 [shape = 'u32[144,128]{1,0:T(1,128)}', space=vmem, size = 0x12000, scoped, tag = 'internal scratch']
  #allocation2 [shape = 'f32[16,256]{1,0:T(8,128)}', space=vmem, size = 0x4000, scoped, tag = 'scratch operand']
  %s0 = inlined_call_operand.vmem [shape: bf16[16,512], index: 0, kind: input, shape index: {}]
  %s1 = inlined_call_operand.vmem [shape: bf16[512,256], index: 1, kind: input, shape index: {}]
  %s2 = inlined_call_operand.vmem [shape: f32[1,256], index: 2, kind: input, shape index: {}]
  %s3 = inlined_call_operand.vmem [shape: bf16[16,256], index: 3, kind: output, shape index: {}]
  %s4 = sld [smem:[#allocation0]]
  $region30: #{network_forward.12} parent=0
    _
  %s6 = ssub.s32 1, %s4
  %s7 = scalar_select 0, %s6, %s4
  // Predicated region
  $region2: #{network_forward.12} parent=0 // pred_check
    _
  $region3: #{network_forward.12} parent=0 // pred_check_branch
    %9 = sbr.rel (0) target = $region5
  $region4: #{network_forward.12} parent=0 // pred_region
    _
  $region5: #{network_forward.12} parent=0 // pred_fallthru
    _
  // Predicated region
  $region6: #{network_forward.12} parent=0 // pred_check
    _
  $region7: #{network_forward.12} parent=0 // pred_check_branch
    %11 = sbr.rel (0) target = $region9
  $region8: #{network_forward.12} parent=0 // pred_region
    _
  $region9: #{network_forward.12} parent=0 // pred_fallthru
    _
  // Predicated region
  $region10: #{network_forward.12} parent=0 // pred_check
    _
  $region11: #{network_forward.12} parent=0 // pred_check_branch
    %13 = sbr.rel (0) target = $region13
  $region12: #{network_forward.12} parent=0 // pred_region
    _
  $region13: #{network_forward.12} parent=0 // pred_fallthru
    _
  %p14 = scmp.eq.s32.totalorder 0, 0
  // Predicated region
  $region14: #{network_forward.12} parent=0 // pred_check
    %p15 = pneg %p14
  $region15: #{network_forward.12} parent=0 // pred_check_branch
    %17 = sbr.rel (%p15) target = $region17
  $region16: #{network_forward.12} parent=0 // pred_region
    %18 = vst [vmem:[#allocation2] sm:$0xff] 0.0
    %19 = vst [vmem:[#allocation2 + $0x8] sm:$0xff] 0.0
    %20 = vst [vmem:[#allocation2 + $0x10] sm:$0xff] 0.0
    %21 = vst [vmem:[#allocation2 + $0x18] sm:$0xff] 0.0
  $region17: #{network_forward.12} parent=0 // pred_fallthru
    _
  %v22 = vld [vmem:[#allocation2] sm:$0xff]
  %v23 = vld [vmem:[#allocation2 + $0x8] sm:$0xff]
  %v24 = vld [vmem:[#allocation2 + $0x10] sm:$0xff]
  %v25 = vld [vmem:[#allocation2 + $0x18] sm:$0xff]
  %v26 = vld [vmem:[%s0] sm:$0xff]
  %v27 = vld [vmem:[%s0 + $0x8] sm:$0xff]
  %v28 = vld [vmem:[%s0 + $0x10] sm:$0xff]
  %v29 = vld [vmem:[%s0 + $0x18] sm:$0xff]
  %v30 = vld [vmem:[%s1] sm:$0xff]
  %v31 = vld [vmem:[%s1 + $0x8] sm:$0xff]
  %v32 = vld [vmem:[%s1 + $0x10] sm:$0xff]
  %v33 = vld [vmem:[%s1 + $0x18] sm:$0xff]
  %v34 = vld [vmem:[%s1 + $0x20] sm:$0xff]
  %v35 = vld [vmem:[%s1 + $0x28] sm:$0xff]
  %v36 = vld [vmem:[%s1 + $0x30] sm:$0xff]
  %v37 = vld [vmem:[%s1 + $0x38] sm:$0xff]
  %v38 = vld [vmem:[%s1 + $0x40] sm:$0xff]
  %v39 = vld [vmem:[%s1 + $0x48] sm:$0xff]
  %v40 = vld [vmem:[%s1 + $0x50] sm:$0xff]
  %v41 = vld [vmem:[%s1 + $0x58] sm:$0xff]
  %v42 = vld [vmem:[%s1 + $0x60] sm:$0xff]
  %v43 = vld [vmem:[%s1 + $0x68] sm:$0xff]
  %v44 = vld [vmem:[%s1 + $0x70] sm:$0xff]
  %v45 = vld [vmem:[%s1 + $0x78] sm:$0xff]
  %v46 = vld [vmem:[%s1 + $0x80] sm:$0xff]
  %v47 = vld [vmem:[%s1 + $0x88] sm:$0xff]
  %v48 = vld [vmem:[%s1 + $0x90] sm:$0xff]
  %v49 = vld [vmem:[%s1 + $0x98] sm:$0xff]
  %v50 = vld [vmem:[%s1 + $0xa0] sm:$0xff]
  %v51 = vld [vmem:[%s1 + $0xa8] sm:$0xff]
  %v52 = vld [vmem:[%s1 + $0xb0] sm:$0xff]
  %v53 = vld [vmem:[%s1 + $0xb8] sm:$0xff]
  %v54 = vld [vmem:[%s1 + $0xc0] sm:$0xff]
  %v55 = vld [vmem:[%s1 + $0xc8] sm:$0xff]
  %v56 = vld [vmem:[%s1 + $0xd0] sm:$0xff]
  %v57 = vld [vmem:[%s1 + $0xd8] sm:$0xff]
  %v58 = vld [vmem:[%s1 + $0xe0] sm:$0xff]
  %v59 = vld [vmem:[%s1 + $0xe8] sm:$0xff]
  %v60 = vld [vmem:[%s1 + $0xf0] sm:$0xff]
  %v61 = vld [vmem:[%s1 + $0xf8] sm:$0xff]
  %v62 = vld [vmem:[%s1 + $0x100] sm:$0xff]
  %v63 = vld [vmem:[%s1 + $0x108] sm:$0xff]
  %v64 = vld [vmem:[%s1 + $0x110] sm:$0xff]
  %v65 = vld [vmem:[%s1 + $0x118] sm:$0xff]
  %v66 = vld [vmem:[%s1 + $0x120] sm:$0xff]
  %v67 = vld [vmem:[%s1 + $0x128] sm:$0xff]
  %v68 = vld [vmem:[%s1 + $0x130] sm:$0xff]
  %v69 = vld [vmem:[%s1 + $0x138] sm:$0xff]
  %v70 = vld [vmem:[%s1 + $0x140] sm:$0xff]
  %v71 = vld [vmem:[%s1 + $0x148] sm:$0xff]
  %v72 = vld [vmem:[%s1 + $0x150] sm:$0xff]
  %v73 = vld [vmem:[%s1 + $0x158] sm:$0xff]
  %v74 = vld [vmem:[%s1 + $0x160] sm:$0xff]
  %v75 = vld [vmem:[%s1 + $0x168] sm:$0xff]
  %v76 = vld [vmem:[%s1 + $0x170] sm:$0xff]
  %v77 = vld [vmem:[%s1 + $0x178] sm:$0xff]
  %v78 = vld [vmem:[%s1 + $0x180] sm:$0xff]
  %v79 = vld [vmem:[%s1 + $0x188] sm:$0xff]
  %v80 = vld [vmem:[%s1 + $0x190] sm:$0xff]
  %v81 = vld [vmem:[%s1 + $0x198] sm:$0xff]
  %v82 = vld [vmem:[%s1 + $0x1a0] sm:$0xff]
  %v83 = vld [vmem:[%s1 + $0x1a8] sm:$0xff]
  %v84 = vld [vmem:[%s1 + $0x1b0] sm:$0xff]
  %v85 = vld [vmem:[%s1 + $0x1b8] sm:$0xff]
  %v86 = vld [vmem:[%s1 + $0x1c0] sm:$0xff]
  %v87 = vld [vmem:[%s1 + $0x1c8] sm:$0xff]
  %v88 = vld [vmem:[%s1 + $0x1d0] sm:$0xff]
  %v89 = vld [vmem:[%s1 + $0x1d8] sm:$0xff]
  %v90 = vld [vmem:[%s1 + $0x1e0] sm:$0xff]
  %v91 = vld [vmem:[%s1 + $0x1e8] sm:$0xff]
  %v92 = vld [vmem:[%s1 + $0x1f0] sm:$0xff]
  %v93 = vld [vmem:[%s1 + $0x1f8] sm:$0xff]
  %v98 = vunpack.c.l.b16 %v26
  %v99 = vunpack.c.h.b16 %v26
  %v100 = vunpack.c.l.b16 %v27
  %v101 = vunpack.c.h.b16 %v27
  %v102 = vunpack.c.l.b16 %v28
  %v103 = vunpack.c.h.b16 %v28
  %v104 = vunpack.c.l.b16 %v29
  %v105 = vunpack.c.h.b16 %v29
  %v106 = vpack.c.b16 %v102, %v98
  %v107 = vpack.c.b16 %v103, %v99
  %v108 = vpack.c.b16 %v104, %v100
  %v109 = vpack.c.b16 %v105, %v101
  %v178 = vunpack.c.l.b16 %v30
  %v179 = vunpack.c.h.b16 %v30
  %v180 = vunpack.c.l.b16 %v31
  %v181 = vunpack.c.h.b16 %v31
  %v182 = vunpack.c.l.b16 %v32
  %v183 = vunpack.c.h.b16 %v32
  %v184 = vunpack.c.l.b16 %v33
  %v185 = vunpack.c.h.b16 %v33
  %v186 = vunpack.c.l.b16 %v34
  %v187 = vunpack.c.h.b16 %v34
  %v188 = vunpack.c.l.b16 %v35
  %v189 = vunpack.c.h.b16 %v35
  %v190 = vunpack.c.l.b16 %v36
  %v191 = vunpack.c.h.b16 %v36
  %v192 = vunpack.c.l.b16 %v37
  %v193 = vunpack.c.h.b16 %v37
  %v194 = vunpack.c.l.b16 %v38
  %v195 = vunpack.c.h.b16 %v38
  %v196 = vunpack.c.l.b16 %v39
  %v197 = vunpack.c.h.b16 %v39
  %v198 = vunpack.c.l.b16 %v40
  %v199 = vunpack.c.h.b16 %v40
  %v200 = vunpack.c.l.b16 %v41
  %v201 = vunpack.c.h.b16 %v41
  %v202 = vunpack.c.l.b16 %v42
  %v203 = vunpack.c.h.b16 %v42
  %v204 = vunpack.c.l.b16 %v43
  %v205 = vunpack.c.h.b16 %v43
  %v206 = vunpack.c.l.b16 %v44
  %v207 = vunpack.c.h.b16 %v44
  %v208 = vunpack.c.l.b16 %v45
  %v209 = vunpack.c.h.b16 %v45
  %v210 = vunpack.c.l.b16 %v46
  %v211 = vunpack.c.h.b16 %v46
  %v212 = vunpack.c.l.b16 %v47
  %v213 = vunpack.c.h.b16 %v47
  %v214 = vunpack.c.l.b16 %v48
  %v215 = vunpack.c.h.b16 %v48
  %v216 = vunpack.c.l.b16 %v49
  %v217 = vunpack.c.h.b16 %v49
  %v218 = vunpack.c.l.b16 %v50
  %v219 = vunpack.c.h.b16 %v50
  %v220 = vunpack.c.l.b16 %v51
  %v221 = vunpack.c.h.b16 %v51
  %v222 = vunpack.c.l.b16 %v52
  %v223 = vunpack.c.h.b16 %v52
  %v224 = vunpack.c.l.b16 %v53
  %v225 = vunpack.c.h.b16 %v53
  %v226 = vunpack.c.l.b16 %v54
  %v227 = vunpack.c.h.b16 %v54
  %v228 = vunpack.c.l.b16 %v55
  %v229 = vunpack.c.h.b16 %v55
  %v230 = vunpack.c.l.b16 %v56
  %v231 = vunpack.c.h.b16 %v56
  %v232 = vunpack.c.l.b16 %v57
  %v233 = vunpack.c.h.b16 %v57
  %v234 = vunpack.c.l.b16 %v58
  %v235 = vunpack.c.h.b16 %v58
  %v236 = vunpack.c.l.b16 %v59
  %v237 = vunpack.c.h.b16 %v59
  %v238 = vunpack.c.l.b16 %v60
  %v239 = vunpack.c.h.b16 %v60
  %v240 = vunpack.c.l.b16 %v61
  %v241 = vunpack.c.h.b16 %v61
  %v242 = vunpack.c.l.b16 %v62
  %v243 = vunpack.c.h.b16 %v62
  %v244 = vunpack.c.l.b16 %v63
  %v245 = vunpack.c.h.b16 %v63
  %v246 = vunpack.c.l.b16 %v64
  %v247 = vunpack.c.h.b16 %v64
  %v248 = vunpack.c.l.b16 %v65
  %v249 = vunpack.c.h.b16 %v65
  %v250 = vunpack.c.l.b16 %v66
  %v251 = vunpack.c.h.b16 %v66
  %v252 = vunpack.c.l.b16 %v67
  %v253 = vunpack.c.h.b16 %v67
  %v254 = vunpack.c.l.b16 %v68
  %v255 = vunpack.c.h.b16 %v68
  %v256 = vunpack.c.l.b16 %v69
  %v257 = vunpack.c.h.b16 %v69
  %v258 = vunpack.c.l.b16 %v70
  %v259 = vunpack.c.h.b16 %v70
  %v260 = vunpack.c.l.b16 %v71
  %v261 = vunpack.c.h.b16 %v71
  %v262 = vunpack.c.l.b16 %v72
  %v263 = vunpack.c.h.b16 %v72
  %v264 = vunpack.c.l.b16 %v73
  %v265 = vunpack.c.h.b16 %v73
  %v266 = vunpack.c.l.b16 %v74
  %v267 = vunpack.c.h.b16 %v74
  %v268 = vunpack.c.l.b16 %v75
  %v269 = vunpack.c.h.b16 %v75
  %v270 = vunpack.c.l.b16 %v76
  %v271 = vunpack.c.h.b16 %v76
  %v272 = vunpack.c.l.b16 %v77
  %v273 = vunpack.c.h.b16 %v77
  %v274 = vunpack.c.l.b16 %v78
  %v275 = vunpack.c.h.b16 %v78
  %v276 = vunpack.c.l.b16 %v79
  %v277 = vunpack.c.h.b16 %v79
  %v278 = vunpack.c.l.b16 %v80
  %v279 = vunpack.c.h.b16 %v80
  %v280 = vunpack.c.l.b16 %v81
  %v281 = vunpack.c.h.b16 %v81
  %v282 = vunpack.c.l.b16 %v82
  %v283 = vunpack.c.h.b16 %v82
  %v284 = vunpack.c.l.b16 %v83
  %v285 = vunpack.c.h.b16 %v83
  %v286 = vunpack.c.l.b16 %v84
  %v287 = vunpack.c.h.b16 %v84
  %v288 = vunpack.c.l.b16 %v85
  %v289 = vunpack.c.h.b16 %v85
  %v290 = vunpack.c.l.b16 %v86
  %v291 = vunpack.c.h.b16 %v86
  %v292 = vunpack.c.l.b16 %v87
  %v293 = vunpack.c.h.b16 %v87
  %v294 = vunpack.c.l.b16 %v88
  %v295 = vunpack.c.h.b16 %v88
  %v296 = vunpack.c.l.b16 %v89
  %v297 = vunpack.c.h.b16 %v89
  %v298 = vunpack.c.l.b16 %v90
  %v299 = vunpack.c.h.b16 %v90
  %v300 = vunpack.c.l.b16 %v91
  %v301 = vunpack.c.h.b16 %v91
  %v302 = vunpack.c.l.b16 %v92
  %v303 = vunpack.c.h.b16 %v92
  %v304 = vunpack.c.l.b16 %v93
  %v305 = vunpack.c.h.b16 %v93
  %v306 = vpack.c.b16 %v180, %v178
  %v307 = vpack.c.b16 %v181, %v179
  %v308 = vpack.c.b16 %v184, %v182
  %v309 = vpack.c.b16 %v185, %v183
  %v310 = vpack.c.b16 %v188, %v186
  %v311 = vpack.c.b16 %v189, %v187
  %v312 = vpack.c.b16 %v192, %v190
  %v313 = vpack.c.b16 %v193, %v191
  %v314 = vpack.c.b16 %v196, %v194
  %v315 = vpack.c.b16 %v197, %v195
  %v316 = vpack.c.b16 %v200, %v198
  %v317 = vpack.c.b16 %v201, %v199
  %v318 = vpack.c.b16 %v204, %v202
  %v319 = vpack.c.b16 %v205, %v203
  %v320 = vpack.c.b16 %v208, %v206
  %v321 = vpack.c.b16 %v209, %v207
  %v322 = vpack.c.b16 %v212, %v210
  %v323 = vpack.c.b16 %v213, %v211
  %v324 = vpack.c.b16 %v216, %v214
  %v325 = vpack.c.b16 %v217, %v215
  %v326 = vpack.c.b16 %v220, %v218
  %v327 = vpack.c.b16 %v221, %v219
  %v328 = vpack.c.b16 %v224, %v222
  %v329 = vpack.c.b16 %v225, %v223
  %v330 = vpack.c.b16 %v228, %v226
  %v331 = vpack.c.b16 %v229, %v227
  %v332 = vpack.c.b16 %v232, %v230
  %v333 = vpack.c.b16 %v233, %v231
  %v334 = vpack.c.b16 %v236, %v234
  %v335 = vpack.c.b16 %v237, %v235
  %v336 = vpack.c.b16 %v240, %v238
  %v337 = vpack.c.b16 %v241, %v239
  %v338 = vpack.c.b16 %v244, %v242
  %v339 = vpack.c.b16 %v245, %v243
  %v340 = vpack.c.b16 %v248, %v246
  %v341 = vpack.c.b16 %v249, %v247
  %v342 = vpack.c.b16 %v252, %v250
  %v343 = vpack.c.b16 %v253, %v251
  %v344 = vpack.c.b16 %v256, %v254
  %v345 = vpack.c.b16 %v257, %v255
  %v346 = vpack.c.b16 %v260, %v258
  %v347 = vpack.c.b16 %v261, %v259
  %v348 = vpack.c.b16 %v264, %v262
  %v349 = vpack.c.b16 %v265, %v263
  %v350 = vpack.c.b16 %v268, %v266
  %v351 = vpack.c.b16 %v269, %v267
  %v352 = vpack.c.b16 %v272, %v270
  %v353 = vpack.c.b16 %v273, %v271
  %v354 = vpack.c.b16 %v276, %v274
  %v355 = vpack.c.b16 %v277, %v275
  %v356 = vpack.c.b16 %v280, %v278
  %v357 = vpack.c.b16 %v281, %v279
  %v358 = vpack.c.b16 %v284, %v282
  %v359 = vpack.c.b16 %v285, %v283
  %v360 = vpack.c.b16 %v288, %v286
  %v361 = vpack.c.b16 %v289, %v287
  %v362 = vpack.c.b16 %v292, %v290
  %v363 = vpack.c.b16 %v293, %v291
  %v364 = vpack.c.b16 %v296, %v294
  %v365 = vpack.c.b16 %v297, %v295
  %v366 = vpack.c.b16 %v300, %v298
  %v367 = vpack.c.b16 %v301, %v299
  %v368 = vpack.c.b16 %v304, %v302
  %v369 = vpack.c.b16 %v305, %v303
  %434 = vmatprep.subr.bf16.mxu0 %v307
  %435 = vmatpush1.bf16.msra.mxu0 %v306
  %436 = vmatprep.subr.bf16.mxu0 %v309
  %437 = vmatpush1.bf16.msra.mxu0 %v308
  %438 = vmatprep.subr.bf16.mxu0 %v311
  %439 = vmatpush1.bf16.msra.mxu0 %v310
  %440 = vmatprep.subr.bf16.mxu0 %v313
  %441 = vmatpush1.bf16.msra.mxu0 %v312
  %442 = vmatprep.subr.bf16.mxu0 %v315
  %443 = vmatpush1.bf16.msra.mxu0 %v314
  %444 = vmatprep.subr.bf16.mxu0 %v317
  %445 = vmatpush1.bf16.msra.mxu0 %v316
  %446 = vmatprep.subr.bf16.mxu0 %v319
  %447 = vmatpush1.bf16.msra.mxu0 %v318
  %448 = vmatprep.subr.bf16.mxu0 %v321
  %449 = vmatpush1.bf16.msra.mxu0 %v320
  %450 = vmatprep.subr.bf16.mxu0 %v323
  %451 = vmatpush1.bf16.msra.mxu0 %v322
  %452 = vmatprep.subr.bf16.mxu0 %v325
  %453 = vmatpush1.bf16.msra.mxu0 %v324
  %454 = vmatprep.subr.bf16.mxu0 %v327
  %455 = vmatpush1.bf16.msra.mxu0 %v326
  %456 = vmatprep.subr.bf16.mxu0 %v329
  %457 = vmatpush1.bf16.msra.mxu0 %v328
  %458 = vmatprep.subr.bf16.mxu0 %v331
  %459 = vmatpush1.bf16.msra.mxu0 %v330
  %460 = vmatprep.subr.bf16.mxu0 %v333
  %461 = vmatpush1.bf16.msra.mxu0 %v332
  %462 = vmatprep.subr.bf16.mxu0 %v335
  %463 = vmatpush1.bf16.msra.mxu0 %v334
  %464 = vmatprep.subr.bf16.mxu0 %v337
  %465 = vmatpush1.bf16.msra.mxu0 %v336
  %466 = vmatprep.mubr.bf16.mxu0 %v107
  %467 = vmatmul.mubr.bf16.gmra.mrb[0].mxu0 %v106
  %v468 = vpop.f32.mrb[0].mxu0
  %v469 = vadd.f32 0.0, %v468
  %v470 = vpop.f32.mrb[0].mxu0
  %v471 = vadd.f32 0.0, %v470
  %v472 = vpop.f32.mrb[0].mxu0
  %v473 = vadd.f32 0.0, %v472
  %v474 = vpop.f32.mrb[0].mxu0
  %v475 = vadd.f32 0.0, %v474
  %476 = vdwg.mxu0
  %477 = vmatprep.subr.bf16.mxu0 %v339
  %478 = vmatpush1.bf16.msra.mxu0 %v338
  %479 = vmatprep.subr.bf16.mxu0 %v341
  %480 = vmatpush1.bf16.msra.mxu0 %v340
  %481 = vmatprep.subr.bf16.mxu0 %v343
  %482 = vmatpush1.bf16.msra.mxu0 %v342
  %483 = vmatprep.subr.bf16.mxu0 %v345
  %484 = vmatpush1.bf16.msra.mxu0 %v344
  %485 = vmatprep.subr.bf16.mxu0 %v347
  %486 = vmatpush1.bf16.msra.mxu0 %v346
  %487 = vmatprep.subr.bf16.mxu0 %v349
  %488 = vmatpush1.bf16.msra.mxu0 %v348
  %489 = vmatprep.subr.bf16.mxu0 %v351
  %490 = vmatpush1.bf16.msra.mxu0 %v350
  %491 = vmatprep.subr.bf16.mxu0 %v353
  %492 = vmatpush1.bf16.msra.mxu0 %v352
  %493 = vmatprep.subr.bf16.mxu0 %v355
  %494 = vmatpush1.bf16.msra.mxu0 %v354
  %495 = vmatprep.subr.bf16.mxu0 %v357
  %496 = vmatpush1.bf16.msra.mxu0 %v356
  %497 = vmatprep.subr.bf16.mxu0 %v359
  %498 = vmatpush1.bf16.msra.mxu0 %v358
  %499 = vmatprep.subr.bf16.mxu0 %v361
  %500 = vmatpush1.bf16.msra.mxu0 %v360
  %501 = vmatprep.subr.bf16.mxu0 %v363
  %502 = vmatpush1.bf16.msra.mxu0 %v362
  %503 = vmatprep.subr.bf16.mxu0 %v365
  %504 = vmatpush1.bf16.msra.mxu0 %v364
  %505 = vmatprep.subr.bf16.mxu0 %v367
  %506 = vmatpush1.bf16.msra.mxu0 %v366
  %507 = vmatprep.subr.bf16.mxu0 %v369
  %508 = vmatpush1.bf16.msra.mxu0 %v368
  %509 = vmatprep.mubr.bf16.mxu0 %v109
  %510 = vmatmul.mubr.bf16.gmra.mrb[0].mxu0 %v108
  %v511 = vpop.f32.mrb[0].mxu0
  %v512 = vadd.f32 %v469, %v511
  %v513 = vpop.f32.mrb[0].mxu0
  %v514 = vadd.f32 %v471, %v513
  %v515 = vpop.f32.mrb[0].mxu0
  %v516 = vadd.f32 %v473, %v515
  %v517 = vpop.f32.mrb[0].mxu0
  %v518 = vadd.f32 %v475, %v517
  %519 = vdwg.mxu0
  %v520 = vadd.f32 %v22, %v512
  %v521 = vadd.f32 %v23, %v514
  %v522 = vadd.f32 %v24, %v516
  %v523 = vadd.f32 %v25, %v518
  %524 = vst [vmem:[#allocation2] sm:$0xff] %v520
  %525 = vst [vmem:[#allocation2 + $0x8] sm:$0xff] %v521
  %526 = vst [vmem:[#allocation2 + $0x10] sm:$0xff] %v522
  %527 = vst [vmem:[#allocation2 + $0x18] sm:$0xff] %v523
  // Predicated region
  $region18: #{network_forward.12} parent=0 // pred_check
    %p528 = pneg %p14
  $region19: #{network_forward.12} parent=0 // pred_check_branch
    %530 = sbr.rel (%p528) target = $region21
  $region20: #{network_forward.12} parent=0 // pred_region
    %v531 = vld [vmem:[#allocation2] sm:$0xff]
    %v532 = vld [vmem:[#allocation2 + $0x8] sm:$0xff]
    %v533 = vld [vmem:[#allocation2 + $0x10] sm:$0xff]
    %v534 = vld [vmem:[#allocation2 + $0x18] sm:$0xff]
    %v535 = vld [vmem:[%s2] sm:$0x3]
    %v537 = vlaneseq
    %v538 = vshrl.u32 %v537, 7
    %v539 = vsub.s32 0, %v538
    %v540 = vrot.slane %v535, %v539
    %v541 = vlaneseq
    %v542 = vshrl.u32 %v541, 7
    %v543 = vsub.s32 1, %v542
    %v544 = vrot.slane %v535, %v543
    %v547 = vadd.f32 %v531, %v540
    %v548 = vadd.f32 %v532, %v544
    %v549 = vadd.f32 %v533, %v540
    %v550 = vadd.f32 %v534, %v544
    %v551 = vmax.f32 %v547, 0.0
    %v552 = vmax.f32 %v548, 0.0
    %v553 = vmax.f32 %v549, 0.0
    %v554 = vmax.f32 %v550, 0.0
    %v555 = vpack.c.bf16 %v553, %v551
    %v556 = vpack.c.bf16 %v554, %v552
    %v559 = vunpack.c.l.b16 %v555
    %v560 = vunpack.c.l.b16 %v556
    %v561 = vunpack.c.h.b16 %v555
    %v562 = vunpack.c.h.b16 %v556
    %v563 = vpack.c.b16 %v560, %v559
    %v564 = vpack.c.b16 %v562, %v561
    %567 = vst [vmem:[%s3] sm:$0xff] %v563
    %568 = vst [vmem:[%s3 + $0x8] sm:$0xff] %v564
  $region21: #{network_forward.12} parent=0 // pred_fallthru
    _
  // Predicated region
  $region22: #{network_forward.12} parent=0 // pred_check
    _
  $region23: #{network_forward.12} parent=0 // pred_check_branch
    %570 = sbr.rel (0) target = $region25
  $region24: #{network_forward.12} parent=0 // pred_region
    _
  $region25: #{network_forward.12} parent=0 // pred_fallthru
    _
  // Predicated region
  $region26: #{network_forward.12} parent=0 // pred_check
    _
  $region27: #{network_forward.12} parent=0 // pred_check_branch
    %572 = sbr.rel (0) target = $region29
  $region28: #{network_forward.12} parent=0 // pred_region
    _
  $region29: #{network_forward.12} parent=0 // pred_fallthru
    _

// kernel: network_forward.13
$region0: #{network_forward.13}
  #allocation0 [shape = 'u32[]', space=smem, size = 0x4, offset = 0x4, fixed_abs, tag = 'smem constant byte address 0x4 - core index']
  #allocation1 [shape = 'u32[144,128]{1,0:T(1,128)}', space=vmem, size = 0x12000, scoped, tag = 'internal scratch']
  #allocation2 [shape = 'f32[16,128]{1,0:T(8,128)}', space=vmem, size = 0x2000, scoped, tag = 'scratch operand']
  %s0 = inlined_call_operand.vmem [shape: bf16[16,256], index: 0, kind: input, shape index: {}]
  %s1 = inlined_call_operand.vmem [shape: bf16[256,128], index: 1, kind: input, shape index: {}]
  %s2 = inlined_call_operand.vmem [shape: f32[1,128], index: 2, kind: input, shape index: {}]
  %s3 = inlined_call_operand.vmem [shape: f32[16,128], index: 3, kind: output, shape index: {}]
  %s4 = sld [smem:[#allocation0]]
  $region30: #{network_forward.13} parent=0
    _
  %s6 = ssub.s32 1, %s4
  %s7 = scalar_select 0, %s6, %s4
  // Predicated region
  $region2: #{network_forward.13} parent=0 // pred_check
    _
  $region3: #{network_forward.13} parent=0 // pred_check_branch
    %9 = sbr.rel (0) target = $region5
  $region4: #{network_forward.13} parent=0 // pred_region
    _
  $region5: #{network_forward.13} parent=0 // pred_fallthru
    _
  // Predicated region
  $region6: #{network_forward.13} parent=0 // pred_check
    _
  $region7: #{network_forward.13} parent=0 // pred_check_branch
    %11 = sbr.rel (0) target = $region9
  $region8: #{network_forward.13} parent=0 // pred_region
    _
  $region9: #{network_forward.13} parent=0 // pred_fallthru
    _
  // Predicated region
  $region10: #{network_forward.13} parent=0 // pred_check
    _
  $region11: #{network_forward.13} parent=0 // pred_check_branch
    %13 = sbr.rel (0) target = $region13
  $region12: #{network_forward.13} parent=0 // pred_region
    _
  $region13: #{network_forward.13} parent=0 // pred_fallthru
    _
  %p15 = scmp.eq.s32.totalorder 0, 0
  // Predicated region
  $region14: #{network_forward.13} parent=0 // pred_check
    %p16 = pneg %p15
  $region15: #{network_forward.13} parent=0 // pred_check_branch
    %18 = sbr.rel (%p16) target = $region17
  $region16: #{network_forward.13} parent=0 // pred_region
    %19 = vst [vmem:[#allocation2] sm:$0xff] 0.0
    %20 = vst [vmem:[#allocation2 + $0x8] sm:$0xff] 0.0
  $region17: #{network_forward.13} parent=0 // pred_fallthru
    _
  %v21 = vld [vmem:[#allocation2] sm:$0xff]
  %v22 = vld [vmem:[#allocation2 + $0x8] sm:$0xff]
  %v23 = vld [vmem:[%s0] sm:$0xff]
  %v24 = vld [vmem:[%s0 + $0x8] sm:$0xff]
  %v25 = vld [vmem:[%s1] sm:$0xf]
  %v26 = vld [vmem:[%s1 + $0x4] sm:$0xf]
  %v27 = vld [vmem:[%s1 + $0x8] sm:$0xf]
  %v28 = vld [vmem:[%s1 + $0xc] sm:$0xf]
  %v29 = vld [vmem:[%s1 + $0x10] sm:$0xf]
  %v30 = vld [vmem:[%s1 + $0x14] sm:$0xf]
  %v31 = vld [vmem:[%s1 + $0x18] sm:$0xf]
  %v32 = vld [vmem:[%s1 + $0x1c] sm:$0xf]
  %v33 = vld [vmem:[%s1 + $0x20] sm:$0xf]
  %v34 = vld [vmem:[%s1 + $0x24] sm:$0xf]
  %v35 = vld [vmem:[%s1 + $0x28] sm:$0xf]
  %v36 = vld [vmem:[%s1 + $0x2c] sm:$0xf]
  %v37 = vld [vmem:[%s1 + $0x30] sm:$0xf]
  %v38 = vld [vmem:[%s1 + $0x34] sm:$0xf]
  %v39 = vld [vmem:[%s1 + $0x38] sm:$0xf]
  %v40 = vld [vmem:[%s1 + $0x3c] sm:$0xf]
  %v41 = vld [vmem:[%s1 + $0x40] sm:$0xf]
  %v42 = vld [vmem:[%s1 + $0x44] sm:$0xf]
  %v43 = vld [vmem:[%s1 + $0x48] sm:$0xf]
  %v44 = vld [vmem:[%s1 + $0x4c] sm:$0xf]
  %v45 = vld [vmem:[%s1 + $0x50] sm:$0xf]
  %v46 = vld [vmem:[%s1 + $0x54] sm:$0xf]
  %v47 = vld [vmem:[%s1 + $0x58] sm:$0xf]
  %v48 = vld [vmem:[%s1 + $0x5c] sm:$0xf]
  %v49 = vld [vmem:[%s1 + $0x60] sm:$0xf]
  %v50 = vld [vmem:[%s1 + $0x64] sm:$0xf]
  %v51 = vld [vmem:[%s1 + $0x68] sm:$0xf]
  %v52 = vld [vmem:[%s1 + $0x6c] sm:$0xf]
  %v53 = vld [vmem:[%s1 + $0x70] sm:$0xf]
  %v54 = vld [vmem:[%s1 + $0x74] sm:$0xf]
  %v55 = vld [vmem:[%s1 + $0x78] sm:$0xf]
  %v56 = vld [vmem:[%s1 + $0x7c] sm:$0xf]
  %v59 = vunpack.c.l.b16 %v23
  %v60 = vunpack.c.h.b16 %v23
  %v61 = vunpack.c.l.b16 %v24
  %v62 = vunpack.c.h.b16 %v24
  %v63 = vpack.c.b16 %v61, %v59
  %v64 = vpack.c.b16 %v62, %v60
  %v99 = vunpack.c.l.b16 %v25
  %v100 = vunpack.c.l.b16 %v26
  %v101 = vunpack.c.l.b16 %v27
  %v102 = vunpack.c.l.b16 %v28
  %v103 = vunpack.c.l.b16 %v29
  %v104 = vunpack.c.l.b16 %v30
  %v105 = vunpack.c.l.b16 %v31
  %v106 = vunpack.c.l.b16 %v32
  %v107 = vunpack.c.l.b16 %v33
  %v108 = vunpack.c.l.b16 %v34
  %v109 = vunpack.c.l.b16 %v35
  %v110 = vunpack.c.l.b16 %v36
  %v111 = vunpack.c.l.b16 %v37
  %v112 = vunpack.c.l.b16 %v38
  %v113 = vunpack.c.l.b16 %v39
  %v114 = vunpack.c.l.b16 %v40
  %v115 = vunpack.c.l.b16 %v41
  %v116 = vunpack.c.l.b16 %v42
  %v117 = vunpack.c.l.b16 %v43
  %v118 = vunpack.c.l.b16 %v44
  %v119 = vunpack.c.l.b16 %v45
  %v120 = vunpack.c.l.b16 %v46
  %v121 = vunpack.c.l.b16 %v47
  %v122 = vunpack.c.l.b16 %v48
  %v123 = vunpack.c.l.b16 %v49
  %v124 = vunpack.c.l.b16 %v50
  %v125 = vunpack.c.l.b16 %v51
  %v126 = vunpack.c.l.b16 %v52
  %v127 = vunpack.c.l.b16 %v53
  %v128 = vunpack.c.l.b16 %v54
  %v129 = vunpack.c.l.b16 %v55
  %v130 = vunpack.c.l.b16 %v56
  %v131 = vpack.c.b16 %v100, %v99
  %v132 = vpack.c.b16 %v102, %v101
  %v133 = vpack.c.b16 %v104, %v103
  %v134 = vpack.c.b16 %v106, %v105
  %v135 = vpack.c.b16 %v108, %v107
  %v136 = vpack.c.b16 %v110, %v109
  %v137 = vpack.c.b16 %v112, %v111
  %v138 = vpack.c.b16 %v114, %v113
  %v139 = vpack.c.b16 %v116, %v115
  %v140 = vpack.c.b16 %v118, %v117
  %v141 = vpack.c.b16 %v120, %v119
  %v142 = vpack.c.b16 %v122, %v121
  %v143 = vpack.c.b16 %v124, %v123
  %v144 = vpack.c.b16 %v126, %v125
  %v145 = vpack.c.b16 %v128, %v127
  %v146 = vpack.c.b16 %v130, %v129
  %163 = vmatprep.subr.bf16.mxu0 0
  %164 = vmatpush1.bf16.msra.mxu0 %v131
  %165 = vmatprep.subr.bf16.mxu0 0
  %166 = vmatpush1.bf16.msra.mxu0 %v132
  %167 = vmatprep.subr.bf16.mxu0 0
  %168 = vmatpush1.bf16.msra.mxu0 %v133
  %169 = vmatprep.subr.bf16.mxu0 0
  %170 = vmatpush1.bf16.msra.mxu0 %v134
  %171 = vmatprep.subr.bf16.mxu0 0
  %172 = vmatpush1.bf16.msra.mxu0 %v135
  %173 = vmatprep.subr.bf16.mxu0 0
  %174 = vmatpush1.bf16.msra.mxu0 %v136
  %175 = vmatprep.subr.bf16.mxu0 0
  %176 = vmatpush1.bf16.msra.mxu0 %v137
  %177 = vmatprep.subr.bf16.mxu0 0
  %178 = vmatpush1.bf16.msra.mxu0 %v138
  %179 = vmatprep.subr.bf16.mxu0 0
  %180 = vmatpush1.bf16.msra.mxu0 %v139
  %181 = vmatprep.subr.bf16.mxu0 0
  %182 = vmatpush1.bf16.msra.mxu0 %v140
  %183 = vmatprep.subr.bf16.mxu0 0
  %184 = vmatpush1.bf16.msra.mxu0 %v141
  %185 = vmatprep.subr.bf16.mxu0 0
  %186 = vmatpush1.bf16.msra.mxu0 %v142
  %187 = vmatprep.subr.bf16.mxu0 0
  %188 = vmatpush1.bf16.msra.mxu0 %v143
  %189 = vmatprep.subr.bf16.mxu0 0
  %190 = vmatpush1.bf16.msra.mxu0 %v144
  %191 = vmatprep.subr.bf16.mxu0 0
  %192 = vmatpush1.bf16.msra.mxu0 %v145
  %193 = vmatprep.subr.bf16.mxu0 0
  %194 = vmatpush1.bf16.msra.mxu0 %v146
  %195 = vmatprep.mubr.bf16.mxu0 %v64
  %196 = vmatmul.mubr.bf16.gmra.mrb[0].mxu0 %v63
  %v197 = vpop.f32.mrb[0].mxu0
  %v198 = vadd.f32 0.0, %v197
  %v199 = vpop.f32.mrb[0].mxu0
  %v200 = vpop.f32.mrb[0].mxu0
  %v201 = vadd.f32 0.0, %v200
  %v202 = vpop.f32.mrb[0].mxu0
  %203 = vdwg.mxu0
  %v204 = vadd.f32 %v21, %v198
  %v205 = vadd.f32 %v22, %v201
  %206 = vst [vmem:[#allocation2] sm:$0xff] %v204
  %207 = vst [vmem:[#allocation2 + $0x8] sm:$0xff] %v205
  // Predicated region
  $region18: #{network_forward.13} parent=0 // pred_check
    %p208 = pneg %p15
  $region19: #{network_forward.13} parent=0 // pred_check_branch
    %210 = sbr.rel (%p208) target = $region21
  $region20: #{network_forward.13} parent=0 // pred_region
    %v211 = vld [vmem:[#allocation2] sm:$0xff]
    %v212 = vld [vmem:[#allocation2 + $0x8] sm:$0xff]
    %v213 = vld [vmem:[%s2] sm:$0x1]
    %v215 = vlaneseq
    %v216 = vshrl.u32 %v215, 7
    %v217 = vsub.s32 0, %v216
    %v218 = vrot.slane %v213, %v217
    %v220 = vadd.f32 %v211, %v218
    %v221 = vadd.f32 %v212, %v218
    %222 = vst [vmem:[%s3] sm:$0xff] %v220
    %223 = vst [vmem:[%s3 + $0x8] sm:$0xff] %v221
  $region21: #{network_forward.13} parent=0 // pred_fallthru
    _
  // Predicated region
  $region22: #{network_forward.13} parent=0 // pred_check
    _
  $region23: #{network_forward.13} parent=0 // pred_check_branch
    %225 = sbr.rel (0) target = $region25
  $region24: #{network_forward.13} parent=0 // pred_region
    _
  $region25: #{network_forward.13} parent=0 // pred_fallthru
    _
  // Predicated region
  $region26: #{network_forward.13} parent=0 // pred_check
    _
  $region27: #{network_forward.13} parent=0 // pred_check_branch
    %227 = sbr.rel (0) target = $region29
  $region28: #{network_forward.13} parent=0 // pred_region
    _
  $region29: #{network_forward.13} parent=0 // pred_fallthru
    _

// kernel: network_forward.11
$region0: #{network_forward.11}
  #allocation0 [shape = 'u32[]', space=smem, size = 0x4, offset = 0x4, fixed_abs, tag = 'smem constant byte address 0x4 - core index']
  #allocation1 [shape = 'u32[144,128]{1,0:T(1,128)}', space=vmem, size = 0x12000, scoped, tag = 'internal scratch']
  #allocation2 [shape = 'f32[16,512]{1,0:T(8,128)}', space=vmem, size = 0x8000, scoped, tag = 'scratch operand']
  %s0 = inlined_call_operand.vmem [shape: bf16[16,12800], index: 0, kind: input, shape index: {}]
  %s1 = inlined_call_operand.vmem [shape: bf16[12800,512], index: 1, kind: input, shape index: {}]
  %s2 = inlined_call_operand.vmem [shape: f32[1,512], index: 2, kind: input, shape index: {}]
  %s3 = inlined_call_operand.vmem [shape: bf16[16,512], index: 3, kind: output, shape index: {}]
  %s4 = sld [smem:[#allocation0]]
  $region76: #{network_forward.11} parent=0
    _
  %s6 = ssub.s32 1, %s4
  %s7 = scalar_select 0, %s6, %s4
  $region1: #{network_forward.11} parent=0
    #allocation3 [shape = 'u8[163840]{0}', space=vmem, size = 0x28000, scoped, tag = 'input window, operand 0']
    loop: start=0, step=1, limit=7
    $region2: #{network_forward.11} parent=1 // loop_pre_header
      _
    $region3: #{network_forward.11} parent=1 // loop_header
      %s9 = sphi 0, %s13
      %p10 = scmp.ge.s32.totalorder %s9, 7
      %s16 = sphi 0, %s28
      %s17 = sphi 0, %s24
      %s18 = sphi 0, %s16
      %s19 = sphi 0, %s17
      %s20 = sphi 0, %s18
      %s21 = sphi 0, %s19
      %s33 = sphi 0, %s35
      %s36 = sphi 0, %s33
      %s37 = sphi 0, %s36
      %s53 = sphi 0, %s37
      %s59 = sphi 0, %s61
      %s62 = sphi 0, %s59
      %s63 = sphi 0, %s62
      %s79 = sphi 0, %s63
      %s83 = sphi 0, %s83
      %s85 = sphi 0, %s83
      %s86 = sphi 0, %s85
      %s100 = sphi 0, %s86
      %s106 = sphi 0, %s108
      %s109 = sphi 0, %s106
      %s110 = sphi 0, %s109
      %s126 = sphi 0, %s110
    $region4: #{network_forward.11} parent=1 // loop_header_branch
      %12 = sbr.rel (%p10) target = $region8
    $region5: #{network_forward.11} parent=1 // loop_body
      %s14 = ssub.s32 %s9, 1
      %s15 = ssub.s32 %s9, 2
      %s22 = sadd.s32 1, %s17
      %p23 = scmp.ge.s32.totalorder %s22, 5
      %s24 = scalar_select %p23, 0, %s22
      %s25 = sadd.s32 1, %s16
      %s26 = scalar_select %p23, %s25, %s16
      %p27 = scmp.ge.s32.totalorder %s26, 1
      %s28 = scalar_select %p27, 0, %s26
      %s29 = ssub.s32 %s16, %s28
      %s30 = ssub.s32 %s17, %s24
      %s31 = sor.u32 %s29, %s30
      %p32 = scmp.eq.s32.totalorder %s31, 0
      %s34 = sadd.s32 %s33, 1
      %s35 = scalar_select %p32, %s33, %s34
      %p38 = pneg %p32
      %p39 = scmp.eq.s32.totalorder %s9, 4
      %p40 = por %p38, %p39
      %p41 = scmp.ne.s32.totalorder %s33, %s36
      %p42 = scmp.eq.s32.totalorder %s9, 0
      %p43 = por %p41, %p42
      %p44 = scmp.ne.s32.totalorder %s33, %s36
      %p45 = scmp.eq.s32.totalorder %s14, 4
      %p46 = por %p44, %p45
      %p47 = scmp.ne.s32.totalorder %s36, %s37
      %p48 = scmp.eq.s32.totalorder %s14, 0
      %p49 = por %p47, %p48
      %p50 = scmp.ne.s32.totalorder %s36, %s37
      %p51 = scmp.eq.s32.totalorder %s15, 4
      %p52 = por %p50, %p51
      %p54 = scmp.ne.s32.totalorder %s37, %s53
      %p55 = scmp.eq.s32.totalorder %s15, 0
      %p56 = por %p54, %p55
      %s57 = ssub.s32 %s17, %s24
      %p58 = scmp.eq.s32.totalorder %s57, 0
      %s60 = sadd.s32 %s59, 1
      %s61 = scalar_select %p58, %s59, %s60
      %p64 = pneg %p58
      %p65 = scmp.eq.s32.totalorder %s9, 4
      %p66 = por %p64, %p65
      %p67 = scmp.ne.s32.totalorder %s59, %s62
      %p68 = scmp.eq.s32.totalorder %s9, 0
      %p69 = por %p67, %p68
      %p70 = scmp.ne.s32.totalorder %s59, %s62
      %p71 = scmp.eq.s32.totalorder %s14, 4
      %p72 = por %p70, %p71
      %p73 = scmp.ne.s32.totalorder %s62, %s63
      %p74 = scmp.eq.s32.totalorder %s14, 0
      %p75 = por %p73, %p74
      %p76 = scmp.ne.s32.totalorder %s62, %s63
      %p77 = scmp.eq.s32.totalorder %s15, 4
      %p78 = por %p76, %p77
      %p80 = scmp.ne.s32.totalorder %s63, %s79
      %p81 = scmp.eq.s32.totalorder %s15, 0
      %p82 = por %p80, %p81
      %s84 = sadd.s32 %s83, 1
      %p87 = scmp.eq.s32.totalorder %s9, 4
      %p88 = scmp.ne.s32.totalorder %s83, %s85
      %p89 = scmp.eq.s32.totalorder %s9, 0
      %p90 = por %p88, %p89
      %p91 = scmp.ne.s32.totalorder %s83, %s85
      %p92 = scmp.eq.s32.totalorder %s14, 4
      %p93 = por %p91, %p92
      %p94 = scmp.ne.s32.totalorder %s85, %s86
      %p95 = scmp.eq.s32.totalorder %s14, 0
      %p96 = por %p94, %p95
      %p97 = scmp.ne.s32.totalorder %s85, %s86
      %p98 = scmp.eq.s32.totalorder %s15, 4
      %p99 = por %p97, %p98
      %p101 = scmp.ne.s32.totalorder %s86, %s100
      %p102 = scmp.eq.s32.totalorder %s15, 0
      %p103 = por %p101, %p102
      %s104 = ssub.s32 %s16, %s28
      %p105 = scmp.eq.s32.totalorder %s104, 0
      %s107 = sadd.s32 %s106, 1
      %s108 = scalar_select %p105, %s106, %s107
      %p111 = pneg %p105
      %p112 = scmp.eq.s32.totalorder %s9, 4
      %p113 = por %p111, %p112
      %p114 = scmp.ne.s32.totalorder %s106, %s109
      %p115 = scmp.eq.s32.totalorder %s9, 0
      %p116 = por %p114, %p115
      %p117 = scmp.ne.s32.totalorder %s106, %s109
      %p118 = scmp.eq.s32.totalorder %s14, 4
      %p119 = por %p117, %p118
      %p120 = scmp.ne.s32.totalorder %s109, %s110
      %p121 = scmp.eq.s32.totalorder %s14, 0
      %p122 = por %p120, %p121
      %p123 = scmp.ne.s32.totalorder %s109, %s110
      %p124 = scmp.eq.s32.totalorder %s15, 4
      %p125 = por %p123, %p124
      %p127 = scmp.ne.s32.totalorder %s110, %s126
      %p128 = scmp.eq.s32.totalorder %s15, 0
      %p129 = por %p127, %p128
      %p130 = scmp.le.s32.totalorder 1, %s9
      %p131 = scmp.lt.s32.totalorder %s9, 6
      %p132 = pnand %p130, %p131
      %p133 = pneg %p132
      // Predicated region
      $region9: #{network_forward.11} parent=5 // pred_check
        _
      $region10: #{network_forward.11} parent=5 // pred_check_branch
        %135 = sbr.rel (%p132) target = $region12
      $region11: #{network_forward.11} parent=5 // pred_region
        %s136 = ssub.s32 %s9, 1
        // Predicated region
        $region13: #{network_forward.11} parent=11 // pred_check
          %p137 = pneg %p96
        $region14: #{network_forward.11} parent=11 // pred_check_branch
          %139 = sbr.rel (%p137) target = $region16
        $region15: #{network_forward.11} parent=11 // pred_region
          _
        $region16: #{network_forward.11} parent=11 // pred_fallthru
          _
      $region12: #{network_forward.11} parent=5 // pred_fallthru
        _
      %p140 = scmp.lt.s32.totalorder %s9, 5
      // Predicated region
      $region17: #{network_forward.11} parent=5 // pred_check
        %p141 = pneg %p140
      $region18: #{network_forward.11} parent=5 // pred_check_branch
        %143 = sbr.rel (%p141) target = $region20
      $region19: #{network_forward.11} parent=5 // pred_region
        // Predicated region
        $region21: #{network_forward.11} parent=19 // pred_check
          %p144 = pneg %p43
        $region22: #{network_forward.11} parent=19 // pred_check_branch
          %146 = sbr.rel (%p144) target = $region24
        $region23: #{network_forward.11} parent=19 // pred_region
          %s147 = sand.u32 %s33, 1
          %s148 = sand.u32 %s33, 1
          %s149 = smul.addr %s148, 160
          %s150 = scalar_lea.vmem [#allocation3], %s149
          %s151 = smul.u32 2, %s16
          %s152 = smul.u32 20, %s17
          %s153 = smul.addr %s151, 100
          %s154 = sadd.s32 %s152, %s153
          %s155 = smul.addr %s154, 4
          %s156 = scalar_lea.vmem %s0, %s155
          // Predicated region
          $region25: #{network_forward.11} parent=23 // pred_check
            _
          $region26: #{network_forward.11} parent=23 // pred_check_branch
            %158 = sbr.rel (0) target = $region28
          $region27: #{network_forward.11} parent=23 // pred_region
            // Predicated region
            $region29: #{network_forward.11} parent=27 // pred_check
              _
            $region30: #{network_forward.11} parent=27 // pred_check_branch
              %160 = sbr.rel (0) target = $region32
            $region31: #{network_forward.11} parent=27 // pred_region
              loop: start=0, step=1, limit=1
              $region33: #{network_forward.11} parent=31 // loop_pre_header
                _
              $region34: #{network_forward.11} parent=31 // loop_header
                %s162 = sphi 0, %s166
                %p163 = scmp.ge.s32.totalorder %s162, 1
                %s167 = sphi %s156, %s156
                %s168 = sphi %s150, %s150
              $region35: #{network_forward.11} parent=31 // loop_header_branch
                %165 = sbr.rel (%p163) target = $region39
              $region36: #{network_forward.11} parent=31 // loop_body
                %v169 = vld [vmem:[%s167] sm:$0xff]
                %170 = vst [vmem:[%s168] sm:$0xff] %v169
                %v171 = vld [vmem:[%s167 + $0x8] sm:$0xff]
                %172 = vst [vmem:[%s168 + $0x8] sm:$0xff] %v171
                %v173 = vld [vmem:[%s167 + $0x10] sm:$0xff]
                %174 = vst [vmem:[%s168 + $0x10] sm:$0xff] %v173
                %v175 = vld [vmem:[%s167 + $0x18] sm:$0xff]
                %176 = vst [vmem:[%s168 + $0x18] sm:$0xff] %v175
                %v177 = vld [vmem:[%s167 + $0x20] sm:$0xff]
                %178 = vst [vmem:[%s168 + $0x20] sm:$0xff] %v177
                %v179 = vld [vmem:[%s167 + $0x28] sm:$0xff]
                %180 = vst [vmem:[%s168 + $0x28] sm:$0xff] %v179
                %v181 = vld [vmem:[%s167 + $0x30] sm:$0xff]
                %182 = vst [vmem:[%s168 + $0x30] sm:$0xff] %v181
                %v183 = vld [vmem:[%s167 + $0x38] sm:$0xff]
                %184 = vst [vmem:[%s168 + $0x38] sm:$0xff] %v183
                %v185 = vld [vmem:[%s167 + $0x40] sm:$0xff]
                %186 = vst [vmem:[%s168 + $0x40] sm:$0xff] %v185
                %v187 = vld [vmem:[%s167 + $0x48] sm:$0xff]
                %188 = vst [vmem:[%s168 + $0x48] sm:$0xff] %v187
                %v189 = vld [vmem:[%s167 + $0x190] sm:$0xff]
                %190 = vst [vmem:[%s168 + $0x50] sm:$0xff] %v189
                %v191 = vld [vmem:[%s167 + $0x198] sm:$0xff]
                %192 = vst [vmem:[%s168 + $0x58] sm:$0xff] %v191
                %v193 = vld [vmem:[%s167 + $0x1a0] sm:$0xff]
                %194 = vst [vmem:[%s168 + $0x60] sm:$0xff] %v193
                %v195 = vld [vmem:[%s167 + $0x1a8] sm:$0xff]
                %196 = vst [vmem:[%s168 + $0x68] sm:$0xff] %v195
                %v197 = vld [vmem:[%s167 + $0x1b0] sm:$0xff]
                %198 = vst [vmem:[%s168 + $0x70] sm:$0xff] %v197
                %v199 = vld [vmem:[%s167 + $0x1b8] sm:$0xff]
                %200 = vst [vmem:[%s168 + $0x78] sm:$0xff] %v199
                %v201 = vld [vmem:[%s167 + $0x1c0] sm:$0xff]
                %202 = vst [vmem:[%s168 + $0x80] sm:$0xff] %v201
                %v203 = vld [vmem:[%s167 + $0x1c8] sm:$0xff]
                %204 = vst [vmem:[%s168 + $0x88] sm:$0xff] %v203
                %v205 = vld [vmem:[%s167 + $0x1d0] sm:$0xff]
                %206 = vst [vmem:[%s168 + $0x90] sm:$0xff] %v205
                %v207 = vld [vmem:[%s167 + $0x1d8] sm:$0xff]
                %208 = vst [vmem:[%s168 + $0x98] sm:$0xff] %v207
              $region37: #{network_forward.11} parent=31 // loop_footer
                %s166 = sadd.s32 1, %s162
              $region38: #{network_forward.11} parent=31 // loop_footer_branch
                %161 = sbr.rel target = $region34
              $region39: #{network_forward.11} parent=31 // loop_exit
                _
            $region32: #{network_forward.11} parent=27 // pred_fallthru
              _
            // Predicated region
            $region40: #{network_forward.11} parent=27 // pred_check
              _
            $region41: #{network_forward.11} parent=27 // pred_check_branch
              %210 = sbr.rel target = $region43
            $region42: #{network_forward.11} parent=27 // pred_region
              _
            $region43: #{network_forward.11} parent=27 // pred_fallthru
              _
          $region28: #{network_forward.11} parent=23 // pred_fallthru
            _
          %211 = vnop
        $region24: #{network_forward.11} parent=19 // pred_fallthru
          _
        // Predicated region
        $region44: #{network_forward.11} parent=19 // pred_check
          %p212 = pneg %p69
        $region45: #{network_forward.11} parent=19 // pred_check_branch
          %214 = sbr.rel (%p212) target = $region47
        $region46: #{network_forward.11} parent=19 // pred_region
          %s215 = smul.u32 320, %s17
          %p216 = scmp.lt.s32.totalorder %s215, 1599
          %s217 = scalar_select %p216, %s215, 1599
          %s218 = smul.addr %s217, 4
          %s219 = smul.addr %s218, 4
          %s220 = scalar_lea.vmem %s1, %s219
          %s221 = smul.u32 320, %s17
        $region47: #{network_forward.11} parent=19 // pred_fallthru
          _
      $region20: #{network_forward.11} parent=5 // pred_fallthru
        _
      %p222 = scmp.le.s32.totalorder 1, %s9
      %p223 = scmp.lt.s32.totalorder %s9, 6
      %p224 = pnand %p222, %p223
      %p225 = pneg %p224
      // Predicated region
      $region48: #{network_forward.11} parent=5 // pred_check
        _
      $region49: #{network_forward.11} parent=5 // pred_check_branch
        %227 = sbr.rel (%p224) target = $region51
      $region50: #{network_forward.11} parent=5 // pred_region
        %s228 = ssub.s32 %s9, 1
        %s229 = sand.u32 %s36, 1
        %s230 = sand.u32 %s36, 1
        %s231 = smul.addr %s230, 160
        %s232 = scalar_lea.vmem [#allocation3], %s231
        // Predicated region
        $region52: #{network_forward.11} parent=50 // pred_check
          %p233 = pneg %p49
        $region53: #{network_forward.11} parent=50 // pred_check_branch
          %235 = sbr.rel (%p233) target = $region55
        $region54: #{network_forward.11} parent=50 // pred_region
          _
        $region55: #{network_forward.11} parent=50 // pred_fallthru
          _
        %s236 = sand.u32 %s36, 1
        %s237 = sand.u32 %s36, 1
        %s238 = smul.addr %s237, 160
        %s239 = scalar_lea.vmem [#allocation3], %s238
        %p240 = pneg %p49
        %p241 = pneg %p46
        %s242 = smul.u32 320, %s19
        %p243 = scmp.lt.s32.totalorder %s242, 1599
        %s244 = scalar_select %p243, %s242, 1599
        %s245 = smul.addr %s244, 4
        %s246 = smul.addr %s245, 4
        %s247 = scalar_lea.vmem %s1, %s246
        %p248 = pneg %p75
        %p249 = pneg %p72
        %p250 = pneg %p96
        %p251 = pneg %p93
        %p252 = pneg %p122
        %p253 = pneg %p119
        %s254 = smul.u32 2, %s18
        %p255 = scmp.lt.s32.totalorder %s254, 1
        %s256 = scalar_select %p255, %s254, 1
        %s257 = smul.addr %s256, 4
        %s258 = smul.addr %s257, 4
        %s259 = scalar_lea.vmem %s3, %s258
        %s260 = smul.u32 2, %s18
        %s261 = smul.u32 20, %s19
        %s262 = smul.u32 320, %s19
        %p263 = scmp.lt.s32.totalorder %s262, 1599
        %s264 = scalar_select %p263, %s262, 1599
        %s265 = smul.addr %s264, 4
        %s266 = smul.addr %s265, 4
        %s267 = scalar_lea.vmem %s1, %s266
        %s268 = smul.u32 320, %s19
        %s269 = smul.u32 2, %s18
        %p270 = scmp.lt.s32.totalorder %s269, 1
        %s271 = scalar_select %p270, %s269, 1
        %s272 = smul.addr %s271, 4
        %s273 = smul.addr %s272, 4
        %s274 = scalar_lea.vmem %s3, %s273
        %s275 = smul.u32 2, %s18
        %p276 = scmp.eq.s32.totalorder %s19, 0
        // Predicated region
        $region56: #{network_forward.11} parent=50 // pred_check
          %p277 = pneg %p276
        $region57: #{network_forward.11} parent=50 // pred_check_branch
          %279 = sbr.rel (%p277) target = $region59
        $region58: #{network_forward.11} parent=50 // pred_region
          %280 = vst [vmem:[#allocation2] sm:$0xff] 0.0
          %281 = vst [vmem:[#allocation2 + $0x8] sm:$0xff] 0.0
          %282 = vst [vmem:[#allocation2 + $0x10] sm:$0xff] 0.0
          %283 = vst [vmem:[#allocation2 + $0x18] sm:$0xff] 0.0
          %284 = vst [vmem:[#allocation2 + $0x20] sm:$0xff] 0.0
          %285 = vst [vmem:[#allocation2 + $0x28] sm:$0xff] 0.0
          %286 = vst [vmem:[#allocation2 + $0x30] sm:$0xff] 0.0
          %287 = vst [vmem:[#allocation2 + $0x38] sm:$0xff] 0.0
        $region59: #{network_forward.11} parent=50 // pred_fallthru
          _
        %v288 = vld [vmem:[#allocation2] sm:$0xff]
        %v289 = vld [vmem:[#allocation2 + $0x8] sm:$0xff]
        %v290 = vld [vmem:[#allocation2 + $0x10] sm:$0xff]
        %v291 = vld [vmem:[#allocation2 + $0x18] sm:$0xff]
        %v292 = vld [vmem:[#allocation2 + $0x20] sm:$0xff]
        %v293 = vld [vmem:[#allocation2 + $0x28] sm:$0xff]
        %v294 = vld [vmem:[#allocation2 + $0x30] sm:$0xff]
        %v295 = vld [vmem:[#allocation2 + $0x38] sm:$0xff]
        %v296 = vld [vmem:[%s232] sm:$0xff]
        %v297 = vld [vmem:[%s232 + $0x8] sm:$0xff]
        %v298 = vld [vmem:[%s232 + $0x10] sm:$0xff]
        %v299 = vld [vmem:[%s232 + $0x18] sm:$0xff]
        %v300 = vld [vmem:[%s232 + $0x20] sm:$0xff]
        %v301 = vld [vmem:[%s232 + $0x28] sm:$0xff]
        %v302 = vld [vmem:[%s232 + $0x30] sm:$0xff]
        %v303 = vld [vmem:[%s232 + $0x38] sm:$0xff]
        %v304 = vld [vmem:[%s232 + $0x40] sm:$0xff]
        %v305 = vld [vmem:[%s232 + $0x48] sm:$0xff]
        %v306 = vld [vmem:[%s232 + $0x50] sm:$0xff]
        %v307 = vld [vmem:[%s232 + $0x58] sm:$0xff]
        %v308 = vld [vmem:[%s232 + $0x60] sm:$0xff]
        %v309 = vld [vmem:[%s232 + $0x68] sm:$0xff]
        %v310 = vld [vmem:[%s232 + $0x70] sm:$0xff]
        %v311 = vld [vmem:[%s232 + $0x78] sm:$0xff]
        %v312 = vld [vmem:[%s232 + $0x80] sm:$0xff]
        %v313 = vld [vmem:[%s232 + $0x88] sm:$0xff]
        %v314 = vld [vmem:[%s232 + $0x90] sm:$0xff]
        %v315 = vld [vmem:[%s232 + $0x98] sm:$0xff]
        %v316 = vld [vmem:[%s267] sm:$0xff]
        %v317 = vld [vmem:[%s267 + $0x8] sm:$0xff]
        %v318 = vld [vmem:[%s267 + $0x10] sm:$0xff]
        %v319 = vld [vmem:[%s267 + $0x18] sm:$0xff]
        %v320 = vld [vmem:[%s267 + $0x20] sm:$0xff]
        %v321 = vld [vmem:[%s267 + $0x28] sm:$0xff]
        %v322 = vld [vmem:[%s267 + $0x30] sm:$0xff]
        %v323 = vld [vmem:[%s267 + $0x38] sm:$0xff]
        %v324 = vld [vmem:[%s267 + $0x40] sm:$0xff]
        %v325 = vld [vmem:[%s267 + $0x48] sm:$0xff]
        %v326 = vld [vmem:[%s267 + $0x50] sm:$0xff]
        %v327 = vld [vmem:[%s267 + $0x58] sm:$0xff]
        %v328 = vld [vmem:[%s267 + $0x60] sm:$0xff]
        %v329 = vld [vmem:[%s267 + $0x68] sm:$0xff]
        %v330 = vld [vmem:[%s267 + $0x70] sm:$0xff]
        %v331 = vld [vmem:[%s267 + $0x78] sm:$0xff]
        %v332 = vld [vmem:[%s267 + $0x80] sm:$0xff]
        %v333 = vld [vmem:[%s267 + $0x88] sm:$0xff]
        %v334 = vld [vmem:[%s267 + $0x90] sm:$0xff]
        %v335 = vld [vmem:[%s267 + $0x98] sm:$0xff]
        %v336 = vld [vmem:[%s267 + $0xa0] sm:$0xff]
        %v337 = vld [vmem:[%s267 + $0xa8] sm:$0xff]
        %v338 = vld [vmem:[%s267 + $0xb0] sm:$0xff]
        %v339 = vld [vmem:[%s267 + $0xb8] sm:$0xff]
        %v340 = vld [vmem:[%s267 + $0xc0] sm:$0xff]
        %v341 = vld [vmem:[%s267 + $0xc8] sm:$0xff]
        %v342 = vld [vmem:[%s267 + $0xd0] sm:$0xff]
        %v343 = vld [vmem:[%s267 + $0xd8] sm:$0xff]
        %v344 = vld [vmem:[%s267 + $0xe0] sm:$0xff]
        %v345 = vld [vmem:[%s267 + $0xe8] sm:$0xff]
        %v346 = vld [vmem:[%s267 + $0xf0] sm:$0xff]
        %v347 = vld [vmem:[%s267 + $0xf8] sm:$0xff]
        %v348 = vld [vmem:[%s267 + $0x100] sm:$0xff]
        %v349 = vld [vmem:[%s267 + $0x108] sm:$0xff]
        %v350 = vld [vmem:[%s267 + $0x110] sm:$0xff]
        %v351 = vld [vmem:[%s267 + $0x118] sm:$0xff]
        %v352 = vld [vmem:[%s267 + $0x120] sm:$0xff]
        %v353 = vld [vmem:[%s267 + $0x128] sm:$0xff]
        %v354 = vld [vmem:[%s267 + $0x130] sm:$0xff]
        %v355 = vld [vmem:[%s267 + $0x138] sm:$0xff]
        %v356 = vld [vmem:[%s267 + $0x140] sm:$0xff]
        %v357 = vld [vmem:[%s267 + $0x148] sm:$0xff]
        %v358 = vld [vmem:[%s267 + $0x150] sm:$0xff]
        %v359 = vld [vmem:[%s267 + $0x158] sm:$0xff]
        %v360 = vld [vmem:[%s267 + $0x160] sm:$0xff]
        %v361 = vld [vmem:[%s267 + $0x168] sm:$0xff]
        %v362 = vld [vmem:[%s267 + $0x170] sm:$0xff]
        %v363 = vld [vmem:[%s267 + $0x178] sm:$0xff]
        %v364 = vld [vmem:[%s267 + $0x180] sm:$0xff]
        %v365 = vld [vmem:[%s267 + $0x188] sm:$0xff]
        %v366 = vld [vmem:[%s267 + $0x190] sm:$0xff]
        %v367 = vld [vmem:[%s267 + $0x198] sm:$0xff]
        %v368 = vld [vmem:[%s267 + $0x1a0] sm:$0xff]
        %v369 = vld [vmem:[%s267 + $0x1a8] sm:$0xff]
        %v370 = vld [vmem:[%s267 + $0x1b0] sm:$0xff]
        %v371 = vld [vmem:[%s267 + $0x1b8] sm:$0xff]
        %v372 = vld [vmem:[%s267 + $0x1c0] sm:$0xff]
        %v373 = vld [vmem:[%s267 + $0x1c8] sm:$0xff]
        %v374 = vld [vmem:[%s267 + $0x1d0] sm:$0xff]
        %v375 = vld [vmem:[%s267 + $0x1d8] sm:$0xff]
        %v376 = vld [vmem:[%s267 + $0x1e0] sm:$0xff]
        %v377 = vld [vmem:[%s267 + $0x1e8] sm:$0xff]
        %v378 = vld [vmem:[%s267 + $0x1f0] sm:$0xff]
        %v379 = vld [vmem:[%s267 + $0x1f8] sm:$0xff]
        %v380 = vld [vmem:[%s267 + $0x200] sm:$0xff]
        %v381 = vld [vmem:[%s267 + $0x208] sm:$0xff]
        %v382 = vld [vmem:[%s267 + $0x210] sm:$0xff]
        %v383 = vld [vmem:[%s267 + $0x218] sm:$0xff]
        %v384 = vld [vmem:[%s267 + $0x220] sm:$0xff]
        %v385 = vld [vmem:[%s267 + $0x228] sm:$0xff]
        %v386 = vld [vmem:[%s267 + $0x230] sm:$0xff]
        %v387 = vld [vmem:[%s267 + $0x238] sm:$0xff]
        %v388 = vld [vmem:[%s267 + $0x240] sm:$0xff]
        %v389 = vld [vmem:[%s267 + $0x248] sm:$0xff]
        %v390 = vld [vmem:[%s267 + $0x250] sm:$0xff]
        %v391 = vld [vmem:[%s267 + $0x258] sm:$0xff]
        %v392 = vld [vmem:[%s267 + $0x260] sm:$0xff]
        %v393 = vld [vmem:[%s267 + $0x268] sm:$0xff]
        %v394 = vld [vmem:[%s267 + $0x270] sm:$0xff]
        %v395 = vld [vmem:[%s267 + $0x278] sm:$0xff]
        %v396 = vld [vmem:[%s267 + $0x280] sm:$0xff]
        %v397 = vld [vmem:[%s267 + $0x288] sm:$0xff]
        %v398 = vld [vmem:[%s267 + $0x290] sm:$0xff]
        %v399 = vld [vmem:[%s267 + $0x298] sm:$0xff]
        %v400 = vld [vmem:[%s267 + $0x2a0] sm:$0xff]
        %v401 = vld [vmem:[%s267 + $0x2a8] sm:$0xff]
        %v402 = vld [vmem:[%s267 + $0x2b0] sm:$0xff]
        %v403 = vld [vmem:[%s267 + $0x2b8] sm:$0xff]
        %v404 = vld [vmem:[%s267 + $0x2c0] sm:$0xff]
        %v405 = vld [vmem:[%s267 + $0x2c8] sm:$0xff]
        %v406 = vld [vmem:[%s267 + $0x2d0] sm:$0xff]
        %v407 = vld [vmem:[%s267 + $0x2d8] sm:$0xff]
        %v408 = vld [vmem:[%s267 + $0x2e0] sm:$0xff]
        %v409 = vld [vmem:[%s267 + $0x2e8] sm:$0xff]
        %v410 = vld [vmem:[%s267 + $0x2f0] sm:$0xff]
        %v411 = vld [vmem:[%s267 + $0x2f8] sm:$0xff]
        %v412 = vld [vmem:[%s267 + $0x300] sm:$0xff]
        %v413 = vld [vmem:[%s267 + $0x308] sm:$0xff]
        %v414 = vld [vmem:[%s267 + $0x310] sm:$0xff]
        %v415 = vld [vmem:[%s267 + $0x318] sm:$0xff]
        %v416 = vld [vmem:[%s267 + $0x320] sm:$0xff]
        %v417 = vld [vmem:[%s267 + $0x328] sm:$0xff]
        %v418 = vld [vmem:[%s267 + $0x330] sm:$0xff]
        %v419 = vld [vmem:[%s267 + $0x338] sm:$0xff]
        %v420 = vld [vmem:[%s267 + $0x340] sm:$0xff]
        %v421 = vld [vmem:[%s267 + $0x348] sm:$0xff]
        %v422 = vld [vmem:[%s267 + $0x350] sm:$0xff]
        %v423 = vld [vmem:[%s267 + $0x358] sm:$0xff]
        %v424 = vld [vmem:[%s267 + $0x360] sm:$0xff]
        %v425 = vld [vmem:[%s267 + $0x368] sm:$0xff]
        %v426 = vld [vmem:[%s267 + $0x370] sm:$0xff]
        %v427 = vld [vmem:[%s267 + $0x378] sm:$0xff]
        %v428 = vld [vmem:[%s267 + $0x380] sm:$0xff]
        %v429 = vld [vmem:[%s267 + $0x388] sm:$0xff]
        %v430 = vld [vmem:[%s267 + $0x390] sm:$0xff]
        %v431 = vld [vmem:[%s267 + $0x398] sm:$0xff]
        %v432 = vld [vmem:[%s267 + $0x3a0] sm:$0xff]
        %v433 = vld [vmem:[%s267 + $0x3a8] sm:$0xff]
        %v434 = vld [vmem:[%s267 + $0x3b0] sm:$0xff]
        %v435 = vld [vmem:[%s267 + $0x3b8] sm:$0xff]
        %v436 = vld [vmem:[%s267 + $0x3c0] sm:$0xff]
        %v437 = vld [vmem:[%s267 + $0x3c8] sm:$0xff]
        %v438 = vld [vmem:[%s267 + $0x3d0] sm:$0xff]
        %v439 = vld [vmem:[%s267 + $0x3d8] sm:$0xff]
        %v440 = vld [vmem:[%s267 + $0x3e0] sm:$0xff]
        %v441 = vld [vmem:[%s267 + $0x3e8] sm:$0xff]
        %v442 = vld [vmem:[%s267 + $0x3f0] sm:$0xff]
        %v443 = vld [vmem:[%s267 + $0x3f8] sm:$0xff]
        %v444 = vld [vmem:[%s267 + $0x400] sm:$0xff]
        %v445 = vld [vmem:[%s267 + $0x408] sm:$0xff]
        %v446 = vld [vmem:[%s267 + $0x410] sm:$0xff]
        %v447 = vld [vmem:[%s267 + $0x418] sm:$0xff]
        %v448 = vld [vmem:[%s267 + $0x420] sm:$0xff]
        %v449 = vld [vmem:[%s267 + $0x428] sm:$0xff]
        %v450 = vld [vmem:[%s267 + $0x430] sm:$0xff]
        %v451 = vld [vmem:[%s267 + $0x438] sm:$0xff]
        %v452 = vld [vmem:[%s267 + $0x440] sm:$0xff]
        %v453 = vld [vmem:[%s267 + $0x448] sm:$0xff]
        %v454 = vld [vmem:[%s267 + $0x450] sm:$0xff]
        %v455 = vld [vmem:[%s267 + $0x458] sm:$0xff]
        %v456 = vld [vmem:[%s267 + $0x460] sm:$0xff]
        %v457 = vld [vmem:[%s267 + $0x468] sm:$0xff]
        %v458 = vld [vmem:[%s267 + $0x470] sm:$0xff]
        %v459 = vld [vmem:[%s267 + $0x478] sm:$0xff]
        %v460 = vld [vmem:[%s267 + $0x480] sm:$0xff]
        %v461 = vld [vmem:[%s267 + $0x488] sm:$0xff]
        %v462 = vld [vmem:[%s267 + $0x490] sm:$0xff]
        %v463 = vld [vmem:[%s267 + $0x498] sm:$0xff]
        %v464 = vld [vmem:[%s267 + $0x4a0] sm:$0xff]
        %v465 = vld [vmem:[%s267 + $0x4a8] sm:$0xff]
        %v466 = vld [vmem:[%s267 + $0x4b0] sm:$0xff]
        %v467 = vld [vmem:[%s267 + $0x4b8] sm:$0xff]
        %v468 = vld [vmem:[%s267 + $0x4c0] sm:$0xff]
        %v469 = vld [vmem:[%s267 + $0x4c8] sm:$0xff]
        %v470 = vld [vmem:[%s267 + $0x4d0] sm:$0xff]
        %v471 = vld [vmem:[%s267 + $0x4d8] sm:$0xff]
        %v472 = vld [vmem:[%s267 + $0x4e0] sm:$0xff]
        %v473 = vld [vmem:[%s267 + $0x4e8] sm:$0xff]
        %v474 = vld [vmem:[%s267 + $0x4f0] sm:$0xff]
        %v475 = vld [vmem:[%s267 + $0x4f8] sm:$0xff]
        %v476 = vld [vmem:[%s267 + $0x500] sm:$0xff]
        %v477 = vld [vmem:[%s267 + $0x508] sm:$0xff]
        %v478 = vld [vmem:[%s267 + $0x510] sm:$0xff]
        %v479 = vld [vmem:[%s267 + $0x518] sm:$0xff]
        %v480 = vld [vmem:[%s267 + $0x520] sm:$0xff]
        %v481 = vld [vmem:[%s267 + $0x528] sm:$0xff]
        %v482 = vld [vmem:[%s267 + $0x530] sm:$0xff]
        %v483 = vld [vmem:[%s267 + $0x538] sm:$0xff]
        %v484 = vld [vmem:[%s267 + $0x540] sm:$0xff]
        %v485 = vld [vmem:[%s267 + $0x548] sm:$0xff]
        %v486 = vld [vmem:[%s267 + $0x550] sm:$0xff]
        %v487 = vld [vmem:[%s267 + $0x558] sm:$0xff]
        %v488 = vld [vmem:[%s267 + $0x560] sm:$0xff]
        %v489 = vld [vmem:[%s267 + $0x568] sm:$0xff]
        %v490 = vld [vmem:[%s267 + $0x570] sm:$0xff]
        %v491 = vld [vmem:[%s267 + $0x578] sm:$0xff]
        %v492 = vld [vmem:[%s267 + $0x580] sm:$0xff]
        %v493 = vld [vmem:[%s267 + $0x588] sm:$0xff]
        %v494 = vld [vmem:[%s267 + $0x590] sm:$0xff]
        %v495 = vld [vmem:[%s267 + $0x598] sm:$0xff]
        %v496 = vld [vmem:[%s267 + $0x5a0] sm:$0xff]
        %v497 = vld [vmem:[%s267 + $0x5a8] sm:$0xff]
        %v498 = vld [vmem:[%s267 + $0x5b0] sm:$0xff]
        %v499 = vld [vmem:[%s267 + $0x5b8] sm:$0xff]
        %v500 = vld [vmem:[%s267 + $0x5c0] sm:$0xff]
        %v501 = vld [vmem:[%s267 + $0x5c8] sm:$0xff]
        %v502 = vld [vmem:[%s267 + $0x5d0] sm:$0xff]
        %v503 = vld [vmem:[%s267 + $0x5d8] sm:$0xff]
        %v504 = vld [vmem:[%s267 + $0x5e0] sm:$0xff]
        %v505 = vld [vmem:[%s267 + $0x5e8] sm:$0xff]
        %v506 = vld [vmem:[%s267 + $0x5f0] sm:$0xff]
        %v507 = vld [vmem:[%s267 + $0x5f8] sm:$0xff]
        %v508 = vld [vmem:[%s267 + $0x600] sm:$0xff]
        %v509 = vld [vmem:[%s267 + $0x608] sm:$0xff]
        %v510 = vld [vmem:[%s267 + $0x610] sm:$0xff]
        %v511 = vld [vmem:[%s267 + $0x618] sm:$0xff]
        %v512 = vld [vmem:[%s267 + $0x620] sm:$0xff]
        %v513 = vld [vmem:[%s267 + $0x628] sm:$0xff]
        %v514 = vld [vmem:[%s267 + $0x630] sm:$0xff]
        %v515 = vld [vmem:[%s267 + $0x638] sm:$0xff]
        %v516 = vld [vmem:[%s267 + $0x640] sm:$0xff]
        %v517 = vld [vmem:[%s267 + $0x648] sm:$0xff]
        %v518 = vld [vmem:[%s267 + $0x650] sm:$0xff]
        %v519 = vld [vmem:[%s267 + $0x658] sm:$0xff]
        %v520 = vld [vmem:[%s267 + $0x660] sm:$0xff]
        %v521 = vld [vmem:[%s267 + $0x668] sm:$0xff]
        %v522 = vld [vmem:[%s267 + $0x670] sm:$0xff]
        %v523 = vld [vmem:[%s267 + $0x678] sm:$0xff]
        %v524 = vld [vmem:[%s267 + $0x680] sm:$0xff]
        %v525 = vld [vmem:[%s267 + $0x688] sm:$0xff]
        %v526 = vld [vmem:[%s267 + $0x690] sm:$0xff]
        %v527 = vld [vmem:[%s267 + $0x698] sm:$0xff]
        %v528 = vld [vmem:[%s267 + $0x6a0] sm:$0xff]
        %v529 = vld [vmem:[%s267 + $0x6a8] sm:$0xff]
        %v530 = vld [vmem:[%s267 + $0x6b0] sm:$0xff]
        %v531 = vld [vmem:[%s267 + $0x6b8] sm:$0xff]
        %v532 = vld [vmem:[%s267 + $0x6c0] sm:$0xff]
        %v533 = vld [vmem:[%s267 + $0x6c8] sm:$0xff]
        %v534 = vld [vmem:[%s267 + $0x6d0] sm:$0xff]
        %v535 = vld [vmem:[%s267 + $0x6d8] sm:$0xff]
        %v536 = vld [vmem:[%s267 + $0x6e0] sm:$0xff]
        %v537 = vld [vmem:[%s267 + $0x6e8] sm:$0xff]
        %v538 = vld [vmem:[%s267 + $0x6f0] sm:$0xff]
        %v539 = vld [vmem:[%s267 + $0x6f8] sm:$0xff]
        %v540 = vld [vmem:[%s267 + $0x700] sm:$0xff]
        %v541 = vld [vmem:[%s267 + $0x708] sm:$0xff]
        %v542 = vld [vmem:[%s267 + $0x710] sm:$0xff]
        %v543 = vld [vmem:[%s267 + $0x718] sm:$0xff]
        %v544 = vld [vmem:[%s267 + $0x720] sm:$0xff]
        %v545 = vld [vmem:[%s267 + $0x728] sm:$0xff]
        %v546 = vld [vmem:[%s267 + $0x730] sm:$0xff]
        %v547 = vld [vmem:[%s267 + $0x738] sm:$0xff]
        %v548 = vld [vmem:[%s267 + $0x740] sm:$0xff]
        %v549 = vld [vmem:[%s267 + $0x748] sm:$0xff]
        %v550 = vld [vmem:[%s267 + $0x750] sm:$0xff]
        %v551 = vld [vmem:[%s267 + $0x758] sm:$0xff]
        %v552 = vld [vmem:[%s267 + $0x760] sm:$0xff]
        %v553 = vld [vmem:[%s267 + $0x768] sm:$0xff]
        %v554 = vld [vmem:[%s267 + $0x770] sm:$0xff]
        %v555 = vld [vmem:[%s267 + $0x778] sm:$0xff]
        %v556 = vld [vmem:[%s267 + $0x780] sm:$0xff]
        %v557 = vld [vmem:[%s267 + $0x788] sm:$0xff]
        %v558 = vld [vmem:[%s267 + $0x790] sm:$0xff]
        %v559 = vld [vmem:[%s267 + $0x798] sm:$0xff]
        %v560 = vld [vmem:[%s267 + $0x7a0] sm:$0xff]
        %v561 = vld [vmem:[%s267 + $0x7a8] sm:$0xff]
        %v562 = vld [vmem:[%s267 + $0x7b0] sm:$0xff]
        %v563 = vld [vmem:[%s267 + $0x7b8] sm:$0xff]
        %v564 = vld [vmem:[%s267 + $0x7c0] sm:$0xff]
        %v565 = vld [vmem:[%s267 + $0x7c8] sm:$0xff]
        %v566 = vld [vmem:[%s267 + $0x7d0] sm:$0xff]
        %v567 = vld [vmem:[%s267 + $0x7d8] sm:$0xff]
        %v568 = vld [vmem:[%s267 + $0x7e0] sm:$0xff]
        %v569 = vld [vmem:[%s267 + $0x7e8] sm:$0xff]
        %v570 = vld [vmem:[%s267 + $0x7f0] sm:$0xff]
        %v571 = vld [vmem:[%s267 + $0x7f8] sm:$0xff]
        %v572 = vld [vmem:[%s267 + $0x800] sm:$0xff]
        %v573 = vld [vmem:[%s267 + $0x808] sm:$0xff]
        %v574 = vld [vmem:[%s267 + $0x810] sm:$0xff]
        %v575 = vld [vmem:[%s267 + $0x818] sm:$0xff]
        %v576 = vld [vmem:[%s267 + $0x820] sm:$0xff]
        %v577 = vld [vmem:[%s267 + $0x828] sm:$0xff]
        %v578 = vld [vmem:[%s267 + $0x830] sm:$0xff]
        %v579 = vld [vmem:[%s267 + $0x838] sm:$0xff]
        %v580 = vld [vmem:[%s267 + $0x840] sm:$0xff]
        %v581 = vld [vmem:[%s267 + $0x848] sm:$0xff]
        %v582 = vld [vmem:[%s267 + $0x850] sm:$0xff]
        %v583 = vld [vmem:[%s267 + $0x858] sm:$0xff]
        %v584 = vld [vmem:[%s267 + $0x860] sm:$0xff]
        %v585 = vld [vmem:[%s267 + $0x868] sm:$0xff]
        %v586 = vld [vmem:[%s267 + $0x870] sm:$0xff]
        %v587 = vld [vmem:[%s267 + $0x878] sm:$0xff]
        %v588 = vld [vmem:[%s267 + $0x880] sm:$0xff]
        %v589 = vld [vmem:[%s267 + $0x888] sm:$0xff]
        %v590 = vld [vmem:[%s267 + $0x890] sm:$0xff]
        %v591 = vld [vmem:[%s267 + $0x898] sm:$0xff]
        %v592 = vld [vmem:[%s267 + $0x8a0] sm:$0xff]
        %v593 = vld [vmem:[%s267 + $0x8a8] sm:$0xff]
        %v594 = vld [vmem:[%s267 + $0x8b0] sm:$0xff]
        %v595 = vld [vmem:[%s267 + $0x8b8] sm:$0xff]
        %v596 = vld [vmem:[%s267 + $0x8c0] sm:$0xff]
        %v597 = vld [vmem:[%s267 + $0x8c8] sm:$0xff]
        %v598 = vld [vmem:[%s267 + $0x8d0] sm:$0xff]
        %v599 = vld [vmem:[%s267 + $0x8d8] sm:$0xff]
        %v600 = vld [vmem:[%s267 + $0x8e0] sm:$0xff]
        %v601 = vld [vmem:[%s267 + $0x8e8] sm:$0xff]
        %v602 = vld [vmem:[%s267 + $0x8f0] sm:$0xff]
        %v603 = vld [vmem:[%s267 + $0x8f8] sm:$0xff]
        %v604 = vld [vmem:[%s267 + $0x900] sm:$0xff]
        %v605 = vld [vmem:[%s267 + $0x908] sm:$0xff]
        %v606 = vld [vmem:[%s267 + $0x910] sm:$0xff]
        %v607 = vld [vmem:[%s267 + $0x918] sm:$0xff]
        %v608 = vld [vmem:[%s267 + $0x920] sm:$0xff]
        %v609 = vld [vmem:[%s267 + $0x928] sm:$0xff]
        %v610 = vld [vmem:[%s267 + $0x930] sm:$0xff]
        %v611 = vld [vmem:[%s267 + $0x938] sm:$0xff]
        %v612 = vld [vmem:[%s267 + $0x940] sm:$0xff]
        %v613 = vld [vmem:[%s267 + $0x948] sm:$0xff]
        %v614 = vld [vmem:[%s267 + $0x950] sm:$0xff]
        %v615 = vld [vmem:[%s267 + $0x958] sm:$0xff]
        %v616 = vld [vmem:[%s267 + $0x960] sm:$0xff]
        %v617 = vld [vmem:[%s267 + $0x968] sm:$0xff]
        %v618 = vld [vmem:[%s267 + $0x970] sm:$0xff]
        %v619 = vld [vmem:[%s267 + $0x978] sm:$0xff]
        %v620 = vld [vmem:[%s267 + $0x980] sm:$0xff]
        %v621 = vld [vmem:[%s267 + $0x988] sm:$0xff]
        %v622 = vld [vmem:[%s267 + $0x990] sm:$0xff]
        %v623 = vld [vmem:[%s267 + $0x998] sm:$0xff]
        %v624 = vld [vmem:[%s267 + $0x9a0] sm:$0xff]
        %v625 = vld [vmem:[%s267 + $0x9a8] sm:$0xff]
        %v626 = vld [vmem:[%s267 + $0x9b0] sm:$0xff]
        %v627 = vld [vmem:[%s267 + $0x9b8] sm:$0xff]
        %v628 = vld [vmem:[%s267 + $0x9c0] sm:$0xff]
        %v629 = vld [vmem:[%s267 + $0x9c8] sm:$0xff]
        %v630 = vld [vmem:[%s267 + $0x9d0] sm:$0xff]
        %v631 = vld [vmem:[%s267 + $0x9d8] sm:$0xff]
        %v632 = vld [vmem:[%s267 + $0x9e0] sm:$0xff]
        %v633 = vld [vmem:[%s267 + $0x9e8] sm:$0xff]
        %v634 = vld [vmem:[%s267 + $0x9f0] sm:$0xff]
        %v635 = vld [vmem:[%s267 + $0x9f8] sm:$0xff]
        %v636 = vld [vmem:[%s267 + $0xa00] sm:$0xff]
        %v637 = vld [vmem:[%s267 + $0xa08] sm:$0xff]
        %v638 = vld [vmem:[%s267 + $0xa10] sm:$0xff]
        %v639 = vld [vmem:[%s267 + $0xa18] sm:$0xff]
        %v640 = vld [vmem:[%s267 + $0xa20] sm:$0xff]
        %v641 = vld [vmem:[%s267 + $0xa28] sm:$0xff]
        %v642 = vld [vmem:[%s267 + $0xa30] sm:$0xff]
        %v643 = vld [vmem:[%s267 + $0xa38] sm:$0xff]
        %v644 = vld [vmem:[%s267 + $0xa40] sm:$0xff]
        %v645 = vld [vmem:[%s267 + $0xa48] sm:$0xff]
        %v646 = vld [vmem:[%s267 + $0xa50] sm:$0xff]
        %v647 = vld [vmem:[%s267 + $0xa58] sm:$0xff]
        %v648 = vld [vmem:[%s267 + $0xa60] sm:$0xff]
        %v649 = vld [vmem:[%s267 + $0xa68] sm:$0xff]
        %v650 = vld [vmem:[%s267 + $0xa70] sm:$0xff]
        %v651 = vld [vmem:[%s267 + $0xa78] sm:$0xff]
        %v652 = vld [vmem:[%s267 + $0xa80] sm:$0xff]
        %v653 = vld [vmem:[%s267 + $0xa88] sm:$0xff]
        %v654 = vld [vmem:[%s267 + $0xa90] sm:$0xff]
        %v655 = vld [vmem:[%s267 + $0xa98] sm:$0xff]
        %v656 = vld [vmem:[%s267 + $0xaa0] sm:$0xff]
        %v657 = vld [vmem:[%s267 + $0xaa8] sm:$0xff]
        %v658 = vld [vmem:[%s267 + $0xab0] sm:$0xff]
        %v659 = vld [vmem:[%s267 + $0xab8] sm:$0xff]
        %v660 = vld [vmem:[%s267 + $0xac0] sm:$0xff]
        %v661 = vld [vmem:[%s267 + $0xac8] sm:$0xff]
        %v662 = vld [vmem:[%s267 + $0xad0] sm:$0xff]
        %v663 = vld [vmem:[%s267 + $0xad8] sm:$0xff]
        %v664 = vld [vmem:[%s267 + $0xae0] sm:$0xff]
        %v665 = vld [vmem:[%s267 + $0xae8] sm:$0xff]
        %v666 = vld [vmem:[%s267 + $0xaf0] sm:$0xff]
        %v667 = vld [vmem:[%s267 + $0xaf8] sm:$0xff]
        %v668 = vld [vmem:[%s267 + $0xb00] sm:$0xff]
        %v669 = vld [vmem:[%s267 + $0xb08] sm:$0xff]
        %v670 = vld [vmem:[%s267 + $0xb10] sm:$0xff]
        %v671 = vld [vmem:[%s267 + $0xb18] sm:$0xff]
        %v672 = vld [vmem:[%s267 + $0xb20] sm:$0xff]
        %v673 = vld [vmem:[%s267 + $0xb28] sm:$0xff]
        %v674 = vld [vmem:[%s267 + $0xb30] sm:$0xff]
        %v675 = vld [vmem:[%s267 + $0xb38] sm:$0xff]
        %v676 = vld [vmem:[%s267 + $0xb40] sm:$0xff]
        %v677 = vld [vmem:[%s267 + $0xb48] sm:$0xff]
        %v678 = vld [vmem:[%s267 + $0xb50] sm:$0xff]
        %v679 = vld [vmem:[%s267 + $0xb58] sm:$0xff]
        %v680 = vld [vmem:[%s267 + $0xb60] sm:$0xff]
        %v681 = vld [vmem:[%s267 + $0xb68] sm:$0xff]
        %v682 = vld [vmem:[%s267 + $0xb70] sm:$0xff]
        %v683 = vld [vmem:[%s267 + $0xb78] sm:$0xff]
        %v684 = vld [vmem:[%s267 + $0xb80] sm:$0xff]
        %v685 = vld [vmem:[%s267 + $0xb88] sm:$0xff]
        %v686 = vld [vmem:[%s267 + $0xb90] sm:$0xff]
        %v687 = vld [vmem:[%s267 + $0xb98] sm:$0xff]
        %v688 = vld [vmem:[%s267 + $0xba0] sm:$0xff]
        %v689 = vld [vmem:[%s267 + $0xba8] sm:$0xff]
        %v690 = vld [vmem:[%s267 + $0xbb0] sm:$0xff]
        %v691 = vld [vmem:[%s267 + $0xbb8] sm:$0xff]
        %v692 = vld [vmem:[%s267 + $0xbc0] sm:$0xff]
        %v693 = vld [vmem:[%s267 + $0xbc8] sm:$0xff]
        %v694 = vld [vmem:[%s267 + $0xbd0] sm:$0xff]
        %v695 = vld [vmem:[%s267 + $0xbd8] sm:$0xff]
        %v696 = vld [vmem:[%s267 + $0xbe0] sm:$0xff]
        %v697 = vld [vmem:[%s267 + $0xbe8] sm:$0xff]
        %v698 = vld [vmem:[%s267 + $0xbf0] sm:$0xff]
        %v699 = vld [vmem:[%s267 + $0xbf8] sm:$0xff]
        %v700 = vld [vmem:[%s267 + $0xc00] sm:$0xff]
        %v701 = vld [vmem:[%s267 + $0xc08] sm:$0xff]
        %v702 = vld [vmem:[%s267 + $0xc10] sm:$0xff]
        %v703 = vld [vmem:[%s267 + $0xc18] sm:$0xff]
        %v704 = vld [vmem:[%s267 + $0xc20] sm:$0xff]
        %v705 = vld [vmem:[%s267 + $0xc28] sm:$0xff]
        %v706 = vld [vmem:[%s267 + $0xc30] sm:$0xff]
        %v707 = vld [vmem:[%s267 + $0xc38] sm:$0xff]
        %v708 = vld [vmem:[%s267 + $0xc40] sm:$0xff]
        %v709 = vld [vmem:[%s267 + $0xc48] sm:$0xff]
        %v710 = vld [vmem:[%s267 + $0xc50] sm:$0xff]
        %v711 = vld [vmem:[%s267 + $0xc58] sm:$0xff]
        %v712 = vld [vmem:[%s267 + $0xc60] sm:$0xff]
        %v713 = vld [vmem:[%s267 + $0xc68] sm:$0xff]
        %v714 = vld [vmem:[%s267 + $0xc70] sm:$0xff]
        %v715 = vld [vmem:[%s267 + $0xc78] sm:$0xff]
        %v716 = vld [vmem:[%s267 + $0xc80] sm:$0xff]
        %v717 = vld [vmem:[%s267 + $0xc88] sm:$0xff]
        %v718 = vld [vmem:[%s267 + $0xc90] sm:$0xff]
        %v719 = vld [vmem:[%s267 + $0xc98] sm:$0xff]
        %v720 = vld [vmem:[%s267 + $0xca0] sm:$0xff]
        %v721 = vld [vmem:[%s267 + $0xca8] sm:$0xff]
        %v722 = vld [vmem:[%s267 + $0xcb0] sm:$0xff]
        %v723 = vld [vmem:[%s267 + $0xcb8] sm:$0xff]
        %v724 = vld [vmem:[%s267 + $0xcc0] sm:$0xff]
        %v725 = vld [vmem:[%s267 + $0xcc8] sm:$0xff]
        %v726 = vld [vmem:[%s267 + $0xcd0] sm:$0xff]
        %v727 = vld [vmem:[%s267 + $0xcd8] sm:$0xff]
        %v728 = vld [vmem:[%s267 + $0xce0] sm:$0xff]
        %v729 = vld [vmem:[%s267 + $0xce8] sm:$0xff]
        %v730 = vld [vmem:[%s267 + $0xcf0] sm:$0xff]
        %v731 = vld [vmem:[%s267 + $0xcf8] sm:$0xff]
        %v732 = vld [vmem:[%s267 + $0xd00] sm:$0xff]
        %v733 = vld [vmem:[%s267 + $0xd08] sm:$0xff]
        %v734 = vld [vmem:[%s267 + $0xd10] sm:$0xff]
        %v735 = vld [vmem:[%s267 + $0xd18] sm:$0xff]
        %v736 = vld [vmem:[%s267 + $0xd20] sm:$0xff]
        %v737 = vld [vmem:[%s267 + $0xd28] sm:$0xff]
        %v738 = vld [vmem:[%s267 + $0xd30] sm:$0xff]
        %v739 = vld [vmem:[%s267 + $0xd38] sm:$0xff]
        %v740 = vld [vmem:[%s267 + $0xd40] sm:$0xff]
        %v741 = vld [vmem:[%s267 + $0xd48] sm:$0xff]
        %v742 = vld [vmem:[%s267 + $0xd50] sm:$0xff]
        %v743 = vld [vmem:[%s267 + $0xd58] sm:$0xff]
        %v744 = vld [vmem:[%s267 + $0xd60] sm:$0xff]
        %v745 = vld [vmem:[%s267 + $0xd68] sm:$0xff]
        %v746 = vld [vmem:[%s267 + $0xd70] sm:$0xff]
        %v747 = vld [vmem:[%s267 + $0xd78] sm:$0xff]
        %v748 = vld [vmem:[%s267 + $0xd80] sm:$0xff]
        %v749 = vld [vmem:[%s267 + $0xd88] sm:$0xff]
        %v750 = vld [vmem:[%s267 + $0xd90] sm:$0xff]
        %v751 = vld [vmem:[%s267 + $0xd98] sm:$0xff]
        %v752 = vld [vmem:[%s267 + $0xda0] sm:$0xff]
        %v753 = vld [vmem:[%s267 + $0xda8] sm:$0xff]
        %v754 = vld [vmem:[%s267 + $0xdb0] sm:$0xff]
        %v755 = vld [vmem:[%s267 + $0xdb8] sm:$0xff]
        %v756 = vld [vmem:[%s267 + $0xdc0] sm:$0xff]
        %v757 = vld [vmem:[%s267 + $0xdc8] sm:$0xff]
        %v758 = vld [vmem:[%s267 + $0xdd0] sm:$0xff]
        %v759 = vld [vmem:[%s267 + $0xdd8] sm:$0xff]
        %v760 = vld [vmem:[%s267 + $0xde0] sm:$0xff]
        %v761 = vld [vmem:[%s267 + $0xde8] sm:$0xff]
        %v762 = vld [vmem:[%s267 + $0xdf0] sm:$0xff]
        %v763 = vld [vmem:[%s267 + $0xdf8] sm:$0xff]
        %v764 = vld [vmem:[%s267 + $0xe00] sm:$0xff]
        %v765 = vld [vmem:[%s267 + $0xe08] sm:$0xff]
        %v766 = vld [vmem:[%s267 + $0xe10] sm:$0xff]
        %v767 = vld [vmem:[%s267 + $0xe18] sm:$0xff]
        %v768 = vld [vmem:[%s267 + $0xe20] sm:$0xff]
        %v769 = vld [vmem:[%s267 + $0xe28] sm:$0xff]
        %v770 = vld [vmem:[%s267 + $0xe30] sm:$0xff]
        %v771 = vld [vmem:[%s267 + $0xe38] sm:$0xff]
        %v772 = vld [vmem:[%s267 + $0xe40] sm:$0xff]
        %v773 = vld [vmem:[%s267 + $0xe48] sm:$0xff]
        %v774 = vld [vmem:[%s267 + $0xe50] sm:$0xff]
        %v775 = vld [vmem:[%s267 + $0xe58] sm:$0xff]
        %v776 = vld [vmem:[%s267 + $0xe60] sm:$0xff]
        %v777 = vld [vmem:[%s267 + $0xe68] sm:$0xff]
        %v778 = vld [vmem:[%s267 + $0xe70] sm:$0xff]
        %v779 = vld [vmem:[%s267 + $0xe78] sm:$0xff]
        %v780 = vld [vmem:[%s267 + $0xe80] sm:$0xff]
        %v781 = vld [vmem:[%s267 + $0xe88] sm:$0xff]
        %v782 = vld [vmem:[%s267 + $0xe90] sm:$0xff]
        %v783 = vld [vmem:[%s267 + $0xe98] sm:$0xff]
        %v784 = vld [vmem:[%s267 + $0xea0] sm:$0xff]
        %v785 = vld [vmem:[%s267 + $0xea8] sm:$0xff]
        %v786 = vld [vmem:[%s267 + $0xeb0] sm:$0xff]
        %v787 = vld [vmem:[%s267 + $0xeb8] sm:$0xff]
        %v788 = vld [vmem:[%s267 + $0xec0] sm:$0xff]
        %v789 = vld [vmem:[%s267 + $0xec8] sm:$0xff]
        %v790 = vld [vmem:[%s267 + $0xed0] sm:$0xff]
        %v791 = vld [vmem:[%s267 + $0xed8] sm:$0xff]
        %v792 = vld [vmem:[%s267 + $0xee0] sm:$0xff]
        %v793 = vld [vmem:[%s267 + $0xee8] sm:$0xff]
        %v794 = vld [vmem:[%s267 + $0xef0] sm:$0xff]
        %v795 = vld [vmem:[%s267 + $0xef8] sm:$0xff]
        %v796 = vld [vmem:[%s267 + $0xf00] sm:$0xff]
        %v797 = vld [vmem:[%s267 + $0xf08] sm:$0xff]
        %v798 = vld [vmem:[%s267 + $0xf10] sm:$0xff]
        %v799 = vld [vmem:[%s267 + $0xf18] sm:$0xff]
        %v800 = vld [vmem:[%s267 + $0xf20] sm:$0xff]
        %v801 = vld [vmem:[%s267 + $0xf28] sm:$0xff]
        %v802 = vld [vmem:[%s267 + $0xf30] sm:$0xff]
        %v803 = vld [vmem:[%s267 + $0xf38] sm:$0xff]
        %v804 = vld [vmem:[%s267 + $0xf40] sm:$0xff]
        %v805 = vld [vmem:[%s267 + $0xf48] sm:$0xff]
        %v806 = vld [vmem:[%s267 + $0xf50] sm:$0xff]
        %v807 = vld [vmem:[%s267 + $0xf58] sm:$0xff]
        %v808 = vld [vmem:[%s267 + $0xf60] sm:$0xff]
        %v809 = vld [vmem:[%s267 + $0xf68] sm:$0xff]
        %v810 = vld [vmem:[%s267 + $0xf70] sm:$0xff]
        %v811 = vld [vmem:[%s267 + $0xf78] sm:$0xff]
        %v812 = vld [vmem:[%s267 + $0xf80] sm:$0xff]
        %v813 = vld [vmem:[%s267 + $0xf88] sm:$0xff]
        %v814 = vld [vmem:[%s267 + $0xf90] sm:$0xff]
        %v815 = vld [vmem:[%s267 + $0xf98] sm:$0xff]
        %v816 = vld [vmem:[%s267 + $0xfa0] sm:$0xff]
        %v817 = vld [vmem:[%s267 + $0xfa8] sm:$0xff]
        %v818 = vld [vmem:[%s267 + $0xfb0] sm:$0xff]
        %v819 = vld [vmem:[%s267 + $0xfb8] sm:$0xff]
        %v820 = vld [vmem:[%s267 + $0xfc0] sm:$0xff]
        %v821 = vld [vmem:[%s267 + $0xfc8] sm:$0xff]
        %v822 = vld [vmem:[%s267 + $0xfd0] sm:$0xff]
        %v823 = vld [vmem:[%s267 + $0xfd8] sm:$0xff]
        %v824 = vld [vmem:[%s267 + $0xfe0] sm:$0xff]
        %v825 = vld [vmem:[%s267 + $0xfe8] sm:$0xff]
        %v826 = vld [vmem:[%s267 + $0xff0] sm:$0xff]
        %v827 = vld [vmem:[%s267 + $0xff8] sm:$0xff]
        %v828 = vld [vmem:[%s267 + $0x1000] sm:$0xff]
        %v829 = vld [vmem:[%s267 + $0x1008] sm:$0xff]
        %v830 = vld [vmem:[%s267 + $0x1010] sm:$0xff]
        %v831 = vld [vmem:[%s267 + $0x1018] sm:$0xff]
        %v832 = vld [vmem:[%s267 + $0x1020] sm:$0xff]
        %v833 = vld [vmem:[%s267 + $0x1028] sm:$0xff]
        %v834 = vld [vmem:[%s267 + $0x1030] sm:$0xff]
        %v835 = vld [vmem:[%s267 + $0x1038] sm:$0xff]
        %v836 = vld [vmem:[%s267 + $0x1040] sm:$0xff]
        %v837 = vld [vmem:[%s267 + $0x1048] sm:$0xff]
        %v838 = vld [vmem:[%s267 + $0x1050] sm:$0xff]
        %v839 = vld [vmem:[%s267 + $0x1058] sm:$0xff]
        %v840 = vld [vmem:[%s267 + $0x1060] sm:$0xff]
        %v841 = vld [vmem:[%s267 + $0x1068] sm:$0xff]
        %v842 = vld [vmem:[%s267 + $0x1070] sm:$0xff]
        %v843 = vld [vmem:[%s267 + $0x1078] sm:$0xff]
        %v844 = vld [vmem:[%s267 + $0x1080] sm:$0xff]
        %v845 = vld [vmem:[%s267 + $0x1088] sm:$0xff]
        %v846 = vld [vmem:[%s267 + $0x1090] sm:$0xff]
        %v847 = vld [vmem:[%s267 + $0x1098] sm:$0xff]
        %v848 = vld [vmem:[%s267 + $0x10a0] sm:$0xff]
        %v849 = vld [vmem:[%s267 + $0x10a8] sm:$0xff]
        %v850 = vld [vmem:[%s267 + $0x10b0] sm:$0xff]
        %v851 = vld [vmem:[%s267 + $0x10b8] sm:$0xff]
        %v852 = vld [vmem:[%s267 + $0x10c0] sm:$0xff]
        %v853 = vld [vmem:[%s267 + $0x10c8] sm:$0xff]
        %v854 = vld [vmem:[%s267 + $0x10d0] sm:$0xff]
        %v855 = vld [vmem:[%s267 + $0x10d8] sm:$0xff]
        %v856 = vld [vmem:[%s267 + $0x10e0] sm:$0xff]
        %v857 = vld [vmem:[%s267 + $0x10e8] sm:$0xff]
        %v858 = vld [vmem:[%s267 + $0x10f0] sm:$0xff]
        %v859 = vld [vmem:[%s267 + $0x10f8] sm:$0xff]
        %v860 = vld [vmem:[%s267 + $0x1100] sm:$0xff]
        %v861 = vld [vmem:[%s267 + $0x1108] sm:$0xff]
        %v862 = vld [vmem:[%s267 + $0x1110] sm:$0xff]
        %v863 = vld [vmem:[%s267 + $0x1118] sm:$0xff]
        %v864 = vld [vmem:[%s267 + $0x1120] sm:$0xff]
        %v865 = vld [vmem:[%s267 + $0x1128] sm:$0xff]
        %v866 = vld [vmem:[%s267 + $0x1130] sm:$0xff]
        %v867 = vld [vmem:[%s267 + $0x1138] sm:$0xff]
        %v868 = vld [vmem:[%s267 + $0x1140] sm:$0xff]
        %v869 = vld [vmem:[%s267 + $0x1148] sm:$0xff]
        %v870 = vld [vmem:[%s267 + $0x1150] sm:$0xff]
        %v871 = vld [vmem:[%s267 + $0x1158] sm:$0xff]
        %v872 = vld [vmem:[%s267 + $0x1160] sm:$0xff]
        %v873 = vld [vmem:[%s267 + $0x1168] sm:$0xff]
        %v874 = vld [vmem:[%s267 + $0x1170] sm:$0xff]
        %v875 = vld [vmem:[%s267 + $0x1178] sm:$0xff]
        %v876 = vld [vmem:[%s267 + $0x1180] sm:$0xff]
        %v877 = vld [vmem:[%s267 + $0x1188] sm:$0xff]
        %v878 = vld [vmem:[%s267 + $0x1190] sm:$0xff]
        %v879 = vld [vmem:[%s267 + $0x1198] sm:$0xff]
        %v880 = vld [vmem:[%s267 + $0x11a0] sm:$0xff]
        %v881 = vld [vmem:[%s267 + $0x11a8] sm:$0xff]
        %v882 = vld [vmem:[%s267 + $0x11b0] sm:$0xff]
        %v883 = vld [vmem:[%s267 + $0x11b8] sm:$0xff]
        %v884 = vld [vmem:[%s267 + $0x11c0] sm:$0xff]
        %v885 = vld [vmem:[%s267 + $0x11c8] sm:$0xff]
        %v886 = vld [vmem:[%s267 + $0x11d0] sm:$0xff]
        %v887 = vld [vmem:[%s267 + $0x11d8] sm:$0xff]
        %v888 = vld [vmem:[%s267 + $0x11e0] sm:$0xff]
        %v889 = vld [vmem:[%s267 + $0x11e8] sm:$0xff]
        %v890 = vld [vmem:[%s267 + $0x11f0] sm:$0xff]
        %v891 = vld [vmem:[%s267 + $0x11f8] sm:$0xff]
        %v892 = vld [vmem:[%s267 + $0x1200] sm:$0xff]
        %v893 = vld [vmem:[%s267 + $0x1208] sm:$0xff]
        %v894 = vld [vmem:[%s267 + $0x1210] sm:$0xff]
        %v895 = vld [vmem:[%s267 + $0x1218] sm:$0xff]
        %v896 = vld [vmem:[%s267 + $0x1220] sm:$0xff]
        %v897 = vld [vmem:[%s267 + $0x1228] sm:$0xff]
        %v898 = vld [vmem:[%s267 + $0x1230] sm:$0xff]
        %v899 = vld [vmem:[%s267 + $0x1238] sm:$0xff]
        %v900 = vld [vmem:[%s267 + $0x1240] sm:$0xff]
        %v901 = vld [vmem:[%s267 + $0x1248] sm:$0xff]
        %v902 = vld [vmem:[%s267 + $0x1250] sm:$0xff]
        %v903 = vld [vmem:[%s267 + $0x1258] sm:$0xff]
        %v904 = vld [vmem:[%s267 + $0x1260] sm:$0xff]
        %v905 = vld [vmem:[%s267 + $0x1268] sm:$0xff]
        %v906 = vld [vmem:[%s267 + $0x1270] sm:$0xff]
        %v907 = vld [vmem:[%s267 + $0x1278] sm:$0xff]
        %v908 = vld [vmem:[%s267 + $0x1280] sm:$0xff]
        %v909 = vld [vmem:[%s267 + $0x1288] sm:$0xff]
        %v910 = vld [vmem:[%s267 + $0x1290] sm:$0xff]
        %v911 = vld [vmem:[%s267 + $0x1298] sm:$0xff]
        %v912 = vld [vmem:[%s267 + $0x12a0] sm:$0xff]
        %v913 = vld [vmem:[%s267 + $0x12a8] sm:$0xff]
        %v914 = vld [vmem:[%s267 + $0x12b0] sm:$0xff]
        %v915 = vld [vmem:[%s267 + $0x12b8] sm:$0xff]
        %v916 = vld [vmem:[%s267 + $0x12c0] sm:$0xff]
        %v917 = vld [vmem:[%s267 + $0x12c8] sm:$0xff]
        %v918 = vld [vmem:[%s267 + $0x12d0] sm:$0xff]
        %v919 = vld [vmem:[%s267 + $0x12d8] sm:$0xff]
        %v920 = vld [vmem:[%s267 + $0x12e0] sm:$0xff]
        %v921 = vld [vmem:[%s267 + $0x12e8] sm:$0xff]
        %v922 = vld [vmem:[%s267 + $0x12f0] sm:$0xff]
        %v923 = vld [vmem:[%s267 + $0x12f8] sm:$0xff]
        %v924 = vld [vmem:[%s267 + $0x1300] sm:$0xff]
        %v925 = vld [vmem:[%s267 + $0x1308] sm:$0xff]
        %v926 = vld [vmem:[%s267 + $0x1310] sm:$0xff]
        %v927 = vld [vmem:[%s267 + $0x1318] sm:$0xff]
        %v928 = vld [vmem:[%s267 + $0x1320] sm:$0xff]
        %v929 = vld [vmem:[%s267 + $0x1328] sm:$0xff]
        %v930 = vld [vmem:[%s267 + $0x1330] sm:$0xff]
        %v931 = vld [vmem:[%s267 + $0x1338] sm:$0xff]
        %v932 = vld [vmem:[%s267 + $0x1340] sm:$0xff]
        %v933 = vld [vmem:[%s267 + $0x1348] sm:$0xff]
        %v934 = vld [vmem:[%s267 + $0x1350] sm:$0xff]
        %v935 = vld [vmem:[%s267 + $0x1358] sm:$0xff]
        %v936 = vld [vmem:[%s267 + $0x1360] sm:$0xff]
        %v937 = vld [vmem:[%s267 + $0x1368] sm:$0xff]
        %v938 = vld [vmem:[%s267 + $0x1370] sm:$0xff]
        %v939 = vld [vmem:[%s267 + $0x1378] sm:$0xff]
        %v940 = vld [vmem:[%s267 + $0x1380] sm:$0xff]
        %v941 = vld [vmem:[%s267 + $0x1388] sm:$0xff]
        %v942 = vld [vmem:[%s267 + $0x1390] sm:$0xff]
        %v943 = vld [vmem:[%s267 + $0x1398] sm:$0xff]
        %v944 = vld [vmem:[%s267 + $0x13a0] sm:$0xff]
        %v945 = vld [vmem:[%s267 + $0x13a8] sm:$0xff]
        %v946 = vld [vmem:[%s267 + $0x13b0] sm:$0xff]
        %v947 = vld [vmem:[%s267 + $0x13b8] sm:$0xff]
        %v948 = vld [vmem:[%s267 + $0x13c0] sm:$0xff]
        %v949 = vld [vmem:[%s267 + $0x13c8] sm:$0xff]
        %v950 = vld [vmem:[%s267 + $0x13d0] sm:$0xff]
        %v951 = vld [vmem:[%s267 + $0x13d8] sm:$0xff]
        %v952 = vld [vmem:[%s267 + $0x13e0] sm:$0xff]
        %v953 = vld [vmem:[%s267 + $0x13e8] sm:$0xff]
        %v954 = vld [vmem:[%s267 + $0x13f0] sm:$0xff]
        %v955 = vld [vmem:[%s267 + $0x13f8] sm:$0xff]
        %v976 = vunpack.c.l.b16 %v296
        %v977 = vunpack.c.h.b16 %v296
        %v978 = vunpack.c.l.b16 %v297
        %v979 = vunpack.c.h.b16 %v297
        %v980 = vunpack.c.l.b16 %v298
        %v981 = vunpack.c.h.b16 %v298
        %v982 = vunpack.c.l.b16 %v299
        %v983 = vunpack.c.h.b16 %v299
        %v984 = vunpack.c.l.b16 %v300
        %v985 = vunpack.c.h.b16 %v300
        %v986 = vunpack.c.l.b16 %v301
        %v987 = vunpack.c.h.b16 %v301
        %v988 = vunpack.c.l.b16 %v302
        %v989 = vunpack.c.h.b16 %v302
        %v990 = vunpack.c.l.b16 %v303
        %v991 = vunpack.c.h.b16 %v303
        %v992 = vunpack.c.l.b16 %v304
        %v993 = vunpack.c.h.b16 %v304
        %v994 = vunpack.c.l.b16 %v305
        %v995 = vunpack.c.h.b16 %v305
        %v996 = vunpack.c.l.b16 %v306
        %v997 = vunpack.c.h.b16 %v306
        %v998 = vunpack.c.l.b16 %v307
        %v999 = vunpack.c.h.b16 %v307
        %v1000 = vunpack.c.l.b16 %v308
        %v1001 = vunpack.c.h.b16 %v308
        %v1002 = vunpack.c.l.b16 %v309
        %v1003 = vunpack.c.h.b16 %v309
        %v1004 = vunpack.c.l.b16 %v310
        %v1005 = vunpack.c.h.b16 %v310
        %v1006 = vunpack.c.l.b16 %v311
        %v1007 = vunpack.c.h.b16 %v311
        %v1008 = vunpack.c.l.b16 %v312
        %v1009 = vunpack.c.h.b16 %v312
        %v1010 = vunpack.c.l.b16 %v313
        %v1011 = vunpack.c.h.b16 %v313
        %v1012 = vunpack.c.l.b16 %v314
        %v1013 = vunpack.c.h.b16 %v314
        %v1014 = vunpack.c.l.b16 %v315
        %v1015 = vunpack.c.h.b16 %v315
        %v1016 = vpack.c.b16 %v996, %v976
        %v1017 = vpack.c.b16 %v997, %v977
        %v1018 = vpack.c.b16 %v998, %v978
        %v1019 = vpack.c.b16 %v999, %v979
        %v1020 = vpack.c.b16 %v1000, %v980
        %v1021 = vpack.c.b16 %v1001, %v981
        %v1022 = vpack.c.b16 %v1002, %v982
        %v1023 = vpack.c.b16 %v1003, %v983
        %v1024 = vpack.c.b16 %v1004, %v984
        %v1025 = vpack.c.b16 %v1005, %v985
        %v1026 = vpack.c.b16 %v1006, %v986
        %v1027 = vpack.c.b16 %v1007, %v987
        %v1028 = vpack.c.b16 %v1008, %v988
        %v1029 = vpack.c.b16 %v1009, %v989
        %v1030 = vpack.c.b16 %v1010, %v990
        %v1031 = vpack.c.b16 %v1011, %v991
        %v1032 = vpack.c.b16 %v1012, %v992
        %v1033 = vpack.c.b16 %v1013, %v993
        %v1034 = vpack.c.b16 %v1014, %v994
        %v1035 = vpack.c.b16 %v1015, %v995
        %v1696 = vunpack.c.l.b16 %v316
        %v1697 = vunpack.c.h.b16 %v316
        %v1698 = vunpack.c.l.b16 %v317
        %v1699 = vunpack.c.h.b16 %v317
        %v1700 = vunpack.c.l.b16 %v318
        %v1701 = vunpack.c.h.b16 %v318
        %v1702 = vunpack.c.l.b16 %v319
        %v1703 = vunpack.c.h.b16 %v319
        %v1704 = vunpack.c.l.b16 %v320
        %v1705 = vunpack.c.h.b16 %v320
        %v1706 = vunpack.c.l.b16 %v321
        %v1707 = vunpack.c.h.b16 %v321
        %v1708 = vunpack.c.l.b16 %v322
        %v1709 = vunpack.c.h.b16 %v322
        %v1710 = vunpack.c.l.b16 %v323
        %v1711 = vunpack.c.h.b16 %v323
        %v1712 = vunpack.c.l.b16 %v324
        %v1713 = vunpack.c.h.b16 %v324
        %v1714 = vunpack.c.l.b16 %v325
        %v1715 = vunpack.c.h.b16 %v325
        %v1716 = vunpack.c.l.b16 %v326
        %v1717 = vunpack.c.h.b16 %v326
        %v1718 = vunpack.c.l.b16 %v327
        %v1719 = vunpack.c.h.b16 %v327
        %v1720 = vunpack.c.l.b16 %v328
        %v1721 = vunpack.c.h.b16 %v328
        %v1722 = vunpack.c.l.b16 %v329
        %v1723 = vunpack.c.h.b16 %v329
        %v1724 = vunpack.c.l.b16 %v330
        %v1725 = vunpack.c.h.b16 %v330
        %v1726 = vunpack.c.l.b16 %v331
        %v1727 = vunpack.c.h.b16 %v331
        %v1728 = vunpack.c.l.b16 %v332
        %v1729 = vunpack.c.h.b16 %v332
        %v1730 = vunpack.c.l.b16 %v333
        %v1731 = vunpack.c.h.b16 %v333
        %v1732 = vunpack.c.l.b16 %v334
        %v1733 = vunpack.c.h.b16 %v334
        %v1734 = vunpack.c.l.b16 %v335
        %v1735 = vunpack.c.h.b16 %v335
        %v1736 = vunpack.c.l.b16 %v336
        %v1737 = vunpack.c.h.b16 %v336
        %v1738 = vunpack.c.l.b16 %v337
        %v1739 = vunpack.c.h.b16 %v337
        %v1740 = vunpack.c.l.b16 %v338
        %v1741 = vunpack.c.h.b16 %v338
        %v1742 = vunpack.c.l.b16 %v339
        %v1743 = vunpack.c.h.b16 %v339
        %v1744 = vunpack.c.l.b16 %v340
        %v1745 = vunpack.c.h.b16 %v340
        %v1746 = vunpack.c.l.b16 %v341
        %v1747 = vunpack.c.h.b16 %v341
        %v1748 = vunpack.c.l.b16 %v342
        %v1749 = vunpack.c.h.b16 %v342
        %v1750 = vunpack.c.l.b16 %v343
        %v1751 = vunpack.c.h.b16 %v343
        %v1752 = vunpack.c.l.b16 %v344
        %v1753 = vunpack.c.h.b16 %v344
        %v1754 = vunpack.c.l.b16 %v345
        %v1755 = vunpack.c.h.b16 %v345
        %v1756 = vunpack.c.l.b16 %v346
        %v1757 = vunpack.c.h.b16 %v346
        %v1758 = vunpack.c.l.b16 %v347
        %v1759 = vunpack.c.h.b16 %v347
        %v1760 = vunpack.c.l.b16 %v348
        %v1761 = vunpack.c.h.b16 %v348
        %v1762 = vunpack.c.l.b16 %v349
        %v1763 = vunpack.c.h.b16 %v349
        %v1764 = vunpack.c.l.b16 %v350
        %v1765 = vunpack.c.h.b16 %v350
        %v1766 = vunpack.c.l.b16 %v351
        %v1767 = vunpack.c.h.b16 %v351
        %v1768 = vunpack.c.l.b16 %v352
        %v1769 = vunpack.c.h.b16 %v352
        %v1770 = vunpack.c.l.b16 %v353
        %v1771 = vunpack.c.h.b16 %v353
        %v1772 = vunpack.c.l.b16 %v354
        %v1773 = vunpack.c.h.b16 %v354
        %v1774 = vunpack.c.l.b16 %v355
        %v1775 = vunpack.c.h.b16 %v355
        %v1776 = vunpack.c.l.b16 %v356
        %v1777 = vunpack.c.h.b16 %v356
        %v1778 = vunpack.c.l.b16 %v357
        %v1779 = vunpack.c.h.b16 %v357
        %v1780 = vunpack.c.l.b16 %v358
        %v1781 = vunpack.c.h.b16 %v358
        %v1782 = vunpack.c.l.b16 %v359
        %v1783 = vunpack.c.h.b16 %v359
        %v1784 = vunpack.c.l.b16 %v360
        %v1785 = vunpack.c.h.b16 %v360
        %v1786 = vunpack.c.l.b16 %v361
        %v1787 = vunpack.c.h.b16 %v361
        %v1788 = vunpack.c.l.b16 %v362
        %v1789 = vunpack.c.h.b16 %v362
        %v1790 = vunpack.c.l.b16 %v363
        %v1791 = vunpack.c.h.b16 %v363
        %v1792 = vunpack.c.l.b16 %v364
        %v1793 = vunpack.c.h.b16 %v364
        %v1794 = vunpack.c.l.b16 %v365
        %v1795 = vunpack.c.h.b16 %v365
        %v1796 = vunpack.c.l.b16 %v366
        %v1797 = vunpack.c.h.b16 %v366
        %v1798 = vunpack.c.l.b16 %v367
        %v1799 = vunpack.c.h.b16 %v367
        %v1800 = vunpack.c.l.b16 %v368
        %v1801 = vunpack.c.h.b16 %v368
        %v1802 = vunpack.c.l.b16 %v369
        %v1803 = vunpack.c.h.b16 %v369
        %v1804 = vunpack.c.l.b16 %v370
        %v1805 = vunpack.c.h.b16 %v370
        %v1806 = vunpack.c.l.b16 %v371
        %v1807 = vunpack.c.h.b16 %v371
        %v1808 = vunpack.c.l.b16 %v372
        %v1809 = vunpack.c.h.b16 %v372
        %v1810 = vunpack.c.l.b16 %v373
        %v1811 = vunpack.c.h.b16 %v373
        %v1812 = vunpack.c.l.b16 %v374
        %v1813 = vunpack.c.h.b16 %v374
        %v1814 = vunpack.c.l.b16 %v375
        %v1815 = vunpack.c.h.b16 %v375
        %v1816 = vunpack.c.l.b16 %v376
        %v1817 = vunpack.c.h.b16 %v376
        %v1818 = vunpack.c.l.b16 %v377
        %v1819 = vunpack.c.h.b16 %v377
        %v1820 = vunpack.c.l.b16 %v378
        %v1821 = vunpack.c.h.b16 %v378
        %v1822 = vunpack.c.l.b16 %v379
        %v1823 = vunpack.c.h.b16 %v379
        %v1824 = vunpack.c.l.b16 %v380
        %v1825 = vunpack.c.h.b16 %v380
        %v1826 = vunpack.c.l.b16 %v381
        %v1827 = vunpack.c.h.b16 %v381
        %v1828 = vunpack.c.l.b16 %v382
        %v1829 = vunpack.c.h.b16 %v382
        %v1830 = vunpack.c.l.b16 %v383
        %v1831 = vunpack.c.h.b16 %v383
        %v1832 = vunpack.c.l.b16 %v384
        %v1833 = vunpack.c.h.b16 %v384
        %v1834 = vunpack.c.l.b16 %v385
        %v1835 = vunpack.c.h.b16 %v385
        %v1836 = vunpack.c.l.b16 %v386
        %v1837 = vunpack.c.h.b16 %v386
        %v1838 = vunpack.c.l.b16 %v387
        %v1839 = vunpack.c.h.b16 %v387
        %v1840 = vunpack.c.l.b16 %v388
        %v1841 = vunpack.c.h.b16 %v388
        %v1842 = vunpack.c.l.b16 %v389
        %v1843 = vunpack.c.h.b16 %v389
        %v1844 = vunpack.c.l.b16 %v390
        %v1845 = vunpack.c.h.b16 %v390
        %v1846 = vunpack.c.l.b16 %v391
        %v1847 = vunpack.c.h.b16 %v391
        %v1848 = vunpack.c.l.b16 %v392
        %v1849 = vunpack.c.h.b16 %v392
        %v1850 = vunpack.c.l.b16 %v393
        %v1851 = vunpack.c.h.b16 %v393
        %v1852 = vunpack.c.l.b16 %v394
        %v1853 = vunpack.c.h.b16 %v394
        %v1854 = vunpack.c.l.b16 %v395
        %v1855 = vunpack.c.h.b16 %v395
        %v1856 = vunpack.c.l.b16 %v396
        %v1857 = vunpack.c.h.b16 %v396
        %v1858 = vunpack.c.l.b16 %v397
        %v1859 = vunpack.c.h.b16 %v397
        %v1860 = vunpack.c.l.b16 %v398
        %v1861 = vunpack.c.h.b16 %v398
        %v1862 = vunpack.c.l.b16 %v399
        %v1863 = vunpack.c.h.b16 %v399
        %v1864 = vunpack.c.l.b16 %v400
        %v1865 = vunpack.c.h.b16 %v400
        %v1866 = vunpack.c.l.b16 %v401
        %v1867 = vunpack.c.h.b16 %v401
        %v1868 = vunpack.c.l.b16 %v402
        %v1869 = vunpack.c.h.b16 %v402
        %v1870 = vunpack.c.l.b16 %v403
        %v1871 = vunpack.c.h.b16 %v403
        %v1872 = vunpack.c.l.b16 %v404
        %v1873 = vunpack.c.h.b16 %v404
        %v1874 = vunpack.c.l.b16 %v405
        %v1875 = vunpack.c.h.b16 %v405
        %v1876 = vunpack.c.l.b16 %v406
        %v1877 = vunpack.c.h.b16 %v406
        %v1878 = vunpack.c.l.b16 %v407
        %v1879 = vunpack.c.h.b16 %v407
        %v1880 = vunpack.c.l.b16 %v408
        %v1881 = vunpack.c.h.b16 %v408
        %v1882 = vunpack.c.l.b16 %v409
        %v1883 = vunpack.c.h.b16 %v409
        %v1884 = vunpack.c.l.b16 %v410
        %v1885 = vunpack.c.h.b16 %v410
        %v1886 = vunpack.c.l.b16 %v411
        %v1887 = vunpack.c.h.b16 %v411
        %v1888 = vunpack.c.l.b16 %v412
        %v1889 = vunpack.c.h.b16 %v412
        %v1890 = vunpack.c.l.b16 %v413
        %v1891 = vunpack.c.h.b16 %v413
        %v1892 = vunpack.c.l.b16 %v414
        %v1893 = vunpack.c.h.b16 %v414
        %v1894 = vunpack.c.l.b16 %v415
        %v1895 = vunpack.c.h.b16 %v415
        %v1896 = vunpack.c.l.b16 %v416
        %v1897 = vunpack.c.h.b16 %v416
        %v1898 = vunpack.c.l.b16 %v417
        %v1899 = vunpack.c.h.b16 %v417
        %v1900 = vunpack.c.l.b16 %v418
        %v1901 = vunpack.c.h.b16 %v418
        %v1902 = vunpack.c.l.b16 %v419
        %v1903 = vunpack.c.h.b16 %v419
        %v1904 = vunpack.c.l.b16 %v420
        %v1905 = vunpack.c.h.b16 %v420
        %v1906 = vunpack.c.l.b16 %v421
        %v1907 = vunpack.c.h.b16 %v421
        %v1908 = vunpack.c.l.b16 %v422
        %v1909 = vunpack.c.h.b16 %v422
        %v1910 = vunpack.c.l.b16 %v423
        %v1911 = vunpack.c.h.b16 %v423
        %v1912 = vunpack.c.l.b16 %v424
        %v1913 = vunpack.c.h.b16 %v424
        %v1914 = vunpack.c.l.b16 %v425
        %v1915 = vunpack.c.h.b16 %v425
        %v1916 = vunpack.c.l.b16 %v426
        %v1917 = vunpack.c.h.b16 %v426
        %v1918 = vunpack.c.l.b16 %v427
        %v1919 = vunpack.c.h.b16 %v427
        %v1920 = vunpack.c.l.b16 %v428
        %v1921 = vunpack.c.h.b16 %v428
        %v1922 = vunpack.c.l.b16 %v429
        %v1923 = vunpack.c.h.b16 %v429
        %v1924 = vunpack.c.l.b16 %v430
        %v1925 = vunpack.c.h.b16 %v430
        %v1926 = vunpack.c.l.b16 %v431
        %v1927 = vunpack.c.h.b16 %v431
        %v1928 = vunpack.c.l.b16 %v432
        %v1929 = vunpack.c.h.b16 %v432
        %v1930 = vunpack.c.l.b16 %v433
        %v1931 = vunpack.c.h.b16 %v433
        %v1932 = vunpack.c.l.b16 %v434
        %v1933 = vunpack.c.h.b16 %v434
        %v1934 = vunpack.c.l.b16 %v435
        %v1935 = vunpack.c.h.b16 %v435
        %v1936 = vunpack.c.l.b16 %v436
        %v1937 = vunpack.c.h.b16 %v436
        %v1938 = vunpack.c.l.b16 %v437
        %v1939 = vunpack.c.h.b16 %v437
        %v1940 = vunpack.c.l.b16 %v438
        %v1941 = vunpack.c.h.b16 %v438
        %v1942 = vunpack.c.l.b16 %v439
        %v1943 = vunpack.c.h.b16 %v439
        %v1944 = vunpack.c.l.b16 %v440
        %v1945 = vunpack.c.h.b16 %v440
        %v1946 = vunpack.c.l.b16 %v441
        %v1947 = vunpack.c.h.b16 %v441
        %v1948 = vunpack.c.l.b16 %v442
        %v1949 = vunpack.c.h.b16 %v442
        %v1950 = vunpack.c.l.b16 %v443
        %v1951 = vunpack.c.h.b16 %v443
        %v1952 = vunpack.c.l.b16 %v444
        %v1953 = vunpack.c.h.b16 %v444
        %v1954 = vunpack.c.l.b16 %v445
        %v1955 = vunpack.c.h.b16 %v445
        %v1956 = vunpack.c.l.b16 %v446
        %v1957 = vunpack.c.h.b16 %v446
        %v1958 = vunpack.c.l.b16 %v447
        %v1959 = vunpack.c.h.b16 %v447
        %v1960 = vunpack.c.l.b16 %v448
        %v1961 = vunpack.c.h.b16 %v448
        %v1962 = vunpack.c.l.b16 %v449
        %v1963 = vunpack.c.h.b16 %v449
        %v1964 = vunpack.c.l.b16 %v450
        %v1965 = vunpack.c.h.b16 %v450
        %v1966 = vunpack.c.l.b16 %v451
        %v1967 = vunpack.c.h.b16 %v451
        %v1968 = vunpack.c.l.b16 %v452
        %v1969 = vunpack.c.h.b16 %v452
        %v1970 = vunpack.c.l.b16 %v453
        %v1971 = vunpack.c.h.b16 %v453
        %v1972 = vunpack.c.l.b16 %v454
        %v1973 = vunpack.c.h.b16 %v454
        %v1974 = vunpack.c.l.b16 %v455
        %v1975 = vunpack.c.h.b16 %v455
        %v1976 = vunpack.c.l.b16 %v456
        %v1977 = vunpack.c.h.b16 %v456
        %v1978 = vunpack.c.l.b16 %v457
        %v1979 = vunpack.c.h.b16 %v457
        %v1980 = vunpack.c.l.b16 %v458
        %v1981 = vunpack.c.h.b16 %v458
        %v1982 = vunpack.c.l.b16 %v459
        %v1983 = vunpack.c.h.b16 %v459
        %v1984 = vunpack.c.l.b16 %v460
        %v1985 = vunpack.c.h.b16 %v460
        %v1986 = vunpack.c.l.b16 %v461
        %v1987 = vunpack.c.h.b16 %v461
        %v1988 = vunpack.c.l.b16 %v462
        %v1989 = vunpack.c.h.b16 %v462
        %v1990 = vunpack.c.l.b16 %v463
        %v1991 = vunpack.c.h.b16 %v463
        %v1992 = vunpack.c.l.b16 %v464
        %v1993 = vunpack.c.h.b16 %v464
        %v1994 = vunpack.c.l.b16 %v465
        %v1995 = vunpack.c.h.b16 %v465
        %v1996 = vunpack.c.l.b16 %v466
        %v1997 = vunpack.c.h.b16 %v466
        %v1998 = vunpack.c.l.b16 %v467
        %v1999 = vunpack.c.h.b16 %v467
        %v2000 = vunpack.c.l.b16 %v468
        %v2001 = vunpack.c.h.b16 %v468
        %v2002 = vunpack.c.l.b16 %v469
        %v2003 = vunpack.c.h.b16 %v469
        %v2004 = vunpack.c.l.b16 %v470
        %v2005 = vunpack.c.h.b16 %v470
        %v2006 = vunpack.c.l.b16 %v471
        %v2007 = vunpack.c.h.b16 %v471
        %v2008 = vunpack.c.l.b16 %v472
        %v2009 = vunpack.c.h.b16 %v472
        %v2010 = vunpack.c.l.b16 %v473
        %v2011 = vunpack.c.h.b16 %v473
        %v2012 = vunpack.c.l.b16 %v474
        %v2013 = vunpack.c.h.b16 %v474
        %v2014 = vunpack.c.l.b16 %v475
        %v2015 = vunpack.c.h.b16 %v475
        %v2016 = vunpack.c.l.b16 %v476
        %v2017 = vunpack.c.h.b16 %v476
        %v2018 = vunpack.c.l.b16 %v477
        %v2019 = vunpack.c.h.b16 %v477
        %v2020 = vunpack.c.l.b16 %v478
        %v2021 = vunpack.c.h.b16 %v478
        %v2022 = vunpack.c.l.b16 %v479
        %v2023 = vunpack.c.h.b16 %v479
        %v2024 = vunpack.c.l.b16 %v480
        %v2025 = vunpack.c.h.b16 %v480
        %v2026 = vunpack.c.l.b16 %v481
        %v2027 = vunpack.c.h.b16 %v481
        %v2028 = vunpack.c.l.b16 %v482
        %v2029 = vunpack.c.h.b16 %v482
        %v2030 = vunpack.c.l.b16 %v483
        %v2031 = vunpack.c.h.b16 %v483
        %v2032 = vunpack.c.l.b16 %v484
        %v2033 = vunpack.c.h.b16 %v484
        %v2034 = vunpack.c.l.b16 %v485
        %v2035 = vunpack.c.h.b16 %v485
        %v2036 = vunpack.c.l.b16 %v486
        %v2037 = vunpack.c.h.b16 %v486
        %v2038 = vunpack.c.l.b16 %v487
        %v2039 = vunpack.c.h.b16 %v487
        %v2040 = vunpack.c.l.b16 %v488
        %v2041 = vunpack.c.h.b16 %v488
        %v2042 = vunpack.c.l.b16 %v489
        %v2043 = vunpack.c.h.b16 %v489
        %v2044 = vunpack.c.l.b16 %v490
        %v2045 = vunpack.c.h.b16 %v490
        %v2046 = vunpack.c.l.b16 %v491
        %v2047 = vunpack.c.h.b16 %v491
        %v2048 = vunpack.c.l.b16 %v492
        %v2049 = vunpack.c.h.b16 %v492
        %v2050 = vunpack.c.l.b16 %v493
        %v2051 = vunpack.c.h.b16 %v493
        %v2052 = vunpack.c.l.b16 %v494
        %v2053 = vunpack.c.h.b16 %v494
        %v2054 = vunpack.c.l.b16 %v495
        %v2055 = vunpack.c.h.b16 %v495
        %v2056 = vunpack.c.l.b16 %v496
        %v2057 = vunpack.c.h.b16 %v496
        %v2058 = vunpack.c.l.b16 %v497
        %v2059 = vunpack.c.h.b16 %v497
        %v2060 = vunpack.c.l.b16 %v498
        %v2061 = vunpack.c.h.b16 %v498
        %v2062 = vunpack.c.l.b16 %v499
        %v2063 = vunpack.c.h.b16 %v499
        %v2064 = vunpack.c.l.b16 %v500
        %v2065 = vunpack.c.h.b16 %v500
        %v2066 = vunpack.c.l.b16 %v501
        %v2067 = vunpack.c.h.b16 %v501
        %v2068 = vunpack.c.l.b16 %v502
        %v2069 = vunpack.c.h.b16 %v502
        %v2070 = vunpack.c.l.b16 %v503
        %v2071 = vunpack.c.h.b16 %v503
        %v2072 = vunpack.c.l.b16 %v504
        %v2073 = vunpack.c.h.b16 %v504
        %v2074 = vunpack.c.l.b16 %v505
        %v2075 = vunpack.c.h.b16 %v505
        %v2076 = vunpack.c.l.b16 %v506
        %v2077 = vunpack.c.h.b16 %v506
        %v2078 = vunpack.c.l.b16 %v507
        %v2079 = vunpack.c.h.b16 %v507
        %v2080 = vunpack.c.l.b16 %v508
        %v2081 = vunpack.c.h.b16 %v508
        %v2082 = vunpack.c.l.b16 %v509
        %v2083 = vunpack.c.h.b16 %v509
        %v2084 = vunpack.c.l.b16 %v510
        %v2085 = vunpack.c.h.b16 %v510
        %v2086 = vunpack.c.l.b16 %v511
        %v2087 = vunpack.c.h.b16 %v511
        %v2088 = vunpack.c.l.b16 %v512
        %v2089 = vunpack.c.h.b16 %v512
        %v2090 = vunpack.c.l.b16 %v513
        %v2091 = vunpack.c.h.b16 %v513
        %v2092 = vunpack.c.l.b16 %v514
        %v2093 = vunpack.c.h.b16 %v514
        %v2094 = vunpack.c.l.b16 %v515
        %v2095 = vunpack.c.h.b16 %v515
        %v2096 = vunpack.c.l.b16 %v516
        %v2097 = vunpack.c.h.b16 %v516
        %v2098 = vunpack.c.l.b16 %v517
        %v2099 = vunpack.c.h.b16 %v517
        %v2100 = vunpack.c.l.b16 %v518
        %v2101 = vunpack.c.h.b16 %v518
        %v2102 = vunpack.c.l.b16 %v519
        %v2103 = vunpack.c.h.b16 %v519
        %v2104 = vunpack.c.l.b16 %v520
        %v2105 = vunpack.c.h.b16 %v520
        %v2106 = vunpack.c.l.b16 %v521
        %v2107 = vunpack.c.h.b16 %v521
        %v2108 = vunpack.c.l.b16 %v522
        %v2109 = vunpack.c.h.b16 %v522
        %v2110 = vunpack.c.l.b16 %v523
        %v2111 = vunpack.c.h.b16 %v523
        %v2112 = vunpack.c.l.b16 %v524
        %v2113 = vunpack.c.h.b16 %v524
        %v2114 = vunpack.c.l.b16 %v525
        %v2115 = vunpack.c.h.b16 %v525
        %v2116 = vunpack.c.l.b16 %v526
        %v2117 = vunpack.c.h.b16 %v526
        %v2118 = vunpack.c.l.b16 %v527
        %v2119 = vunpack.c.h.b16 %v527
        %v2120 = vunpack.c.l.b16 %v528
        %v2121 = vunpack.c.h.b16 %v528
        %v2122 = vunpack.c.l.b16 %v529
        %v2123 = vunpack.c.h.b16 %v529
        %v2124 = vunpack.c.l.b16 %v530
        %v2125 = vunpack.c.h.b16 %v530
        %v2126 = vunpack.c.l.b16 %v531
        %v2127 = vunpack.c.h.b16 %v531
        %v2128 = vunpack.c.l.b16 %v532
        %v2129 = vunpack.c.h.b16 %v532
        %v2130 = vunpack.c.l.b16 %v533
        %v2131 = vunpack.c.h.b16 %v533
        %v2132 = vunpack.c.l.b16 %v534
        %v2133 = vunpack.c.h.b16 %v534
        %v2134 = vunpack.c.l.b16 %v535
        %v2135 = vunpack.c.h.b16 %v535
        %v2136 = vunpack.c.l.b16 %v536
        %v2137 = vunpack.c.h.b16 %v536
        %v2138 = vunpack.c.l.b16 %v537
        %v2139 = vunpack.c.h.b16 %v537
        %v2140 = vunpack.c.l.b16 %v538
        %v2141 = vunpack.c.h.b16 %v538
        %v2142 = vunpack.c.l.b16 %v539
        %v2143 = vunpack.c.h.b16 %v539
        %v2144 = vunpack.c.l.b16 %v540
        %v2145 = vunpack.c.h.b16 %v540
        %v2146 = vunpack.c.l.b16 %v541
        %v2147 = vunpack.c.h.b16 %v541
        %v2148 = vunpack.c.l.b16 %v542
        %v2149 = vunpack.c.h.b16 %v542
        %v2150 = vunpack.c.l.b16 %v543
        %v2151 = vunpack.c.h.b16 %v543
        %v2152 = vunpack.c.l.b16 %v544
        %v2153 = vunpack.c.h.b16 %v544
        %v2154 = vunpack.c.l.b16 %v545
        %v2155 = vunpack.c.h.b16 %v545
        %v2156 = vunpack.c.l.b16 %v546
        %v2157 = vunpack.c.h.b16 %v546
        %v2158 = vunpack.c.l.b16 %v547
        %v2159 = vunpack.c.h.b16 %v547
        %v2160 = vunpack.c.l.b16 %v548
        %v2161 = vunpack.c.h.b16 %v548
        %v2162 = vunpack.c.l.b16 %v549
        %v2163 = vunpack.c.h.b16 %v549
        %v2164 = vunpack.c.l.b16 %v550
        %v2165 = vunpack.c.h.b16 %v550
        %v2166 = vunpack.c.l.b16 %v551
        %v2167 = vunpack.c.h.b16 %v551
        %v2168 = vunpack.c.l.b16 %v552
        %v2169 = vunpack.c.h.b16 %v552
        %v2170 = vunpack.c.l.b16 %v553
        %v2171 = vunpack.c.h.b16 %v553
        %v2172 = vunpack.c.l.b16 %v554
        %v2173 = vunpack.c.h.b16 %v554
        %v2174 = vunpack.c.l.b16 %v555
        %v2175 = vunpack.c.h.b16 %v555
        %v2176 = vunpack.c.l.b16 %v556
        %v2177 = vunpack.c.h.b16 %v556
        %v2178 = vunpack.c.l.b16 %v557
        %v2179 = vunpack.c.h.b16 %v557
        %v2180 = vunpack.c.l.b16 %v558
        %v2181 = vunpack.c.h.b16 %v558
        %v2182 = vunpack.c.l.b16 %v559
        %v2183 = vunpack.c.h.b16 %v559
        %v2184 = vunpack.c.l.b16 %v560
        %v2185 = vunpack.c.h.b16 %v560
        %v2186 = vunpack.c.l.b16 %v561
        %v2187 = vunpack.c.h.b16 %v561
        %v2188 = vunpack.c.l.b16 %v562
        %v2189 = vunpack.c.h.b16 %v562
        %v2190 = vunpack.c.l.b16 %v563
        %v2191 = vunpack.c.h.b16 %v563
        %v2192 = vunpack.c.l.b16 %v564
        %v2193 = vunpack.c.h.b16 %v564
        %v2194 = vunpack.c.l.b16 %v565
        %v2195 = vunpack.c.h.b16 %v565
        %v2196 = vunpack.c.l.b16 %v566
        %v2197 = vunpack.c.h.b16 %v566
        %v2198 = vunpack.c.l.b16 %v567
        %v2199 = vunpack.c.h.b16 %v567
        %v2200 = vunpack.c.l.b16 %v568
        %v2201 = vunpack.c.h.b16 %v568
        %v2202 = vunpack.c.l.b16 %v569
        %v2203 = vunpack.c.h.b16 %v569
        %v2204 = vunpack.c.l.b16 %v570
        %v2205 = vunpack.c.h.b16 %v570
        %v2206 = vunpack.c.l.b16 %v571
        %v2207 = vunpack.c.h.b16 %v571
        %v2208 = vunpack.c.l.b16 %v572
        %v2209 = vunpack.c.h.b16 %v572
        %v2210 = vunpack.c.l.b16 %v573
        %v2211 = vunpack.c.h.b16 %v573
        %v2212 = vunpack.c.l.b16 %v574
        %v2213 = vunpack.c.h.b16 %v574
        %v2214 = vunpack.c.l.b16 %v575
        %v2215 = vunpack.c.h.b16 %v575
        %v2216 = vunpack.c.l.b16 %v576
        %v2217 = vunpack.c.h.b16 %v576
        %v2218 = vunpack.c.l.b16 %v577
        %v2219 = vunpack.c.h.b16 %v577
        %v2220 = vunpack.c.l.b16 %v578
        %v2221 = vunpack.c.h.b16 %v578
        %v2222 = vunpack.c.l.b16 %v579
        %v2223 = vunpack.c.h.b16 %v579
        %v2224 = vunpack.c.l.b16 %v580
        %v2225 = vunpack.c.h.b16 %v580
        %v2226 = vunpack.c.l.b16 %v581
        %v2227 = vunpack.c.h.b16 %v581
        %v2228 = vunpack.c.l.b16 %v582
        %v2229 = vunpack.c.h.b16 %v582
        %v2230 = vunpack.c.l.b16 %v583
        %v2231 = vunpack.c.h.b16 %v583
        %v2232 = vunpack.c.l.b16 %v584
        %v2233 = vunpack.c.h.b16 %v584
        %v2234 = vunpack.c.l.b16 %v585
        %v2235 = vunpack.c.h.b16 %v585
        %v2236 = vunpack.c.l.b16 %v586
        %v2237 = vunpack.c.h.b16 %v586
        %v2238 = vunpack.c.l.b16 %v587
        %v2239 = vunpack.c.h.b16 %v587
        %v2240 = vunpack.c.l.b16 %v588
        %v2241 = vunpack.c.h.b16 %v588
        %v2242 = vunpack.c.l.b16 %v589
        %v2243 = vunpack.c.h.b16 %v589
        %v2244 = vunpack.c.l.b16 %v590
        %v2245 = vunpack.c.h.b16 %v590
        %v2246 = vunpack.c.l.b16 %v591
        %v2247 = vunpack.c.h.b16 %v591
        %v2248 = vunpack.c.l.b16 %v592
        %v2249 = vunpack.c.h.b16 %v592
        %v2250 = vunpack.c.l.b16 %v593
        %v2251 = vunpack.c.h.b16 %v593
        %v2252 = vunpack.c.l.b16 %v594
        %v2253 = vunpack.c.h.b16 %v594
        %v2254 = vunpack.c.l.b16 %v595
        %v2255 = vunpack.c.h.b16 %v595
        %v2256 = vunpack.c.l.b16 %v596
        %v2257 = vunpack.c.h.b16 %v596
        %v2258 = vunpack.c.l.b16 %v597
        %v2259 = vunpack.c.h.b16 %v597
        %v2260 = vunpack.c.l.b16 %v598
        %v2261 = vunpack.c.h.b16 %v598
        %v2262 = vunpack.c.l.b16 %v599
        %v2263 = vunpack.c.h.b16 %v599
        %v2264 = vunpack.c.l.b16 %v600
        %v2265 = vunpack.c.h.b16 %v600
        %v2266 = vunpack.c.l.b16 %v601
        %v2267 = vunpack.c.h.b16 %v601
        %v2268 = vunpack.c.l.b16 %v602
        %v2269 = vunpack.c.h.b16 %v602
        %v2270 = vunpack.c.l.b16 %v603
        %v2271 = vunpack.c.h.b16 %v603
        %v2272 = vunpack.c.l.b16 %v604
        %v2273 = vunpack.c.h.b16 %v604
        %v2274 = vunpack.c.l.b16 %v605
        %v2275 = vunpack.c.h.b16 %v605
        %v2276 = vunpack.c.l.b16 %v606
        %v2277 = vunpack.c.h.b16 %v606
        %v2278 = vunpack.c.l.b16 %v607
        %v2279 = vunpack.c.h.b16 %v607
        %v2280 = vunpack.c.l.b16 %v608
        %v2281 = vunpack.c.h.b16 %v608
        %v2282 = vunpack.c.l.b16 %v609
        %v2283 = vunpack.c.h.b16 %v609
        %v2284 = vunpack.c.l.b16 %v610
        %v2285 = vunpack.c.h.b16 %v610
        %v2286 = vunpack.c.l.b16 %v611
        %v2287 = vunpack.c.h.b16 %v611
        %v2288 = vunpack.c.l.b16 %v612
        %v2289 = vunpack.c.h.b16 %v612
        %v2290 = vunpack.c.l.b16 %v613
        %v2291 = vunpack.c.h.b16 %v613
        %v2292 = vunpack.c.l.b16 %v614
        %v2293 = vunpack.c.h.b16 %v614
        %v2294 = vunpack.c.l.b16 %v615
        %v2295 = vunpack.c.h.b16 %v615
        %v2296 = vunpack.c.l.b16 %v616
        %v2297 = vunpack.c.h.b16 %v616
        %v2298 = vunpack.c.l.b16 %v617
        %v2299 = vunpack.c.h.b16 %v617
        %v2300 = vunpack.c.l.b16 %v618
        %v2301 = vunpack.c.h.b16 %v618
        %v2302 = vunpack.c.l.b16 %v619
        %v2303 = vunpack.c.h.b16 %v619
        %v2304 = vunpack.c.l.b16 %v620
        %v2305 = vunpack.c.h.b16 %v620
        %v2306 = vunpack.c.l.b16 %v621
        %v2307 = vunpack.c.h.b16 %v621
        %v2308 = vunpack.c.l.b16 %v622
        %v2309 = vunpack.c.h.b16 %v622
        %v2310 = vunpack.c.l.b16 %v623
        %v2311 = vunpack.c.h.b16 %v623
        %v2312 = vunpack.c.l.b16 %v624
        %v2313 = vunpack.c.h.b16 %v624
        %v2314 = vunpack.c.l.b16 %v625
        %v2315 = vunpack.c.h.b16 %v625
        %v2316 = vunpack.c.l.b16 %v626
        %v2317 = vunpack.c.h.b16 %v626
        %v2318 = vunpack.c.l.b16 %v627
        %v2319 = vunpack.c.h.b16 %v627
        %v2320 = vunpack.c.l.b16 %v628
        %v2321 = vunpack.c.h.b16 %v628
        %v2322 = vunpack.c.l.b16 %v629
        %v2323 = vunpack.c.h.b16 %v629
        %v2324 = vunpack.c.l.b16 %v630
        %v2325 = vunpack.c.h.b16 %v630
        %v2326 = vunpack.c.l.b16 %v631
        %v2327 = vunpack.c.h.b16 %v631
        %v2328 = vunpack.c.l.b16 %v632
        %v2329 = vunpack.c.h.b16 %v632
        %v2330 = vunpack.c.l.b16 %v633
        %v2331 = vunpack.c.h.b16 %v633
        %v2332 = vunpack.c.l.b16 %v634
        %v2333 = vunpack.c.h.b16 %v634
        %v2334 = vunpack.c.l.b16 %v635
        %v2335 = vunpack.c.h.b16 %v635
        %v2336 = vunpack.c.l.b16 %v636
        %v2337 = vunpack.c.h.b16 %v636
        %v2338 = vunpack.c.l.b16 %v637
        %v2339 = vunpack.c.h.b16 %v637
        %v2340 = vunpack.c.l.b16 %v638
        %v2341 = vunpack.c.h.b16 %v638
        %v2342 = vunpack.c.l.b16 %v639
        %v2343 = vunpack.c.h.b16 %v639
        %v2344 = vunpack.c.l.b16 %v640
        %v2345 = vunpack.c.h.b16 %v640
        %v2346 = vunpack.c.l.b16 %v641
        %v2347 = vunpack.c.h.b16 %v641
        %v2348 = vunpack.c.l.b16 %v642
        %v2349 = vunpack.c.h.b16 %v642
        %v2350 = vunpack.c.l.b16 %v643
        %v2351 = vunpack.c.h.b16 %v643
        %v2352 = vunpack.c.l.b16 %v644
        %v2353 = vunpack.c.h.b16 %v644
        %v2354 = vunpack.c.l.b16 %v645
        %v2355 = vunpack.c.h.b16 %v645
        %v2356 = vunpack.c.l.b16 %v646
        %v2357 = vunpack.c.h.b16 %v646
        %v2358 = vunpack.c.l.b16 %v647
        %v2359 = vunpack.c.h.b16 %v647
        %v2360 = vunpack.c.l.b16 %v648
        %v2361 = vunpack.c.h.b16 %v648
        %v2362 = vunpack.c.l.b16 %v649
        %v2363 = vunpack.c.h.b16 %v649
        %v2364 = vunpack.c.l.b16 %v650
        %v2365 = vunpack.c.h.b16 %v650
        %v2366 = vunpack.c.l.b16 %v651
        %v2367 = vunpack.c.h.b16 %v651
        %v2368 = vunpack.c.l.b16 %v652
        %v2369 = vunpack.c.h.b16 %v652
        %v2370 = vunpack.c.l.b16 %v653
        %v2371 = vunpack.c.h.b16 %v653
        %v2372 = vunpack.c.l.b16 %v654
        %v2373 = vunpack.c.h.b16 %v654
        %v2374 = vunpack.c.l.b16 %v655
        %v2375 = vunpack.c.h.b16 %v655
        %v2376 = vunpack.c.l.b16 %v656
        %v2377 = vunpack.c.h.b16 %v656
        %v2378 = vunpack.c.l.b16 %v657
        %v2379 = vunpack.c.h.b16 %v657
        %v2380 = vunpack.c.l.b16 %v658
        %v2381 = vunpack.c.h.b16 %v658
        %v2382 = vunpack.c.l.b16 %v659
        %v2383 = vunpack.c.h.b16 %v659
        %v2384 = vunpack.c.l.b16 %v660
        %v2385 = vunpack.c.h.b16 %v660
        %v2386 = vunpack.c.l.b16 %v661
        %v2387 = vunpack.c.h.b16 %v661
        %v2388 = vunpack.c.l.b16 %v662
        %v2389 = vunpack.c.h.b16 %v662
        %v2390 = vunpack.c.l.b16 %v663
        %v2391 = vunpack.c.h.b16 %v663
        %v2392 = vunpack.c.l.b16 %v664
        %v2393 = vunpack.c.h.b16 %v664
        %v2394 = vunpack.c.l.b16 %v665
        %v2395 = vunpack.c.h.b16 %v665
        %v2396 = vunpack.c.l.b16 %v666
        %v2397 = vunpack.c.h.b16 %v666
        %v2398 = vunpack.c.l.b16 %v667
        %v2399 = vunpack.c.h.b16 %v667
        %v2400 = vunpack.c.l.b16 %v668
        %v2401 = vunpack.c.h.b16 %v668
        %v2402 = vunpack.c.l.b16 %v669
        %v2403 = vunpack.c.h.b16 %v669
        %v2404 = vunpack.c.l.b16 %v670
        %v2405 = vunpack.c.h.b16 %v670
        %v2406 = vunpack.c.l.b16 %v671
        %v2407 = vunpack.c.h.b16 %v671
        %v2408 = vunpack.c.l.b16 %v672
        %v2409 = vunpack.c.h.b16 %v672
        %v2410 = vunpack.c.l.b16 %v673
        %v2411 = vunpack.c.h.b16 %v673
        %v2412 = vunpack.c.l.b16 %v674
        %v2413 = vunpack.c.h.b16 %v674
        %v2414 = vunpack.c.l.b16 %v675
        %v2415 = vunpack.c.h.b16 %v675
        %v2416 = vunpack.c.l.b16 %v676
        %v2417 = vunpack.c.h.b16 %v676
        %v2418 = vunpack.c.l.b16 %v677
        %v2419 = vunpack.c.h.b16 %v677
        %v2420 = vunpack.c.l.b16 %v678
        %v2421 = vunpack.c.h.b16 %v678
        %v2422 = vunpack.c.l.b16 %v679
        %v2423 = vunpack.c.h.b16 %v679
        %v2424 = vunpack.c.l.b16 %v680
        %v2425 = vunpack.c.h.b16 %v680
        %v2426 = vunpack.c.l.b16 %v681
        %v2427 = vunpack.c.h.b16 %v681
        %v2428 = vunpack.c.l.b16 %v682
        %v2429 = vunpack.c.h.b16 %v682
        %v2430 = vunpack.c.l.b16 %v683
        %v2431 = vunpack.c.h.b16 %v683
        %v2432 = vunpack.c.l.b16 %v684
        %v2433 = vunpack.c.h.b16 %v684
        %v2434 = vunpack.c.l.b16 %v685
        %v2435 = vunpack.c.h.b16 %v685
        %v2436 = vunpack.c.l.b16 %v686
        %v2437 = vunpack.c.h.b16 %v686
        %v2438 = vunpack.c.l.b16 %v687
        %v2439 = vunpack.c.h.b16 %v687
        %v2440 = vunpack.c.l.b16 %v688
        %v2441 = vunpack.c.h.b16 %v688
        %v2442 = vunpack.c.l.b16 %v689
        %v2443 = vunpack.c.h.b16 %v689
        %v2444 = vunpack.c.l.b16 %v690
        %v2445 = vunpack.c.h.b16 %v690
        %v2446 = vunpack.c.l.b16 %v691
        %v2447 = vunpack.c.h.b16 %v691
        %v2448 = vunpack.c.l.b16 %v692
        %v2449 = vunpack.c.h.b16 %v692
        %v2450 = vunpack.c.l.b16 %v693
        %v2451 = vunpack.c.h.b16 %v693
        %v2452 = vunpack.c.l.b16 %v694
        %v2453 = vunpack.c.h.b16 %v694
        %v2454 = vunpack.c.l.b16 %v695
        %v2455 = vunpack.c.h.b16 %v695
        %v2456 = vunpack.c.l.b16 %v696
        %v2457 = vunpack.c.h.b16 %v696
        %v2458 = vunpack.c.l.b16 %v697
        %v2459 = vunpack.c.h.b16 %v697
        %v2460 = vunpack.c.l.b16 %v698
        %v2461 = vunpack.c.h.b16 %v698
        %v2462 = vunpack.c.l.b16 %v699
        %v2463 = vunpack.c.h.b16 %v699
        %v2464 = vunpack.c.l.b16 %v700
        %v2465 = vunpack.c.h.b16 %v700
        %v2466 = vunpack.c.l.b16 %v701
        %v2467 = vunpack.c.h.b16 %v701
        %v2468 = vunpack.c.l.b16 %v702
        %v2469 = vunpack.c.h.b16 %v702
        %v2470 = vunpack.c.l.b16 %v703
        %v2471 = vunpack.c.h.b16 %v703
        %v2472 = vunpack.c.l.b16 %v704
        %v2473 = vunpack.c.h.b16 %v704
        %v2474 = vunpack.c.l.b16 %v705
        %v2475 = vunpack.c.h.b16 %v705
        %v2476 = vunpack.c.l.b16 %v706
        %v2477 = vunpack.c.h.b16 %v706
        %v2478 = vunpack.c.l.b16 %v707
        %v2479 = vunpack.c.h.b16 %v707
        %v2480 = vunpack.c.l.b16 %v708
        %v2481 = vunpack.c.h.b16 %v708
        %v2482 = vunpack.c.l.b16 %v709
        %v2483 = vunpack.c.h.b16 %v709
        %v2484 = vunpack.c.l.b16 %v710
        %v2485 = vunpack.c.h.b16 %v710
        %v2486 = vunpack.c.l.b16 %v711
        %v2487 = vunpack.c.h.b16 %v711
        %v2488 = vunpack.c.l.b16 %v712
        %v2489 = vunpack.c.h.b16 %v712
        %v2490 = vunpack.c.l.b16 %v713
        %v2491 = vunpack.c.h.b16 %v713
        %v2492 = vunpack.c.l.b16 %v714
        %v2493 = vunpack.c.h.b16 %v714
        %v2494 = vunpack.c.l.b16 %v715
        %v2495 = vunpack.c.h.b16 %v715
        %v2496 = vunpack.c.l.b16 %v716
        %v2497 = vunpack.c.h.b16 %v716
        %v2498 = vunpack.c.l.b16 %v717
        %v2499 = vunpack.c.h.b16 %v717
        %v2500 = vunpack.c.l.b16 %v718
        %v2501 = vunpack.c.h.b16 %v718
        %v2502 = vunpack.c.l.b16 %v719
        %v2503 = vunpack.c.h.b16 %v719
        %v2504 = vunpack.c.l.b16 %v720
        %v2505 = vunpack.c.h.b16 %v720
        %v2506 = vunpack.c.l.b16 %v721
        %v2507 = vunpack.c.h.b16 %v721
        %v2508 = vunpack.c.l.b16 %v722
        %v2509 = vunpack.c.h.b16 %v722
        %v2510 = vunpack.c.l.b16 %v723
        %v2511 = vunpack.c.h.b16 %v723
        %v2512 = vunpack.c.l.b16 %v724
        %v2513 = vunpack.c.h.b16 %v724
        %v2514 = vunpack.c.l.b16 %v725
        %v2515 = vunpack.c.h.b16 %v725
        %v2516 = vunpack.c.l.b16 %v726
        %v2517 = vunpack.c.h.b16 %v726
        %v2518 = vunpack.c.l.b16 %v727
        %v2519 = vunpack.c.h.b16 %v727
        %v2520 = vunpack.c.l.b16 %v728
        %v2521 = vunpack.c.h.b16 %v728
        %v2522 = vunpack.c.l.b16 %v729
        %v2523 = vunpack.c.h.b16 %v729
        %v2524 = vunpack.c.l.b16 %v730
        %v2525 = vunpack.c.h.b16 %v730
        %v2526 = vunpack.c.l.b16 %v731
        %v2527 = vunpack.c.h.b16 %v731
        %v2528 = vunpack.c.l.b16 %v732
        %v2529 = vunpack.c.h.b16 %v732
        %v2530 = vunpack.c.l.b16 %v733
        %v2531 = vunpack.c.h.b16 %v733
        %v2532 = vunpack.c.l.b16 %v734
        %v2533 = vunpack.c.h.b16 %v734
        %v2534 = vunpack.c.l.b16 %v735
        %v2535 = vunpack.c.h.b16 %v735
        %v2536 = vunpack.c.l.b16 %v736
        %v2537 = vunpack.c.h.b16 %v736
        %v2538 = vunpack.c.l.b16 %v737
        %v2539 = vunpack.c.h.b16 %v737
        %v2540 = vunpack.c.l.b16 %v738
        %v2541 = vunpack.c.h.b16 %v738
        %v2542 = vunpack.c.l.b16 %v739
        %v2543 = vunpack.c.h.b16 %v739
        %v2544 = vunpack.c.l.b16 %v740
        %v2545 = vunpack.c.h.b16 %v740
        %v2546 = vunpack.c.l.b16 %v741
        %v2547 = vunpack.c.h.b16 %v741
        %v2548 = vunpack.c.l.b16 %v742
        %v2549 = vunpack.c.h.b16 %v742
        %v2550 = vunpack.c.l.b16 %v743
        %v2551 = vunpack.c.h.b16 %v743
        %v2552 = vunpack.c.l.b16 %v744
        %v2553 = vunpack.c.h.b16 %v744
        %v2554 = vunpack.c.l.b16 %v745
        %v2555 = vunpack.c.h.b16 %v745
        %v2556 = vunpack.c.l.b16 %v746
        %v2557 = vunpack.c.h.b16 %v746
        %v2558 = vunpack.c.l.b16 %v747
        %v2559 = vunpack.c.h.b16 %v747
        %v2560 = vunpack.c.l.b16 %v748
        %v2561 = vunpack.c.h.b16 %v748
        %v2562 = vunpack.c.l.b16 %v749
        %v2563 = vunpack.c.h.b16 %v749
        %v2564 = vunpack.c.l.b16 %v750
        %v2565 = vunpack.c.h.b16 %v750
        %v2566 = vunpack.c.l.b16 %v751
        %v2567 = vunpack.c.h.b16 %v751
        %v2568 = vunpack.c.l.b16 %v752
        %v2569 = vunpack.c.h.b16 %v752
        %v2570 = vunpack.c.l.b16 %v753
        %v2571 = vunpack.c.h.b16 %v753
        %v2572 = vunpack.c.l.b16 %v754
        %v2573 = vunpack.c.h.b16 %v754
        %v2574 = vunpack.c.l.b16 %v755
        %v2575 = vunpack.c.h.b16 %v755
        %v2576 = vunpack.c.l.b16 %v756
        %v2577 = vunpack.c.h.b16 %v756
        %v2578 = vunpack.c.l.b16 %v757
        %v2579 = vunpack.c.h.b16 %v757
        %v2580 = vunpack.c.l.b16 %v758
        %v2581 = vunpack.c.h.b16 %v758
        %v2582 = vunpack.c.l.b16 %v759
        %v2583 = vunpack.c.h.b16 %v759
        %v2584 = vunpack.c.l.b16 %v760
        %v2585 = vunpack.c.h.b16 %v760
        %v2586 = vunpack.c.l.b16 %v761
        %v2587 = vunpack.c.h.b16 %v761
        %v2588 = vunpack.c.l.b16 %v762
        %v2589 = vunpack.c.h.b16 %v762
        %v2590 = vunpack.c.l.b16 %v763
        %v2591 = vunpack.c.h.b16 %v763
        %v2592 = vunpack.c.l.b16 %v764
        %v2593 = vunpack.c.h.b16 %v764
        %v2594 = vunpack.c.l.b16 %v765
        %v2595 = vunpack.c.h.b16 %v765
        %v2596 = vunpack.c.l.b16 %v766
        %v2597 = vunpack.c.h.b16 %v766
        %v2598 = vunpack.c.l.b16 %v767
        %v2599 = vunpack.c.h.b16 %v767
        %v2600 = vunpack.c.l.b16 %v768
        %v2601 = vunpack.c.h.b16 %v768
        %v2602 = vunpack.c.l.b16 %v769
        %v2603 = vunpack.c.h.b16 %v769
        %v2604 = vunpack.c.l.b16 %v770
        %v2605 = vunpack.c.h.b16 %v770
        %v2606 = vunpack.c.l.b16 %v771
        %v2607 = vunpack.c.h.b16 %v771
        %v2608 = vunpack.c.l.b16 %v772
        %v2609 = vunpack.c.h.b16 %v772
        %v2610 = vunpack.c.l.b16 %v773
        %v2611 = vunpack.c.h.b16 %v773
        %v2612 = vunpack.c.l.b16 %v774
        %v2613 = vunpack.c.h.b16 %v774
        %v2614 = vunpack.c.l.b16 %v775
        %v2615 = vunpack.c.h.b16 %v775
        %v2616 = vunpack.c.l.b16 %v776
        %v2617 = vunpack.c.h.b16 %v776
        %v2618 = vunpack.c.l.b16 %v777
        %v2619 = vunpack.c.h.b16 %v777
        %v2620 = vunpack.c.l.b16 %v778
        %v2621 = vunpack.c.h.b16 %v778
        %v2622 = vunpack.c.l.b16 %v779
        %v2623 = vunpack.c.h.b16 %v779
        %v2624 = vunpack.c.l.b16 %v780
        %v2625 = vunpack.c.h.b16 %v780
        %v2626 = vunpack.c.l.b16 %v781
        %v2627 = vunpack.c.h.b16 %v781
        %v2628 = vunpack.c.l.b16 %v782
        %v2629 = vunpack.c.h.b16 %v782
        %v2630 = vunpack.c.l.b16 %v783
        %v2631 = vunpack.c.h.b16 %v783
        %v2632 = vunpack.c.l.b16 %v784
        %v2633 = vunpack.c.h.b16 %v784
        %v2634 = vunpack.c.l.b16 %v785
        %v2635 = vunpack.c.h.b16 %v785
        %v2636 = vunpack.c.l.b16 %v786
        %v2637 = vunpack.c.h.b16 %v786
        %v2638 = vunpack.c.l.b16 %v787
        %v2639 = vunpack.c.h.b16 %v787
        %v2640 = vunpack.c.l.b16 %v788
        %v2641 = vunpack.c.h.b16 %v788
        %v2642 = vunpack.c.l.b16 %v789
        %v2643 = vunpack.c.h.b16 %v789
        %v2644 = vunpack.c.l.b16 %v790
        %v2645 = vunpack.c.h.b16 %v790
        %v2646 = vunpack.c.l.b16 %v791
        %v2647 = vunpack.c.h.b16 %v791
        %v2648 = vunpack.c.l.b16 %v792
        %v2649 = vunpack.c.h.b16 %v792
        %v2650 = vunpack.c.l.b16 %v793
        %v2651 = vunpack.c.h.b16 %v793
        %v2652 = vunpack.c.l.b16 %v794
        %v2653 = vunpack.c.h.b16 %v794
        %v2654 = vunpack.c.l.b16 %v795
        %v2655 = vunpack.c.h.b16 %v795
        %v2656 = vunpack.c.l.b16 %v796
        %v2657 = vunpack.c.h.b16 %v796
        %v2658 = vunpack.c.l.b16 %v797
        %v2659 = vunpack.c.h.b16 %v797
        %v2660 = vunpack.c.l.b16 %v798
        %v2661 = vunpack.c.h.b16 %v798
        %v2662 = vunpack.c.l.b16 %v799
        %v2663 = vunpack.c.h.b16 %v799
        %v2664 = vunpack.c.l.b16 %v800
        %v2665 = vunpack.c.h.b16 %v800
        %v2666 = vunpack.c.l.b16 %v801
        %v2667 = vunpack.c.h.b16 %v801
        %v2668 = vunpack.c.l.b16 %v802
        %v2669 = vunpack.c.h.b16 %v802
        %v2670 = vunpack.c.l.b16 %v803
        %v2671 = vunpack.c.h.b16 %v803
        %v2672 = vunpack.c.l.b16 %v804
        %v2673 = vunpack.c.h.b16 %v804
        %v2674 = vunpack.c.l.b16 %v805
        %v2675 = vunpack.c.h.b16 %v805
        %v2676 = vunpack.c.l.b16 %v806
        %v2677 = vunpack.c.h.b16 %v806
        %v2678 = vunpack.c.l.b16 %v807
        %v2679 = vunpack.c.h.b16 %v807
        %v2680 = vunpack.c.l.b16 %v808
        %v2681 = vunpack.c.h.b16 %v808
        %v2682 = vunpack.c.l.b16 %v809
        %v2683 = vunpack.c.h.b16 %v809
        %v2684 = vunpack.c.l.b16 %v810
        %v2685 = vunpack.c.h.b16 %v810
        %v2686 = vunpack.c.l.b16 %v811
        %v2687 = vunpack.c.h.b16 %v811
        %v2688 = vunpack.c.l.b16 %v812
        %v2689 = vunpack.c.h.b16 %v812
        %v2690 = vunpack.c.l.b16 %v813
        %v2691 = vunpack.c.h.b16 %v813
        %v2692 = vunpack.c.l.b16 %v814
        %v2693 = vunpack.c.h.b16 %v814
        %v2694 = vunpack.c.l.b16 %v815
        %v2695 = vunpack.c.h.b16 %v815
        %v2696 = vunpack.c.l.b16 %v816
        %v2697 = vunpack.c.h.b16 %v816
        %v2698 = vunpack.c.l.b16 %v817
        %v2699 = vunpack.c.h.b16 %v817
        %v2700 = vunpack.c.l.b16 %v818
        %v2701 = vunpack.c.h.b16 %v818
        %v2702 = vunpack.c.l.b16 %v819
        %v2703 = vunpack.c.h.b16 %v819
        %v2704 = vunpack.c.l.b16 %v820
        %v2705 = vunpack.c.h.b16 %v820
        %v2706 = vunpack.c.l.b16 %v821
        %v2707 = vunpack.c.h.b16 %v821
        %v2708 = vunpack.c.l.b16 %v822
        %v2709 = vunpack.c.h.b16 %v822
        %v2710 = vunpack.c.l.b16 %v823
        %v2711 = vunpack.c.h.b16 %v823
        %v2712 = vunpack.c.l.b16 %v824
        %v2713 = vunpack.c.h.b16 %v824
        %v2714 = vunpack.c.l.b16 %v825
        %v2715 = vunpack.c.h.b16 %v825
        %v2716 = vunpack.c.l.b16 %v826
        %v2717 = vunpack.c.h.b16 %v826
        %v2718 = vunpack.c.l.b16 %v827
        %v2719 = vunpack.c.h.b16 %v827
        %v2720 = vunpack.c.l.b16 %v828
        %v2721 = vunpack.c.h.b16 %v828
        %v2722 = vunpack.c.l.b16 %v829
        %v2723 = vunpack.c.h.b16 %v829
        %v2724 = vunpack.c.l.b16 %v830
        %v2725 = vunpack.c.h.b16 %v830
        %v2726 = vunpack.c.l.b16 %v831
        %v2727 = vunpack.c.h.b16 %v831
        %v2728 = vunpack.c.l.b16 %v832
        %v2729 = vunpack.c.h.b16 %v832
        %v2730 = vunpack.c.l.b16 %v833
        %v2731 = vunpack.c.h.b16 %v833
        %v2732 = vunpack.c.l.b16 %v834
        %v2733 = vunpack.c.h.b16 %v834
        %v2734 = vunpack.c.l.b16 %v835
        %v2735 = vunpack.c.h.b16 %v835
        %v2736 = vunpack.c.l.b16 %v836
        %v2737 = vunpack.c.h.b16 %v836
        %v2738 = vunpack.c.l.b16 %v837
        %v2739 = vunpack.c.h.b16 %v837
        %v2740 = vunpack.c.l.b16 %v838
        %v2741 = vunpack.c.h.b16 %v838
        %v2742 = vunpack.c.l.b16 %v839
        %v2743 = vunpack.c.h.b16 %v839
        %v2744 = vunpack.c.l.b16 %v840
        %v2745 = vunpack.c.h.b16 %v840
        %v2746 = vunpack.c.l.b16 %v841
        %v2747 = vunpack.c.h.b16 %v841
        %v2748 = vunpack.c.l.b16 %v842
        %v2749 = vunpack.c.h.b16 %v842
        %v2750 = vunpack.c.l.b16 %v843
        %v2751 = vunpack.c.h.b16 %v843
        %v2752 = vunpack.c.l.b16 %v844
        %v2753 = vunpack.c.h.b16 %v844
        %v2754 = vunpack.c.l.b16 %v845
        %v2755 = vunpack.c.h.b16 %v845
        %v2756 = vunpack.c.l.b16 %v846
        %v2757 = vunpack.c.h.b16 %v846
        %v2758 = vunpack.c.l.b16 %v847
        %v2759 = vunpack.c.h.b16 %v847
        %v2760 = vunpack.c.l.b16 %v848
        %v2761 = vunpack.c.h.b16 %v848
        %v2762 = vunpack.c.l.b16 %v849
        %v2763 = vunpack.c.h.b16 %v849
        %v2764 = vunpack.c.l.b16 %v850
        %v2765 = vunpack.c.h.b16 %v850
        %v2766 = vunpack.c.l.b16 %v851
        %v2767 = vunpack.c.h.b16 %v851
        %v2768 = vunpack.c.l.b16 %v852
        %v2769 = vunpack.c.h.b16 %v852
        %v2770 = vunpack.c.l.b16 %v853
        %v2771 = vunpack.c.h.b16 %v853
        %v2772 = vunpack.c.l.b16 %v854
        %v2773 = vunpack.c.h.b16 %v854
        %v2774 = vunpack.c.l.b16 %v855
        %v2775 = vunpack.c.h.b16 %v855
        %v2776 = vunpack.c.l.b16 %v856
        %v2777 = vunpack.c.h.b16 %v856
        %v2778 = vunpack.c.l.b16 %v857
        %v2779 = vunpack.c.h.b16 %v857
        %v2780 = vunpack.c.l.b16 %v858
        %v2781 = vunpack.c.h.b16 %v858
        %v2782 = vunpack.c.l.b16 %v859
        %v2783 = vunpack.c.h.b16 %v859
        %v2784 = vunpack.c.l.b16 %v860
        %v2785 = vunpack.c.h.b16 %v860
        %v2786 = vunpack.c.l.b16 %v861
        %v2787 = vunpack.c.h.b16 %v861
        %v2788 = vunpack.c.l.b16 %v862
        %v2789 = vunpack.c.h.b16 %v862
        %v2790 = vunpack.c.l.b16 %v863
        %v2791 = vunpack.c.h.b16 %v863
        %v2792 = vunpack.c.l.b16 %v864
        %v2793 = vunpack.c.h.b16 %v864
        %v2794 = vunpack.c.l.b16 %v865
        %v2795 = vunpack.c.h.b16 %v865
        %v2796 = vunpack.c.l.b16 %v866
        %v2797 = vunpack.c.h.b16 %v866
        %v2798 = vunpack.c.l.b16 %v867
        %v2799 = vunpack.c.h.b16 %v867
        %v2800 = vunpack.c.l.b16 %v868
        %v2801 = vunpack.c.h.b16 %v868
        %v2802 = vunpack.c.l.b16 %v869
        %v2803 = vunpack.c.h.b16 %v869
        %v2804 = vunpack.c.l.b16 %v870
        %v2805 = vunpack.c.h.b16 %v870
        %v2806 = vunpack.c.l.b16 %v871
        %v2807 = vunpack.c.h.b16 %v871
        %v2808 = vunpack.c.l.b16 %v872
        %v2809 = vunpack.c.h.b16 %v872
        %v2810 = vunpack.c.l.b16 %v873
        %v2811 = vunpack.c.h.b16 %v873
        %v2812 = vunpack.c.l.b16 %v874
        %v2813 = vunpack.c.h.b16 %v874
        %v2814 = vunpack.c.l.b16 %v875
        %v2815 = vunpack.c.h.b16 %v875
        %v2816 = vunpack.c.l.b16 %v876
        %v2817 = vunpack.c.h.b16 %v876
        %v2818 = vunpack.c.l.b16 %v877
        %v2819 = vunpack.c.h.b16 %v877
        %v2820 = vunpack.c.l.b16 %v878
        %v2821 = vunpack.c.h.b16 %v878
        %v2822 = vunpack.c.l.b16 %v879
        %v2823 = vunpack.c.h.b16 %v879
        %v2824 = vunpack.c.l.b16 %v880
        %v2825 = vunpack.c.h.b16 %v880
        %v2826 = vunpack.c.l.b16 %v881
        %v2827 = vunpack.c.h.b16 %v881
        %v2828 = vunpack.c.l.b16 %v882
        %v2829 = vunpack.c.h.b16 %v882
        %v2830 = vunpack.c.l.b16 %v883
        %v2831 = vunpack.c.h.b16 %v883
        %v2832 = vunpack.c.l.b16 %v884
        %v2833 = vunpack.c.h.b16 %v884
        %v2834 = vunpack.c.l.b16 %v885
        %v2835 = vunpack.c.h.b16 %v885
        %v2836 = vunpack.c.l.b16 %v886
        %v2837 = vunpack.c.h.b16 %v886
        %v2838 = vunpack.c.l.b16 %v887
        %v2839 = vunpack.c.h.b16 %v887
        %v2840 = vunpack.c.l.b16 %v888
        %v2841 = vunpack.c.h.b16 %v888
        %v2842 = vunpack.c.l.b16 %v889
        %v2843 = vunpack.c.h.b16 %v889
        %v2844 = vunpack.c.l.b16 %v890
        %v2845 = vunpack.c.h.b16 %v890
        %v2846 = vunpack.c.l.b16 %v891
        %v2847 = vunpack.c.h.b16 %v891
        %v2848 = vunpack.c.l.b16 %v892
        %v2849 = vunpack.c.h.b16 %v892
        %v2850 = vunpack.c.l.b16 %v893
        %v2851 = vunpack.c.h.b16 %v893
        %v2852 = vunpack.c.l.b16 %v894
        %v2853 = vunpack.c.h.b16 %v894
        %v2854 = vunpack.c.l.b16 %v895
        %v2855 = vunpack.c.h.b16 %v895
        %v2856 = vunpack.c.l.b16 %v896
        %v2857 = vunpack.c.h.b16 %v896
        %v2858 = vunpack.c.l.b16 %v897
        %v2859 = vunpack.c.h.b16 %v897
        %v2860 = vunpack.c.l.b16 %v898
        %v2861 = vunpack.c.h.b16 %v898
        %v2862 = vunpack.c.l.b16 %v899
        %v2863 = vunpack.c.h.b16 %v899
        %v2864 = vunpack.c.l.b16 %v900
        %v2865 = vunpack.c.h.b16 %v900
        %v2866 = vunpack.c.l.b16 %v901
        %v2867 = vunpack.c.h.b16 %v901
        %v2868 = vunpack.c.l.b16 %v902
        %v2869 = vunpack.c.h.b16 %v902
        %v2870 = vunpack.c.l.b16 %v903
        %v2871 = vunpack.c.h.b16 %v903
        %v2872 = vunpack.c.l.b16 %v904
        %v2873 = vunpack.c.h.b16 %v904
        %v2874 = vunpack.c.l.b16 %v905
        %v2875 = vunpack.c.h.b16 %v905
        %v2876 = vunpack.c.l.b16 %v906
        %v2877 = vunpack.c.h.b16 %v906
        %v2878 = vunpack.c.l.b16 %v907
        %v2879 = vunpack.c.h.b16 %v907
        %v2880 = vunpack.c.l.b16 %v908
        %v2881 = vunpack.c.h.b16 %v908
        %v2882 = vunpack.c.l.b16 %v909
        %v2883 = vunpack.c.h.b16 %v909
        %v2884 = vunpack.c.l.b16 %v910
        %v2885 = vunpack.c.h.b16 %v910
        %v2886 = vunpack.c.l.b16 %v911
        %v2887 = vunpack.c.h.b16 %v911
        %v2888 = vunpack.c.l.b16 %v912
        %v2889 = vunpack.c.h.b16 %v912
        %v2890 = vunpack.c.l.b16 %v913
        %v2891 = vunpack.c.h.b16 %v913
        %v2892 = vunpack.c.l.b16 %v914
        %v2893 = vunpack.c.h.b16 %v914
        %v2894 = vunpack.c.l.b16 %v915
        %v2895 = vunpack.c.h.b16 %v915
        %v2896 = vunpack.c.l.b16 %v916
        %v2897 = vunpack.c.h.b16 %v916
        %v2898 = vunpack.c.l.b16 %v917
        %v2899 = vunpack.c.h.b16 %v917
        %v2900 = vunpack.c.l.b16 %v918
        %v2901 = vunpack.c.h.b16 %v918
        %v2902 = vunpack.c.l.b16 %v919
        %v2903 = vunpack.c.h.b16 %v919
        %v2904 = vunpack.c.l.b16 %v920
        %v2905 = vunpack.c.h.b16 %v920
        %v2906 = vunpack.c.l.b16 %v921
        %v2907 = vunpack.c.h.b16 %v921
        %v2908 = vunpack.c.l.b16 %v922
        %v2909 = vunpack.c.h.b16 %v922
        %v2910 = vunpack.c.l.b16 %v923
        %v2911 = vunpack.c.h.b16 %v923
        %v2912 = vunpack.c.l.b16 %v924
        %v2913 = vunpack.c.h.b16 %v924
        %v2914 = vunpack.c.l.b16 %v925
        %v2915 = vunpack.c.h.b16 %v925
        %v2916 = vunpack.c.l.b16 %v926
        %v2917 = vunpack.c.h.b16 %v926
        %v2918 = vunpack.c.l.b16 %v927
        %v2919 = vunpack.c.h.b16 %v927
        %v2920 = vunpack.c.l.b16 %v928
        %v2921 = vunpack.c.h.b16 %v928
        %v2922 = vunpack.c.l.b16 %v929
        %v2923 = vunpack.c.h.b16 %v929
        %v2924 = vunpack.c.l.b16 %v930
        %v2925 = vunpack.c.h.b16 %v930
        %v2926 = vunpack.c.l.b16 %v931
        %v2927 = vunpack.c.h.b16 %v931
        %v2928 = vunpack.c.l.b16 %v932
        %v2929 = vunpack.c.h.b16 %v932
        %v2930 = vunpack.c.l.b16 %v933
        %v2931 = vunpack.c.h.b16 %v933
        %v2932 = vunpack.c.l.b16 %v934
        %v2933 = vunpack.c.h.b16 %v934
        %v2934 = vunpack.c.l.b16 %v935
        %v2935 = vunpack.c.h.b16 %v935
        %v2936 = vunpack.c.l.b16 %v936
        %v2937 = vunpack.c.h.b16 %v936
        %v2938 = vunpack.c.l.b16 %v937
        %v2939 = vunpack.c.h.b16 %v937
        %v2940 = vunpack.c.l.b16 %v938
        %v2941 = vunpack.c.h.b16 %v938
        %v2942 = vunpack.c.l.b16 %v939
        %v2943 = vunpack.c.h.b16 %v939
        %v2944 = vunpack.c.l.b16 %v940
        %v2945 = vunpack.c.h.b16 %v940
        %v2946 = vunpack.c.l.b16 %v941
        %v2947 = vunpack.c.h.b16 %v941
        %v2948 = vunpack.c.l.b16 %v942
        %v2949 = vunpack.c.h.b16 %v942
        %v2950 = vunpack.c.l.b16 %v943
        %v2951 = vunpack.c.h.b16 %v943
        %v2952 = vunpack.c.l.b16 %v944
        %v2953 = vunpack.c.h.b16 %v944
        %v2954 = vunpack.c.l.b16 %v945
        %v2955 = vunpack.c.h.b16 %v945
        %v2956 = vunpack.c.l.b16 %v946
        %v2957 = vunpack.c.h.b16 %v946
        %v2958 = vunpack.c.l.b16 %v947
        %v2959 = vunpack.c.h.b16 %v947
        %v2960 = vunpack.c.l.b16 %v948
        %v2961 = vunpack.c.h.b16 %v948
        %v2962 = vunpack.c.l.b16 %v949
        %v2963 = vunpack.c.h.b16 %v949
        %v2964 = vunpack.c.l.b16 %v950
        %v2965 = vunpack.c.h.b16 %v950
        %v2966 = vunpack.c.l.b16 %v951
        %v2967 = vunpack.c.h.b16 %v951
        %v2968 = vunpack.c.l.b16 %v952
        %v2969 = vunpack.c.h.b16 %v952
        %v2970 = vunpack.c.l.b16 %v953
        %v2971 = vunpack.c.h.b16 %v953
        %v2972 = vunpack.c.l.b16 %v954
        %v2973 = vunpack.c.h.b16 %v954
        %v2974 = vunpack.c.l.b16 %v955
        %v2975 = vunpack.c.h.b16 %v955
        %v2976 = vpack.c.b16 %v1700, %v1696
        %v2977 = vpack.c.b16 %v1701, %v1697
        %v2978 = vpack.c.b16 %v1702, %v1698
        %v2979 = vpack.c.b16 %v1703, %v1699
        %v2980 = vpack.c.b16 %v1708, %v1704
        %v2981 = vpack.c.b16 %v1709, %v1705
        %v2982 = vpack.c.b16 %v1710, %v1706
        %v2983 = vpack.c.b16 %v1711, %v1707
        %v2984 = vpack.c.b16 %v1716, %v1712
        %v2985 = vpack.c.b16 %v1717, %v1713
        %v2986 = vpack.c.b16 %v1718, %v1714
        %v2987 = vpack.c.b16 %v1719, %v1715
        %v2988 = vpack.c.b16 %v1724, %v1720
        %v2989 = vpack.c.b16 %v1725, %v1721
        %v2990 = vpack.c.b16 %v1726, %v1722
        %v2991 = vpack.c.b16 %v1727, %v1723
        %v2992 = vpack.c.b16 %v1732, %v1728
        %v2993 = vpack.c.b16 %v1733, %v1729
        %v2994 = vpack.c.b16 %v1734, %v1730
        %v2995 = vpack.c.b16 %v1735, %v1731
        %v2996 = vpack.c.b16 %v1740, %v1736
        %v2997 = vpack.c.b16 %v1741, %v1737
        %v2998 = vpack.c.b16 %v1742, %v1738
        %v2999 = vpack.c.b16 %v1743, %v1739
        %v3000 = vpack.c.b16 %v1748, %v1744
        %v3001 = vpack.c.b16 %v1749, %v1745
        %v3002 = vpack.c.b16 %v1750, %v1746
        %v3003 = vpack.c.b16 %v1751, %v1747
        %v3004 = vpack.c.b16 %v1756, %v1752
        %v3005 = vpack.c.b16 %v1757, %v1753
        %v3006 = vpack.c.b16 %v1758, %v1754
        %v3007 = vpack.c.b16 %v1759, %v1755
        %v3008 = vpack.c.b16 %v1764, %v1760
        %v3009 = vpack.c.b16 %v1765, %v1761
        %v3010 = vpack.c.b16 %v1766, %v1762
        %v3011 = vpack.c.b16 %v1767, %v1763
        %v3012 = vpack.c.b16 %v1772, %v1768
        %v3013 = vpack.c.b16 %v1773, %v1769
        %v3014 = vpack.c.b16 %v1774, %v1770
        %v3015 = vpack.c.b16 %v1775, %v1771
        %v3016 = vpack.c.b16 %v1780, %v1776
        %v3017 = vpack.c.b16 %v1781, %v1777
        %v3018 = vpack.c.b16 %v1782, %v1778
        %v3019 = vpack.c.b16 %v1783, %v1779
        %v3020 = vpack.c.b16 %v1788, %v1784
        %v3021 = vpack.c.b16 %v1789, %v1785
        %v3022 = vpack.c.b16 %v1790, %v1786
        %v3023 = vpack.c.b16 %v1791, %v1787
        %v3024 = vpack.c.b16 %v1796, %v1792
        %v3025 = vpack.c.b16 %v1797, %v1793
        %v3026 = vpack.c.b16 %v1798, %v1794
        %v3027 = vpack.c.b16 %v1799, %v1795
        %v3028 = vpack.c.b16 %v1804, %v1800
        %v3029 = vpack.c.b16 %v1805, %v1801
        %v3030 = vpack.c.b16 %v1806, %v1802
        %v3031 = vpack.c.b16 %v1807, %v1803
        %v3032 = vpack.c.b16 %v1812, %v1808
        %v3033 = vpack.c.b16 %v1813, %v1809
        %v3034 = vpack.c.b16 %v1814, %v1810
        %v3035 = vpack.c.b16 %v1815, %v1811
        %v3036 = vpack.c.b16 %v1820, %v1816
        %v3037 = vpack.c.b16 %v1821, %v1817
        %v3038 = vpack.c.b16 %v1822, %v1818
        %v3039 = vpack.c.b16 %v1823, %v1819
        %v3040 = vpack.c.b16 %v1828, %v1824
        %v3041 = vpack.c.b16 %v1829, %v1825
        %v3042 = vpack.c.b16 %v1830, %v1826
        %v3043 = vpack.c.b16 %v1831, %v1827
        %v3044 = vpack.c.b16 %v1836, %v1832
        %v3045 = vpack.c.b16 %v1837, %v1833
        %v3046 = vpack.c.b16 %v1838, %v1834
        %v3047 = vpack.c.b16 %v1839, %v1835
        %v3048 = vpack.c.b16 %v1844, %v1840
        %v3049 = vpack.c.b16 %v1845, %v1841
        %v3050 = vpack.c.b16 %v1846, %v1842
        %v3051 = vpack.c.b16 %v1847, %v1843
        %v3052 = vpack.c.b16 %v1852, %v1848
        %v3053 = vpack.c.b16 %v1853, %v1849
        %v3054 = vpack.c.b16 %v1854, %v1850
        %v3055 = vpack.c.b16 %v1855, %v1851
        %v3056 = vpack.c.b16 %v1860, %v1856
        %v3057 = vpack.c.b16 %v1861, %v1857
        %v3058 = vpack.c.b16 %v1862, %v1858
        %v3059 = vpack.c.b16 %v1863, %v1859
        %v3060 = vpack.c.b16 %v1868, %v1864
        %v3061 = vpack.c.b16 %v1869, %v1865
        %v3062 = vpack.c.b16 %v1870, %v1866
        %v3063 = vpack.c.b16 %v1871, %v1867
        %v3064 = vpack.c.b16 %v1876, %v1872
        %v3065 = vpack.c.b16 %v1877, %v1873
        %v3066 = vpack.c.b16 %v1878, %v1874
        %v3067 = vpack.c.b16 %v1879, %v1875
        %v3068 = vpack.c.b16 %v1884, %v1880
        %v3069 = vpack.c.b16 %v1885, %v1881
        %v3070 = vpack.c.b16 %v1886, %v1882
        %v3071 = vpack.c.b16 %v1887, %v1883
        %v3072 = vpack.c.b16 %v1892, %v1888
        %v3073 = vpack.c.b16 %v1893, %v1889
        %v3074 = vpack.c.b16 %v1894, %v1890
        %v3075 = vpack.c.b16 %v1895, %v1891
        %v3076 = vpack.c.b16 %v1900, %v1896
        %v3077 = vpack.c.b16 %v1901, %v1897
        %v3078 = vpack.c.b16 %v1902, %v1898
        %v3079 = vpack.c.b16 %v1903, %v1899
        %v3080 = vpack.c.b16 %v1908, %v1904
        %v3081 = vpack.c.b16 %v1909, %v1905
        %v3082 = vpack.c.b16 %v1910, %v1906
        %v3083 = vpack.c.b16 %v1911, %v1907
        %v3084 = vpack.c.b16 %v1916, %v1912
        %v3085 = vpack.c.b16 %v1917, %v1913
        %v3086 = vpack.c.b16 %v1918, %v1914
        %v3087 = vpack.c.b16 %v1919, %v1915
        %v3088 = vpack.c.b16 %v1924, %v1920
        %v3089 = vpack.c.b16 %v1925, %v1921
        %v3090 = vpack.c.b16 %v1926, %v1922
        %v3091 = vpack.c.b16 %v1927, %v1923
        %v3092 = vpack.c.b16 %v1932, %v1928
        %v3093 = vpack.c.b16 %v1933, %v1929
        %v3094 = vpack.c.b16 %v1934, %v1930
        %v3095 = vpack.c.b16 %v1935, %v1931
        %v3096 = vpack.c.b16 %v1940, %v1936
        %v3097 = vpack.c.b16 %v1941, %v1937
        %v3098 = vpack.c.b16 %v1942, %v1938
        %v3099 = vpack.c.b16 %v1943, %v1939
        %v3100 = vpack.c.b16 %v1948, %v1944
        %v3101 = vpack.c.b16 %v1949, %v1945
        %v3102 = vpack.c.b16 %v1950, %v1946
        %v3103 = vpack.c.b16 %v1951, %v1947
        %v3104 = vpack.c.b16 %v1956, %v1952
        %v3105 = vpack.c.b16 %v1957, %v1953
        %v3106 = vpack.c.b16 %v1958, %v1954
        %v3107 = vpack.c.b16 %v1959, %v1955
        %v3108 = vpack.c.b16 %v1964, %v1960
        %v3109 = vpack.c.b16 %v1965, %v1961
        %v3110 = vpack.c.b16 %v1966, %v1962
        %v3111 = vpack.c.b16 %v1967, %v1963
        %v3112 = vpack.c.b16 %v1972, %v1968
        %v3113 = vpack.c.b16 %v1973, %v1969
        %v3114 = vpack.c.b16 %v1974, %v1970
        %v3115 = vpack.c.b16 %v1975, %v1971
        %v3116 = vpack.c.b16 %v1980, %v1976
        %v3117 = vpack.c.b16 %v1981, %v1977
        %v3118 = vpack.c.b16 %v1982, %v1978
        %v3119 = vpack.c.b16 %v1983, %v1979
        %v3120 = vpack.c.b16 %v1988, %v1984
        %v3121 = vpack.c.b16 %v1989, %v1985
        %v3122 = vpack.c.b16 %v1990, %v1986
        %v3123 = vpack.c.b16 %v1991, %v1987
        %v3124 = vpack.c.b16 %v1996, %v1992
        %v3125 = vpack.c.b16 %v1997, %v1993
        %v3126 = vpack.c.b16 %v1998, %v1994
        %v3127 = vpack.c.b16 %v1999, %v1995
        %v3128 = vpack.c.b16 %v2004, %v2000
        %v3129 = vpack.c.b16 %v2005, %v2001
        %v3130 = vpack.c.b16 %v2006, %v2002
        %v3131 = vpack.c.b16 %v2007, %v2003
        %v3132 = vpack.c.b16 %v2012, %v2008
        %v3133 = vpack.c.b16 %v2013, %v2009
        %v3134 = vpack.c.b16 %v2014, %v2010
        %v3135 = vpack.c.b16 %v2015, %v2011
        %v3136 = vpack.c.b16 %v2020, %v2016
        %v3137 = vpack.c.b16 %v2021, %v2017
        %v3138 = vpack.c.b16 %v2022, %v2018
        %v3139 = vpack.c.b16 %v2023, %v2019
        %v3140 = vpack.c.b16 %v2028, %v2024
        %v3141 = vpack.c.b16 %v2029, %v2025
        %v3142 = vpack.c.b16 %v2030, %v2026
        %v3143 = vpack.c.b16 %v2031, %v2027
        %v3144 = vpack.c.b16 %v2036, %v2032
        %v3145 = vpack.c.b16 %v2037, %v2033
        %v3146 = vpack.c.b16 %v2038, %v2034
        %v3147 = vpack.c.b16 %v2039, %v2035
        %v3148 = vpack.c.b16 %v2044, %v2040
        %v3149 = vpack.c.b16 %v2045, %v2041
        %v3150 = vpack.c.b16 %v2046, %v2042
        %v3151 = vpack.c.b16 %v2047, %v2043
        %v3152 = vpack.c.b16 %v2052, %v2048
        %v3153 = vpack.c.b16 %v2053, %v2049
        %v3154 = vpack.c.b16 %v2054, %v2050
        %v3155 = vpack.c.b16 %v2055, %v2051
        %v3156 = vpack.c.b16 %v2060, %v2056
        %v3157 = vpack.c.b16 %v2061, %v2057
        %v3158 = vpack.c.b16 %v2062, %v2058
        %v3159 = vpack.c.b16 %v2063, %v2059
        %v3160 = vpack.c.b16 %v2068, %v2064
        %v3161 = vpack.c.b16 %v2069, %v2065
        %v3162 = vpack.c.b16 %v2070, %v2066
        %v3163 = vpack.c.b16 %v2071, %v2067
        %v3164 = vpack.c.b16 %v2076, %v2072
        %v3165 = vpack.c.b16 %v2077, %v2073
        %v3166 = vpack.c.b16 %v2078, %v2074
        %v3167 = vpack.c.b16 %v2079, %v2075
        %v3168 = vpack.c.b16 %v2084, %v2080
        %v3169 = vpack.c.b16 %v2085, %v2081
        %v3170 = vpack.c.b16 %v2086, %v2082
        %v3171 = vpack.c.b16 %v2087, %v2083
        %v3172 = vpack.c.b16 %v2092, %v2088
        %v3173 = vpack.c.b16 %v2093, %v2089
        %v3174 = vpack.c.b16 %v2094, %v2090
        %v3175 = vpack.c.b16 %v2095, %v2091
        %v3176 = vpack.c.b16 %v2100, %v2096
        %v3177 = vpack.c.b16 %v2101, %v2097
        %v3178 = vpack.c.b16 %v2102, %v2098
        %v3179 = vpack.c.b16 %v2103, %v2099
        %v3180 = vpack.c.b16 %v2108, %v2104
        %v3181 = vpack.c.b16 %v2109, %v2105
        %v3182 = vpack.c.b16 %v2110, %v2106
        %v3183 = vpack.c.b16 %v2111, %v2107
        %v3184 = vpack.c.b16 %v2116, %v2112
        %v3185 = vpack.c.b16 %v2117, %v2113
        %v3186 = vpack.c.b16 %v2118, %v2114
        %v3187 = vpack.c.b16 %v2119, %v2115
        %v3188 = vpack.c.b16 %v2124, %v2120
        %v3189 = vpack.c.b16 %v2125, %v2121
        %v3190 = vpack.c.b16 %v2126, %v2122
        %v3191 = vpack.c.b16 %v2127, %v2123
        %v3192 = vpack.c.b16 %v2132, %v2128
        %v3193 = vpack.c.b16 %v2133, %v2129
        %v3194 = vpack.c.b16 %v2134, %v2130
        %v3195 = vpack.c.b16 %v2135, %v2131
        %v3196 = vpack.c.b16 %v2140, %v2136
        %v3197 = vpack.c.b16 %v2141, %v2137
        %v3198 = vpack.c.b16 %v2142, %v2138
        %v3199 = vpack.c.b16 %v2143, %v2139
        %v3200 = vpack.c.b16 %v2148, %v2144
        %v3201 = vpack.c.b16 %v2149, %v2145
        %v3202 = vpack.c.b16 %v2150, %v2146
        %v3203 = vpack.c.b16 %v2151, %v2147
        %v3204 = vpack.c.b16 %v2156, %v2152
        %v3205 = vpack.c.b16 %v2157, %v2153
        %v3206 = vpack.c.b16 %v2158, %v2154
        %v3207 = vpack.c.b16 %v2159, %v2155
        %v3208 = vpack.c.b16 %v2164, %v2160
        %v3209 = vpack.c.b16 %v2165, %v2161
        %v3210 = vpack.c.b16 %v2166, %v2162
        %v3211 = vpack.c.b16 %v2167, %v2163
        %v3212 = vpack.c.b16 %v2172, %v2168
        %v3213 = vpack.c.b16 %v2173, %v2169
        %v3214 = vpack.c.b16 %v2174, %v2170
        %v3215 = vpack.c.b16 %v2175, %v2171
        %v3216 = vpack.c.b16 %v2180, %v2176
        %v3217 = vpack.c.b16 %v2181, %v2177
        %v3218 = vpack.c.b16 %v2182, %v2178
        %v3219 = vpack.c.b16 %v2183, %v2179
        %v3220 = vpack.c.b16 %v2188, %v2184
        %v3221 = vpack.c.b16 %v2189, %v2185
        %v3222 = vpack.c.b16 %v2190, %v2186
        %v3223 = vpack.c.b16 %v2191, %v2187
        %v3224 = vpack.c.b16 %v2196, %v2192
        %v3225 = vpack.c.b16 %v2197, %v2193
        %v3226 = vpack.c.b16 %v2198, %v2194
        %v3227 = vpack.c.b16 %v2199, %v2195
        %v3228 = vpack.c.b16 %v2204, %v2200
        %v3229 = vpack.c.b16 %v2205, %v2201
        %v3230 = vpack.c.b16 %v2206, %v2202
        %v3231 = vpack.c.b16 %v2207, %v2203
        %v3232 = vpack.c.b16 %v2212, %v2208
        %v3233 = vpack.c.b16 %v2213, %v2209
        %v3234 = vpack.c.b16 %v2214, %v2210
        %v3235 = vpack.c.b16 %v2215, %v2211
        %v3236 = vpack.c.b16 %v2220, %v2216
        %v3237 = vpack.c.b16 %v2221, %v2217
        %v3238 = vpack.c.b16 %v2222, %v2218
        %v3239 = vpack.c.b16 %v2223, %v2219
        %v3240 = vpack.c.b16 %v2228, %v2224
        %v3241 = vpack.c.b16 %v2229, %v2225
        %v3242 = vpack.c.b16 %v2230, %v2226
        %v3243 = vpack.c.b16 %v2231, %v2227
        %v3244 = vpack.c.b16 %v2236, %v2232
        %v3245 = vpack.c.b16 %v2237, %v2233
        %v3246 = vpack.c.b16 %v2238, %v2234
        %v3247 = vpack.c.b16 %v2239, %v2235
        %v3248 = vpack.c.b16 %v2244, %v2240
        %v3249 = vpack.c.b16 %v2245, %v2241
        %v3250 = vpack.c.b16 %v2246, %v2242
        %v3251 = vpack.c.b16 %v2247, %v2243
        %v3252 = vpack.c.b16 %v2252, %v2248
        %v3253 = vpack.c.b16 %v2253, %v2249
        %v3254 = vpack.c.b16 %v2254, %v2250
        %v3255 = vpack.c.b16 %v2255, %v2251
        %v3256 = vpack.c.b16 %v2260, %v2256
        %v3257 = vpack.c.b16 %v2261, %v2257
        %v3258 = vpack.c.b16 %v2262, %v2258
        %v3259 = vpack.c.b16 %v2263, %v2259
        %v3260 = vpack.c.b16 %v2268, %v2264
        %v3261 = vpack.c.b16 %v2269, %v2265
        %v3262 = vpack.c.b16 %v2270, %v2266
        %v3263 = vpack.c.b16 %v2271, %v2267
        %v3264 = vpack.c.b16 %v2276, %v2272
        %v3265 = vpack.c.b16 %v2277, %v2273
        %v3266 = vpack.c.b16 %v2278, %v2274
        %v3267 = vpack.c.b16 %v2279, %v2275
        %v3268 = vpack.c.b16 %v2284, %v2280
        %v3269 = vpack.c.b16 %v2285, %v2281
        %v3270 = vpack.c.b16 %v2286, %v2282
        %v3271 = vpack.c.b16 %v2287, %v2283
        %v3272 = vpack.c.b16 %v2292, %v2288
        %v3273 = vpack.c.b16 %v2293, %v2289
        %v3274 = vpack.c.b16 %v2294, %v2290
        %v3275 = vpack.c.b16 %v2295, %v2291
        %v3276 = vpack.c.b16 %v2300, %v2296
        %v3277 = vpack.c.b16 %v2301, %v2297
        %v3278 = vpack.c.b16 %v2302, %v2298
        %v3279 = vpack.c.b16 %v2303, %v2299
        %v3280 = vpack.c.b16 %v2308, %v2304
        %v3281 = vpack.c.b16 %v2309, %v2305
        %v3282 = vpack.c.b16 %v2310, %v2306
        %v3283 = vpack.c.b16 %v2311, %v2307
        %v3284 = vpack.c.b16 %v2316, %v2312
        %v3285 = vpack.c.b16 %v2317, %v2313
        %v3286 = vpack.c.b16 %v2318, %v2314
        %v3287 = vpack.c.b16 %v2319, %v2315
        %v3288 = vpack.c.b16 %v2324, %v2320
        %v3289 = vpack.c.b16 %v2325, %v2321
        %v3290 = vpack.c.b16 %v2326, %v2322
        %v3291 = vpack.c.b16 %v2327, %v2323
        %v3292 = vpack.c.b16 %v2332, %v2328
        %v3293 = vpack.c.b16 %v2333, %v2329
        %v3294 = vpack.c.b16 %v2334, %v2330
        %v3295 = vpack.c.b16 %v2335, %v2331
        %v3296 = vpack.c.b16 %v2340, %v2336
        %v3297 = vpack.c.b16 %v2341, %v2337
        %v3298 = vpack.c.b16 %v2342, %v2338
        %v3299 = vpack.c.b16 %v2343, %v2339
        %v3300 = vpack.c.b16 %v2348, %v2344
        %v3301 = vpack.c.b16 %v2349, %v2345
        %v3302 = vpack.c.b16 %v2350, %v2346
        %v3303 = vpack.c.b16 %v2351, %v2347
        %v3304 = vpack.c.b16 %v2356, %v2352
        %v3305 = vpack.c.b16 %v2357, %v2353
        %v3306 = vpack.c.b16 %v2358, %v2354
        %v3307 = vpack.c.b16 %v2359, %v2355
        %v3308 = vpack.c.b16 %v2364, %v2360
        %v3309 = vpack.c.b16 %v2365, %v2361
        %v3310 = vpack.c.b16 %v2366, %v2362
        %v3311 = vpack.c.b16 %v2367, %v2363
        %v3312 = vpack.c.b16 %v2372, %v2368
        %v3313 = vpack.c.b16 %v2373, %v2369
        %v3314 = vpack.c.b16 %v2374, %v2370
        %v3315 = vpack.c.b16 %v2375, %v2371
        %v3316 = vpack.c.b16 %v2380, %v2376
        %v3317 = vpack.c.b16 %v2381, %v2377
        %v3318 = vpack.c.b16 %v2382, %v2378
        %v3319 = vpack.c.b16 %v2383, %v2379
        %v3320 = vpack.c.b16 %v2388, %v2384
        %v3321 = vpack.c.b16 %v2389, %v2385
        %v3322 = vpack.c.b16 %v2390, %v2386
        %v3323 = vpack.c.b16 %v2391, %v2387
        %v3324 = vpack.c.b16 %v2396, %v2392
        %v3325 = vpack.c.b16 %v2397, %v2393
        %v3326 = vpack.c.b16 %v2398, %v2394
        %v3327 = vpack.c.b16 %v2399, %v2395
        %v3328 = vpack.c.b16 %v2404, %v2400
        %v3329 = vpack.c.b16 %v2405, %v2401
        %v3330 = vpack.c.b16 %v2406, %v2402
        %v3331 = vpack.c.b16 %v2407, %v2403
        %v3332 = vpack.c.b16 %v2412, %v2408
        %v3333 = vpack.c.b16 %v2413, %v2409
        %v3334 = vpack.c.b16 %v2414, %v2410
        %v3335 = vpack.c.b16 %v2415, %v2411
        %v3336 = vpack.c.b16 %v2420, %v2416
        %v3337 = vpack.c.b16 %v2421, %v2417
        %v3338 = vpack.c.b16 %v2422, %v2418
        %v3339 = vpack.c.b16 %v2423, %v2419
        %v3340 = vpack.c.b16 %v2428, %v2424
        %v3341 = vpack.c.b16 %v2429, %v2425
        %v3342 = vpack.c.b16 %v2430, %v2426
        %v3343 = vpack.c.b16 %v2431, %v2427
        %v3344 = vpack.c.b16 %v2436, %v2432
        %v3345 = vpack.c.b16 %v2437, %v2433
        %v3346 = vpack.c.b16 %v2438, %v2434
        %v3347 = vpack.c.b16 %v2439, %v2435
        %v3348 = vpack.c.b16 %v2444, %v2440
        %v3349 = vpack.c.b16 %v2445, %v2441
        %v3350 = vpack.c.b16 %v2446, %v2442
        %v3351 = vpack.c.b16 %v2447, %v2443
        %v3352 = vpack.c.b16 %v2452, %v2448
        %v3353 = vpack.c.b16 %v2453, %v2449
        %v3354 = vpack.c.b16 %v2454, %v2450
        %v3355 = vpack.c.b16 %v2455, %v2451
        %v3356 = vpack.c.b16 %v2460, %v2456
        %v3357 = vpack.c.b16 %v2461, %v2457
        %v3358 = vpack.c.b16 %v2462, %v2458
        %v3359 = vpack.c.b16 %v2463, %v2459
        %v3360 = vpack.c.b16 %v2468, %v2464
        %v3361 = vpack.c.b16 %v2469, %v2465
        %v3362 = vpack.c.b16 %v2470, %v2466
        %v3363 = vpack.c.b16 %v2471, %v2467
        %v3364 = vpack.c.b16 %v2476, %v2472
        %v3365 = vpack.c.b16 %v2477, %v2473
        %v3366 = vpack.c.b16 %v2478, %v2474
        %v3367 = vpack.c.b16 %v2479, %v2475
        %v3368 = vpack.c.b16 %v2484, %v2480
        %v3369 = vpack.c.b16 %v2485, %v2481
        %v3370 = vpack.c.b16 %v2486, %v2482
        %v3371 = vpack.c.b16 %v2487, %v2483
        %v3372 = vpack.c.b16 %v2492, %v2488
        %v3373 = vpack.c.b16 %v2493, %v2489
        %v3374 = vpack.c.b16 %v2494, %v2490
        %v3375 = vpack.c.b16 %v2495, %v2491
        %v3376 = vpack.c.b16 %v2500, %v2496
        %v3377 = vpack.c.b16 %v2501, %v2497
        %v3378 = vpack.c.b16 %v2502, %v2498
        %v3379 = vpack.c.b16 %v2503, %v2499
        %v3380 = vpack.c.b16 %v2508, %v2504
        %v3381 = vpack.c.b16 %v2509, %v2505
        %v3382 = vpack.c.b16 %v2510, %v2506
        %v3383 = vpack.c.b16 %v2511, %v2507
        %v3384 = vpack.c.b16 %v2516, %v2512
        %v3385 = vpack.c.b16 %v2517, %v2513
        %v3386 = vpack.c.b16 %v2518, %v2514
        %v3387 = vpack.c.b16 %v2519, %v2515
        %v3388 = vpack.c.b16 %v2524, %v2520
        %v3389 = vpack.c.b16 %v2525, %v2521
        %v3390 = vpack.c.b16 %v2526, %v2522
        %v3391 = vpack.c.b16 %v2527, %v2523
        %v3392 = vpack.c.b16 %v2532, %v2528
        %v3393 = vpack.c.b16 %v2533, %v2529
        %v3394 = vpack.c.b16 %v2534, %v2530
        %v3395 = vpack.c.b16 %v2535, %v2531
        %v3396 = vpack.c.b16 %v2540, %v2536
        %v3397 = vpack.c.b16 %v2541, %v2537
        %v3398 = vpack.c.b16 %v2542, %v2538
        %v3399 = vpack.c.b16 %v2543, %v2539
        %v3400 = vpack.c.b16 %v2548, %v2544
        %v3401 = vpack.c.b16 %v2549, %v2545
        %v3402 = vpack.c.b16 %v2550, %v2546
        %v3403 = vpack.c.b16 %v2551, %v2547
        %v3404 = vpack.c.b16 %v2556, %v2552
        %v3405 = vpack.c.b16 %v2557, %v2553
        %v3406 = vpack.c.b16 %v2558, %v2554
        %v3407 = vpack.c.b16 %v2559, %v2555
        %v3408 = vpack.c.b16 %v2564, %v2560
        %v3409 = vpack.c.b16 %v2565, %v2561
        %v3410 = vpack.c.b16 %v2566, %v2562
        %v3411 = vpack.c.b16 %v2567, %v2563
        %v3412 = vpack.c.b16 %v2572, %v2568
        %v3413 = vpack.c.b16 %v2573, %v2569
        %v3414 = vpack.c.b16 %v2574, %v2570
        %v3415 = vpack.c.b16 %v2575, %v2571
        %v3416 = vpack.c.b16 %v2580, %v2576
        %v3417 = vpack.c.b16 %v2581, %v2577
        %v3418 = vpack.c.b16 %v2582, %v2578
        %v3419 = vpack.c.b16 %v2583, %v2579
        %v3420 = vpack.c.b16 %v2588, %v2584
        %v3421 = vpack.c.b16 %v2589, %v2585
        %v3422 = vpack.c.b16 %v2590, %v2586
        %v3423 = vpack.c.b16 %v2591, %v2587
        %v3424 = vpack.c.b16 %v2596, %v2592
        %v3425 = vpack.c.b16 %v2597, %v2593
        %v3426 = vpack.c.b16 %v2598, %v2594
        %v3427 = vpack.c.b16 %v2599, %v2595
        %v3428 = vpack.c.b16 %v2604, %v2600
        %v3429 = vpack.c.b16 %v2605, %v2601
        %v3430 = vpack.c.b16 %v2606, %v2602
        %v3431 = vpack.c.b16 %v2607, %v2603
        %v3432 = vpack.c.b16 %v2612, %v2608
        %v3433 = vpack.c.b16 %v2613, %v2609
        %v3434 = vpack.c.b16 %v2614, %v2610
        %v3435 = vpack.c.b16 %v2615, %v2611
        %v3436 = vpack.c.b16 %v2620, %v2616
        %v3437 = vpack.c.b16 %v2621, %v2617
        %v3438 = vpack.c.b16 %v2622, %v2618
        %v3439 = vpack.c.b16 %v2623, %v2619
        %v3440 = vpack.c.b16 %v2628, %v2624
        %v3441 = vpack.c.b16 %v2629, %v2625
        %v3442 = vpack.c.b16 %v2630, %v2626
        %v3443 = vpack.c.b16 %v2631, %v2627
        %v3444 = vpack.c.b16 %v2636, %v2632
        %v3445 = vpack.c.b16 %v2637, %v2633
        %v3446 = vpack.c.b16 %v2638, %v2634
        %v3447 = vpack.c.b16 %v2639, %v2635
        %v3448 = vpack.c.b16 %v2644, %v2640
        %v3449 = vpack.c.b16 %v2645, %v2641
        %v3450 = vpack.c.b16 %v2646, %v2642
        %v3451 = vpack.c.b16 %v2647, %v2643
        %v3452 = vpack.c.b16 %v2652, %v2648
        %v3453 = vpack.c.b16 %v2653, %v2649
        %v3454 = vpack.c.b16 %v2654, %v2650
        %v3455 = vpack.c.b16 %v2655, %v2651
        %v3456 = vpack.c.b16 %v2660, %v2656
        %v3457 = vpack.c.b16 %v2661, %v2657
        %v3458 = vpack.c.b16 %v2662, %v2658
        %v3459 = vpack.c.b16 %v2663, %v2659
        %v3460 = vpack.c.b16 %v2668, %v2664
        %v3461 = vpack.c.b16 %v2669, %v2665
        %v3462 = vpack.c.b16 %v2670, %v2666
        %v3463 = vpack.c.b16 %v2671, %v2667
        %v3464 = vpack.c.b16 %v2676, %v2672
        %v3465 = vpack.c.b16 %v2677, %v2673
        %v3466 = vpack.c.b16 %v2678, %v2674
        %v3467 = vpack.c.b16 %v2679, %v2675
        %v3468 = vpack.c.b16 %v2684, %v2680
        %v3469 = vpack.c.b16 %v2685, %v2681
        %v3470 = vpack.c.b16 %v2686, %v2682
        %v3471 = vpack.c.b16 %v2687, %v2683
        %v3472 = vpack.c.b16 %v2692, %v2688
        %v3473 = vpack.c.b16 %v2693, %v2689
        %v3474 = vpack.c.b16 %v2694, %v2690
        %v3475 = vpack.c.b16 %v2695, %v2691
        %v3476 = vpack.c.b16 %v2700, %v2696
        %v3477 = vpack.c.b16 %v2701, %v2697
        %v3478 = vpack.c.b16 %v2702, %v2698
        %v3479 = vpack.c.b16 %v2703, %v2699
        %v3480 = vpack.c.b16 %v2708, %v2704
        %v3481 = vpack.c.b16 %v2709, %v2705
        %v3482 = vpack.c.b16 %v2710, %v2706
        %v3483 = vpack.c.b16 %v2711, %v2707
        %v3484 = vpack.c.b16 %v2716, %v2712
        %v3485 = vpack.c.b16 %v2717, %v2713
        %v3486 = vpack.c.b16 %v2718, %v2714
        %v3487 = vpack.c.b16 %v2719, %v2715
        %v3488 = vpack.c.b16 %v2724, %v2720
        %v3489 = vpack.c.b16 %v2725, %v2721
        %v3490 = vpack.c.b16 %v2726, %v2722
        %v3491 = vpack.c.b16 %v2727, %v2723
        %v3492 = vpack.c.b16 %v2732, %v2728
        %v3493 = vpack.c.b16 %v2733, %v2729
        %v3494 = vpack.c.b16 %v2734, %v2730
        %v3495 = vpack.c.b16 %v2735, %v2731
        %v3496 = vpack.c.b16 %v2740, %v2736
        %v3497 = vpack.c.b16 %v2741, %v2737
        %v3498 = vpack.c.b16 %v2742, %v2738
        %v3499 = vpack.c.b16 %v2743, %v2739
        %v3500 = vpack.c.b16 %v2748, %v2744
        %v3501 = vpack.c.b16 %v2749, %v2745
        %v3502 = vpack.c.b16 %v2750, %v2746
        %v3503 = vpack.c.b16 %v2751, %v2747
        %v3504 = vpack.c.b16 %v2756, %v2752
        %v3505 = vpack.c.b16 %v2757, %v2753
        %v3506 = vpack.c.b16 %v2758, %v2754
        %v3507 = vpack.c.b16 %v2759, %v2755
        %v3508 = vpack.c.b16 %v2764, %v2760
        %v3509 = vpack.c.b16 %v2765, %v2761
        %v3510 = vpack.c.b16 %v2766, %v2762
        %v3511 = vpack.c.b16 %v2767, %v2763
        %v3512 = vpack.c.b16 %v2772, %v2768
        %v3513 = vpack.c.b16 %v2773, %v2769
        %v3514 = vpack.c.b16 %v2774, %v2770
        %v3515 = vpack.c.b16 %v2775, %v2771
        %v3516 = vpack.c.b16 %v2780, %v2776
        %v3517 = vpack.c.b16 %v2781, %v2777
        %v3518 = vpack.c.b16 %v2782, %v2778
        %v3519 = vpack.c.b16 %v2783, %v2779
        %v3520 = vpack.c.b16 %v2788, %v2784
        %v3521 = vpack.c.b16 %v2789, %v2785
        %v3522 = vpack.c.b16 %v2790, %v2786
        %v3523 = vpack.c.b16 %v2791, %v2787
        %v3524 = vpack.c.b16 %v2796, %v2792
        %v3525 = vpack.c.b16 %v2797, %v2793
        %v3526 = vpack.c.b16 %v2798, %v2794
        %v3527 = vpack.c.b16 %v2799, %v2795
        %v3528 = vpack.c.b16 %v2804, %v2800
        %v3529 = vpack.c.b16 %v2805, %v2801
        %v3530 = vpack.c.b16 %v2806, %v2802
        %v3531 = vpack.c.b16 %v2807, %v2803
        %v3532 = vpack.c.b16 %v2812, %v2808
        %v3533 = vpack.c.b16 %v2813, %v2809
        %v3534 = vpack.c.b16 %v2814, %v2810
        %v3535 = vpack.c.b16 %v2815, %v2811
        %v3536 = vpack.c.b16 %v2820, %v2816
        %v3537 = vpack.c.b16 %v2821, %v2817
        %v3538 = vpack.c.b16 %v2822, %v2818
        %v3539 = vpack.c.b16 %v2823, %v2819
        %v3540 = vpack.c.b16 %v2828, %v2824
        %v3541 = vpack.c.b16 %v2829, %v2825
        %v3542 = vpack.c.b16 %v2830, %v2826
        %v3543 = vpack.c.b16 %v2831, %v2827
        %v3544 = vpack.c.b16 %v2836, %v2832
        %v3545 = vpack.c.b16 %v2837, %v2833
        %v3546 = vpack.c.b16 %v2838, %v2834
        %v3547 = vpack.c.b16 %v2839, %v2835
        %v3548 = vpack.c.b16 %v2844, %v2840
        %v3549 = vpack.c.b16 %v2845, %v2841
        %v3550 = vpack.c.b16 %v2846, %v2842
        %v3551 = vpack.c.b16 %v2847, %v2843
        %v3552 = vpack.c.b16 %v2852, %v2848
        %v3553 = vpack.c.b16 %v2853, %v2849
        %v3554 = vpack.c.b16 %v2854, %v2850
        %v3555 = vpack.c.b16 %v2855, %v2851
        %v3556 = vpack.c.b16 %v2860, %v2856
        %v3557 = vpack.c.b16 %v2861, %v2857
        %v3558 = vpack.c.b16 %v2862, %v2858
        %v3559 = vpack.c.b16 %v2863, %v2859
        %v3560 = vpack.c.b16 %v2868, %v2864
        %v3561 = vpack.c.b16 %v2869, %v2865
        %v3562 = vpack.c.b16 %v2870, %v2866
        %v3563 = vpack.c.b16 %v2871, %v2867
        %v3564 = vpack.c.b16 %v2876, %v2872
        %v3565 = vpack.c.b16 %v2877, %v2873
        %v3566 = vpack.c.b16 %v2878, %v2874
        %v3567 = vpack.c.b16 %v2879, %v2875
        %v3568 = vpack.c.b16 %v2884, %v2880
        %v3569 = vpack.c.b16 %v2885, %v2881
        %v3570 = vpack.c.b16 %v2886, %v2882
        %v3571 = vpack.c.b16 %v2887, %v2883
        %v3572 = vpack.c.b16 %v2892, %v2888
        %v3573 = vpack.c.b16 %v2893, %v2889
        %v3574 = vpack.c.b16 %v2894, %v2890
        %v3575 = vpack.c.b16 %v2895, %v2891
        %v3576 = vpack.c.b16 %v2900, %v2896
        %v3577 = vpack.c.b16 %v2901, %v2897
        %v3578 = vpack.c.b16 %v2902, %v2898
        %v3579 = vpack.c.b16 %v2903, %v2899
        %v3580 = vpack.c.b16 %v2908, %v2904
        %v3581 = vpack.c.b16 %v2909, %v2905
        %v3582 = vpack.c.b16 %v2910, %v2906
        %v3583 = vpack.c.b16 %v2911, %v2907
        %v3584 = vpack.c.b16 %v2916, %v2912
        %v3585 = vpack.c.b16 %v2917, %v2913
        %v3586 = vpack.c.b16 %v2918, %v2914
        %v3587 = vpack.c.b16 %v2919, %v2915
        %v3588 = vpack.c.b16 %v2924, %v2920
        %v3589 = vpack.c.b16 %v2925, %v2921
        %v3590 = vpack.c.b16 %v2926, %v2922
        %v3591 = vpack.c.b16 %v2927, %v2923
        %v3592 = vpack.c.b16 %v2932, %v2928
        %v3593 = vpack.c.b16 %v2933, %v2929
        %v3594 = vpack.c.b16 %v2934, %v2930
        %v3595 = vpack.c.b16 %v2935, %v2931
        %v3596 = vpack.c.b16 %v2940, %v2936
        %v3597 = vpack.c.b16 %v2941, %v2937
        %v3598 = vpack.c.b16 %v2942, %v2938
        %v3599 = vpack.c.b16 %v2943, %v2939
        %v3600 = vpack.c.b16 %v2948, %v2944
        %v3601 = vpack.c.b16 %v2949, %v2945
        %v3602 = vpack.c.b16 %v2950, %v2946
        %v3603 = vpack.c.b16 %v2951, %v2947
        %v3604 = vpack.c.b16 %v2956, %v2952
        %v3605 = vpack.c.b16 %v2957, %v2953
        %v3606 = vpack.c.b16 %v2958, %v2954
        %v3607 = vpack.c.b16 %v2959, %v2955
        %v3608 = vpack.c.b16 %v2964, %v2960
        %v3609 = vpack.c.b16 %v2965, %v2961
        %v3610 = vpack.c.b16 %v2966, %v2962
        %v3611 = vpack.c.b16 %v2967, %v2963
        %v3612 = vpack.c.b16 %v2972, %v2968
        %v3613 = vpack.c.b16 %v2973, %v2969
        %v3614 = vpack.c.b16 %v2974, %v2970
        %v3615 = vpack.c.b16 %v2975, %v2971
        %4256 = vmatprep.subr.bf16.mxu0 %v2977
        %4257 = vmatpush1.bf16.msra.mxu0 %v2976
        %4258 = vmatprep.subr.bf16.mxu0 %v2981
        %4259 = vmatpush1.bf16.msra.mxu0 %v2980
        %4260 = vmatprep.subr.bf16.mxu0 %v2985
        %4261 = vmatpush1.bf16.msra.mxu0 %v2984
        %4262 = vmatprep.subr.bf16.mxu0 %v2989
        %4263 = vmatpush1.bf16.msra.mxu0 %v2988
        %4264 = vmatprep.subr.bf16.mxu0 %v2993
        %4265 = vmatpush1.bf16.msra.mxu0 %v2992
        %4266 = vmatprep.subr.bf16.mxu0 %v2997
        %4267 = vmatpush1.bf16.msra.mxu0 %v2996
        %4268 = vmatprep.subr.bf16.mxu0 %v3001
        %4269 = vmatpush1.bf16.msra.mxu0 %v3000
        %4270 = vmatprep.subr.bf16.mxu0 %v3005
        %4271 = vmatpush1.bf16.msra.mxu0 %v3004
        %4272 = vmatprep.subr.bf16.mxu0 %v3009
        %4273 = vmatpush1.bf16.msra.mxu0 %v3008
        %4274 = vmatprep.subr.bf16.mxu0 %v3013
        %4275 = vmatpush1.bf16.msra.mxu0 %v3012
        %4276 = vmatprep.subr.bf16.mxu0 %v3017
        %4277 = vmatpush1.bf16.msra.mxu0 %v3016
        %4278 = vmatprep.subr.bf16.mxu0 %v3021
        %4279 = vmatpush1.bf16.msra.mxu0 %v3020
        %4280 = vmatprep.subr.bf16.mxu0 %v3025
        %4281 = vmatpush1.bf16.msra.mxu0 %v3024
        %4282 = vmatprep.subr.bf16.mxu0 %v3029
        %4283 = vmatpush1.bf16.msra.mxu0 %v3028
        %4284 = vmatprep.subr.bf16.mxu0 %v3033
        %4285 = vmatpush1.bf16.msra.mxu0 %v3032
        %4286 = vmatprep.subr.bf16.mxu0 %v3037
        %4287 = vmatpush1.bf16.msra.mxu0 %v3036
        %4288 = vmatprep.mubr.bf16.mxu0 %v1017
        %4289 = vmatmul.mubr.bf16.gmra.mrb[0].mxu0 %v1016
        %v4290 = vpop.f32.mrb[0].mxu0
        %v4291 = vadd.f32 0.0, %v4290
        %v4292 = vpop.f32.mrb[0].mxu0
        %v4293 = vadd.f32 0.0, %v4292
        %v4294 = vpop.f32.mrb[0].mxu0
        %v4295 = vadd.f32 0.0, %v4294
        %v4296 = vpop.f32.mrb[0].mxu0
        %v4297 = vadd.f32 0.0, %v4296
        %4298 = vdwg.mxu0
        %4299 = vmatprep.subr.bf16.mxu0 %v3041
        %4300 = vmatpush1.bf16.msra.mxu0 %v3040
        %4301 = vmatprep.subr.bf16.mxu0 %v3045
        %4302 = vmatpush1.bf16.msra.mxu0 %v3044
        %4303 = vmatprep.subr.bf16.mxu0 %v3049
        %4304 = vmatpush1.bf16.msra.mxu0 %v3048
        %4305 = vmatprep.subr.bf16.mxu0 %v3053
        %4306 = vmatpush1.bf16.msra.mxu0 %v3052
        %4307 = vmatprep.subr.bf16.mxu0 %v3057
        %4308 = vmatpush1.bf16.msra.mxu0 %v3056
        %4309 = vmatprep.subr.bf16.mxu0 %v3061
        %4310 = vmatpush1.bf16.msra.mxu0 %v3060
        %4311 = vmatprep.subr.bf16.mxu0 %v3065
        %4312 = vmatpush1.bf16.msra.mxu0 %v3064
        %4313 = vmatprep.subr.bf16.mxu0 %v3069
        %4314 = vmatpush1.bf16.msra.mxu0 %v3068
        %4315 = vmatprep.subr.bf16.mxu0 %v3073
        %4316 = vmatpush1.bf16.msra.mxu0 %v3072
        %4317 = vmatprep.subr.bf16.mxu0 %v3077
        %4318 = vmatpush1.bf16.msra.mxu0 %v3076
        %4319 = vmatprep.subr.bf16.mxu0 %v3081
        %4320 = vmatpush1.bf16.msra.mxu0 %v3080
        %4321 = vmatprep.subr.bf16.mxu0 %v3085
        %4322 = vmatpush1.bf16.msra.mxu0 %v3084
        %4323 = vmatprep.subr.bf16.mxu0 %v3089
        %4324 = vmatpush1.bf16.msra.mxu0 %v3088
        %4325 = vmatprep.subr.bf16.mxu0 %v3093
        %4326 = vmatpush1.bf16.msra.mxu0 %v3092
        %4327 = vmatprep.subr.bf16.mxu0 %v3097
        %4328 = vmatpush1.bf16.msra.mxu0 %v3096
        %4329 = vmatprep.subr.bf16.mxu0 %v3101
        %4330 = vmatpush1.bf16.msra.mxu0 %v3100
        %4331 = vmatprep.mubr.bf16.mxu0 %v1019
        %4332 = vmatmul.mubr.bf16.gmra.mrb[0].mxu0 %v1018
        %v4333 = vpop.f32.mrb[0].mxu0
        %v4334 = vadd.f32 %v4291, %v4333
        %v4335 = vpop.f32.mrb[0].mxu0
        %v4336 = vadd.f32 %v4293, %v4335
        %v4337 = vpop.f32.mrb[0].mxu0
        %v4338 = vadd.f32 %v4295, %v4337
        %v4339 = vpop.f32.mrb[0].mxu0
        %v4340 = vadd.f32 %v4297, %v4339
        %4341 = vdwg.mxu0
        %4342 = vmatprep.subr.bf16.mxu0 %v3105
        %4343 = vmatpush1.bf16.msra.mxu0 %v3104
        %4344 = vmatprep.subr.bf16.mxu0 %v3109
        %4345 = vmatpush1.bf16.msra.mxu0 %v3108
        %4346 = vmatprep.subr.bf16.mxu0 %v3113
        %4347 = vmatpush1.bf16.msra.mxu0 %v3112
        %4348 = vmatprep.subr.bf16.mxu0 %v3117
        %4349 = vmatpush1.bf16.msra.mxu0 %v3116
        %4350 = vmatprep.subr.bf16.mxu0 %v3121
        %4351 = vmatpush1.bf16.msra.mxu0 %v3120
        %4352 = vmatprep.subr.bf16.mxu0 %v3125
        %4353 = vmatpush1.bf16.msra.mxu0 %v3124
        %4354 = vmatprep.subr.bf16.mxu0 %v3129
        %4355 = vmatpush1.bf16.msra.mxu0 %v3128
        %4356 = vmatprep.subr.bf16.mxu0 %v3133
        %4357 = vmatpush1.bf16.msra.mxu0 %v3132
        %4358 = vmatprep.subr.bf16.mxu0 %v3137
        %4359 = vmatpush1.bf16.msra.mxu0 %v3136
        %4360 = vmatprep.subr.bf16.mxu0 %v3141
        %4361 = vmatpush1.bf16.msra.mxu0 %v3140
        %4362 = vmatprep.subr.bf16.mxu0 %v3145
        %4363 = vmatpush1.bf16.msra.mxu0 %v3144
        %4364 = vmatprep.subr.bf16.mxu0 %v3149
        %4365 = vmatpush1.bf16.msra.mxu0 %v3148
        %4366 = vmatprep.subr.bf16.mxu0 %v3153
        %4367 = vmatpush1.bf16.msra.mxu0 %v3152
        %4368 = vmatprep.subr.bf16.mxu0 %v3157
        %4369 = vmatpush1.bf16.msra.mxu0 %v3156
        %4370 = vmatprep.subr.bf16.mxu0 %v3161
        %4371 = vmatpush1.bf16.msra.mxu0 %v3160
        %4372 = vmatprep.subr.bf16.mxu0 %v3165
        %4373 = vmatpush1.bf16.msra.mxu0 %v3164
        %4374 = vmatprep.mubr.bf16.mxu0 %v1021
        %4375 = vmatmul.mubr.bf16.gmra.mrb[0].mxu0 %v1020
        %v4376 = vpop.f32.mrb[0].mxu0
        %v4377 = vadd.f32 %v4334, %v4376
        %v4378 = vpop.f32.mrb[0].mxu0
        %v4379 = vadd.f32 %v4336, %v4378
        %v4380 = vpop.f32.mrb[0].mxu0
        %v4381 = vadd.f32 %v4338, %v4380
        %v4382 = vpop.f32.mrb[0].mxu0
        %v4383 = vadd.f32 %v4340, %v4382
        %4384 = vdwg.mxu0
        %4385 = vmatprep.subr.bf16.mxu0 %v3169
        %4386 = vmatpush1.bf16.msra.mxu0 %v3168
        %4387 = vmatprep.subr.bf16.mxu0 %v3173
        %4388 = vmatpush1.bf16.msra.mxu0 %v3172
        %4389 = vmatprep.subr.bf16.mxu0 %v3177
        %4390 = vmatpush1.bf16.msra.mxu0 %v3176
        %4391 = vmatprep.subr.bf16.mxu0 %v3181
        %4392 = vmatpush1.bf16.msra.mxu0 %v3180
        %4393 = vmatprep.subr.bf16.mxu0 %v3185
        %4394 = vmatpush1.bf16.msra.mxu0 %v3184
        %4395 = vmatprep.subr.bf16.mxu0 %v3189
        %4396 = vmatpush1.bf16.msra.mxu0 %v3188
        %4397 = vmatprep.subr.bf16.mxu0 %v3193
        %4398 = vmatpush1.bf16.msra.mxu0 %v3192
        %4399 = vmatprep.subr.bf16.mxu0 %v3197
        %4400 = vmatpush1.bf16.msra.mxu0 %v3196
        %4401 = vmatprep.subr.bf16.mxu0 %v3201
        %4402 = vmatpush1.bf16.msra.mxu0 %v3200
        %4403 = vmatprep.subr.bf16.mxu0 %v3205
        %4404 = vmatpush1.bf16.msra.mxu0 %v3204
        %4405 = vmatprep.subr.bf16.mxu0 %v3209
        %4406 = vmatpush1.bf16.msra.mxu0 %v3208
        %4407 = vmatprep.subr.bf16.mxu0 %v3213
        %4408 = vmatpush1.bf16.msra.mxu0 %v3212
        %4409 = vmatprep.subr.bf16.mxu0 %v3217
        %4410 = vmatpush1.bf16.msra.mxu0 %v3216
        %4411 = vmatprep.subr.bf16.mxu0 %v3221
        %4412 = vmatpush1.bf16.msra.mxu0 %v3220
        %4413 = vmatprep.subr.bf16.mxu0 %v3225
        %4414 = vmatpush1.bf16.msra.mxu0 %v3224
        %4415 = vmatprep.subr.bf16.mxu0 %v3229
        %4416 = vmatpush1.bf16.msra.mxu0 %v3228
        %4417 = vmatprep.mubr.bf16.mxu0 %v1023
        %4418 = vmatmul.mubr.bf16.gmra.mrb[0].mxu0 %v1022
        %v4419 = vpop.f32.mrb[0].mxu0
        %v4420 = vadd.f32 %v4377, %v4419
        %v4421 = vpop.f32.mrb[0].mxu0
        %v4422 = vadd.f32 %v4379, %v4421
        %v4423 = vpop.f32.mrb[0].mxu0
        %v4424 = vadd.f32 %v4381, %v4423
        %v4425 = vpop.f32.mrb[0].mxu0
        %v4426 = vadd.f32 %v4383, %v4425
        %4427 = vdwg.mxu0
        %4428 = vmatprep.subr.bf16.mxu0 %v3233
        %4429 = vmatpush1.bf16.msra.mxu0 %v3232
        %4430 = vmatprep.subr.bf16.mxu0 %v3237
        %4431 = vmatpush1.bf16.msra.mxu0 %v3236
        %4432 = vmatprep.subr.bf16.mxu0 %v3241
        %4433 = vmatpush1.bf16.msra.mxu0 %v3240
        %4434 = vmatprep.subr.bf16.mxu0 %v3245
        %4435 = vmatpush1.bf16.msra.mxu0 %v3244
        %4436 = vmatprep.subr.bf16.mxu0 %v3249
        %4437 = vmatpush1.bf16.msra.mxu0 %v3248
        %4438 = vmatprep.subr.bf16.mxu0 %v3253
        %4439 = vmatpush1.bf16.msra.mxu0 %v3252
        %4440 = vmatprep.subr.bf16.mxu0 %v3257
        %4441 = vmatpush1.bf16.msra.mxu0 %v3256
        %4442 = vmatprep.subr.bf16.mxu0 %v3261
        %4443 = vmatpush1.bf16.msra.mxu0 %v3260
        %4444 = vmatprep.subr.bf16.mxu0 %v3265
        %4445 = vmatpush1.bf16.msra.mxu0 %v3264
        %4446 = vmatprep.subr.bf16.mxu0 %v3269
        %4447 = vmatpush1.bf16.msra.mxu0 %v3268
        %4448 = vmatprep.subr.bf16.mxu0 %v3273
        %4449 = vmatpush1.bf16.msra.mxu0 %v3272
        %4450 = vmatprep.subr.bf16.mxu0 %v3277
        %4451 = vmatpush1.bf16.msra.mxu0 %v3276
        %4452 = vmatprep.subr.bf16.mxu0 %v3281
        %4453 = vmatpush1.bf16.msra.mxu0 %v3280
        %4454 = vmatprep.subr.bf16.mxu0 %v3285
        %4455 = vmatpush1.bf16.msra.mxu0 %v3284
        %4456 = vmatprep.subr.bf16.mxu0 %v3289
        %4457 = vmatpush1.bf16.msra.mxu0 %v3288
        %4458 = vmatprep.subr.bf16.mxu0 %v3293
        %4459 = vmatpush1.bf16.msra.mxu0 %v3292
        %4460 = vmatprep.mubr.bf16.mxu0 %v1025
        %4461 = vmatmul.mubr.bf16.gmra.mrb[0].mxu0 %v1024
        %v4462 = vpop.f32.mrb[0].mxu0
        %v4463 = vadd.f32 %v4420, %v4462
        %v4464 = vpop.f32.mrb[0].mxu0
        %v4465 = vadd.f32 %v4422, %v4464
        %v4466 = vpop.f32.mrb[0].mxu0
        %v4467 = vadd.f32 %v4424, %v4466
        %v4468 = vpop.f32.mrb[0].mxu0
        %v4469 = vadd.f32 %v4426, %v4468
        %4470 = vdwg.mxu0
        %4471 = vmatprep.subr.bf16.mxu0 %v3297
        %4472 = vmatpush1.bf16.msra.mxu0 %v3296
        %4473 = vmatprep.subr.bf16.mxu0 %v3301
        %4474 = vmatpush1.bf16.msra.mxu0 %v3300
        %4475 = vmatprep.subr.bf16.mxu0 %v3305
        %4476 = vmatpush1.bf16.msra.mxu0 %v3304
        %4477 = vmatprep.subr.bf16.mxu0 %v3309
        %4478 = vmatpush1.bf16.msra.mxu0 %v3308
        %4479 = vmatprep.subr.bf16.mxu0 %v3313
        %4480 = vmatpush1.bf16.msra.mxu0 %v3312
        %4481 = vmatprep.subr.bf16.mxu0 %v3317
        %4482 = vmatpush1.bf16.msra.mxu0 %v3316
        %4483 = vmatprep.subr.bf16.mxu0 %v3321
        %4484 = vmatpush1.bf16.msra.mxu0 %v3320
        %4485 = vmatprep.subr.bf16.mxu0 %v3325
        %4486 = vmatpush1.bf16.msra.mxu0 %v3324
        %4487 = vmatprep.subr.bf16.mxu0 %v3329
        %4488 = vmatpush1.bf16.msra.mxu0 %v3328
        %4489 = vmatprep.subr.bf16.mxu0 %v3333
        %4490 = vmatpush1.bf16.msra.mxu0 %v3332
        %4491 = vmatprep.subr.bf16.mxu0 %v3337
        %4492 = vmatpush1.bf16.msra.mxu0 %v3336
        %4493 = vmatprep.subr.bf16.mxu0 %v3341
        %4494 = vmatpush1.bf16.msra.mxu0 %v3340
        %4495 = vmatprep.subr.bf16.mxu0 %v3345
        %4496 = vmatpush1.bf16.msra.mxu0 %v3344
        %4497 = vmatprep.subr.bf16.mxu0 %v3349
        %4498 = vmatpush1.bf16.msra.mxu0 %v3348
        %4499 = vmatprep.subr.bf16.mxu0 %v3353
        %4500 = vmatpush1.bf16.msra.mxu0 %v3352
        %4501 = vmatprep.subr.bf16.mxu0 %v3357
        %4502 = vmatpush1.bf16.msra.mxu0 %v3356
        %4503 = vmatprep.mubr.bf16.mxu0 %v1027
        %4504 = vmatmul.mubr.bf16.gmra.mrb[0].mxu0 %v1026
        %v4505 = vpop.f32.mrb[0].mxu0
        %v4506 = vadd.f32 %v4463, %v4505
        %v4507 = vpop.f32.mrb[0].mxu0
        %v4508 = vadd.f32 %v4465, %v4507
        %v4509 = vpop.f32.mrb[0].mxu0
        %v4510 = vadd.f32 %v4467, %v4509
        %v4511 = vpop.f32.mrb[0].mxu0
        %v4512 = vadd.f32 %v4469, %v4511
        %4513 = vdwg.mxu0
        %4514 = vmatprep.subr.bf16.mxu0 %v3361
        %4515 = vmatpush1.bf16.msra.mxu0 %v3360
        %4516 = vmatprep.subr.bf16.mxu0 %v3365
        %4517 = vmatpush1.bf16.msra.mxu0 %v3364
        %4518 = vmatprep.subr.bf16.mxu0 %v3369
        %4519 = vmatpush1.bf16.msra.mxu0 %v3368
        %4520 = vmatprep.subr.bf16.mxu0 %v3373
        %4521 = vmatpush1.bf16.msra.mxu0 %v3372
        %4522 = vmatprep.subr.bf16.mxu0 %v3377
        %4523 = vmatpush1.bf16.msra.mxu0 %v3376
        %4524 = vmatprep.subr.bf16.mxu0 %v3381
        %4525 = vmatpush1.bf16.msra.mxu0 %v3380
        %4526 = vmatprep.subr.bf16.mxu0 %v3385
        %4527 = vmatpush1.bf16.msra.mxu0 %v3384
        %4528 = vmatprep.subr.bf16.mxu0 %v3389
        %4529 = vmatpush1.bf16.msra.mxu0 %v3388
        %4530 = vmatprep.subr.bf16.mxu0 %v3393
        %4531 = vmatpush1.bf16.msra.mxu0 %v3392
        %4532 = vmatprep.subr.bf16.mxu0 %v3397
        %4533 = vmatpush1.bf16.msra.mxu0 %v3396
        %4534 = vmatprep.subr.bf16.mxu0 %v3401
        %4535 = vmatpush1.bf16.msra.mxu0 %v3400
        %4536 = vmatprep.subr.bf16.mxu0 %v3405
        %4537 = vmatpush1.bf16.msra.mxu0 %v3404
        %4538 = vmatprep.subr.bf16.mxu0 %v3409
        %4539 = vmatpush1.bf16.msra.mxu0 %v3408
        %4540 = vmatprep.subr.bf16.mxu0 %v3413
        %4541 = vmatpush1.bf16.msra.mxu0 %v3412
        %4542 = vmatprep.subr.bf16.mxu0 %v3417
        %4543 = vmatpush1.bf16.msra.mxu0 %v3416
        %4544 = vmatprep.subr.bf16.mxu0 %v3421
        %4545 = vmatpush1.bf16.msra.mxu0 %v3420
        %4546 = vmatprep.mubr.bf16.mxu0 %v1029
        %4547 = vmatmul.mubr.bf16.gmra.mrb[0].mxu0 %v1028
        %v4548 = vpop.f32.mrb[0].mxu0
        %v4549 = vadd.f32 %v4506, %v4548
        %v4550 = vpop.f32.mrb[0].mxu0
        %v4551 = vadd.f32 %v4508, %v4550
        %v4552 = vpop.f32.mrb[0].mxu0
        %v4553 = vadd.f32 %v4510, %v4552
        %v4554 = vpop.f32.mrb[0].mxu0
        %v4555 = vadd.f32 %v4512, %v4554
        %4556 = vdwg.mxu0
        %4557 = vmatprep.subr.bf16.mxu0 %v3425
        %4558 = vmatpush1.bf16.msra.mxu0 %v3424
        %4559 = vmatprep.subr.bf16.mxu0 %v3429
        %4560 = vmatpush1.bf16.msra.mxu0 %v3428
        %4561 = vmatprep.subr.bf16.mxu0 %v3433
        %4562 = vmatpush1.bf16.msra.mxu0 %v3432
        %4563 = vmatprep.subr.bf16.mxu0 %v3437
        %4564 = vmatpush1.bf16.msra.mxu0 %v3436
        %4565 = vmatprep.subr.bf16.mxu0 %v3441
        %4566 = vmatpush1.bf16.msra.mxu0 %v3440
        %4567 = vmatprep.subr.bf16.mxu0 %v3445
        %4568 = vmatpush1.bf16.msra.mxu0 %v3444
        %4569 = vmatprep.subr.bf16.mxu0 %v3449
        %4570 = vmatpush1.bf16.msra.mxu0 %v3448
        %4571 = vmatprep.subr.bf16.mxu0 %v3453
        %4572 = vmatpush1.bf16.msra.mxu0 %v3452
        %4573 = vmatprep.subr.bf16.mxu0 %v3457
        %4574 = vmatpush1.bf16.msra.mxu0 %v3456
        %4575 = vmatprep.subr.bf16.mxu0 %v3461
        %4576 = vmatpush1.bf16.msra.mxu0 %v3460
        %4577 = vmatprep.subr.bf16.mxu0 %v3465
        %4578 = vmatpush1.bf16.msra.mxu0 %v3464
        %4579 = vmatprep.subr.bf16.mxu0 %v3469
        %4580 = vmatpush1.bf16.msra.mxu0 %v3468
        %4581 = vmatprep.subr.bf16.mxu0 %v3473
        %4582 = vmatpush1.bf16.msra.mxu0 %v3472
        %4583 = vmatprep.subr.bf16.mxu0 %v3477
        %4584 = vmatpush1.bf16.msra.mxu0 %v3476
        %4585 = vmatprep.subr.bf16.mxu0 %v3481
        %4586 = vmatpush1.bf16.msra.mxu0 %v3480
        %4587 = vmatprep.subr.bf16.mxu0 %v3485
        %4588 = vmatpush1.bf16.msra.mxu0 %v3484
        %4589 = vmatprep.mubr.bf16.mxu0 %v1031
        %4590 = vmatmul.mubr.bf16.gmra.mrb[0].mxu0 %v1030
        %v4591 = vpop.f32.mrb[0].mxu0
        %v4592 = vadd.f32 %v4549, %v4591
        %v4593 = vpop.f32.mrb[0].mxu0
        %v4594 = vadd.f32 %v4551, %v4593
        %v4595 = vpop.f32.mrb[0].mxu0
        %v4596 = vadd.f32 %v4553, %v4595
        %v4597 = vpop.f32.mrb[0].mxu0
        %v4598 = vadd.f32 %v4555, %v4597
        %4599 = vdwg.mxu0
        %4600 = vmatprep.subr.bf16.mxu0 %v3489
        %4601 = vmatpush1.bf16.msra.mxu0 %v3488
        %4602 = vmatprep.subr.bf16.mxu0 %v3493
        %4603 = vmatpush1.bf16.msra.mxu0 %v3492
        %4604 = vmatprep.subr.bf16.mxu0 %v3497
        %4605 = vmatpush1.bf16.msra.mxu0 %v3496
        %4606 = vmatprep.subr.bf16.mxu0 %v3501
        %4607 = vmatpush1.bf16.msra.mxu0 %v3500
        %4608 = vmatprep.subr.bf16.mxu0 %v3505
        %4609 = vmatpush1.bf16.msra.mxu0 %v3504
        %4610 = vmatprep.subr.bf16.mxu0 %v3509
        %4611 = vmatpush1.bf16.msra.mxu0 %v3508
        %4612 = vmatprep.subr.bf16.mxu0 %v3513
        %4613 = vmatpush1.bf16.msra.mxu0 %v3512
        %4614 = vmatprep.subr.bf16.mxu0 %v3517
        %4615 = vmatpush1.bf16.msra.mxu0 %v3516
        %4616 = vmatprep.subr.bf16.mxu0 %v3521
        %4617 = vmatpush1.bf16.msra.mxu0 %v3520
        %4618 = vmatprep.subr.bf16.mxu0 %v3525
        %4619 = vmatpush1.bf16.msra.mxu0 %v3524
        %4620 = vmatprep.subr.bf16.mxu0 %v3529
        %4621 = vmatpush1.bf16.msra.mxu0 %v3528
        %4622 = vmatprep.subr.bf16.mxu0 %v3533
        %4623 = vmatpush1.bf16.msra.mxu0 %v3532
        %4624 = vmatprep.subr.bf16.mxu0 %v3537
        %4625 = vmatpush1.bf16.msra.mxu0 %v3536
        %4626 = vmatprep.subr.bf16.mxu0 %v3541
        %4627 = vmatpush1.bf16.msra.mxu0 %v3540
        %4628 = vmatprep.subr.bf16.mxu0 %v3545
        %4629 = vmatpush1.bf16.msra.mxu0 %v3544
        %4630 = vmatprep.subr.bf16.mxu0 %v3549
        %4631 = vmatpush1.bf16.msra.mxu0 %v3548
        %4632 = vmatprep.mubr.bf16.mxu0 %v1033
        %4633 = vmatmul.mubr.bf16.gmra.mrb[0].mxu0 %v1032
        %v4634 = vpop.f32.mrb[0].mxu0
        %v4635 = vadd.f32 %v4592, %v4634
        %v4636 = vpop.f32.mrb[0].mxu0
        %v4637 = vadd.f32 %v4594, %v4636
        %v4638 = vpop.f32.mrb[0].mxu0
        %v4639 = vadd.f32 %v4596, %v4638
        %v4640 = vpop.f32.mrb[0].mxu0
        %v4641 = vadd.f32 %v4598, %v4640
        %4642 = vdwg.mxu0
        %4643 = vmatprep.subr.bf16.mxu0 %v3553
        %4644 = vmatpush1.bf16.msra.mxu0 %v3552
        %4645 = vmatprep.subr.bf16.mxu0 %v3557
        %4646 = vmatpush1.bf16.msra.mxu0 %v3556
        %4647 = vmatprep.subr.bf16.mxu0 %v3561
        %4648 = vmatpush1.bf16.msra.mxu0 %v3560
        %4649 = vmatprep.subr.bf16.mxu0 %v3565
        %4650 = vmatpush1.bf16.msra.mxu0 %v3564
        %4651 = vmatprep.subr.bf16.mxu0 %v3569
        %4652 = vmatpush1.bf16.msra.mxu0 %v3568
        %4653 = vmatprep.subr.bf16.mxu0 %v3573
        %4654 = vmatpush1.bf16.msra.mxu0 %v3572
        %4655 = vmatprep.subr.bf16.mxu0 %v3577
        %4656 = vmatpush1.bf16.msra.mxu0 %v3576
        %4657 = vmatprep.subr.bf16.mxu0 %v3581
        %4658 = vmatpush1.bf16.msra.mxu0 %v3580
        %4659 = vmatprep.subr.bf16.mxu0 %v3585
        %4660 = vmatpush1.bf16.msra.mxu0 %v3584
        %4661 = vmatprep.subr.bf16.mxu0 %v3589
        %4662 = vmatpush1.bf16.msra.mxu0 %v3588
        %4663 = vmatprep.subr.bf16.mxu0 %v3593
        %4664 = vmatpush1.bf16.msra.mxu0 %v3592
        %4665 = vmatprep.subr.bf16.mxu0 %v3597
        %4666 = vmatpush1.bf16.msra.mxu0 %v3596
        %4667 = vmatprep.subr.bf16.mxu0 %v3601
        %4668 = vmatpush1.bf16.msra.mxu0 %v3600
        %4669 = vmatprep.subr.bf16.mxu0 %v3605
        %4670 = vmatpush1.bf16.msra.mxu0 %v3604
        %4671 = vmatprep.subr.bf16.mxu0 %v3609
        %4672 = vmatpush1.bf16.msra.mxu0 %v3608
        %4673 = vmatprep.subr.bf16.mxu0 %v3613
        %4674 = vmatpush1.bf16.msra.mxu0 %v3612
        %4675 = vmatprep.mubr.bf16.mxu0 %v1035
        %4676 = vmatmul.mubr.bf16.gmra.mrb[0].mxu0 %v1034
        %v4677 = vpop.f32.mrb[0].mxu0
        %v4678 = vadd.f32 %v4635, %v4677
        %v4679 = vpop.f32.mrb[0].mxu0
        %v4680 = vadd.f32 %v4637, %v4679
        %v4681 = vpop.f32.mrb[0].mxu0
        %v4682 = vadd.f32 %v4639, %v4681
        %v4683 = vpop.f32.mrb[0].mxu0
        %v4684 = vadd.f32 %v4641, %v4683
        %4685 = vdwg.mxu0
        %4686 = vmatprep.subr.bf16.mxu0 %v2979
        %4687 = vmatpush1.bf16.msra.mxu0 %v2978
        %4688 = vmatprep.subr.bf16.mxu0 %v2983
        %4689 = vmatpush1.bf16.msra.mxu0 %v2982
        %4690 = vmatprep.subr.bf16.mxu0 %v2987
        %4691 = vmatpush1.bf16.msra.mxu0 %v2986
        %4692 = vmatprep.subr.bf16.mxu0 %v2991
        %4693 = vmatpush1.bf16.msra.mxu0 %v2990
        %4694 = vmatprep.subr.bf16.mxu0 %v2995
        %4695 = vmatpush1.bf16.msra.mxu0 %v2994
        %4696 = vmatprep.subr.bf16.mxu0 %v2999
        %4697 = vmatpush1.bf16.msra.mxu0 %v2998
        %4698 = vmatprep.subr.bf16.mxu0 %v3003
        %4699 = vmatpush1.bf16.msra.mxu0 %v3002
        %4700 = vmatprep.subr.bf16.mxu0 %v3007
        %4701 = vmatpush1.bf16.msra.mxu0 %v3006
        %4702 = vmatprep.subr.bf16.mxu0 %v3011
        %4703 = vmatpush1.bf16.msra.mxu0 %v3010
        %4704 = vmatprep.subr.bf16.mxu0 %v3015
        %4705 = vmatpush1.bf16.msra.mxu0 %v3014
        %4706 = vmatprep.subr.bf16.mxu0 %v3019
        %4707 = vmatpush1.bf16.msra.mxu0 %v3018
        %4708 = vmatprep.subr.bf16.mxu0 %v3023
        %4709 = vmatpush1.bf16.msra.mxu0 %v3022
        %4710 = vmatprep.subr.bf16.mxu0 %v3027
        %4711 = vmatpush1.bf16.msra.mxu0 %v3026
        %4712 = vmatprep.subr.bf16.mxu0 %v3031
        %4713 = vmatpush1.bf16.msra.mxu0 %v3030
        %4714 = vmatprep.subr.bf16.mxu0 %v3035
        %4715 = vmatpush1.bf16.msra.mxu0 %v3034
        %4716 = vmatprep.subr.bf16.mxu0 %v3039
        %4717 = vmatpush1.bf16.msra.mxu0 %v3038
        %4718 = vmatprep.mubr.bf16.mxu0 %v1017
        %4719 = vmatmul.mubr.bf16.gmra.mrb[0].mxu0 %v1016
        %v4720 = vpop.f32.mrb[0].mxu0
        %v4721 = vadd.f32 0.0, %v4720
        %v4722 = vpop.f32.mrb[0].mxu0
        %v4723 = vadd.f32 0.0, %v4722
        %v4724 = vpop.f32.mrb[0].mxu0
        %v4725 = vadd.f32 0.0, %v4724
        %v4726 = vpop.f32.mrb[0].mxu0
        %v4727 = vadd.f32 0.0, %v4726
        %4728 = vdwg.mxu0
        %4729 = vmatprep.subr.bf16.mxu0 %v3043
        %4730 = vmatpush1.bf16.msra.mxu0 %v3042
        %4731 = vmatprep.subr.bf16.mxu0 %v3047
        %4732 = vmatpush1.bf16.msra.mxu0 %v3046
        %4733 = vmatprep.subr.bf16.mxu0 %v3051
        %4734 = vmatpush1.bf16.msra.mxu0 %v3050
        %4735 = vmatprep.subr.bf16.mxu0 %v3055
        %4736 = vmatpush1.bf16.msra.mxu0 %v3054
        %4737 = vmatprep.subr.bf16.mxu0 %v3059
        %4738 = vmatpush1.bf16.msra.mxu0 %v3058
        %4739 = vmatprep.subr.bf16.mxu0 %v3063
        %4740 = vmatpush1.bf16.msra.mxu0 %v3062
        %4741 = vmatprep.subr.bf16.mxu0 %v3067
        %4742 = vmatpush1.bf16.msra.mxu0 %v3066
        %4743 = vmatprep.subr.bf16.mxu0 %v3071
        %4744 = vmatpush1.bf16.msra.mxu0 %v3070
        %4745 = vmatprep.subr.bf16.mxu0 %v3075
        %4746 = vmatpush1.bf16.msra.mxu0 %v3074
        %4747 = vmatprep.subr.bf16.mxu0 %v3079
        %4748 = vmatpush1.bf16.msra.mxu0 %v3078
        %4749 = vmatprep.subr.bf16.mxu0 %v3083
        %4750 = vmatpush1.bf16.msra.mxu0 %v3082
        %4751 = vmatprep.subr.bf16.mxu0 %v3087
        %4752 = vmatpush1.bf16.msra.mxu0 %v3086
        %4753 = vmatprep.subr.bf16.mxu0 %v3091
        %4754 = vmatpush1.bf16.msra.mxu0 %v3090
        %4755 = vmatprep.subr.bf16.mxu0 %v3095
        %4756 = vmatpush1.bf16.msra.mxu0 %v3094
        %4757 = vmatprep.subr.bf16.mxu0 %v3099
        %4758 = vmatpush1.bf16.msra.mxu0 %v3098
        %4759 = vmatprep.subr.bf16.mxu0 %v3103
        %4760 = vmatpush1.bf16.msra.mxu0 %v3102
        %4761 = vmatprep.mubr.bf16.mxu0 %v1019
        %4762 = vmatmul.mubr.bf16.gmra.mrb[0].mxu0 %v1018
        %v4763 = vpop.f32.mrb[0].mxu0
        %v4764 = vadd.f32 %v4721, %v4763
        %v4765 = vpop.f32.mrb[0].mxu0
        %v4766 = vadd.f32 %v4723, %v4765
        %v4767 = vpop.f32.mrb[0].mxu0
        %v4768 = vadd.f32 %v4725, %v4767
        %v4769 = vpop.f32.mrb[0].mxu0
        %v4770 = vadd.f32 %v4727, %v4769
        %4771 = vdwg.mxu0
        %4772 = vmatprep.subr.bf16.mxu0 %v3107
        %4773 = vmatpush1.bf16.msra.mxu0 %v3106
        %4774 = vmatprep.subr.bf16.mxu0 %v3111
        %4775 = vmatpush1.bf16.msra.mxu0 %v3110
        %4776 = vmatprep.subr.bf16.mxu0 %v3115
        %4777 = vmatpush1.bf16.msra.mxu0 %v3114
        %4778 = vmatprep.subr.bf16.mxu0 %v3119
        %4779 = vmatpush1.bf16.msra.mxu0 %v3118
        %4780 = vmatprep.subr.bf16.mxu0 %v3123
        %4781 = vmatpush1.bf16.msra.mxu0 %v3122
        %4782 = vmatprep.subr.bf16.mxu0 %v3127
        %4783 = vmatpush1.bf16.msra.mxu0 %v3126
        %4784 = vmatprep.subr.bf16.mxu0 %v3131
        %4785 = vmatpush1.bf16.msra.mxu0 %v3130
        %4786 = vmatprep.subr.bf16.mxu0 %v3135
        %4787 = vmatpush1.bf16.msra.mxu0 %v3134
        %4788 = vmatprep.subr.bf16.mxu0 %v3139
        %4789 = vmatpush1.bf16.msra.mxu0 %v3138
        %4790 = vmatprep.subr.bf16.mxu0 %v3143
        %4791 = vmatpush1.bf16.msra.mxu0 %v3142
        %4792 = vmatprep.subr.bf16.mxu0 %v3147
        %4793 = vmatpush1.bf16.msra.mxu0 %v3146
        %4794 = vmatprep.subr.bf16.mxu0 %v3151
        %4795 = vmatpush1.bf16.msra.mxu0 %v3150
        %4796 = vmatprep.subr.bf16.mxu0 %v3155
        %4797 = vmatpush1.bf16.msra.mxu0 %v3154
        %4798 = vmatprep.subr.bf16.mxu0 %v3159
        %4799 = vmatpush1.bf16.msra.mxu0 %v3158
        %4800 = vmatprep.subr.bf16.mxu0 %v3163
        %4801 = vmatpush1.bf16.msra.mxu0 %v3162
        %4802 = vmatprep.subr.bf16.mxu0 %v3167
        %4803 = vmatpush1.bf16.msra.mxu0 %v3166
        %4804 = vmatprep.mubr.bf16.mxu0 %v1021
        %4805 = vmatmul.mubr.bf16.gmra.mrb[0].mxu0 %v1020
        %v4806 = vpop.f32.mrb[0].mxu0
        %v4807 = vadd.f32 %v4764, %v4806
        %v4808 = vpop.f32.mrb[0].mxu0
        %v4809 = vadd.f32 %v4766, %v4808
        %v4810 = vpop.f32.mrb[0].mxu0
        %v4811 = vadd.f32 %v4768, %v4810
        %v4812 = vpop.f32.mrb[0].mxu0
        %v4813 = vadd.f32 %v4770, %v4812
        %4814 = vdwg.mxu0
        %4815 = vmatprep.subr.bf16.mxu0 %v3171
        %4816 = vmatpush1.bf16.msra.mxu0 %v3170
        %4817 = vmatprep.subr.bf16.mxu0 %v3175
        %4818 = vmatpush1.bf16.msra.mxu0 %v3174
        %4819 = vmatprep.subr.bf16.mxu0 %v3179
        %4820 = vmatpush1.bf16.msra.mxu0 %v3178
        %4821 = vmatprep.subr.bf16.mxu0 %v3183
        %4822 = vmatpush1.bf16.msra.mxu0 %v3182
        %4823 = vmatprep.subr.bf16.mxu0 %v3187
        %4824 = vmatpush1.bf16.msra.mxu0 %v3186
        %4825 = vmatprep.subr.bf16.mxu0 %v3191
        %4826 = vmatpush1.bf16.msra.mxu0 %v3190
        %4827 = vmatprep.subr.bf16.mxu0 %v3195
        %4828 = vmatpush1.bf16.msra.mxu0 %v3194
        %4829 = vmatprep.subr.bf16.mxu0 %v3199
        %4830 = vmatpush1.bf16.msra.mxu0 %v3198
        %4831 = vmatprep.subr.bf16.mxu0 %v3203
        %4832 = vmatpush1.bf16.msra.mxu0 %v3202
        %4833 = vmatprep.subr.bf16.mxu0 %v3207
        %4834 = vmatpush1.bf16.msra.mxu0 %v3206
        %4835 = vmatprep.subr.bf16.mxu0 %v3211
        %4836 = vmatpush1.bf16.msra.mxu0 %v3210
        %4837 = vmatprep.subr.bf16.mxu0 %v3215
        %4838 = vmatpush1.bf16.msra.mxu0 %v3214
        %4839 = vmatprep.subr.bf16.mxu0 %v3219
        %4840 = vmatpush1.bf16.msra.mxu0 %v3218
        %4841 = vmatprep.subr.bf16.mxu0 %v3223
        %4842 = vmatpush1.bf16.msra.mxu0 %v3222
        %4843 = vmatprep.subr.bf16.mxu0 %v3227
        %4844 = vmatpush1.bf16.msra.mxu0 %v3226
        %4845 = vmatprep.subr.bf16.mxu0 %v3231
        %4846 = vmatpush1.bf16.msra.mxu0 %v3230
        %4847 = vmatprep.mubr.bf16.mxu0 %v1023
        %4848 = vmatmul.mubr.bf16.gmra.mrb[0].mxu0 %v1022
        %v4849 = vpop.f32.mrb[0].mxu0
        %v4850 = vadd.f32 %v4807, %v4849
        %v4851 = vpop.f32.mrb[0].mxu0
        %v4852 = vadd.f32 %v4809, %v4851
        %v4853 = vpop.f32.mrb[0].mxu0
        %v4854 = vadd.f32 %v4811, %v4853
        %v4855 = vpop.f32.mrb[0].mxu0
        %v4856 = vadd.f32 %v4813, %v4855
        %4857 = vdwg.mxu0
        %4858 = vmatprep.subr.bf16.mxu0 %v3235
        %4859 = vmatpush1.bf16.msra.mxu0 %v3234
        %4860 = vmatprep.subr.bf16.mxu0 %v3239
        %4861 = vmatpush1.bf16.msra.mxu0 %v3238
        %4862 = vmatprep.subr.bf16.mxu0 %v3243
        %4863 = vmatpush1.bf16.msra.mxu0 %v3242
        %4864 = vmatprep.subr.bf16.mxu0 %v3247
        %4865 = vmatpush1.bf16.msra.mxu0 %v3246
        %4866 = vmatprep.subr.bf16.mxu0 %v3251
        %4867 = vmatpush1.bf16.msra.mxu0 %v3250
        %4868 = vmatprep.subr.bf16.mxu0 %v3255
        %4869 = vmatpush1.bf16.msra.mxu0 %v3254
        %4870 = vmatprep.subr.bf16.mxu0 %v3259
        %4871 = vmatpush1.bf16.msra.mxu0 %v3258
        %4872 = vmatprep.subr.bf16.mxu0 %v3263
        %4873 = vmatpush1.bf16.msra.mxu0 %v3262
        %4874 = vmatprep.subr.bf16.mxu0 %v3267
        %4875 = vmatpush1.bf16.msra.mxu0 %v3266
        %4876 = vmatprep.subr.bf16.mxu0 %v3271
        %4877 = vmatpush1.bf16.msra.mxu0 %v3270
        %4878 = vmatprep.subr.bf16.mxu0 %v3275
        %4879 = vmatpush1.bf16.msra.mxu0 %v3274
        %4880 = vmatprep.subr.bf16.mxu0 %v3279
        %4881 = vmatpush1.bf16.msra.mxu0 %v3278
        %4882 = vmatprep.subr.bf16.mxu0 %v3283
        %4883 = vmatpush1.bf16.msra.mxu0 %v3282
        %4884 = vmatprep.subr.bf16.mxu0 %v3287
        %4885 = vmatpush1.bf16.msra.mxu0 %v3286
        %4886 = vmatprep.subr.bf16.mxu0 %v3291
        %4887 = vmatpush1.bf16.msra.mxu0 %v3290
        %4888 = vmatprep.subr.bf16.mxu0 %v3295
        %4889 = vmatpush1.bf16.msra.mxu0 %v3294
        %4890 = vmatprep.mubr.bf16.mxu0 %v1025
        %4891 = vmatmul.mubr.bf16.gmra.mrb[0].mxu0 %v1024
        %v4892 = vpop.f32.mrb[0].mxu0
        %v4893 = vadd.f32 %v4850, %v4892
        %v4894 = vpop.f32.mrb[0].mxu0
        %v4895 = vadd.f32 %v4852, %v4894
        %v4896 = vpop.f32.mrb[0].mxu0
        %v4897 = vadd.f32 %v4854, %v4896
        %v4898 = vpop.f32.mrb[0].mxu0
        %v4899 = vadd.f32 %v4856, %v4898
        %4900 = vdwg.mxu0
        %4901 = vmatprep.subr.bf16.mxu0 %v3299
        %4902 = vmatpush1.bf16.msra.mxu0 %v3298
        %4903 = vmatprep.subr.bf16.mxu0 %v3303
        %4904 = vmatpush1.bf16.msra.mxu0 %v3302
        %4905 = vmatprep.subr.bf16.mxu0 %v3307
        %4906 = vmatpush1.bf16.msra.mxu0 %v3306
        %4907 = vmatprep.subr.bf16.mxu0 %v3311
        %4908 = vmatpush1.bf16.msra.mxu0 %v3310
        %4909 = vmatprep.subr.bf16.mxu0 %v3315
        %4910 = vmatpush1.bf16.msra.mxu0 %v3314
        %4911 = vmatprep.subr.bf16.mxu0 %v3319
        %4912 = vmatpush1.bf16.msra.mxu0 %v3318
        %4913 = vmatprep.subr.bf16.mxu0 %v3323
        %4914 = vmatpush1.bf16.msra.mxu0 %v3322
        %4915 = vmatprep.subr.bf16.mxu0 %v3327
        %4916 = vmatpush1.bf16.msra.mxu0 %v3326
        %4917 = vmatprep.subr.bf16.mxu0 %v3331
        %4918 = vmatpush1.bf16.msra.mxu0 %v3330
        %4919 = vmatprep.subr.bf16.mxu0 %v3335
        %4920 = vmatpush1.bf16.msra.mxu0 %v3334
        %4921 = vmatprep.subr.bf16.mxu0 %v3339
        %4922 = vmatpush1.bf16.msra.mxu0 %v3338
        %4923 = vmatprep.subr.bf16.mxu0 %v3343
        %4924 = vmatpush1.bf16.msra.mxu0 %v3342
        %4925 = vmatprep.subr.bf16.mxu0 %v3347
        %4926 = vmatpush1.bf16.msra.mxu0 %v3346
        %4927 = vmatprep.subr.bf16.mxu0 %v3351
        %4928 = vmatpush1.bf16.msra.mxu0 %v3350
        %4929 = vmatprep.subr.bf16.mxu0 %v3355
        %4930 = vmatpush1.bf16.msra.mxu0 %v3354
        %4931 = vmatprep.subr.bf16.mxu0 %v3359
        %4932 = vmatpush1.bf16.msra.mxu0 %v3358
        %4933 = vmatprep.mubr.bf16.mxu0 %v1027
        %4934 = vmatmul.mubr.bf16.gmra.mrb[0].mxu0 %v1026
        %v4935 = vpop.f32.mrb[0].mxu0
        %v4936 = vadd.f32 %v4893, %v4935
        %v4937 = vpop.f32.mrb[0].mxu0
        %v4938 = vadd.f32 %v4895, %v4937
        %v4939 = vpop.f32.mrb[0].mxu0
        %v4940 = vadd.f32 %v4897, %v4939
        %v4941 = vpop.f32.mrb[0].mxu0
        %v4942 = vadd.f32 %v4899, %v4941
        %4943 = vdwg.mxu0
        %4944 = vmatprep.subr.bf16.mxu0 %v3363
        %4945 = vmatpush1.bf16.msra.mxu0 %v3362
        %4946 = vmatprep.subr.bf16.mxu0 %v3367
        %4947 = vmatpush1.bf16.msra.mxu0 %v3366
        %4948 = vmatprep.subr.bf16.mxu0 %v3371
        %4949 = vmatpush1.bf16.msra.mxu0 %v3370
        %4950 = vmatprep.subr.bf16.mxu0 %v3375
        %4951 = vmatpush1.bf16.msra.mxu0 %v3374
        %4952 = vmatprep.subr.bf16.mxu0 %v3379
        %4953 = vmatpush1.bf16.msra.mxu0 %v3378
        %4954 = vmatprep.subr.bf16.mxu0 %v3383
        %4955 = vmatpush1.bf16.msra.mxu0 %v3382
        %4956 = vmatprep.subr.bf16.mxu0 %v3387
        %4957 = vmatpush1.bf16.msra.mxu0 %v3386
        %4958 = vmatprep.subr.bf16.mxu0 %v3391
        %4959 = vmatpush1.bf16.msra.mxu0 %v3390
        %4960 = vmatprep.subr.bf16.mxu0 %v3395
        %4961 = vmatpush1.bf16.msra.mxu0 %v3394
        %4962 = vmatprep.subr.bf16.mxu0 %v3399
        %4963 = vmatpush1.bf16.msra.mxu0 %v3398
        %4964 = vmatprep.subr.bf16.mxu0 %v3403
        %4965 = vmatpush1.bf16.msra.mxu0 %v3402
        %4966 = vmatprep.subr.bf16.mxu0 %v3407
        %4967 = vmatpush1.bf16.msra.mxu0 %v3406
        %4968 = vmatprep.subr.bf16.mxu0 %v3411
        %4969 = vmatpush1.bf16.msra.mxu0 %v3410
        %4970 = vmatprep.subr.bf16.mxu0 %v3415
        %4971 = vmatpush1.bf16.msra.mxu0 %v3414
        %4972 = vmatprep.subr.bf16.mxu0 %v3419
        %4973 = vmatpush1.bf16.msra.mxu0 %v3418
        %4974 = vmatprep.subr.bf16.mxu0 %v3423
        %4975 = vmatpush1.bf16.msra.mxu0 %v3422
        %4976 = vmatprep.mubr.bf16.mxu0 %v1029
        %4977 = vmatmul.mubr.bf16.gmra.mrb[0].mxu0 %v1028
        %v4978 = vpop.f32.mrb[0].mxu0
        %v4979 = vadd.f32 %v4936, %v4978
        %v4980 = vpop.f32.mrb[0].mxu0
        %v4981 = vadd.f32 %v4938, %v4980
        %v4982 = vpop.f32.mrb[0].mxu0
        %v4983 = vadd.f32 %v4940, %v4982
        %v4984 = vpop.f32.mrb[0].mxu0
        %v4985 = vadd.f32 %v4942, %v4984
        %4986 = vdwg.mxu0
        %4987 = vmatprep.subr.bf16.mxu0 %v3427
        %4988 = vmatpush1.bf16.msra.mxu0 %v3426
        %4989 = vmatprep.subr.bf16.mxu0 %v3431
        %4990 = vmatpush1.bf16.msra.mxu0 %v3430
        %4991 = vmatprep.subr.bf16.mxu0 %v3435
        %4992 = vmatpush1.bf16.msra.mxu0 %v3434
        %4993 = vmatprep.subr.bf16.mxu0 %v3439
        %4994 = vmatpush1.bf16.msra.mxu0 %v3438
        %4995 = vmatprep.subr.bf16.mxu0 %v3443
        %4996 = vmatpush1.bf16.msra.mxu0 %v3442
        %4997 = vmatprep.subr.bf16.mxu0 %v3447
        %4998 = vmatpush1.bf16.msra.mxu0 %v3446
        %4999 = vmatprep.subr.bf16.mxu0 %v3451
        %5000 = vmatpush1.bf16.msra.mxu0 %v3450
        %5001 = vmatprep.subr.bf16.mxu0 %v3455
        %5002 = vmatpush1.bf16.msra.mxu0 %v3454
        %5003 = vmatprep.subr.bf16.mxu0 %v3459
        %5004 = vmatpush1.bf16.msra.mxu0 %v3458
        %5005 = vmatprep.subr.bf16.mxu0 %v3463
        %5006 = vmatpush1.bf16.msra.mxu0 %v3462
        %5007 = vmatprep.subr.bf16.mxu0 %v3467
        %5008 = vmatpush1.bf16.msra.mxu0 %v3466
        %5009 = vmatprep.subr.bf16.mxu0 %v3471
        %5010 = vmatpush1.bf16.msra.mxu0 %v3470
        %5011 = vmatprep.subr.bf16.mxu0 %v3475
        %5012 = vmatpush1.bf16.msra.mxu0 %v3474
        %5013 = vmatprep.subr.bf16.mxu0 %v3479
        %5014 = vmatpush1.bf16.msra.mxu0 %v3478
        %5015 = vmatprep.subr.bf16.mxu0 %v3483
        %5016 = vmatpush1.bf16.msra.mxu0 %v3482
        %5017 = vmatprep.subr.bf16.mxu0 %v3487
        %5018 = vmatpush1.bf16.msra.mxu0 %v3486
        %5019 = vmatprep.mubr.bf16.mxu0 %v1031
        %5020 = vmatmul.mubr.bf16.gmra.mrb[0].mxu0 %v1030
        %v5021 = vpop.f32.mrb[0].mxu0
        %v5022 = vadd.f32 %v4979, %v5021
        %v5023 = vpop.f32.mrb[0].mxu0
        %v5024 = vadd.f32 %v4981, %v5023
        %v5025 = vpop.f32.mrb[0].mxu0
        %v5026 = vadd.f32 %v4983, %v5025
        %v5027 = vpop.f32.mrb[0].mxu0
        %v5028 = vadd.f32 %v4985, %v5027
        %5029 = vdwg.mxu0
        %5030 = vmatprep.subr.bf16.mxu0 %v3491
        %5031 = vmatpush1.bf16.msra.mxu0 %v3490
        %5032 = vmatprep.subr.bf16.mxu0 %v3495
        %5033 = vmatpush1.bf16.msra.mxu0 %v3494
        %5034 = vmatprep.subr.bf16.mxu0 %v3499
        %5035 = vmatpush1.bf16.msra.mxu0 %v3498
        %5036 = vmatprep.subr.bf16.mxu0 %v3503
        %5037 = vmatpush1.bf16.msra.mxu0 %v3502
        %5038 = vmatprep.subr.bf16.mxu0 %v3507
        %5039 = vmatpush1.bf16.msra.mxu0 %v3506
        %5040 = vmatprep.subr.bf16.mxu0 %v3511
        %5041 = vmatpush1.bf16.msra.mxu0 %v3510
        %5042 = vmatprep.subr.bf16.mxu0 %v3515
        %5043 = vmatpush1.bf16.msra.mxu0 %v3514
        %5044 = vmatprep.subr.bf16.mxu0 %v3519
        %5045 = vmatpush1.bf16.msra.mxu0 %v3518
        %5046 = vmatprep.subr.bf16.mxu0 %v3523
        %5047 = vmatpush1.bf16.msra.mxu0 %v3522
        %5048 = vmatprep.subr.bf16.mxu0 %v3527
        %5049 = vmatpush1.bf16.msra.mxu0 %v3526
        %5050 = vmatprep.subr.bf16.mxu0 %v3531
        %5051 = vmatpush1.bf16.msra.mxu0 %v3530
        %5052 = vmatprep.subr.bf16.mxu0 %v3535
        %5053 = vmatpush1.bf16.msra.mxu0 %v3534
        %5054 = vmatprep.subr.bf16.mxu0 %v3539
        %5055 = vmatpush1.bf16.msra.mxu0 %v3538
        %5056 = vmatprep.subr.bf16.mxu0 %v3543
        %5057 = vmatpush1.bf16.msra.mxu0 %v3542
        %5058 = vmatprep.subr.bf16.mxu0 %v3547
        %5059 = vmatpush1.bf16.msra.mxu0 %v3546
        %5060 = vmatprep.subr.bf16.mxu0 %v3551
        %5061 = vmatpush1.bf16.msra.mxu0 %v3550
        %5062 = vmatprep.mubr.bf16.mxu0 %v1033
        %5063 = vmatmul.mubr.bf16.gmra.mrb[0].mxu0 %v1032
        %v5064 = vpop.f32.mrb[0].mxu0
        %v5065 = vadd.f32 %v5022, %v5064
        %v5066 = vpop.f32.mrb[0].mxu0
        %v5067 = vadd.f32 %v5024, %v5066
        %v5068 = vpop.f32.mrb[0].mxu0
        %v5069 = vadd.f32 %v5026, %v5068
        %v5070 = vpop.f32.mrb[0].mxu0
        %v5071 = vadd.f32 %v5028, %v5070
        %5072 = vdwg.mxu0
        %5073 = vmatprep.subr.bf16.mxu0 %v3555
        %5074 = vmatpush1.bf16.msra.mxu0 %v3554
        %5075 = vmatprep.subr.bf16.mxu0 %v3559
        %5076 = vmatpush1.bf16.msra.mxu0 %v3558
        %5077 = vmatprep.subr.bf16.mxu0 %v3563
        %5078 = vmatpush1.bf16.msra.mxu0 %v3562
        %5079 = vmatprep.subr.bf16.mxu0 %v3567
        %5080 = vmatpush1.bf16.msra.mxu0 %v3566
        %5081 = vmatprep.subr.bf16.mxu0 %v3571
        %5082 = vmatpush1.bf16.msra.mxu0 %v3570
        %5083 = vmatprep.subr.bf16.mxu0 %v3575
        %5084 = vmatpush1.bf16.msra.mxu0 %v3574
        %5085 = vmatprep.subr.bf16.mxu0 %v3579
        %5086 = vmatpush1.bf16.msra.mxu0 %v3578
        %5087 = vmatprep.subr.bf16.mxu0 %v3583
        %5088 = vmatpush1.bf16.msra.mxu0 %v3582
        %5089 = vmatprep.subr.bf16.mxu0 %v3587
        %5090 = vmatpush1.bf16.msra.mxu0 %v3586
        %5091 = vmatprep.subr.bf16.mxu0 %v3591
        %5092 = vmatpush1.bf16.msra.mxu0 %v3590
        %5093 = vmatprep.subr.bf16.mxu0 %v3595
        %5094 = vmatpush1.bf16.msra.mxu0 %v3594
        %5095 = vmatprep.subr.bf16.mxu0 %v3599
        %5096 = vmatpush1.bf16.msra.mxu0 %v3598
        %5097 = vmatprep.subr.bf16.mxu0 %v3603
        %5098 = vmatpush1.bf16.msra.mxu0 %v3602
        %5099 = vmatprep.subr.bf16.mxu0 %v3607
        %5100 = vmatpush1.bf16.msra.mxu0 %v3606
        %5101 = vmatprep.subr.bf16.mxu0 %v3611
        %5102 = vmatpush1.bf16.msra.mxu0 %v3610
        %5103 = vmatprep.subr.bf16.mxu0 %v3615
        %5104 = vmatpush1.bf16.msra.mxu0 %v3614
        %5105 = vmatprep.mubr.bf16.mxu0 %v1035
        %5106 = vmatmul.mubr.bf16.gmra.mrb[0].mxu0 %v1034
        %v5107 = vpop.f32.mrb[0].mxu0
        %v5108 = vadd.f32 %v5065, %v5107
        %v5109 = vpop.f32.mrb[0].mxu0
        %v5110 = vadd.f32 %v5067, %v5109
        %v5111 = vpop.f32.mrb[0].mxu0
        %v5112 = vadd.f32 %v5069, %v5111
        %v5113 = vpop.f32.mrb[0].mxu0
        %v5114 = vadd.f32 %v5071, %v5113
        %5115 = vdwg.mxu0
        %v5116 = vadd.f32 %v288, %v4678
        %v5117 = vadd.f32 %v289, %v4680
        %v5118 = vadd.f32 %v290, %v5108
        %v5119 = vadd.f32 %v291, %v5110
        %v5120 = vadd.f32 %v292, %v4682
        %v5121 = vadd.f32 %v293, %v4684
        %v5122 = vadd.f32 %v294, %v5112
        %v5123 = vadd.f32 %v295, %v5114
        %5124 = vst [vmem:[#allocation2] sm:$0xff] %v5116
        %5125 = vst [vmem:[#allocation2 + $0x8] sm:$0xff] %v5117
        %5126 = vst [vmem:[#allocation2 + $0x10] sm:$0xff] %v5118
        %5127 = vst [vmem:[#allocation2 + $0x18] sm:$0xff] %v5119
        %5128 = vst [vmem:[#allocation2 + $0x20] sm:$0xff] %v5120
        %5129 = vst [vmem:[#allocation2 + $0x28] sm:$0xff] %v5121
        %5130 = vst [vmem:[#allocation2 + $0x30] sm:$0xff] %v5122
        %5131 = vst [vmem:[#allocation2 + $0x38] sm:$0xff] %v5123
        %p5132 = scmp.eq.s32.totalorder %s19, 4
        // Predicated region
        $region60: #{network_forward.11} parent=50 // pred_check
          %p5133 = pneg %p5132
        $region61: #{network_forward.11} parent=50 // pred_check_branch
          %5135 = sbr.rel (%p5133) target = $region63
        $region62: #{network_forward.11} parent=50 // pred_region
          %v5136 = vld [vmem:[#allocation2] sm:$0xff]
          %v5137 = vld [vmem:[#allocation2 + $0x8] sm:$0xff]
          %v5138 = vld [vmem:[#allocation2 + $0x10] sm:$0xff]
          %v5139 = vld [vmem:[#allocation2 + $0x18] sm:$0xff]
          %v5140 = vld [vmem:[#allocation2 + $0x20] sm:$0xff]
          %v5141 = vld [vmem:[#allocation2 + $0x28] sm:$0xff]
          %v5142 = vld [vmem:[#allocation2 + $0x30] sm:$0xff]
          %v5143 = vld [vmem:[#allocation2 + $0x38] sm:$0xff]
          %v5144 = vld [vmem:[%s2] sm:$0xf]
          %v5146 = vlaneseq
          %v5147 = vshrl.u32 %v5146, 7
          %v5148 = vsub.s32 0, %v5147
          %v5149 = vrot.slane %v5144, %v5148
          %v5150 = vlaneseq
          %v5151 = vshrl.u32 %v5150, 7
          %v5152 = vsub.s32 1, %v5151
          %v5153 = vrot.slane %v5144, %v5152
          %v5154 = vlaneseq
          %v5155 = vshrl.u32 %v5154, 7
          %v5156 = vsub.s32 2, %v5155
          %v5157 = vrot.slane %v5144, %v5156
          %v5158 = vlaneseq
          %v5159 = vshrl.u32 %v5158, 7
          %v5160 = vsub.s32 3, %v5159
          %v5161 = vrot.slane %v5144, %v5160
          %v5166 = vadd.f32 %v5136, %v5149
          %v5167 = vadd.f32 %v5137, %v5153
          %v5168 = vadd.f32 %v5138, %v5157
          %v5169 = vadd.f32 %v5139, %v5161
          %v5170 = vadd.f32 %v5140, %v5149
          %v5171 = vadd.f32 %v5141, %v5153
          %v5172 = vadd.f32 %v5142, %v5157
          %v5173 = vadd.f32 %v5143, %v5161
          %v5174 = vmax.f32 %v5166, 0.0
          %v5175 = vmax.f32 %v5167, 0.0
          %v5176 = vmax.f32 %v5168, 0.0
          %v5177 = vmax.f32 %v5169, 0.0
          %v5178 = vmax.f32 %v5170, 0.0
          %v5179 = vmax.f32 %v5171, 0.0
          %v5180 = vmax.f32 %v5172, 0.0
          %v5181 = vmax.f32 %v5173, 0.0
          %v5182 = vpack.c.bf16 %v5178, %v5174
          %v5183 = vpack.c.bf16 %v5179, %v5175
          %v5184 = vpack.c.bf16 %v5180, %v5176
          %v5185 = vpack.c.bf16 %v5181, %v5177
          %v5190 = vunpack.c.l.b16 %v5182
          %v5191 = vunpack.c.l.b16 %v5183
          %v5192 = vunpack.c.l.b16 %v5184
          %v5193 = vunpack.c.l.b16 %v5185
          %v5194 = vunpack.c.h.b16 %v5182
          %v5195 = vunpack.c.h.b16 %v5183
          %v5196 = vunpack.c.h.b16 %v5184
          %v5197 = vunpack.c.h.b16 %v5185
          %v5198 = vpack.c.b16 %v5191, %v5190
          %v5199 = vpack.c.b16 %v5193, %v5192
          %v5200 = vpack.c.b16 %v5195, %v5194
          %v5201 = vpack.c.b16 %v5197, %v5196
          %5206 = vst [vmem:[%s274] sm:$0xff] %v5198
          %5207 = vst [vmem:[%s274 + $0x8] sm:$0xff] %v5199
          %5208 = vst [vmem:[%s274 + $0x10] sm:$0xff] %v5200
          %5209 = vst [vmem:[%s274 + $0x18] sm:$0xff] %v5201
        $region63: #{network_forward.11} parent=50 // pred_fallthru
          _
        %s5210 = smul.u32 2, %s18
        %p5211 = scmp.lt.s32.totalorder %s5210, 1
        %s5212 = scalar_select %p5211, %s5210, 1
        %s5213 = smul.addr %s5212, 4
        %s5214 = smul.addr %s5213, 4
        %s5215 = scalar_lea.vmem %s3, %s5214
        // Predicated region
        $region64: #{network_forward.11} parent=50 // pred_check
          %p5216 = pneg %p119
        $region65: #{network_forward.11} parent=50 // pred_check_branch
          %5218 = sbr.rel (%p5216) target = $region67
        $region66: #{network_forward.11} parent=50 // pred_region
          %s5219 = smul.u32 2, %s18
        $region67: #{network_forward.11} parent=50 // pred_fallthru
          _
        // Predicated region
        $region68: #{network_forward.11} parent=50 // pred_check
          %p5220 = pneg %p119
        $region69: #{network_forward.11} parent=50 // pred_check_branch
          %5222 = sbr.rel (%p5220) target = $region71
        $region70: #{network_forward.11} parent=50 // pred_region
          %s5223 = smul.u32 2, %s18
          %p5224 = scmp.lt.s32.totalorder %s5223, 1
          %s5225 = scalar_select %p5224, %s5223, 1
          %s5226 = smul.addr %s5225, 4
          %s5227 = smul.addr %s5226, 4
          %s5228 = scalar_lea.vmem %s3, %s5227
        $region71: #{network_forward.11} parent=50 // pred_fallthru
          _
      $region51: #{network_forward.11} parent=5 // pred_fallthru
        _
      %p5229 = scmp.le.s32.totalorder 2, %s9
      // Predicated region
      $region72: #{network_forward.11} parent=5 // pred_check
        %p5230 = pneg %p5229
      $region73: #{network_forward.11} parent=5 // pred_check_branch
        %5232 = sbr.rel (%p5230) target = $region75
      $region74: #{network_forward.11} parent=5 // pred_region
        %s5233 = ssub.s32 %s9, 2
      $region75: #{network_forward.11} parent=5 // pred_fallthru
        _
    $region6: #{network_forward.11} parent=1 // loop_footer
      %s13 = sadd.s32 1, %s9
    $region7: #{network_forward.11} parent=1 // loop_footer_branch
      %8 = sbr.rel target = $region3
    $region8: #{network_forward.11} parent=1 // loop_exit
      _

</llo_original>
